<compile_context>
chip_gen: v7x
topology: tpu7x:2x2x1
jax: 0.10.0
libtpu: 0.0.40
codegen_flags: <defaults>
</compile_context>

<pallas_src>
import functools

import jax
import jax.numpy as jnp
from jax.experimental import pallas as pl
from jax.experimental.pallas import tpu as pltpu


# ----------------------------------------------------------------------------
# Hardware-aware sizing helpers.
# ----------------------------------------------------------------------------
def _vmem_capacity_bytes():
    try:
        return int(pltpu.get_tpu_info().vmem_capacity_bytes)
    except Exception:
        return 64 * 1024 * 1024  # conservative (v7x per-TC VMEM)


def _linear_tiling():
    cap = _vmem_capacity_bytes()
    if cap >= 100 * 1024 * 1024:          # v5e / v6e: 128 MiB physical VMEM
        return (512, 256, 128), 96 * 1024 * 1024
    return (256, 128), 32 * 1024 * 1024   # v7x: 64 MiB physical VMEM


def _pick_tile(dim, prefs):
    for p in prefs:
        if dim >= p:
            return p
    return dim  # small dim: single full block (always legal)


def _round_up(x, m):
    return (x + m - 1) // m * m


# ----------------------------------------------------------------------------
# LSTM cell elementwise math.  Fused gate column order is (i, f, o, g):
# the three sigmoid gates are one contiguous lane-aligned (B, 3H) slab.
# ----------------------------------------------------------------------------
def _lstm_cell(gates, c_prev, hd):
    """gates: (B, 4H) f32 pre-activations in (i, f, o, g) order."""
    sig = jax.nn.sigmoid(gates[:, :3 * hd])     # one EUP pass over (B, 3H)
    i = sig[:, 0 * hd:1 * hd]
    f = sig[:, 1 * hd:2 * hd]
    o = sig[:, 2 * hd:3 * hd]
    g = jnp.tanh(gates[:, 3 * hd:4 * hd])
    c_new = f * c_prev + i * g
    h_new = o * jnp.tanh(c_new)
    return h_new, c_new


# ----------------------------------------------------------------------------
# Tiled linear kernel: (N, K) @ (K, V) + b, lane-dense output tiles, both grid
# axes parallel.  Used for the final vocab projection.  N / V are padded to
# tile multiples (zero pad) and the result is sliced back.
# ----------------------------------------------------------------------------
def linear_kernel(x_ref, w_ref, b_ref, o_ref):
    o_ref[...] = (jnp.dot(x_ref[...], w_ref[...],
                          preferred_element_type=jnp.float32)
                  + b_ref[...])


def linear(x, w, b, *, tile_prefs, vmem_limit):
    """x: (N, K) bf16, w: (K, V) bf16, b: (1, V) f32  ->  (N, V) f32."""
    N, K = x.shape
    V = w.shape[1]
    tm = _pick_tile(N, tile_prefs)
    tn = _pick_tile(V, tile_prefs)
    Np, Vp = _round_up(N, tm), _round_up(V, tn)
    if Np != N:
        x = jnp.pad(x, ((0, Np - N), (0, 0)))
    if Vp != V:
        w = jnp.pad(w, ((0, 0), (0, Vp - V)))
        b = jnp.pad(b, ((0, 0), (0, Vp - V)))

    out = pl.pallas_call(
        linear_kernel,
        out_shape=jax.ShapeDtypeStruct((Np, Vp), jnp.float32),
        grid_spec=pltpu.PrefetchScalarGridSpec(
            num_scalar_prefetch=0,
            grid=(Np // tm, Vp // tn),
            in_specs=[
                pl.BlockSpec((tm, K), lambda i, j: (i, 0)),
                pl.BlockSpec((K, tn), lambda i, j: (0, j)),
                pl.BlockSpec((1, tn), lambda i, j: (0, j)),
            ],
            out_specs=pl.BlockSpec((tm, tn), lambda i, j: (i, j)),
        ),
        compiler_params=pltpu.CompilerParams(
            dimension_semantics=("parallel", "parallel"),
            vmem_limit_bytes=vmem_limit),
    )(x, w, b)

    if Np != N or Vp != V:
        out = out[:N, :V]
    return out


# ----------------------------------------------------------------------------
# Fused 2-layer LSTM recurrence kernel (input projection folded in).
#   emb_ref : (T_BLK, Bt, E)  bf16   embeddings block
#   w0_ref  : (E+H, 4H)       bf16   fused [W_ih_l0 ; W_hh_l0], cols (i,f,o,g)
#   w1_ref  : (2H, 4H)        bf16   fused [W_ih_l1 ; W_hh_l1]
#   b0/b1   : (1, 4H)         f32    b_ih + b_hh per layer
#   hin/cin : (2, Bt, H)      f32    initial state
# Outputs: y (S, Bt, H) bf16 layer-1 hidden per step; h/c (2, Bt, H) f32 final
# state.  h_ref / c_ref use constant-over-time index maps -> resident blocks
# used directly as the carried state across time grid steps.
# ----------------------------------------------------------------------------
def lstm2_kernel(emb_ref, w0_ref, w1_ref, b0_ref, b1_ref, hin_ref, cin_ref,
                 y_ref, h_ref, c_ref, *, unroll):
    hd = h_ref.shape[-1]
    t_blk = emb_ref.shape[0]

    @pl.when(pl.program_id(1) == 0)
    def _():
        h_ref[...] = hin_ref[...]
        c_ref[...] = cin_ref[...]

    w0 = w0_ref[...]
    w1 = w1_ref[...]
    b0 = b0_ref[...]
    b1 = b1_ref[...]

    def step(t, carry):
        h0, c0, h1, c1 = carry
        x_t = emb_ref[t]                                        # (Bt, E) bf16
        # Layer 0: one deep fused matmul (K = E + H).
        g0 = jnp.dot(jnp.concatenate([x_t, h0.astype(jnp.bfloat16)], axis=-1),
                     w0, preferred_element_type=jnp.float32) + b0
        h0n, c0n = _lstm_cell(g0, c0, hd)
        # Layer 1: one deep fused matmul (K = 2H); input is layer-0's fresh h.
        g1 = jnp.dot(jnp.concatenate([h0n.astype(jnp.bfloat16),
                                      h1.astype(jnp.bfloat16)], axis=-1),
                     w1, preferred_element_type=jnp.float32) + b1
        h1n, c1n = _lstm_cell(g1, c1, hd)
        y_ref[t] = h1n.astype(y_ref.dtype)
        return (h0n, c0n, h1n, c1n)

    carry0 = (h_ref[0], c_ref[0], h_ref[1], c_ref[1])
    h0f, c0f, h1f, c1f = jax.lax.fori_loop(0, t_blk, step, carry0,
                                           unroll=unroll)
    h_ref[0] = h0f
    c_ref[0] = c0f
    h_ref[1] = h1f
    c_ref[1] = c1f


def _pick_time_block(S, B, E, H, vmem_budget):
    """Largest time block dividing S whose VMEM footprint fits the budget."""
    G = 4 * H
    fixed = 2 * ((E + H) * G + 2 * H * G)          # bf16 fused weight slabs
    fixed += 4 * 2 * G                             # f32 biases
    fixed += 4 * 4 * (2 * B * H)                   # hin/cin + resident h/c (f32)
    for t in (32, 16, 8, 4, 2, 1):
        if S % t:
            continue
        blocks = 2 * (t * B * E * 2 + t * B * H * 2)   # dbl-buffered emb + y (bf16)
        if fixed + blocks <= vmem_budget:
            return t
    return 1


def lstm2(embeds, w0, w1, b0, b1, h0, c0):
    """embeds: (S, B, E) bf16.  Returns (y:(S,B,H) bf16, h_n, c_n:(2,B,H) f32)."""
    S, B, E = embeds.shape
    H = h0.shape[-1]
    G = 4 * H

    vmem_cap = _vmem_capacity_bytes()
    t_blk = _pick_time_block(S, B, E, H, int(vmem_cap * 0.6))
    lstm_limit = max(32 * 1024 * 1024, min(vmem_cap * 3 // 4, 96 * 1024 * 1024))

    # v7x: give each TensorCore an independent batch shard when the batch
    # splits into sublane-aligned tiles; harmless (single tile) otherwise.
    n_bt = 2 if (B % 16 == 0) else 1
    bt = B // n_bt

    # Back off from full unroll when the per-step working set gets large.
    unroll = True if (bt * H * 4) <= 64 * 1024 else 4

    kernel = functools.partial(lstm2_kernel, unroll=unroll)
    return pl.pallas_call(
        kernel,
        out_shape=(jax.ShapeDtypeStruct((S, B, H), jnp.bfloat16),
                   jax.ShapeDtypeStruct((2, B, H), jnp.float32),
                   jax.ShapeDtypeStruct((2, B, H), jnp.float32)),
        grid_spec=pltpu.PrefetchScalarGridSpec(
            num_scalar_prefetch=0,
            grid=(n_bt, S // t_blk),
            in_specs=[
                pl.BlockSpec((t_blk, bt, E), lambda b, t: (t, b, 0)),   # embeds
                pl.BlockSpec((E + H, G), lambda b, t: (0, 0)),          # W0 fused
                pl.BlockSpec((2 * H, G), lambda b, t: (0, 0)),          # W1 fused
                pl.BlockSpec((1, G), lambda b, t: (0, 0)),              # b0
                pl.BlockSpec((1, G), lambda b, t: (0, 0)),              # b1
                pl.BlockSpec((2, bt, H), lambda b, t: (0, b, 0)),       # h0
                pl.BlockSpec((2, bt, H), lambda b, t: (0, b, 0)),       # c0
            ],
            out_specs=(
                pl.BlockSpec((t_blk, bt, H), lambda b, t: (t, b, 0)),   # y
                pl.BlockSpec((2, bt, H), lambda b, t: (0, b, 0)),       # h_N
                pl.BlockSpec((2, bt, H), lambda b, t: (0, b, 0)),       # c_N
            ),
        ),
        compiler_params=pltpu.CompilerParams(
            dimension_semantics=("parallel", "arbitrary"),
            vmem_limit_bytes=int(lstm_limit)),
    )(embeds, w0, w1, b0, b1, h0, c0)


# ----------------------------------------------------------------------------
# Full PoetryModel forward
# ----------------------------------------------------------------------------
def poetry_model_forward(params, inputs, hidden=None):
    """inputs: (seq_len, batch) int32 token ids.  Returns (logits, (h_n, c_n))."""
    S, B = inputs.shape
    H = params["hidden_dim"]
    if hidden is None:
        h0 = jnp.zeros((2, B, H), jnp.float32)
        c0 = jnp.zeros((2, B, H), jnp.float32)
    else:
        h0, c0 = hidden

    # Embedding gather (glue); table is bf16 -> gather yields bf16 directly.
    embeds = jnp.take(params["embedding"], inputs, axis=0)      # (S, B, E) bf16

    # Fused 2-layer recurrence; layer-0 output and gates never touch HBM.
    y1, h_n, c_n = lstm2(embeds, params["l0_w"], params["l1_w"],
                         params["l0_b"], params["l1_b"], h0, c0)

    # Output projection on the flattened (S*B, H) slab (y1 already bf16).
    prefs, lim = _linear_tiling()
    logits = linear(y1.reshape(S * B, H), params["lin_w"], params["lin_b"],
                    tile_prefs=prefs, vmem_limit=lim)
    return logits, (h_n, c_n)


# ----------------------------------------------------------------------------
# Pure-JAX reference (same math, same fused layout, same bf16 quantization).
# ----------------------------------------------------------------------------
def _ref_forward(params, inputs, hidden=None):
    S, B = inputs.shape
    H = params["hidden_dim"]
    if hidden is None:
        h0 = jnp.zeros((2, B, H), jnp.float32)
        c0 = jnp.zeros((2, B, H), jnp.float32)
    else:
        h0, c0 = hidden

    embeds = jnp.take(params["embedding"], inputs, axis=0)      # bf16

    def step(carry, x_t):
        h0_, c0_, h1_, c1_ = carry
        g0 = (jnp.dot(jnp.concatenate([x_t, h0_.astype(jnp.bfloat16)], axis=-1),
                      params["l0_w"], preferred_element_type=jnp.float32)
              + params["l0_b"])
        h0n, c0n = _lstm_cell(g0, c0_, H)
        g1 = (jnp.dot(jnp.concatenate([h0n.astype(jnp.bfloat16),
                                       h1_.astype(jnp.bfloat16)], axis=-1),
                      params["l1_w"], preferred_element_type=jnp.float32)
              + params["l1_b"])
        h1n, c1n = _lstm_cell(g1, c1_, H)
        return (h0n, c0n, h1n, c1n), h1n.astype(jnp.bfloat16)

    (h0f, c0f, h1f, c1f), y1 = jax.lax.scan(
        step, (h0[0], c0[0], h0[1], c0[1]), embeds)
    logits = (jnp.dot(y1.reshape(S * B, H), params["lin_w"],
                      preferred_element_type=jnp.float32)
              + params["lin_b"])
    return logits, (jnp.stack([h0f, h1f]), jnp.stack([c0f, c1f]))


# ----------------------------------------------------------------------------
# Deterministic parameter init (synthetic, not a checkpoint).
# Fused-gate layout: per layer, W = [W_ih ; W_hh] stacked along K, shape
# (D_in + H, 4H), gate COLUMN order (i, f, o, g); bias = b_ih + b_hh, (1, 4H).
# Weights/embedding in bf16 (MXU operands); biases in f32.
# (A PyTorch checkpoint would need the (i,f,g,o)->(i,f,o,g) column permute.)
# ----------------------------------------------------------------------------
def init_params(key, vocab_size, embedding_dim, hidden_dim):
    keys = jax.random.split(key, 10)
    H, E, V = hidden_dim, embedding_dim, vocab_size
    s = 0.1

    def u(k, shape, dtype=jnp.float32):
        return jax.random.uniform(k, shape, jnp.float32, -s, s).astype(dtype)

    return {
        "hidden_dim": H,
        "embedding": u(keys[0], (V, E), jnp.bfloat16),
        "l0_w": u(keys[1], (E + H, 4 * H), jnp.bfloat16),
        "l0_b": u(keys[2], (1, 4 * H)) + u(keys[3], (1, 4 * H)),   # b_ih + b_hh
        "l1_w": u(keys[4], (2 * H, 4 * H), jnp.bfloat16),
        "l1_b": u(keys[5], (1, 4 * H)) + u(keys[6], (1, 4 * H)),
        "lin_w": u(keys[7], (H, V), jnp.bfloat16),
        "lin_b": u(keys[8], (1, V)),
    }


if __name__ == "__main__":
    # Small but above the (8,128) architecture floor (perf-review item #9).
    vocab_size, embedding_dim, hidden_dim = 256, 128, 128
    seq_len, batch = 16, 8

    key = jax.random.PRNGKey(0)
    pkey, ikey = jax.random.split(key)
    params = init_params(pkey, vocab_size, embedding_dim, hidden_dim)
    inputs = jax.random.randint(ikey, (seq_len, batch), 0, vocab_size,
                                dtype=jnp.int32)

    fwd = jax.jit(functools.partial(poetry_model_forward, params))
    logits, (h_n, c_n) = fwd(inputs)
    jax.block_until_ready((logits, h_n, c_n))

    # Cross-check against the pure-JAX reference (same bf16 quantization).
    ref_logits, (ref_h, ref_c) = _ref_forward(params, inputs)
    assert logits.shape == (seq_len * batch, vocab_size)
    assert h_n.shape == (2, batch, hidden_dim)
    assert c_n.shape == (2, batch, hidden_dim)
    assert jnp.allclose(logits, ref_logits, atol=1e-2, rtol=1e-2)
    assert jnp.allclose(h_n, ref_h, atol=1e-2, rtol=1e-2)
    assert jnp.allclose(c_n, ref_c, atol=1e-2, rtol=1e-2)

    print("KERNEL_OK")
</pallas_src>

<mosaic_0001>
module attributes {stable_mosaic.version = 11 : i64} {
  func.func @lstm2_kernel(%arg0: i32, %arg1: i32, %arg2: memref<16x8x128xbf16, #tpu.memory_space<vmem>>, %arg3: memref<256x512xbf16, #tpu.memory_space<vmem>>, %arg4: memref<256x512xbf16, #tpu.memory_space<vmem>>, %arg5: memref<1x512xf32, #tpu.memory_space<vmem>>, %arg6: memref<1x512xf32, #tpu.memory_space<vmem>>, %arg7: memref<2x8x128xf32, #tpu.memory_space<vmem>>, %arg8: memref<2x8x128xf32, #tpu.memory_space<vmem>>, %arg9: memref<16x8x128xbf16, #tpu.memory_space<vmem>>, %arg10: memref<2x8x128xf32, #tpu.memory_space<vmem>>, %arg11: memref<2x8x128xf32, #tpu.memory_space<vmem>>) attributes {dimension_semantics = [#tpu.dimension_semantics<parallel>, #tpu.dimension_semantics<arbitrary>], iteration_bounds = array<i64: 1, 1>, scalar_prefetch = 0 : i64, scratch_operands = 0 : i64, tpu.core_type = #tpu.core_type<tc>, window_params = [{transform_indices = @transform_0, window_bounds = array<i64: 16, 8, 128>}, {pipeline_mode = #tpu.pipeline_mode<synchronous>, transform_indices = @transform_1, window_bounds = array<i64: 256, 512>}, {pipeline_mode = #tpu.pipeline_mode<synchronous>, transform_indices = @transform_2, window_bounds = array<i64: 256, 512>}, {pipeline_mode = #tpu.pipeline_mode<synchronous>, transform_indices = @transform_3, window_bounds = array<i64: 1, 512>}, {pipeline_mode = #tpu.pipeline_mode<synchronous>, transform_indices = @transform_4, window_bounds = array<i64: 1, 512>}, {transform_indices = @transform_5, window_bounds = array<i64: 2, 8, 128>}, {transform_indices = @transform_6, window_bounds = array<i64: 2, 8, 128>}, {transform_indices = @transform_7, window_bounds = array<i64: 16, 8, 128>}, {transform_indices = @transform_8, window_bounds = array<i64: 2, 8, 128>}, {transform_indices = @transform_9, window_bounds = array<i64: 2, 8, 128>}]} {
    %c0_i32 = arith.constant 0 : i32
    %0 = arith.cmpi eq, %arg1, %c0_i32 : i32
    %1 = arith.extui %0 : i1 to i32
    %c0_i32_0 = arith.constant 0 : i32
    %2 = arith.cmpi ne, %1, %c0_i32_0 : i32
    scf.if %2 {
      %c0_159 = arith.constant 0 : index
      %c0_160 = arith.constant 0 : index
      %c0_161 = arith.constant 0 : index
      %843 = vector.load %arg7[%c0_159, %c0_160, %c0_161] : memref<2x8x128xf32, #tpu.memory_space<vmem>>, vector<2x8x128xf32>
      %c0_162 = arith.constant 0 : index
      %c0_163 = arith.constant 0 : index
      %c0_164 = arith.constant 0 : index
      %844 = vector.load %arg10[%c0_162, %c0_163, %c0_164] : memref<2x8x128xf32, #tpu.memory_space<vmem>>, vector<2x8x128xf32>
      tpu.vector_store %arg10[%c0_162, %c0_163, %c0_164], %843 {strides = array<i32>} : memref<2x8x128xf32, #tpu.memory_space<vmem>>, vector<2x8x128xf32>,
      %c0_165 = arith.constant 0 : index
      %c0_166 = arith.constant 0 : index
      %c0_167 = arith.constant 0 : index
      %845 = vector.load %arg8[%c0_165, %c0_166, %c0_167] : memref<2x8x128xf32, #tpu.memory_space<vmem>>, vector<2x8x128xf32>
      %c0_168 = arith.constant 0 : index
      %c0_169 = arith.constant 0 : index
      %c0_170 = arith.constant 0 : index
      %846 = vector.load %arg11[%c0_168, %c0_169, %c0_170] : memref<2x8x128xf32, #tpu.memory_space<vmem>>, vector<2x8x128xf32>
      tpu.vector_store %arg11[%c0_168, %c0_169, %c0_170], %845 {strides = array<i32>} : memref<2x8x128xf32, #tpu.memory_space<vmem>>, vector<2x8x128xf32>,
    } else {
    }
    %c0 = arith.constant 0 : index
    %c0_1 = arith.constant 0 : index
    %3 = vector.load %arg3[%c0, %c0_1] : memref<256x512xbf16, #tpu.memory_space<vmem>>, vector<256x512xbf16>
    %c0_2 = arith.constant 0 : index
    %c0_3 = arith.constant 0 : index
    %4 = vector.load %arg4[%c0_2, %c0_3] : memref<256x512xbf16, #tpu.memory_space<vmem>>, vector<256x512xbf16>
    %c0_4 = arith.constant 0 : index
    %c0_5 = arith.constant 0 : index
    %5 = vector.load %arg5[%c0_4, %c0_5] : memref<1x512xf32, #tpu.memory_space<vmem>>, vector<1x512xf32>
    %c0_6 = arith.constant 0 : index
    %c0_7 = arith.constant 0 : index
    %6 = vector.load %arg6[%c0_6, %c0_7] : memref<1x512xf32, #tpu.memory_space<vmem>>, vector<1x512xf32>
    %c0_8 = arith.constant 0 : index
    %c0_9 = arith.constant 0 : index
    %c0_10 = arith.constant 0 : index
    %7 = vector.load %arg10[%c0_8, %c0_9, %c0_10] : memref<2x8x128xf32, #tpu.memory_space<vmem>>, vector<1x8x128xf32>
    %8 = vector.shape_cast %7 : vector<1x8x128xf32> to vector<8x128xf32>
    %c0_11 = arith.constant 0 : index
    %c0_12 = arith.constant 0 : index
    %c0_13 = arith.constant 0 : index
    %9 = vector.load %arg11[%c0_11, %c0_12, %c0_13] : memref<2x8x128xf32, #tpu.memory_space<vmem>>, vector<1x8x128xf32>
    %10 = vector.shape_cast %9 : vector<1x8x128xf32> to vector<8x128xf32>
    %c1 = arith.constant 1 : index
    %c0_14 = arith.constant 0 : index
    %c0_15 = arith.constant 0 : index
    %11 = vector.load %arg10[%c1, %c0_14, %c0_15] : memref<2x8x128xf32, #tpu.memory_space<vmem>>, vector<1x8x128xf32>
    %12 = vector.shape_cast %11 : vector<1x8x128xf32> to vector<8x128xf32>
    %c1_16 = arith.constant 1 : index
    %c0_17 = arith.constant 0 : index
    %c0_18 = arith.constant 0 : index
    %13 = vector.load %arg11[%c1_16, %c0_17, %c0_18] : memref<2x8x128xf32, #tpu.memory_space<vmem>>, vector<1x8x128xf32>
    %14 = vector.shape_cast %13 : vector<1x8x128xf32> to vector<8x128xf32>
    %c0_i32_19 = arith.constant 0 : i32
    %15 = arith.index_cast %c0_i32_19 : i32 to index
    %c0_20 = arith.constant 0 : index
    %c0_21 = arith.constant 0 : index
    %16 = vector.load %arg2[%15, %c0_20, %c0_21] : memref<16x8x128xbf16, #tpu.memory_space<vmem>>, vector<1x8x128xbf16>
    %17 = vector.shape_cast %16 : vector<1x8x128xbf16> to vector<8x128xbf16>
    %18 = arith.truncf %8 : vector<8x128xf32> to vector<8x128xbf16>
    %19 = tpu.concatenate %17, %18 in 1 : vector<8x128xbf16>, vector<8x128xbf16> -> vector<8x256xbf16>
    %cst = arith.constant dense<0.000000e+00> : vector<8x512xf32>
    %20 = tpu.matmul %19, %3, %cst {dimension_numbers = #tpu.dot_dimension_numbers<[1], [0], [0], [1], [0, 0, 1, 1], [], []>} : vector<8x256xbf16>, vector<256x512xbf16>, vector<8x512xf32> -> vector<8x512xf32>
    %21 = vector.broadcast %5 : vector<1x512xf32> to vector<8x512xf32>
    %22 = arith.addf %20, %21 : vector<8x512xf32>
    %23 = vector.extract_strided_slice %22 {offsets = [0, 0], sizes = [8, 384], strides = [1, 1]} : vector<8x512xf32> to vector<8x384xf32>
    %24 = arith.negf %23 : vector<8x384xf32>
    %25 = math.exp %24 : vector<8x384xf32>
    %cst_22 = arith.constant 1.000000e+00 : f32
    %26 = vector.broadcast %cst_22 : f32 to vector<8x384xf32>
    %27 = arith.addf %26, %25 : vector<8x384xf32>
    %28 = arith.divf %26, %27 : vector<8x384xf32>
    %29 = vector.extract_strided_slice %28 {offsets = [0, 0], sizes = [8, 128], strides = [1, 1]} : vector<8x384xf32> to vector<8x128xf32>
    %30 = vector.extract_strided_slice %28 {offsets = [0, 128], sizes = [8, 128], strides = [1, 1]} : vector<8x384xf32> to vector<8x128xf32>
    %31 = vector.extract_strided_slice %28 {offsets = [0, 256], sizes = [8, 128], strides = [1, 1]} : vector<8x384xf32> to vector<8x128xf32>
    %32 = vector.extract_strided_slice %22 {offsets = [0, 384], sizes = [8, 128], strides = [1, 1]} : vector<8x512xf32> to vector<8x128xf32>
    %33 = math.tanh %32 : vector<8x128xf32>
    %34 = arith.mulf %30, %10 : vector<8x128xf32>
    %35 = arith.mulf %29, %33 : vector<8x128xf32>
    %36 = arith.addf %34, %35 : vector<8x128xf32>
    %37 = math.tanh %36 : vector<8x128xf32>
    %38 = arith.mulf %31, %37 : vector<8x128xf32>
    %39 = arith.truncf %38 : vector<8x128xf32> to vector<8x128xbf16>
    %40 = arith.truncf %12 : vector<8x128xf32> to vector<8x128xbf16>
    %41 = tpu.concatenate %39, %40 in 1 : vector<8x128xbf16>, vector<8x128xbf16> -> vector<8x256xbf16>
    %cst_23 = arith.constant dense<0.000000e+00> : vector<8x512xf32>
    %42 = tpu.matmul %41, %4, %cst_23 {dimension_numbers = #tpu.dot_dimension_numbers<[1], [0], [0], [1], [0, 0, 1, 1], [], []>} : vector<8x256xbf16>, vector<256x512xbf16>, vector<8x512xf32> -> vector<8x512xf32>
    %43 = vector.broadcast %6 : vector<1x512xf32> to vector<8x512xf32>
    %44 = arith.addf %42, %43 : vector<8x512xf32>
    %45 = vector.extract_strided_slice %44 {offsets = [0, 0], sizes = [8, 384], strides = [1, 1]} : vector<8x512xf32> to vector<8x384xf32>
    %46 = arith.negf %45 : vector<8x384xf32>
    %47 = math.exp %46 : vector<8x384xf32>
    %cst_24 = arith.constant 1.000000e+00 : f32
    %48 = vector.broadcast %cst_24 : f32 to vector<8x384xf32>
    %49 = arith.addf %48, %47 : vector<8x384xf32>
    %50 = arith.divf %48, %49 : vector<8x384xf32>
    %51 = vector.extract_strided_slice %50 {offsets = [0, 0], sizes = [8, 128], strides = [1, 1]} : vector<8x384xf32> to vector<8x128xf32>
    %52 = vector.extract_strided_slice %50 {offsets = [0, 128], sizes = [8, 128], strides = [1, 1]} : vector<8x384xf32> to vector<8x128xf32>
    %53 = vector.extract_strided_slice %50 {offsets = [0, 256], sizes = [8, 128], strides = [1, 1]} : vector<8x384xf32> to vector<8x128xf32>
    %54 = vector.extract_strided_slice %44 {offsets = [0, 384], sizes = [8, 128], strides = [1, 1]} : vector<8x512xf32> to vector<8x128xf32>
    %55 = math.tanh %54 : vector<8x128xf32>
    %56 = arith.mulf %52, %14 : vector<8x128xf32>
    %57 = arith.mulf %51, %55 : vector<8x128xf32>
    %58 = arith.addf %56, %57 : vector<8x128xf32>
    %59 = math.tanh %58 : vector<8x128xf32>
    %60 = arith.mulf %53, %59 : vector<8x128xf32>
    %61 = arith.truncf %60 : vector<8x128xf32> to vector<8x128xbf16>
    %62 = arith.index_cast %c0_i32_19 : i32 to index
    %c0_25 = arith.constant 0 : index
    %c0_26 = arith.constant 0 : index
    %63 = vector.load %arg9[%62, %c0_25, %c0_26] : memref<16x8x128xbf16, #tpu.memory_space<vmem>>, vector<1x8x128xbf16>
    %64 = vector.shape_cast %63 : vector<1x8x128xbf16> to vector<8x128xbf16>
    %65 = vector.shape_cast %61 : vector<8x128xbf16> to vector<1x8x128xbf16>
    tpu.vector_store %arg9[%62, %c0_25, %c0_26], %65 {strides = array<i32>} : memref<16x8x128xbf16, #tpu.memory_space<vmem>>, vector<1x8x128xbf16>,
    %c1_i32 = arith.constant 1 : i32
    %66 = arith.index_cast %c1_i32 : i32 to index
    %c0_27 = arith.constant 0 : index
    %c0_28 = arith.constant 0 : index
    %67 = vector.load %arg2[%66, %c0_27, %c0_28] : memref<16x8x128xbf16, #tpu.memory_space<vmem>>, vector<1x8x128xbf16>
    %68 = vector.shape_cast %67 : vector<1x8x128xbf16> to vector<8x128xbf16>
    %69 = arith.truncf %38 : vector<8x128xf32> to vector<8x128xbf16>
    %70 = tpu.concatenate %68, %69 in 1 : vector<8x128xbf16>, vector<8x128xbf16> -> vector<8x256xbf16>
    %cst_29 = arith.constant dense<0.000000e+00> : vector<8x512xf32>
    %71 = tpu.matmul %70, %3, %cst_29 {dimension_numbers = #tpu.dot_dimension_numbers<[1], [0], [0], [1], [0, 0, 1, 1], [], []>} : vector<8x256xbf16>, vector<256x512xbf16>, vector<8x512xf32> -> vector<8x512xf32>
    %72 = vector.broadcast %5 : vector<1x512xf32> to vector<8x512xf32>
    %73 = arith.addf %71, %72 : vector<8x512xf32>
    %74 = vector.extract_strided_slice %73 {offsets = [0, 0], sizes = [8, 384], strides = [1, 1]} : vector<8x512xf32> to vector<8x384xf32>
    %75 = arith.negf %74 : vector<8x384xf32>
    %76 = math.exp %75 : vector<8x384xf32>
    %cst_30 = arith.constant 1.000000e+00 : f32
    %77 = vector.broadcast %cst_30 : f32 to vector<8x384xf32>
    %78 = arith.addf %77, %76 : vector<8x384xf32>
    %79 = arith.divf %77, %78 : vector<8x384xf32>
    %80 = vector.extract_strided_slice %79 {offsets = [0, 0], sizes = [8, 128], strides = [1, 1]} : vector<8x384xf32> to vector<8x128xf32>
    %81 = vector.extract_strided_slice %79 {offsets = [0, 128], sizes = [8, 128], strides = [1, 1]} : vector<8x384xf32> to vector<8x128xf32>
    %82 = vector.extract_strided_slice %79 {offsets = [0, 256], sizes = [8, 128], strides = [1, 1]} : vector<8x384xf32> to vector<8x128xf32>
    %83 = vector.extract_strided_slice %73 {offsets = [0, 384], sizes = [8, 128], strides = [1, 1]} : vector<8x512xf32> to vector<8x128xf32>
    %84 = math.tanh %83 : vector<8x128xf32>
    %85 = arith.mulf %81, %36 : vector<8x128xf32>
    %86 = arith.mulf %80, %84 : vector<8x128xf32>
    %87 = arith.addf %85, %86 : vector<8x128xf32>
    %88 = math.tanh %87 : vector<8x128xf32>
    %89 = arith.mulf %82, %88 : vector<8x128xf32>
    %90 = arith.truncf %89 : vector<8x128xf32> to vector<8x128xbf16>
    %91 = arith.truncf %60 : vector<8x128xf32> to vector<8x128xbf16>
    %92 = tpu.concatenate %90, %91 in 1 : vector<8x128xbf16>, vector<8x128xbf16> -> vector<8x256xbf16>
    %cst_31 = arith.constant dense<0.000000e+00> : vector<8x512xf32>
    %93 = tpu.matmul %92, %4, %cst_31 {dimension_numbers = #tpu.dot_dimension_numbers<[1], [0], [0], [1], [0, 0, 1, 1], [], []>} : vector<8x256xbf16>, vector<256x512xbf16>, vector<8x512xf32> -> vector<8x512xf32>
    %94 = vector.broadcast %6 : vector<1x512xf32> to vector<8x512xf32>
    %95 = arith.addf %93, %94 : vector<8x512xf32>
    %96 = vector.extract_strided_slice %95 {offsets = [0, 0], sizes = [8, 384], strides = [1, 1]} : vector<8x512xf32> to vector<8x384xf32>
    %97 = arith.negf %96 : vector<8x384xf32>
    %98 = math.exp %97 : vector<8x384xf32>
    %cst_32 = arith.constant 1.000000e+00 : f32
    %99 = vector.broadcast %cst_32 : f32 to vector<8x384xf32>
    %100 = arith.addf %99, %98 : vector<8x384xf32>
    %101 = arith.divf %99, %100 : vector<8x384xf32>
    %102 = vector.extract_strided_slice %101 {offsets = [0, 0], sizes = [8, 128], strides = [1, 1]} : vector<8x384xf32> to vector<8x128xf32>
    %103 = vector.extract_strided_slice %101 {offsets = [0, 128], sizes = [8, 128], strides = [1, 1]} : vector<8x384xf32> to vector<8x128xf32>
    %104 = vector.extract_strided_slice %101 {offsets = [0, 256], sizes = [8, 128], strides = [1, 1]} : vector<8x384xf32> to vector<8x128xf32>
    %105 = vector.extract_strided_slice %95 {offsets = [0, 384], sizes = [8, 128], strides = [1, 1]} : vector<8x512xf32> to vector<8x128xf32>
    %106 = math.tanh %105 : vector<8x128xf32>
    %107 = arith.mulf %103, %58 : vector<8x128xf32>
    %108 = arith.mulf %102, %106 : vector<8x128xf32>
    %109 = arith.addf %107, %108 : vector<8x128xf32>
    %110 = math.tanh %109 : vector<8x128xf32>
    %111 = arith.mulf %104, %110 : vector<8x128xf32>
    %112 = arith.truncf %111 : vector<8x128xf32> to vector<8x128xbf16>
    %113 = arith.index_cast %c1_i32 : i32 to index
    %c0_33 = arith.constant 0 : index
    %c0_34 = arith.constant 0 : index
    %114 = vector.load %arg9[%113, %c0_33, %c0_34] : memref<16x8x128xbf16, #tpu.memory_space<vmem>>, vector<1x8x128xbf16>
    %115 = vector.shape_cast %114 : vector<1x8x128xbf16> to vector<8x128xbf16>
    %116 = vector.shape_cast %112 : vector<8x128xbf16> to vector<1x8x128xbf16>
    tpu.vector_store %arg9[%113, %c0_33, %c0_34], %116 {strides = array<i32>} : memref<16x8x128xbf16, #tpu.memory_space<vmem>>, vector<1x8x128xbf16>,
    %c2_i32 = arith.constant 2 : i32
    %117 = arith.index_cast %c2_i32 : i32 to index
    %c0_35 = arith.constant 0 : index
    %c0_36 = arith.constant 0 : index
    %118 = vector.load %arg2[%117, %c0_35, %c0_36] : memref<16x8x128xbf16, #tpu.memory_space<vmem>>, vector<1x8x128xbf16>
    %119 = vector.shape_cast %118 : vector<1x8x128xbf16> to vector<8x128xbf16>
    %120 = arith.truncf %89 : vector<8x128xf32> to vector<8x128xbf16>
    %121 = tpu.concatenate %119, %120 in 1 : vector<8x128xbf16>, vector<8x128xbf16> -> vector<8x256xbf16>
    %cst_37 = arith.constant dense<0.000000e+00> : vector<8x512xf32>
    %122 = tpu.matmul %121, %3, %cst_37 {dimension_numbers = #tpu.dot_dimension_numbers<[1], [0], [0], [1], [0, 0, 1, 1], [], []>} : vector<8x256xbf16>, vector<256x512xbf16>, vector<8x512xf32> -> vector<8x512xf32>
    %123 = vector.broadcast %5 : vector<1x512xf32> to vector<8x512xf32>
    %124 = arith.addf %122, %123 : vector<8x512xf32>
    %125 = vector.extract_strided_slice %124 {offsets = [0, 0], sizes = [8, 384], strides = [1, 1]} : vector<8x512xf32> to vector<8x384xf32>
    %126 = arith.negf %125 : vector<8x384xf32>
    %127 = math.exp %126 : vector<8x384xf32>
    %cst_38 = arith.constant 1.000000e+00 : f32
    %128 = vector.broadcast %cst_38 : f32 to vector<8x384xf32>
    %129 = arith.addf %128, %127 : vector<8x384xf32>
    %130 = arith.divf %128, %129 : vector<8x384xf32>
    %131 = vector.extract_strided_slice %130 {offsets = [0, 0], sizes = [8, 128], strides = [1, 1]} : vector<8x384xf32> to vector<8x128xf32>
    %132 = vector.extract_strided_slice %130 {offsets = [0, 128], sizes = [8, 128], strides = [1, 1]} : vector<8x384xf32> to vector<8x128xf32>
    %133 = vector.extract_strided_slice %130 {offsets = [0, 256], sizes = [8, 128], strides = [1, 1]} : vector<8x384xf32> to vector<8x128xf32>
    %134 = vector.extract_strided_slice %124 {offsets = [0, 384], sizes = [8, 128], strides = [1, 1]} : vector<8x512xf32> to vector<8x128xf32>
    %135 = math.tanh %134 : vector<8x128xf32>
    %136 = arith.mulf %132, %87 : vector<8x128xf32>
    %137 = arith.mulf %131, %135 : vector<8x128xf32>
    %138 = arith.addf %136, %137 : vector<8x128xf32>
    %139 = math.tanh %138 : vector<8x128xf32>
    %140 = arith.mulf %133, %139 : vector<8x128xf32>
    %141 = arith.truncf %140 : vector<8x128xf32> to vector<8x128xbf16>
    %142 = arith.truncf %111 : vector<8x128xf32> to vector<8x128xbf16>
    %143 = tpu.concatenate %141, %142 in 1 : vector<8x128xbf16>, vector<8x128xbf16> -> vector<8x256xbf16>
    %cst_39 = arith.constant dense<0.000000e+00> : vector<8x512xf32>
    %144 = tpu.matmul %143, %4, %cst_39 {dimension_numbers = #tpu.dot_dimension_numbers<[1], [0], [0], [1], [0, 0, 1, 1], [], []>} : vector<8x256xbf16>, vector<256x512xbf16>, vector<8x512xf32> -> vector<8x512xf32>
    %145 = vector.broadcast %6 : vector<1x512xf32> to vector<8x512xf32>
    %146 = arith.addf %144, %145 : vector<8x512xf32>
    %147 = vector.extract_strided_slice %146 {offsets = [0, 0], sizes = [8, 384], strides = [1, 1]} : vector<8x512xf32> to vector<8x384xf32>
    %148 = arith.negf %147 : vector<8x384xf32>
    %149 = math.exp %148 : vector<8x384xf32>
    %cst_40 = arith.constant 1.000000e+00 : f32
    %150 = vector.broadcast %cst_40 : f32 to vector<8x384xf32>
    %151 = arith.addf %150, %149 : vector<8x384xf32>
    %152 = arith.divf %150, %151 : vector<8x384xf32>
    %153 = vector.extract_strided_slice %152 {offsets = [0, 0], sizes = [8, 128], strides = [1, 1]} : vector<8x384xf32> to vector<8x128xf32>
    %154 = vector.extract_strided_slice %152 {offsets = [0, 128], sizes = [8, 128], strides = [1, 1]} : vector<8x384xf32> to vector<8x128xf32>
    %155 = vector.extract_strided_slice %152 {offsets = [0, 256], sizes = [8, 128], strides = [1, 1]} : vector<8x384xf32> to vector<8x128xf32>
    %156 = vector.extract_strided_slice %146 {offsets = [0, 384], sizes = [8, 128], strides = [1, 1]} : vector<8x512xf32> to vector<8x128xf32>
    %157 = math.tanh %156 : vector<8x128xf32>
    %158 = arith.mulf %154, %109 : vector<8x128xf32>
    %159 = arith.mulf %153, %157 : vector<8x128xf32>
    %160 = arith.addf %158, %159 : vector<8x128xf32>
    %161 = math.tanh %160 : vector<8x128xf32>
    %162 = arith.mulf %155, %161 : vector<8x128xf32>
    %163 = arith.truncf %162 : vector<8x128xf32> to vector<8x128xbf16>
    %164 = arith.index_cast %c2_i32 : i32 to index
    %c0_41 = arith.constant 0 : index
    %c0_42 = arith.constant 0 : index
    %165 = vector.load %arg9[%164, %c0_41, %c0_42] : memref<16x8x128xbf16, #tpu.memory_space<vmem>>, vector<1x8x128xbf16>
    %166 = vector.shape_cast %165 : vector<1x8x128xbf16> to vector<8x128xbf16>
    %167 = vector.shape_cast %163 : vector<8x128xbf16> to vector<1x8x128xbf16>
    tpu.vector_store %arg9[%164, %c0_41, %c0_42], %167 {strides = array<i32>} : memref<16x8x128xbf16, #tpu.memory_space<vmem>>, vector<1x8x128xbf16>,
    %c3_i32 = arith.constant 3 : i32
    %168 = arith.index_cast %c3_i32 : i32 to index
    %c0_43 = arith.constant 0 : index
    %c0_44 = arith.constant 0 : index
    %169 = vector.load %arg2[%168, %c0_43, %c0_44] : memref<16x8x128xbf16, #tpu.memory_space<vmem>>, vector<1x8x128xbf16>
    %170 = vector.shape_cast %169 : vector<1x8x128xbf16> to vector<8x128xbf16>
    %171 = arith.truncf %140 : vector<8x128xf32> to vector<8x128xbf16>
    %172 = tpu.concatenate %170, %171 in 1 : vector<8x128xbf16>, vector<8x128xbf16> -> vector<8x256xbf16>
    %cst_45 = arith.constant dense<0.000000e+00> : vector<8x512xf32>
    %173 = tpu.matmul %172, %3, %cst_45 {dimension_numbers = #tpu.dot_dimension_numbers<[1], [0], [0], [1], [0, 0, 1, 1], [], []>} : vector<8x256xbf16>, vector<256x512xbf16>, vector<8x512xf32> -> vector<8x512xf32>
    %174 = vector.broadcast %5 : vector<1x512xf32> to vector<8x512xf32>
    %175 = arith.addf %173, %174 : vector<8x512xf32>
    %176 = vector.extract_strided_slice %175 {offsets = [0, 0], sizes = [8, 384], strides = [1, 1]} : vector<8x512xf32> to vector<8x384xf32>
    %177 = arith.negf %176 : vector<8x384xf32>
    %178 = math.exp %177 : vector<8x384xf32>
    %cst_46 = arith.constant 1.000000e+00 : f32
    %179 = vector.broadcast %cst_46 : f32 to vector<8x384xf32>
    %180 = arith.addf %179, %178 : vector<8x384xf32>
    %181 = arith.divf %179, %180 : vector<8x384xf32>
    %182 = vector.extract_strided_slice %181 {offsets = [0, 0], sizes = [8, 128], strides = [1, 1]} : vector<8x384xf32> to vector<8x128xf32>
    %183 = vector.extract_strided_slice %181 {offsets = [0, 128], sizes = [8, 128], strides = [1, 1]} : vector<8x384xf32> to vector<8x128xf32>
    %184 = vector.extract_strided_slice %181 {offsets = [0, 256], sizes = [8, 128], strides = [1, 1]} : vector<8x384xf32> to vector<8x128xf32>
    %185 = vector.extract_strided_slice %175 {offsets = [0, 384], sizes = [8, 128], strides = [1, 1]} : vector<8x512xf32> to vector<8x128xf32>
    %186 = math.tanh %185 : vector<8x128xf32>
    %187 = arith.mulf %183, %138 : vector<8x128xf32>
    %188 = arith.mulf %182, %186 : vector<8x128xf32>
    %189 = arith.addf %187, %188 : vector<8x128xf32>
    %190 = math.tanh %189 : vector<8x128xf32>
    %191 = arith.mulf %184, %190 : vector<8x128xf32>
    %192 = arith.truncf %191 : vector<8x128xf32> to vector<8x128xbf16>
    %193 = arith.truncf %162 : vector<8x128xf32> to vector<8x128xbf16>
    %194 = tpu.concatenate %192, %193 in 1 : vector<8x128xbf16>, vector<8x128xbf16> -> vector<8x256xbf16>
    %cst_47 = arith.constant dense<0.000000e+00> : vector<8x512xf32>
    %195 = tpu.matmul %194, %4, %cst_47 {dimension_numbers = #tpu.dot_dimension_numbers<[1], [0], [0], [1], [0, 0, 1, 1], [], []>} : vector<8x256xbf16>, vector<256x512xbf16>, vector<8x512xf32> -> vector<8x512xf32>
    %196 = vector.broadcast %6 : vector<1x512xf32> to vector<8x512xf32>
    %197 = arith.addf %195, %196 : vector<8x512xf32>
    %198 = vector.extract_strided_slice %197 {offsets = [0, 0], sizes = [8, 384], strides = [1, 1]} : vector<8x512xf32> to vector<8x384xf32>
    %199 = arith.negf %198 : vector<8x384xf32>
    %200 = math.exp %199 : vector<8x384xf32>
    %cst_48 = arith.constant 1.000000e+00 : f32
    %201 = vector.broadcast %cst_48 : f32 to vector<8x384xf32>
    %202 = arith.addf %201, %200 : vector<8x384xf32>
    %203 = arith.divf %201, %202 : vector<8x384xf32>
    %204 = vector.extract_strided_slice %203 {offsets = [0, 0], sizes = [8, 128], strides = [1, 1]} : vector<8x384xf32> to vector<8x128xf32>
    %205 = vector.extract_strided_slice %203 {offsets = [0, 128], sizes = [8, 128], strides = [1, 1]} : vector<8x384xf32> to vector<8x128xf32>
    %206 = vector.extract_strided_slice %203 {offsets = [0, 256], sizes = [8, 128], strides = [1, 1]} : vector<8x384xf32> to vector<8x128xf32>
    %207 = vector.extract_strided_slice %197 {offsets = [0, 384], sizes = [8, 128], strides = [1, 1]} : vector<8x512xf32> to vector<8x128xf32>
    %208 = math.tanh %207 : vector<8x128xf32>
    %209 = arith.mulf %205, %160 : vector<8x128xf32>
    %210 = arith.mulf %204, %208 : vector<8x128xf32>
    %211 = arith.addf %209, %210 : vector<8x128xf32>
    %212 = math.tanh %211 : vector<8x128xf32>
    %213 = arith.mulf %206, %212 : vector<8x128xf32>
    %214 = arith.truncf %213 : vector<8x128xf32> to vector<8x128xbf16>
    %215 = arith.index_cast %c3_i32 : i32 to index
    %c0_49 = arith.constant 0 : index
    %c0_50 = arith.constant 0 : index
    %216 = vector.load %arg9[%215, %c0_49, %c0_50] : memref<16x8x128xbf16, #tpu.memory_space<vmem>>, vector<1x8x128xbf16>
    %217 = vector.shape_cast %216 : vector<1x8x128xbf16> to vector<8x128xbf16>
    %218 = vector.shape_cast %214 : vector<8x128xbf16> to vector<1x8x128xbf16>
    tpu.vector_store %arg9[%215, %c0_49, %c0_50], %218 {strides = array<i32>} : memref<16x8x128xbf16, #tpu.memory_space<vmem>>, vector<1x8x128xbf16>,
    %c4_i32 = arith.constant 4 : i32
    %219 = arith.index_cast %c4_i32 : i32 to index
    %c0_51 = arith.constant 0 : index
    %c0_52 = arith.constant 0 : index
    %220 = vector.load %arg2[%219, %c0_51, %c0_52] : memref<16x8x128xbf16, #tpu.memory_space<vmem>>, vector<1x8x128xbf16>
    %221 = vector.shape_cast %220 : vector<1x8x128xbf16> to vector<8x128xbf16>
    %222 = arith.truncf %191 : vector<8x128xf32> to vector<8x128xbf16>
    %223 = tpu.concatenate %221, %222 in 1 : vector<8x128xbf16>, vector<8x128xbf16> -> vector<8x256xbf16>
    %cst_53 = arith.constant dense<0.000000e+00> : vector<8x512xf32>
    %224 = tpu.matmul %223, %3, %cst_53 {dimension_numbers = #tpu.dot_dimension_numbers<[1], [0], [0], [1], [0, 0, 1, 1], [], []>} : vector<8x256xbf16>, vector<256x512xbf16>, vector<8x512xf32> -> vector<8x512xf32>
    %225 = vector.broadcast %5 : vector<1x512xf32> to vector<8x512xf32>
    %226 = arith.addf %224, %225 : vector<8x512xf32>
    %227 = vector.extract_strided_slice %226 {offsets = [0, 0], sizes = [8, 384], strides = [1, 1]} : vector<8x512xf32> to vector<8x384xf32>
    %228 = arith.negf %227 : vector<8x384xf32>
    %229 = math.exp %228 : vector<8x384xf32>
    %cst_54 = arith.constant 1.000000e+00 : f32
    %230 = vector.broadcast %cst_54 : f32 to vector<8x384xf32>
    %231 = arith.addf %230, %229 : vector<8x384xf32>
    %232 = arith.divf %230, %231 : vector<8x384xf32>
    %233 = vector.extract_strided_slice %232 {offsets = [0, 0], sizes = [8, 128], strides = [1, 1]} : vector<8x384xf32> to vector<8x128xf32>
    %234 = vector.extract_strided_slice %232 {offsets = [0, 128], sizes = [8, 128], strides = [1, 1]} : vector<8x384xf32> to vector<8x128xf32>
    %235 = vector.extract_strided_slice %232 {offsets = [0, 256], sizes = [8, 128], strides = [1, 1]} : vector<8x384xf32> to vector<8x128xf32>
    %236 = vector.extract_strided_slice %226 {offsets = [0, 384], sizes = [8, 128], strides = [1, 1]} : vector<8x512xf32> to vector<8x128xf32>
    %237 = math.tanh %236 : vector<8x128xf32>
    %238 = arith.mulf %234, %189 : vector<8x128xf32>
    %239 = arith.mulf %233, %237 : vector<8x128xf32>
    %240 = arith.addf %238, %239 : vector<8x128xf32>
    %241 = math.tanh %240 : vector<8x128xf32>
    %242 = arith.mulf %235, %241 : vector<8x128xf32>
    %243 = arith.truncf %242 : vector<8x128xf32> to vector<8x128xbf16>
    %244 = arith.truncf %213 : vector<8x128xf32> to vector<8x128xbf16>
    %245 = tpu.concatenate %243, %244 in 1 : vector<8x128xbf16>, vector<8x128xbf16> -> vector<8x256xbf16>
    %cst_55 = arith.constant dense<0.000000e+00> : vector<8x512xf32>
    %246 = tpu.matmul %245, %4, %cst_55 {dimension_numbers = #tpu.dot_dimension_numbers<[1], [0], [0], [1], [0, 0, 1, 1], [], []>} : vector<8x256xbf16>, vector<256x512xbf16>, vector<8x512xf32> -> vector<8x512xf32>
    %247 = vector.broadcast %6 : vector<1x512xf32> to vector<8x512xf32>
    %248 = arith.addf %246, %247 : vector<8x512xf32>
    %249 = vector.extract_strided_slice %248 {offsets = [0, 0], sizes = [8, 384], strides = [1, 1]} : vector<8x512xf32> to vector<8x384xf32>
    %250 = arith.negf %249 : vector<8x384xf32>
    %251 = math.exp %250 : vector<8x384xf32>
    %cst_56 = arith.constant 1.000000e+00 : f32
    %252 = vector.broadcast %cst_56 : f32 to vector<8x384xf32>
    %253 = arith.addf %252, %251 : vector<8x384xf32>
    %254 = arith.divf %252, %253 : vector<8x384xf32>
    %255 = vector.extract_strided_slice %254 {offsets = [0, 0], sizes = [8, 128], strides = [1, 1]} : vector<8x384xf32> to vector<8x128xf32>
    %256 = vector.extract_strided_slice %254 {offsets = [0, 128], sizes = [8, 128], strides = [1, 1]} : vector<8x384xf32> to vector<8x128xf32>
    %257 = vector.extract_strided_slice %254 {offsets = [0, 256], sizes = [8, 128], strides = [1, 1]} : vector<8x384xf32> to vector<8x128xf32>
    %258 = vector.extract_strided_slice %248 {offsets = [0, 384], sizes = [8, 128], strides = [1, 1]} : vector<8x512xf32> to vector<8x128xf32>
    %259 = math.tanh %258 : vector<8x128xf32>
    %260 = arith.mulf %256, %211 : vector<8x128xf32>
    %261 = arith.mulf %255, %259 : vector<8x128xf32>
    %262 = arith.addf %260, %261 : vector<8x128xf32>
    %263 = math.tanh %262 : vector<8x128xf32>
    %264 = arith.mulf %257, %263 : vector<8x128xf32>
    %265 = arith.truncf %264 : vector<8x128xf32> to vector<8x128xbf16>
    %266 = arith.index_cast %c4_i32 : i32 to index
    %c0_57 = arith.constant 0 : index
    %c0_58 = arith.constant 0 : index
    %267 = vector.load %arg9[%266, %c0_57, %c0_58] : memref<16x8x128xbf16, #tpu.memory_space<vmem>>, vector<1x8x128xbf16>
    %268 = vector.shape_cast %267 : vector<1x8x128xbf16> to vector<8x128xbf16>
    %269 = vector.shape_cast %265 : vector<8x128xbf16> to vector<1x8x128xbf16>
    tpu.vector_store %arg9[%266, %c0_57, %c0_58], %269 {strides = array<i32>} : memref<16x8x128xbf16, #tpu.memory_space<vmem>>, vector<1x8x128xbf16>,
    %c5_i32 = arith.constant 5 : i32
    %270 = arith.index_cast %c5_i32 : i32 to index
    %c0_59 = arith.constant 0 : index
    %c0_60 = arith.constant 0 : index
    %271 = vector.load %arg2[%270, %c0_59, %c0_60] : memref<16x8x128xbf16, #tpu.memory_space<vmem>>, vector<1x8x128xbf16>
    %272 = vector.shape_cast %271 : vector<1x8x128xbf16> to vector<8x128xbf16>
    %273 = arith.truncf %242 : vector<8x128xf32> to vector<8x128xbf16>
    %274 = tpu.concatenate %272, %273 in 1 : vector<8x128xbf16>, vector<8x128xbf16> -> vector<8x256xbf16>
    %cst_61 = arith.constant dense<0.000000e+00> : vector<8x512xf32>
    %275 = tpu.matmul %274, %3, %cst_61 {dimension_numbers = #tpu.dot_dimension_numbers<[1], [0], [0], [1], [0, 0, 1, 1], [], []>} : vector<8x256xbf16>, vector<256x512xbf16>, vector<8x512xf32> -> vector<8x512xf32>
    %276 = vector.broadcast %5 : vector<1x512xf32> to vector<8x512xf32>
    %277 = arith.addf %275, %276 : vector<8x512xf32>
    %278 = vector.extract_strided_slice %277 {offsets = [0, 0], sizes = [8, 384], strides = [1, 1]} : vector<8x512xf32> to vector<8x384xf32>
    %279 = arith.negf %278 : vector<8x384xf32>
    %280 = math.exp %279 : vector<8x384xf32>
    %cst_62 = arith.constant 1.000000e+00 : f32
    %281 = vector.broadcast %cst_62 : f32 to vector<8x384xf32>
    %282 = arith.addf %281, %280 : vector<8x384xf32>
    %283 = arith.divf %281, %282 : vector<8x384xf32>
    %284 = vector.extract_strided_slice %283 {offsets = [0, 0], sizes = [8, 128], strides = [1, 1]} : vector<8x384xf32> to vector<8x128xf32>
    %285 = vector.extract_strided_slice %283 {offsets = [0, 128], sizes = [8, 128], strides = [1, 1]} : vector<8x384xf32> to vector<8x128xf32>
    %286 = vector.extract_strided_slice %283 {offsets = [0, 256], sizes = [8, 128], strides = [1, 1]} : vector<8x384xf32> to vector<8x128xf32>
    %287 = vector.extract_strided_slice %277 {offsets = [0, 384], sizes = [8, 128], strides = [1, 1]} : vector<8x512xf32> to vector<8x128xf32>
    %288 = math.tanh %287 : vector<8x128xf32>
    %289 = arith.mulf %285, %240 : vector<8x128xf32>
    %290 = arith.mulf %284, %288 : vector<8x128xf32>
    %291 = arith.addf %289, %290 : vector<8x128xf32>
    %292 = math.tanh %291 : vector<8x128xf32>
    %293 = arith.mulf %286, %292 : vector<8x128xf32>
    %294 = arith.truncf %293 : vector<8x128xf32> to vector<8x128xbf16>
    %295 = arith.truncf %264 : vector<8x128xf32> to vector<8x128xbf16>
    %296 = tpu.concatenate %294, %295 in 1 : vector<8x128xbf16>, vector<8x128xbf16> -> vector<8x256xbf16>
    %cst_63 = arith.constant dense<0.000000e+00> : vector<8x512xf32>
    %297 = tpu.matmul %296, %4, %cst_63 {dimension_numbers = #tpu.dot_dimension_numbers<[1], [0], [0], [1], [0, 0, 1, 1], [], []>} : vector<8x256xbf16>, vector<256x512xbf16>, vector<8x512xf32> -> vector<8x512xf32>
    %298 = vector.broadcast %6 : vector<1x512xf32> to vector<8x512xf32>
    %299 = arith.addf %297, %298 : vector<8x512xf32>
    %300 = vector.extract_strided_slice %299 {offsets = [0, 0], sizes = [8, 384], strides = [1, 1]} : vector<8x512xf32> to vector<8x384xf32>
    %301 = arith.negf %300 : vector<8x384xf32>
    %302 = math.exp %301 : vector<8x384xf32>
    %cst_64 = arith.constant 1.000000e+00 : f32
    %303 = vector.broadcast %cst_64 : f32 to vector<8x384xf32>
    %304 = arith.addf %303, %302 : vector<8x384xf32>
    %305 = arith.divf %303, %304 : vector<8x384xf32>
    %306 = vector.extract_strided_slice %305 {offsets = [0, 0], sizes = [8, 128], strides = [1, 1]} : vector<8x384xf32> to vector<8x128xf32>
    %307 = vector.extract_strided_slice %305 {offsets = [0, 128], sizes = [8, 128], strides = [1, 1]} : vector<8x384xf32> to vector<8x128xf32>
    %308 = vector.extract_strided_slice %305 {offsets = [0, 256], sizes = [8, 128], strides = [1, 1]} : vector<8x384xf32> to vector<8x128xf32>
    %309 = vector.extract_strided_slice %299 {offsets = [0, 384], sizes = [8, 128], strides = [1, 1]} : vector<8x512xf32> to vector<8x128xf32>
    %310 = math.tanh %309 : vector<8x128xf32>
    %311 = arith.mulf %307, %262 : vector<8x128xf32>
    %312 = arith.mulf %306, %310 : vector<8x128xf32>
    %313 = arith.addf %311, %312 : vector<8x128xf32>
    %314 = math.tanh %313 : vector<8x128xf32>
    %315 = arith.mulf %308, %314 : vector<8x128xf32>
    %316 = arith.truncf %315 : vector<8x128xf32> to vector<8x128xbf16>
    %317 = arith.index_cast %c5_i32 : i32 to index
    %c0_65 = arith.constant 0 : index
    %c0_66 = arith.constant 0 : index
    %318 = vector.load %arg9[%317, %c0_65, %c0_66] : memref<16x8x128xbf16, #tpu.memory_space<vmem>>, vector<1x8x128xbf16>
    %319 = vector.shape_cast %318 : vector<1x8x128xbf16> to vector<8x128xbf16>
    %320 = vector.shape_cast %316 : vector<8x128xbf16> to vector<1x8x128xbf16>
    tpu.vector_store %arg9[%317, %c0_65, %c0_66], %320 {strides = array<i32>} : memref<16x8x128xbf16, #tpu.memory_space<vmem>>, vector<1x8x128xbf16>,
    %c6_i32 = arith.constant 6 : i32
    %321 = arith.index_cast %c6_i32 : i32 to index
    %c0_67 = arith.constant 0 : index
    %c0_68 = arith.constant 0 : index
    %322 = vector.load %arg2[%321, %c0_67, %c0_68] : memref<16x8x128xbf16, #tpu.memory_space<vmem>>, vector<1x8x128xbf16>
    %323 = vector.shape_cast %322 : vector<1x8x128xbf16> to vector<8x128xbf16>
    %324 = arith.truncf %293 : vector<8x128xf32> to vector<8x128xbf16>
    %325 = tpu.concatenate %323, %324 in 1 : vector<8x128xbf16>, vector<8x128xbf16> -> vector<8x256xbf16>
    %cst_69 = arith.constant dense<0.000000e+00> : vector<8x512xf32>
    %326 = tpu.matmul %325, %3, %cst_69 {dimension_numbers = #tpu.dot_dimension_numbers<[1], [0], [0], [1], [0, 0, 1, 1], [], []>} : vector<8x256xbf16>, vector<256x512xbf16>, vector<8x512xf32> -> vector<8x512xf32>
    %327 = vector.broadcast %5 : vector<1x512xf32> to vector<8x512xf32>
    %328 = arith.addf %326, %327 : vector<8x512xf32>
    %329 = vector.extract_strided_slice %328 {offsets = [0, 0], sizes = [8, 384], strides = [1, 1]} : vector<8x512xf32> to vector<8x384xf32>
    %330 = arith.negf %329 : vector<8x384xf32>
    %331 = math.exp %330 : vector<8x384xf32>
    %cst_70 = arith.constant 1.000000e+00 : f32
    %332 = vector.broadcast %cst_70 : f32 to vector<8x384xf32>
    %333 = arith.addf %332, %331 : vector<8x384xf32>
    %334 = arith.divf %332, %333 : vector<8x384xf32>
    %335 = vector.extract_strided_slice %334 {offsets = [0, 0], sizes = [8, 128], strides = [1, 1]} : vector<8x384xf32> to vector<8x128xf32>
    %336 = vector.extract_strided_slice %334 {offsets = [0, 128], sizes = [8, 128], strides = [1, 1]} : vector<8x384xf32> to vector<8x128xf32>
    %337 = vector.extract_strided_slice %334 {offsets = [0, 256], sizes = [8, 128], strides = [1, 1]} : vector<8x384xf32> to vector<8x128xf32>
    %338 = vector.extract_strided_slice %328 {offsets = [0, 384], sizes = [8, 128], strides = [1, 1]} : vector<8x512xf32> to vector<8x128xf32>
    %339 = math.tanh %338 : vector<8x128xf32>
    %340 = arith.mulf %336, %291 : vector<8x128xf32>
    %341 = arith.mulf %335, %339 : vector<8x128xf32>
    %342 = arith.addf %340, %341 : vector<8x128xf32>
    %343 = math.tanh %342 : vector<8x128xf32>
    %344 = arith.mulf %337, %343 : vector<8x128xf32>
    %345 = arith.truncf %344 : vector<8x128xf32> to vector<8x128xbf16>
    %346 = arith.truncf %315 : vector<8x128xf32> to vector<8x128xbf16>
    %347 = tpu.concatenate %345, %346 in 1 : vector<8x128xbf16>, vector<8x128xbf16> -> vector<8x256xbf16>
    %cst_71 = arith.constant dense<0.000000e+00> : vector<8x512xf32>
    %348 = tpu.matmul %347, %4, %cst_71 {dimension_numbers = #tpu.dot_dimension_numbers<[1], [0], [0], [1], [0, 0, 1, 1], [], []>} : vector<8x256xbf16>, vector<256x512xbf16>, vector<8x512xf32> -> vector<8x512xf32>
    %349 = vector.broadcast %6 : vector<1x512xf32> to vector<8x512xf32>
    %350 = arith.addf %348, %349 : vector<8x512xf32>
    %351 = vector.extract_strided_slice %350 {offsets = [0, 0], sizes = [8, 384], strides = [1, 1]} : vector<8x512xf32> to vector<8x384xf32>
    %352 = arith.negf %351 : vector<8x384xf32>
    %353 = math.exp %352 : vector<8x384xf32>
    %cst_72 = arith.constant 1.000000e+00 : f32
    %354 = vector.broadcast %cst_72 : f32 to vector<8x384xf32>
    %355 = arith.addf %354, %353 : vector<8x384xf32>
    %356 = arith.divf %354, %355 : vector<8x384xf32>
    %357 = vector.extract_strided_slice %356 {offsets = [0, 0], sizes = [8, 128], strides = [1, 1]} : vector<8x384xf32> to vector<8x128xf32>
    %358 = vector.extract_strided_slice %356 {offsets = [0, 128], sizes = [8, 128], strides = [1, 1]} : vector<8x384xf32> to vector<8x128xf32>
    %359 = vector.extract_strided_slice %356 {offsets = [0, 256], sizes = [8, 128], strides = [1, 1]} : vector<8x384xf32> to vector<8x128xf32>
    %360 = vector.extract_strided_slice %350 {offsets = [0, 384], sizes = [8, 128], strides = [1, 1]} : vector<8x512xf32> to vector<8x128xf32>
    %361 = math.tanh %360 : vector<8x128xf32>
    %362 = arith.mulf %358, %313 : vector<8x128xf32>
    %363 = arith.mulf %357, %361 : vector<8x128xf32>
    %364 = arith.addf %362, %363 : vector<8x128xf32>
    %365 = math.tanh %364 : vector<8x128xf32>
    %366 = arith.mulf %359, %365 : vector<8x128xf32>
    %367 = arith.truncf %366 : vector<8x128xf32> to vector<8x128xbf16>
    %368 = arith.index_cast %c6_i32 : i32 to index
    %c0_73 = arith.constant 0 : index
    %c0_74 = arith.constant 0 : index
    %369 = vector.load %arg9[%368, %c0_73, %c0_74] : memref<16x8x128xbf16, #tpu.memory_space<vmem>>, vector<1x8x128xbf16>
    %370 = vector.shape_cast %369 : vector<1x8x128xbf16> to vector<8x128xbf16>
    %371 = vector.shape_cast %367 : vector<8x128xbf16> to vector<1x8x128xbf16>
    tpu.vector_store %arg9[%368, %c0_73, %c0_74], %371 {strides = array<i32>} : memref<16x8x128xbf16, #tpu.memory_space<vmem>>, vector<1x8x128xbf16>,
    %c7_i32 = arith.constant 7 : i32
    %372 = arith.index_cast %c7_i32 : i32 to index
    %c0_75 = arith.constant 0 : index
    %c0_76 = arith.constant 0 : index
    %373 = vector.load %arg2[%372, %c0_75, %c0_76] : memref<16x8x128xbf16, #tpu.memory_space<vmem>>, vector<1x8x128xbf16>
    %374 = vector.shape_cast %373 : vector<1x8x128xbf16> to vector<8x128xbf16>
    %375 = arith.truncf %344 : vector<8x128xf32> to vector<8x128xbf16>
    %376 = tpu.concatenate %374, %375 in 1 : vector<8x128xbf16>, vector<8x128xbf16> -> vector<8x256xbf16>
    %cst_77 = arith.constant dense<0.000000e+00> : vector<8x512xf32>
    %377 = tpu.matmul %376, %3, %cst_77 {dimension_numbers = #tpu.dot_dimension_numbers<[1], [0], [0], [1], [0, 0, 1, 1], [], []>} : vector<8x256xbf16>, vector<256x512xbf16>, vector<8x512xf32> -> vector<8x512xf32>
    %378 = vector.broadcast %5 : vector<1x512xf32> to vector<8x512xf32>
    %379 = arith.addf %377, %378 : vector<8x512xf32>
    %380 = vector.extract_strided_slice %379 {offsets = [0, 0], sizes = [8, 384], strides = [1, 1]} : vector<8x512xf32> to vector<8x384xf32>
    %381 = arith.negf %380 : vector<8x384xf32>
    %382 = math.exp %381 : vector<8x384xf32>
    %cst_78 = arith.constant 1.000000e+00 : f32
    %383 = vector.broadcast %cst_78 : f32 to vector<8x384xf32>
    %384 = arith.addf %383, %382 : vector<8x384xf32>
    %385 = arith.divf %383, %384 : vector<8x384xf32>
    %386 = vector.extract_strided_slice %385 {offsets = [0, 0], sizes = [8, 128], strides = [1, 1]} : vector<8x384xf32> to vector<8x128xf32>
    %387 = vector.extract_strided_slice %385 {offsets = [0, 128], sizes = [8, 128], strides = [1, 1]} : vector<8x384xf32> to vector<8x128xf32>
    %388 = vector.extract_strided_slice %385 {offsets = [0, 256], sizes = [8, 128], strides = [1, 1]} : vector<8x384xf32> to vector<8x128xf32>
    %389 = vector.extract_strided_slice %379 {offsets = [0, 384], sizes = [8, 128], strides = [1, 1]} : vector<8x512xf32> to vector<8x128xf32>
    %390 = math.tanh %389 : vector<8x128xf32>
    %391 = arith.mulf %387, %342 : vector<8x128xf32>
    %392 = arith.mulf %386, %390 : vector<8x128xf32>
    %393 = arith.addf %391, %392 : vector<8x128xf32>
    %394 = math.tanh %393 : vector<8x128xf32>
    %395 = arith.mulf %388, %394 : vector<8x128xf32>
    %396 = arith.truncf %395 : vector<8x128xf32> to vector<8x128xbf16>
    %397 = arith.truncf %366 : vector<8x128xf32> to vector<8x128xbf16>
    %398 = tpu.concatenate %396, %397 in 1 : vector<8x128xbf16>, vector<8x128xbf16> -> vector<8x256xbf16>
    %cst_79 = arith.constant dense<0.000000e+00> : vector<8x512xf32>
    %399 = tpu.matmul %398, %4, %cst_79 {dimension_numbers = #tpu.dot_dimension_numbers<[1], [0], [0], [1], [0, 0, 1, 1], [], []>} : vector<8x256xbf16>, vector<256x512xbf16>, vector<8x512xf32> -> vector<8x512xf32>
    %400 = vector.broadcast %6 : vector<1x512xf32> to vector<8x512xf32>
    %401 = arith.addf %399, %400 : vector<8x512xf32>
    %402 = vector.extract_strided_slice %401 {offsets = [0, 0], sizes = [8, 384], strides = [1, 1]} : vector<8x512xf32> to vector<8x384xf32>
    %403 = arith.negf %402 : vector<8x384xf32>
    %404 = math.exp %403 : vector<8x384xf32>
    %cst_80 = arith.constant 1.000000e+00 : f32
    %405 = vector.broadcast %cst_80 : f32 to vector<8x384xf32>
    %406 = arith.addf %405, %404 : vector<8x384xf32>
    %407 = arith.divf %405, %406 : vector<8x384xf32>
    %408 = vector.extract_strided_slice %407 {offsets = [0, 0], sizes = [8, 128], strides = [1, 1]} : vector<8x384xf32> to vector<8x128xf32>
    %409 = vector.extract_strided_slice %407 {offsets = [0, 128], sizes = [8, 128], strides = [1, 1]} : vector<8x384xf32> to vector<8x128xf32>
    %410 = vector.extract_strided_slice %407 {offsets = [0, 256], sizes = [8, 128], strides = [1, 1]} : vector<8x384xf32> to vector<8x128xf32>
    %411 = vector.extract_strided_slice %401 {offsets = [0, 384], sizes = [8, 128], strides = [1, 1]} : vector<8x512xf32> to vector<8x128xf32>
    %412 = math.tanh %411 : vector<8x128xf32>
    %413 = arith.mulf %409, %364 : vector<8x128xf32>
    %414 = arith.mulf %408, %412 : vector<8x128xf32>
    %415 = arith.addf %413, %414 : vector<8x128xf32>
    %416 = math.tanh %415 : vector<8x128xf32>
    %417 = arith.mulf %410, %416 : vector<8x128xf32>
    %418 = arith.truncf %417 : vector<8x128xf32> to vector<8x128xbf16>
    %419 = arith.index_cast %c7_i32 : i32 to index
    %c0_81 = arith.constant 0 : index
    %c0_82 = arith.constant 0 : index
    %420 = vector.load %arg9[%419, %c0_81, %c0_82] : memref<16x8x128xbf16, #tpu.memory_space<vmem>>, vector<1x8x128xbf16>
    %421 = vector.shape_cast %420 : vector<1x8x128xbf16> to vector<8x128xbf16>
    %422 = vector.shape_cast %418 : vector<8x128xbf16> to vector<1x8x128xbf16>
    tpu.vector_store %arg9[%419, %c0_81, %c0_82], %422 {strides = array<i32>} : memref<16x8x128xbf16, #tpu.memory_space<vmem>>, vector<1x8x128xbf16>,
    %c8_i32 = arith.constant 8 : i32
    %423 = arith.index_cast %c8_i32 : i32 to index
    %c0_83 = arith.constant 0 : index
    %c0_84 = arith.constant 0 : index
    %424 = vector.load %arg2[%423, %c0_83, %c0_84] : memref<16x8x128xbf16, #tpu.memory_space<vmem>>, vector<1x8x128xbf16>
    %425 = vector.shape_cast %424 : vector<1x8x128xbf16> to vector<8x128xbf16>
    %426 = arith.truncf %395 : vector<8x128xf32> to vector<8x128xbf16>
    %427 = tpu.concatenate %425, %426 in 1 : vector<8x128xbf16>, vector<8x128xbf16> -> vector<8x256xbf16>
    %cst_85 = arith.constant dense<0.000000e+00> : vector<8x512xf32>
    %428 = tpu.matmul %427, %3, %cst_85 {dimension_numbers = #tpu.dot_dimension_numbers<[1], [0], [0], [1], [0, 0, 1, 1], [], []>} : vector<8x256xbf16>, vector<256x512xbf16>, vector<8x512xf32> -> vector<8x512xf32>
    %429 = vector.broadcast %5 : vector<1x512xf32> to vector<8x512xf32>
    %430 = arith.addf %428, %429 : vector<8x512xf32>
    %431 = vector.extract_strided_slice %430 {offsets = [0, 0], sizes = [8, 384], strides = [1, 1]} : vector<8x512xf32> to vector<8x384xf32>
    %432 = arith.negf %431 : vector<8x384xf32>
    %433 = math.exp %432 : vector<8x384xf32>
    %cst_86 = arith.constant 1.000000e+00 : f32
    %434 = vector.broadcast %cst_86 : f32 to vector<8x384xf32>
    %435 = arith.addf %434, %433 : vector<8x384xf32>
    %436 = arith.divf %434, %435 : vector<8x384xf32>
    %437 = vector.extract_strided_slice %436 {offsets = [0, 0], sizes = [8, 128], strides = [1, 1]} : vector<8x384xf32> to vector<8x128xf32>
    %438 = vector.extract_strided_slice %436 {offsets = [0, 128], sizes = [8, 128], strides = [1, 1]} : vector<8x384xf32> to vector<8x128xf32>
    %439 = vector.extract_strided_slice %436 {offsets = [0, 256], sizes = [8, 128], strides = [1, 1]} : vector<8x384xf32> to vector<8x128xf32>
    %440 = vector.extract_strided_slice %430 {offsets = [0, 384], sizes = [8, 128], strides = [1, 1]} : vector<8x512xf32> to vector<8x128xf32>
    %441 = math.tanh %440 : vector<8x128xf32>
    %442 = arith.mulf %438, %393 : vector<8x128xf32>
    %443 = arith.mulf %437, %441 : vector<8x128xf32>
    %444 = arith.addf %442, %443 : vector<8x128xf32>
    %445 = math.tanh %444 : vector<8x128xf32>
    %446 = arith.mulf %439, %445 : vector<8x128xf32>
    %447 = arith.truncf %446 : vector<8x128xf32> to vector<8x128xbf16>
    %448 = arith.truncf %417 : vector<8x128xf32> to vector<8x128xbf16>
    %449 = tpu.concatenate %447, %448 in 1 : vector<8x128xbf16>, vector<8x128xbf16> -> vector<8x256xbf16>
    %cst_87 = arith.constant dense<0.000000e+00> : vector<8x512xf32>
    %450 = tpu.matmul %449, %4, %cst_87 {dimension_numbers = #tpu.dot_dimension_numbers<[1], [0], [0], [1], [0, 0, 1, 1], [], []>} : vector<8x256xbf16>, vector<256x512xbf16>, vector<8x512xf32> -> vector<8x512xf32>
    %451 = vector.broadcast %6 : vector<1x512xf32> to vector<8x512xf32>
    %452 = arith.addf %450, %451 : vector<8x512xf32>
    %453 = vector.extract_strided_slice %452 {offsets = [0, 0], sizes = [8, 384], strides = [1, 1]} : vector<8x512xf32> to vector<8x384xf32>
    %454 = arith.negf %453 : vector<8x384xf32>
    %455 = math.exp %454 : vector<8x384xf32>
    %cst_88 = arith.constant 1.000000e+00 : f32
    %456 = vector.broadcast %cst_88 : f32 to vector<8x384xf32>
    %457 = arith.addf %456, %455 : vector<8x384xf32>
    %458 = arith.divf %456, %457 : vector<8x384xf32>
    %459 = vector.extract_strided_slice %458 {offsets = [0, 0], sizes = [8, 128], strides = [1, 1]} : vector<8x384xf32> to vector<8x128xf32>
    %460 = vector.extract_strided_slice %458 {offsets = [0, 128], sizes = [8, 128], strides = [1, 1]} : vector<8x384xf32> to vector<8x128xf32>
    %461 = vector.extract_strided_slice %458 {offsets = [0, 256], sizes = [8, 128], strides = [1, 1]} : vector<8x384xf32> to vector<8x128xf32>
    %462 = vector.extract_strided_slice %452 {offsets = [0, 384], sizes = [8, 128], strides = [1, 1]} : vector<8x512xf32> to vector<8x128xf32>
    %463 = math.tanh %462 : vector<8x128xf32>
    %464 = arith.mulf %460, %415 : vector<8x128xf32>
    %465 = arith.mulf %459, %463 : vector<8x128xf32>
    %466 = arith.addf %464, %465 : vector<8x128xf32>
    %467 = math.tanh %466 : vector<8x128xf32>
    %468 = arith.mulf %461, %467 : vector<8x128xf32>
    %469 = arith.truncf %468 : vector<8x128xf32> to vector<8x128xbf16>
    %470 = arith.index_cast %c8_i32 : i32 to index
    %c0_89 = arith.constant 0 : index
    %c0_90 = arith.constant 0 : index
    %471 = vector.load %arg9[%470, %c0_89, %c0_90] : memref<16x8x128xbf16, #tpu.memory_space<vmem>>, vector<1x8x128xbf16>
    %472 = vector.shape_cast %471 : vector<1x8x128xbf16> to vector<8x128xbf16>
    %473 = vector.shape_cast %469 : vector<8x128xbf16> to vector<1x8x128xbf16>
    tpu.vector_store %arg9[%470, %c0_89, %c0_90], %473 {strides = array<i32>} : memref<16x8x128xbf16, #tpu.memory_space<vmem>>, vector<1x8x128xbf16>,
    %c9_i32 = arith.constant 9 : i32
    %474 = arith.index_cast %c9_i32 : i32 to index
    %c0_91 = arith.constant 0 : index
    %c0_92 = arith.constant 0 : index
    %475 = vector.load %arg2[%474, %c0_91, %c0_92] : memref<16x8x128xbf16, #tpu.memory_space<vmem>>, vector<1x8x128xbf16>
    %476 = vector.shape_cast %475 : vector<1x8x128xbf16> to vector<8x128xbf16>
    %477 = arith.truncf %446 : vector<8x128xf32> to vector<8x128xbf16>
    %478 = tpu.concatenate %476, %477 in 1 : vector<8x128xbf16>, vector<8x128xbf16> -> vector<8x256xbf16>
    %cst_93 = arith.constant dense<0.000000e+00> : vector<8x512xf32>
    %479 = tpu.matmul %478, %3, %cst_93 {dimension_numbers = #tpu.dot_dimension_numbers<[1], [0], [0], [1], [0, 0, 1, 1], [], []>} : vector<8x256xbf16>, vector<256x512xbf16>, vector<8x512xf32> -> vector<8x512xf32>
    %480 = vector.broadcast %5 : vector<1x512xf32> to vector<8x512xf32>
    %481 = arith.addf %479, %480 : vector<8x512xf32>
    %482 = vector.extract_strided_slice %481 {offsets = [0, 0], sizes = [8, 384], strides = [1, 1]} : vector<8x512xf32> to vector<8x384xf32>
    %483 = arith.negf %482 : vector<8x384xf32>
    %484 = math.exp %483 : vector<8x384xf32>
    %cst_94 = arith.constant 1.000000e+00 : f32
    %485 = vector.broadcast %cst_94 : f32 to vector<8x384xf32>
    %486 = arith.addf %485, %484 : vector<8x384xf32>
    %487 = arith.divf %485, %486 : vector<8x384xf32>
    %488 = vector.extract_strided_slice %487 {offsets = [0, 0], sizes = [8, 128], strides = [1, 1]} : vector<8x384xf32> to vector<8x128xf32>
    %489 = vector.extract_strided_slice %487 {offsets = [0, 128], sizes = [8, 128], strides = [1, 1]} : vector<8x384xf32> to vector<8x128xf32>
    %490 = vector.extract_strided_slice %487 {offsets = [0, 256], sizes = [8, 128], strides = [1, 1]} : vector<8x384xf32> to vector<8x128xf32>
    %491 = vector.extract_strided_slice %481 {offsets = [0, 384], sizes = [8, 128], strides = [1, 1]} : vector<8x512xf32> to vector<8x128xf32>
    %492 = math.tanh %491 : vector<8x128xf32>
    %493 = arith.mulf %489, %444 : vector<8x128xf32>
    %494 = arith.mulf %488, %492 : vector<8x128xf32>
    %495 = arith.addf %493, %494 : vector<8x128xf32>
    %496 = math.tanh %495 : vector<8x128xf32>
    %497 = arith.mulf %490, %496 : vector<8x128xf32>
    %498 = arith.truncf %497 : vector<8x128xf32> to vector<8x128xbf16>
    %499 = arith.truncf %468 : vector<8x128xf32> to vector<8x128xbf16>
    %500 = tpu.concatenate %498, %499 in 1 : vector<8x128xbf16>, vector<8x128xbf16> -> vector<8x256xbf16>
    %cst_95 = arith.constant dense<0.000000e+00> : vector<8x512xf32>
    %501 = tpu.matmul %500, %4, %cst_95 {dimension_numbers = #tpu.dot_dimension_numbers<[1], [0], [0], [1], [0, 0, 1, 1], [], []>} : vector<8x256xbf16>, vector<256x512xbf16>, vector<8x512xf32> -> vector<8x512xf32>
    %502 = vector.broadcast %6 : vector<1x512xf32> to vector<8x512xf32>
    %503 = arith.addf %501, %502 : vector<8x512xf32>
    %504 = vector.extract_strided_slice %503 {offsets = [0, 0], sizes = [8, 384], strides = [1, 1]} : vector<8x512xf32> to vector<8x384xf32>
    %505 = arith.negf %504 : vector<8x384xf32>
    %506 = math.exp %505 : vector<8x384xf32>
    %cst_96 = arith.constant 1.000000e+00 : f32
    %507 = vector.broadcast %cst_96 : f32 to vector<8x384xf32>
    %508 = arith.addf %507, %506 : vector<8x384xf32>
    %509 = arith.divf %507, %508 : vector<8x384xf32>
    %510 = vector.extract_strided_slice %509 {offsets = [0, 0], sizes = [8, 128], strides = [1, 1]} : vector<8x384xf32> to vector<8x128xf32>
    %511 = vector.extract_strided_slice %509 {offsets = [0, 128], sizes = [8, 128], strides = [1, 1]} : vector<8x384xf32> to vector<8x128xf32>
    %512 = vector.extract_strided_slice %509 {offsets = [0, 256], sizes = [8, 128], strides = [1, 1]} : vector<8x384xf32> to vector<8x128xf32>
    %513 = vector.extract_strided_slice %503 {offsets = [0, 384], sizes = [8, 128], strides = [1, 1]} : vector<8x512xf32> to vector<8x128xf32>
    %514 = math.tanh %513 : vector<8x128xf32>
    %515 = arith.mulf %511, %466 : vector<8x128xf32>
    %516 = arith.mulf %510, %514 : vector<8x128xf32>
    %517 = arith.addf %515, %516 : vector<8x128xf32>
    %518 = math.tanh %517 : vector<8x128xf32>
    %519 = arith.mulf %512, %518 : vector<8x128xf32>
    %520 = arith.truncf %519 : vector<8x128xf32> to vector<8x128xbf16>
    %521 = arith.index_cast %c9_i32 : i32 to index
    %c0_97 = arith.constant 0 : index
    %c0_98 = arith.constant 0 : index
    %522 = vector.load %arg9[%521, %c0_97, %c0_98] : memref<16x8x128xbf16, #tpu.memory_space<vmem>>, vector<1x8x128xbf16>
    %523 = vector.shape_cast %522 : vector<1x8x128xbf16> to vector<8x128xbf16>
    %524 = vector.shape_cast %520 : vector<8x128xbf16> to vector<1x8x128xbf16>
    tpu.vector_store %arg9[%521, %c0_97, %c0_98], %524 {strides = array<i32>} : memref<16x8x128xbf16, #tpu.memory_space<vmem>>, vector<1x8x128xbf16>,
    %c10_i32 = arith.constant 10 : i32
    %525 = arith.index_cast %c10_i32 : i32 to index
    %c0_99 = arith.constant 0 : index
    %c0_100 = arith.constant 0 : index
    %526 = vector.load %arg2[%525, %c0_99, %c0_100] : memref<16x8x128xbf16, #tpu.memory_space<vmem>>, vector<1x8x128xbf16>
    %527 = vector.shape_cast %526 : vector<1x8x128xbf16> to vector<8x128xbf16>
    %528 = arith.truncf %497 : vector<8x128xf32> to vector<8x128xbf16>
    %529 = tpu.concatenate %527, %528 in 1 : vector<8x128xbf16>, vector<8x128xbf16> -> vector<8x256xbf16>
    %cst_101 = arith.constant dense<0.000000e+00> : vector<8x512xf32>
    %530 = tpu.matmul %529, %3, %cst_101 {dimension_numbers = #tpu.dot_dimension_numbers<[1], [0], [0], [1], [0, 0, 1, 1], [], []>} : vector<8x256xbf16>, vector<256x512xbf16>, vector<8x512xf32> -> vector<8x512xf32>
    %531 = vector.broadcast %5 : vector<1x512xf32> to vector<8x512xf32>
    %532 = arith.addf %530, %531 : vector<8x512xf32>
    %533 = vector.extract_strided_slice %532 {offsets = [0, 0], sizes = [8, 384], strides = [1, 1]} : vector<8x512xf32> to vector<8x384xf32>
    %534 = arith.negf %533 : vector<8x384xf32>
    %535 = math.exp %534 : vector<8x384xf32>
    %cst_102 = arith.constant 1.000000e+00 : f32
    %536 = vector.broadcast %cst_102 : f32 to vector<8x384xf32>
    %537 = arith.addf %536, %535 : vector<8x384xf32>
    %538 = arith.divf %536, %537 : vector<8x384xf32>
    %539 = vector.extract_strided_slice %538 {offsets = [0, 0], sizes = [8, 128], strides = [1, 1]} : vector<8x384xf32> to vector<8x128xf32>
    %540 = vector.extract_strided_slice %538 {offsets = [0, 128], sizes = [8, 128], strides = [1, 1]} : vector<8x384xf32> to vector<8x128xf32>
    %541 = vector.extract_strided_slice %538 {offsets = [0, 256], sizes = [8, 128], strides = [1, 1]} : vector<8x384xf32> to vector<8x128xf32>
    %542 = vector.extract_strided_slice %532 {offsets = [0, 384], sizes = [8, 128], strides = [1, 1]} : vector<8x512xf32> to vector<8x128xf32>
    %543 = math.tanh %542 : vector<8x128xf32>
    %544 = arith.mulf %540, %495 : vector<8x128xf32>
    %545 = arith.mulf %539, %543 : vector<8x128xf32>
    %546 = arith.addf %544, %545 : vector<8x128xf32>
    %547 = math.tanh %546 : vector<8x128xf32>
    %548 = arith.mulf %541, %547 : vector<8x128xf32>
    %549 = arith.truncf %548 : vector<8x128xf32> to vector<8x128xbf16>
    %550 = arith.truncf %519 : vector<8x128xf32> to vector<8x128xbf16>
    %551 = tpu.concatenate %549, %550 in 1 : vector<8x128xbf16>, vector<8x128xbf16> -> vector<8x256xbf16>
    %cst_103 = arith.constant dense<0.000000e+00> : vector<8x512xf32>
    %552 = tpu.matmul %551, %4, %cst_103 {dimension_numbers = #tpu.dot_dimension_numbers<[1], [0], [0], [1], [0, 0, 1, 1], [], []>} : vector<8x256xbf16>, vector<256x512xbf16>, vector<8x512xf32> -> vector<8x512xf32>
    %553 = vector.broadcast %6 : vector<1x512xf32> to vector<8x512xf32>
    %554 = arith.addf %552, %553 : vector<8x512xf32>
    %555 = vector.extract_strided_slice %554 {offsets = [0, 0], sizes = [8, 384], strides = [1, 1]} : vector<8x512xf32> to vector<8x384xf32>
    %556 = arith.negf %555 : vector<8x384xf32>
    %557 = math.exp %556 : vector<8x384xf32>
    %cst_104 = arith.constant 1.000000e+00 : f32
    %558 = vector.broadcast %cst_104 : f32 to vector<8x384xf32>
    %559 = arith.addf %558, %557 : vector<8x384xf32>
    %560 = arith.divf %558, %559 : vector<8x384xf32>
    %561 = vector.extract_strided_slice %560 {offsets = [0, 0], sizes = [8, 128], strides = [1, 1]} : vector<8x384xf32> to vector<8x128xf32>
    %562 = vector.extract_strided_slice %560 {offsets = [0, 128], sizes = [8, 128], strides = [1, 1]} : vector<8x384xf32> to vector<8x128xf32>
    %563 = vector.extract_strided_slice %560 {offsets = [0, 256], sizes = [8, 128], strides = [1, 1]} : vector<8x384xf32> to vector<8x128xf32>
    %564 = vector.extract_strided_slice %554 {offsets = [0, 384], sizes = [8, 128], strides = [1, 1]} : vector<8x512xf32> to vector<8x128xf32>
    %565 = math.tanh %564 : vector<8x128xf32>
    %566 = arith.mulf %562, %517 : vector<8x128xf32>
    %567 = arith.mulf %561, %565 : vector<8x128xf32>
    %568 = arith.addf %566, %567 : vector<8x128xf32>
    %569 = math.tanh %568 : vector<8x128xf32>
    %570 = arith.mulf %563, %569 : vector<8x128xf32>
    %571 = arith.truncf %570 : vector<8x128xf32> to vector<8x128xbf16>
    %572 = arith.index_cast %c10_i32 : i32 to index
    %c0_105 = arith.constant 0 : index
    %c0_106 = arith.constant 0 : index
    %573 = vector.load %arg9[%572, %c0_105, %c0_106] : memref<16x8x128xbf16, #tpu.memory_space<vmem>>, vector<1x8x128xbf16>
    %574 = vector.shape_cast %573 : vector<1x8x128xbf16> to vector<8x128xbf16>
    %575 = vector.shape_cast %571 : vector<8x128xbf16> to vector<1x8x128xbf16>
    tpu.vector_store %arg9[%572, %c0_105, %c0_106], %575 {strides = array<i32>} : memref<16x8x128xbf16, #tpu.memory_space<vmem>>, vector<1x8x128xbf16>,
    %c11_i32 = arith.constant 11 : i32
    %576 = arith.index_cast %c11_i32 : i32 to index
    %c0_107 = arith.constant 0 : index
    %c0_108 = arith.constant 0 : index
    %577 = vector.load %arg2[%576, %c0_107, %c0_108] : memref<16x8x128xbf16, #tpu.memory_space<vmem>>, vector<1x8x128xbf16>
    %578 = vector.shape_cast %577 : vector<1x8x128xbf16> to vector<8x128xbf16>
    %579 = arith.truncf %548 : vector<8x128xf32> to vector<8x128xbf16>
    %580 = tpu.concatenate %578, %579 in 1 : vector<8x128xbf16>, vector<8x128xbf16> -> vector<8x256xbf16>
    %cst_109 = arith.constant dense<0.000000e+00> : vector<8x512xf32>
    %581 = tpu.matmul %580, %3, %cst_109 {dimension_numbers = #tpu.dot_dimension_numbers<[1], [0], [0], [1], [0, 0, 1, 1], [], []>} : vector<8x256xbf16>, vector<256x512xbf16>, vector<8x512xf32> -> vector<8x512xf32>
    %582 = vector.broadcast %5 : vector<1x512xf32> to vector<8x512xf32>
    %583 = arith.addf %581, %582 : vector<8x512xf32>
    %584 = vector.extract_strided_slice %583 {offsets = [0, 0], sizes = [8, 384], strides = [1, 1]} : vector<8x512xf32> to vector<8x384xf32>
    %585 = arith.negf %584 : vector<8x384xf32>
    %586 = math.exp %585 : vector<8x384xf32>
    %cst_110 = arith.constant 1.000000e+00 : f32
    %587 = vector.broadcast %cst_110 : f32 to vector<8x384xf32>
    %588 = arith.addf %587, %586 : vector<8x384xf32>
    %589 = arith.divf %587, %588 : vector<8x384xf32>
    %590 = vector.extract_strided_slice %589 {offsets = [0, 0], sizes = [8, 128], strides = [1, 1]} : vector<8x384xf32> to vector<8x128xf32>
    %591 = vector.extract_strided_slice %589 {offsets = [0, 128], sizes = [8, 128], strides = [1, 1]} : vector<8x384xf32> to vector<8x128xf32>
    %592 = vector.extract_strided_slice %589 {offsets = [0, 256], sizes = [8, 128], strides = [1, 1]} : vector<8x384xf32> to vector<8x128xf32>
    %593 = vector.extract_strided_slice %583 {offsets = [0, 384], sizes = [8, 128], strides = [1, 1]} : vector<8x512xf32> to vector<8x128xf32>
    %594 = math.tanh %593 : vector<8x128xf32>
    %595 = arith.mulf %591, %546 : vector<8x128xf32>
    %596 = arith.mulf %590, %594 : vector<8x128xf32>
    %597 = arith.addf %595, %596 : vector<8x128xf32>
    %598 = math.tanh %597 : vector<8x128xf32>
    %599 = arith.mulf %592, %598 : vector<8x128xf32>
    %600 = arith.truncf %599 : vector<8x128xf32> to vector<8x128xbf16>
    %601 = arith.truncf %570 : vector<8x128xf32> to vector<8x128xbf16>
    %602 = tpu.concatenate %600, %601 in 1 : vector<8x128xbf16>, vector<8x128xbf16> -> vector<8x256xbf16>
    %cst_111 = arith.constant dense<0.000000e+00> : vector<8x512xf32>
    %603 = tpu.matmul %602, %4, %cst_111 {dimension_numbers = #tpu.dot_dimension_numbers<[1], [0], [0], [1], [0, 0, 1, 1], [], []>} : vector<8x256xbf16>, vector<256x512xbf16>, vector<8x512xf32> -> vector<8x512xf32>
    %604 = vector.broadcast %6 : vector<1x512xf32> to vector<8x512xf32>
    %605 = arith.addf %603, %604 : vector<8x512xf32>
    %606 = vector.extract_strided_slice %605 {offsets = [0, 0], sizes = [8, 384], strides = [1, 1]} : vector<8x512xf32> to vector<8x384xf32>
    %607 = arith.negf %606 : vector<8x384xf32>
    %608 = math.exp %607 : vector<8x384xf32>
    %cst_112 = arith.constant 1.000000e+00 : f32
    %609 = vector.broadcast %cst_112 : f32 to vector<8x384xf32>
    %610 = arith.addf %609, %608 : vector<8x384xf32>
    %611 = arith.divf %609, %610 : vector<8x384xf32>
    %612 = vector.extract_strided_slice %611 {offsets = [0, 0], sizes = [8, 128], strides = [1, 1]} : vector<8x384xf32> to vector<8x128xf32>
    %613 = vector.extract_strided_slice %611 {offsets = [0, 128], sizes = [8, 128], strides = [1, 1]} : vector<8x384xf32> to vector<8x128xf32>
    %614 = vector.extract_strided_slice %611 {offsets = [0, 256], sizes = [8, 128], strides = [1, 1]} : vector<8x384xf32> to vector<8x128xf32>
    %615 = vector.extract_strided_slice %605 {offsets = [0, 384], sizes = [8, 128], strides = [1, 1]} : vector<8x512xf32> to vector<8x128xf32>
    %616 = math.tanh %615 : vector<8x128xf32>
    %617 = arith.mulf %613, %568 : vector<8x128xf32>
    %618 = arith.mulf %612, %616 : vector<8x128xf32>
    %619 = arith.addf %617, %618 : vector<8x128xf32>
    %620 = math.tanh %619 : vector<8x128xf32>
    %621 = arith.mulf %614, %620 : vector<8x128xf32>
    %622 = arith.truncf %621 : vector<8x128xf32> to vector<8x128xbf16>
    %623 = arith.index_cast %c11_i32 : i32 to index
    %c0_113 = arith.constant 0 : index
    %c0_114 = arith.constant 0 : index
    %624 = vector.load %arg9[%623, %c0_113, %c0_114] : memref<16x8x128xbf16, #tpu.memory_space<vmem>>, vector<1x8x128xbf16>
    %625 = vector.shape_cast %624 : vector<1x8x128xbf16> to vector<8x128xbf16>
    %626 = vector.shape_cast %622 : vector<8x128xbf16> to vector<1x8x128xbf16>
    tpu.vector_store %arg9[%623, %c0_113, %c0_114], %626 {strides = array<i32>} : memref<16x8x128xbf16, #tpu.memory_space<vmem>>, vector<1x8x128xbf16>,
    %c12_i32 = arith.constant 12 : i32
    %627 = arith.index_cast %c12_i32 : i32 to index
    %c0_115 = arith.constant 0 : index
    %c0_116 = arith.constant 0 : index
    %628 = vector.load %arg2[%627, %c0_115, %c0_116] : memref<16x8x128xbf16, #tpu.memory_space<vmem>>, vector<1x8x128xbf16>
    %629 = vector.shape_cast %628 : vector<1x8x128xbf16> to vector<8x128xbf16>
    %630 = arith.truncf %599 : vector<8x128xf32> to vector<8x128xbf16>
    %631 = tpu.concatenate %629, %630 in 1 : vector<8x128xbf16>, vector<8x128xbf16> -> vector<8x256xbf16>
    %cst_117 = arith.constant dense<0.000000e+00> : vector<8x512xf32>
    %632 = tpu.matmul %631, %3, %cst_117 {dimension_numbers = #tpu.dot_dimension_numbers<[1], [0], [0], [1], [0, 0, 1, 1], [], []>} : vector<8x256xbf16>, vector<256x512xbf16>, vector<8x512xf32> -> vector<8x512xf32>
    %633 = vector.broadcast %5 : vector<1x512xf32> to vector<8x512xf32>
    %634 = arith.addf %632, %633 : vector<8x512xf32>
    %635 = vector.extract_strided_slice %634 {offsets = [0, 0], sizes = [8, 384], strides = [1, 1]} : vector<8x512xf32> to vector<8x384xf32>
    %636 = arith.negf %635 : vector<8x384xf32>
    %637 = math.exp %636 : vector<8x384xf32>
    %cst_118 = arith.constant 1.000000e+00 : f32
    %638 = vector.broadcast %cst_118 : f32 to vector<8x384xf32>
    %639 = arith.addf %638, %637 : vector<8x384xf32>
    %640 = arith.divf %638, %639 : vector<8x384xf32>
    %641 = vector.extract_strided_slice %640 {offsets = [0, 0], sizes = [8, 128], strides = [1, 1]} : vector<8x384xf32> to vector<8x128xf32>
    %642 = vector.extract_strided_slice %640 {offsets = [0, 128], sizes = [8, 128], strides = [1, 1]} : vector<8x384xf32> to vector<8x128xf32>
    %643 = vector.extract_strided_slice %640 {offsets = [0, 256], sizes = [8, 128], strides = [1, 1]} : vector<8x384xf32> to vector<8x128xf32>
    %644 = vector.extract_strided_slice %634 {offsets = [0, 384], sizes = [8, 128], strides = [1, 1]} : vector<8x512xf32> to vector<8x128xf32>
    %645 = math.tanh %644 : vector<8x128xf32>
    %646 = arith.mulf %642, %597 : vector<8x128xf32>
    %647 = arith.mulf %641, %645 : vector<8x128xf32>
    %648 = arith.addf %646, %647 : vector<8x128xf32>
    %649 = math.tanh %648 : vector<8x128xf32>
    %650 = arith.mulf %643, %649 : vector<8x128xf32>
    %651 = arith.truncf %650 : vector<8x128xf32> to vector<8x128xbf16>
    %652 = arith.truncf %621 : vector<8x128xf32> to vector<8x128xbf16>
    %653 = tpu.concatenate %651, %652 in 1 : vector<8x128xbf16>, vector<8x128xbf16> -> vector<8x256xbf16>
    %cst_119 = arith.constant dense<0.000000e+00> : vector<8x512xf32>
    %654 = tpu.matmul %653, %4, %cst_119 {dimension_numbers = #tpu.dot_dimension_numbers<[1], [0], [0], [1], [0, 0, 1, 1], [], []>} : vector<8x256xbf16>, vector<256x512xbf16>, vector<8x512xf32> -> vector<8x512xf32>
    %655 = vector.broadcast %6 : vector<1x512xf32> to vector<8x512xf32>
    %656 = arith.addf %654, %655 : vector<8x512xf32>
    %657 = vector.extract_strided_slice %656 {offsets = [0, 0], sizes = [8, 384], strides = [1, 1]} : vector<8x512xf32> to vector<8x384xf32>
    %658 = arith.negf %657 : vector<8x384xf32>
    %659 = math.exp %658 : vector<8x384xf32>
    %cst_120 = arith.constant 1.000000e+00 : f32
    %660 = vector.broadcast %cst_120 : f32 to vector<8x384xf32>
    %661 = arith.addf %660, %659 : vector<8x384xf32>
    %662 = arith.divf %660, %661 : vector<8x384xf32>
    %663 = vector.extract_strided_slice %662 {offsets = [0, 0], sizes = [8, 128], strides = [1, 1]} : vector<8x384xf32> to vector<8x128xf32>
    %664 = vector.extract_strided_slice %662 {offsets = [0, 128], sizes = [8, 128], strides = [1, 1]} : vector<8x384xf32> to vector<8x128xf32>
    %665 = vector.extract_strided_slice %662 {offsets = [0, 256], sizes = [8, 128], strides = [1, 1]} : vector<8x384xf32> to vector<8x128xf32>
    %666 = vector.extract_strided_slice %656 {offsets = [0, 384], sizes = [8, 128], strides = [1, 1]} : vector<8x512xf32> to vector<8x128xf32>
    %667 = math.tanh %666 : vector<8x128xf32>
    %668 = arith.mulf %664, %619 : vector<8x128xf32>
    %669 = arith.mulf %663, %667 : vector<8x128xf32>
    %670 = arith.addf %668, %669 : vector<8x128xf32>
    %671 = math.tanh %670 : vector<8x128xf32>
    %672 = arith.mulf %665, %671 : vector<8x128xf32>
    %673 = arith.truncf %672 : vector<8x128xf32> to vector<8x128xbf16>
    %674 = arith.index_cast %c12_i32 : i32 to index
    %c0_121 = arith.constant 0 : index
    %c0_122 = arith.constant 0 : index
    %675 = vector.load %arg9[%674, %c0_121, %c0_122] : memref<16x8x128xbf16, #tpu.memory_space<vmem>>, vector<1x8x128xbf16>
    %676 = vector.shape_cast %675 : vector<1x8x128xbf16> to vector<8x128xbf16>
    %677 = vector.shape_cast %673 : vector<8x128xbf16> to vector<1x8x128xbf16>
    tpu.vector_store %arg9[%674, %c0_121, %c0_122], %677 {strides = array<i32>} : memref<16x8x128xbf16, #tpu.memory_space<vmem>>, vector<1x8x128xbf16>,
    %c13_i32 = arith.constant 13 : i32
    %678 = arith.index_cast %c13_i32 : i32 to index
    %c0_123 = arith.constant 0 : index
    %c0_124 = arith.constant 0 : index
    %679 = vector.load %arg2[%678, %c0_123, %c0_124] : memref<16x8x128xbf16, #tpu.memory_space<vmem>>, vector<1x8x128xbf16>
    %680 = vector.shape_cast %679 : vector<1x8x128xbf16> to vector<8x128xbf16>
    %681 = arith.truncf %650 : vector<8x128xf32> to vector<8x128xbf16>
    %682 = tpu.concatenate %680, %681 in 1 : vector<8x128xbf16>, vector<8x128xbf16> -> vector<8x256xbf16>
    %cst_125 = arith.constant dense<0.000000e+00> : vector<8x512xf32>
    %683 = tpu.matmul %682, %3, %cst_125 {dimension_numbers = #tpu.dot_dimension_numbers<[1], [0], [0], [1], [0, 0, 1, 1], [], []>} : vector<8x256xbf16>, vector<256x512xbf16>, vector<8x512xf32> -> vector<8x512xf32>
    %684 = vector.broadcast %5 : vector<1x512xf32> to vector<8x512xf32>
    %685 = arith.addf %683, %684 : vector<8x512xf32>
    %686 = vector.extract_strided_slice %685 {offsets = [0, 0], sizes = [8, 384], strides = [1, 1]} : vector<8x512xf32> to vector<8x384xf32>
    %687 = arith.negf %686 : vector<8x384xf32>
    %688 = math.exp %687 : vector<8x384xf32>
    %cst_126 = arith.constant 1.000000e+00 : f32
    %689 = vector.broadcast %cst_126 : f32 to vector<8x384xf32>
    %690 = arith.addf %689, %688 : vector<8x384xf32>
    %691 = arith.divf %689, %690 : vector<8x384xf32>
    %692 = vector.extract_strided_slice %691 {offsets = [0, 0], sizes = [8, 128], strides = [1, 1]} : vector<8x384xf32> to vector<8x128xf32>
    %693 = vector.extract_strided_slice %691 {offsets = [0, 128], sizes = [8, 128], strides = [1, 1]} : vector<8x384xf32> to vector<8x128xf32>
    %694 = vector.extract_strided_slice %691 {offsets = [0, 256], sizes = [8, 128], strides = [1, 1]} : vector<8x384xf32> to vector<8x128xf32>
    %695 = vector.extract_strided_slice %685 {offsets = [0, 384], sizes = [8, 128], strides = [1, 1]} : vector<8x512xf32> to vector<8x128xf32>
    %696 = math.tanh %695 : vector<8x128xf32>
    %697 = arith.mulf %693, %648 : vector<8x128xf32>
    %698 = arith.mulf %692, %696 : vector<8x128xf32>
    %699 = arith.addf %697, %698 : vector<8x128xf32>
    %700 = math.tanh %699 : vector<8x128xf32>
    %701 = arith.mulf %694, %700 : vector<8x128xf32>
    %702 = arith.truncf %701 : vector<8x128xf32> to vector<8x128xbf16>
    %703 = arith.truncf %672 : vector<8x128xf32> to vector<8x128xbf16>
    %704 = tpu.concatenate %702, %703 in 1 : vector<8x128xbf16>, vector<8x128xbf16> -> vector<8x256xbf16>
    %cst_127 = arith.constant dense<0.000000e+00> : vector<8x512xf32>
    %705 = tpu.matmul %704, %4, %cst_127 {dimension_numbers = #tpu.dot_dimension_numbers<[1], [0], [0], [1], [0, 0, 1, 1], [], []>} : vector<8x256xbf16>, vector<256x512xbf16>, vector<8x512xf32> -> vector<8x512xf32>
    %706 = vector.broadcast %6 : vector<1x512xf32> to vector<8x512xf32>
    %707 = arith.addf %705, %706 : vector<8x512xf32>
    %708 = vector.extract_strided_slice %707 {offsets = [0, 0], sizes = [8, 384], strides = [1, 1]} : vector<8x512xf32> to vector<8x384xf32>
    %709 = arith.negf %708 : vector<8x384xf32>
    %710 = math.exp %709 : vector<8x384xf32>
    %cst_128 = arith.constant 1.000000e+00 : f32
    %711 = vector.broadcast %cst_128 : f32 to vector<8x384xf32>
    %712 = arith.addf %711, %710 : vector<8x384xf32>
    %713 = arith.divf %711, %712 : vector<8x384xf32>
    %714 = vector.extract_strided_slice %713 {offsets = [0, 0], sizes = [8, 128], strides = [1, 1]} : vector<8x384xf32> to vector<8x128xf32>
    %715 = vector.extract_strided_slice %713 {offsets = [0, 128], sizes = [8, 128], strides = [1, 1]} : vector<8x384xf32> to vector<8x128xf32>
    %716 = vector.extract_strided_slice %713 {offsets = [0, 256], sizes = [8, 128], strides = [1, 1]} : vector<8x384xf32> to vector<8x128xf32>
    %717 = vector.extract_strided_slice %707 {offsets = [0, 384], sizes = [8, 128], strides = [1, 1]} : vector<8x512xf32> to vector<8x128xf32>
    %718 = math.tanh %717 : vector<8x128xf32>
    %719 = arith.mulf %715, %670 : vector<8x128xf32>
    %720 = arith.mulf %714, %718 : vector<8x128xf32>
    %721 = arith.addf %719, %720 : vector<8x128xf32>
    %722 = math.tanh %721 : vector<8x128xf32>
    %723 = arith.mulf %716, %722 : vector<8x128xf32>
    %724 = arith.truncf %723 : vector<8x128xf32> to vector<8x128xbf16>
    %725 = arith.index_cast %c13_i32 : i32 to index
    %c0_129 = arith.constant 0 : index
    %c0_130 = arith.constant 0 : index
    %726 = vector.load %arg9[%725, %c0_129, %c0_130] : memref<16x8x128xbf16, #tpu.memory_space<vmem>>, vector<1x8x128xbf16>
    %727 = vector.shape_cast %726 : vector<1x8x128xbf16> to vector<8x128xbf16>
    %728 = vector.shape_cast %724 : vector<8x128xbf16> to vector<1x8x128xbf16>
    tpu.vector_store %arg9[%725, %c0_129, %c0_130], %728 {strides = array<i32>} : memref<16x8x128xbf16, #tpu.memory_space<vmem>>, vector<1x8x128xbf16>,
    %c14_i32 = arith.constant 14 : i32
    %729 = arith.index_cast %c14_i32 : i32 to index
    %c0_131 = arith.constant 0 : index
    %c0_132 = arith.constant 0 : index
    %730 = vector.load %arg2[%729, %c0_131, %c0_132] : memref<16x8x128xbf16, #tpu.memory_space<vmem>>, vector<1x8x128xbf16>
    %731 = vector.shape_cast %730 : vector<1x8x128xbf16> to vector<8x128xbf16>
    %732 = arith.truncf %701 : vector<8x128xf32> to vector<8x128xbf16>
    %733 = tpu.concatenate %731, %732 in 1 : vector<8x128xbf16>, vector<8x128xbf16> -> vector<8x256xbf16>
    %cst_133 = arith.constant dense<0.000000e+00> : vector<8x512xf32>
    %734 = tpu.matmul %733, %3, %cst_133 {dimension_numbers = #tpu.dot_dimension_numbers<[1], [0], [0], [1], [0, 0, 1, 1], [], []>} : vector<8x256xbf16>, vector<256x512xbf16>, vector<8x512xf32> -> vector<8x512xf32>
    %735 = vector.broadcast %5 : vector<1x512xf32> to vector<8x512xf32>
    %736 = arith.addf %734, %735 : vector<8x512xf32>
    %737 = vector.extract_strided_slice %736 {offsets = [0, 0], sizes = [8, 384], strides = [1, 1]} : vector<8x512xf32> to vector<8x384xf32>
    %738 = arith.negf %737 : vector<8x384xf32>
    %739 = math.exp %738 : vector<8x384xf32>
    %cst_134 = arith.constant 1.000000e+00 : f32
    %740 = vector.broadcast %cst_134 : f32 to vector<8x384xf32>
    %741 = arith.addf %740, %739 : vector<8x384xf32>
    %742 = arith.divf %740, %741 : vector<8x384xf32>
    %743 = vector.extract_strided_slice %742 {offsets = [0, 0], sizes = [8, 128], strides = [1, 1]} : vector<8x384xf32> to vector<8x128xf32>
    %744 = vector.extract_strided_slice %742 {offsets = [0, 128], sizes = [8, 128], strides = [1, 1]} : vector<8x384xf32> to vector<8x128xf32>
    %745 = vector.extract_strided_slice %742 {offsets = [0, 256], sizes = [8, 128], strides = [1, 1]} : vector<8x384xf32> to vector<8x128xf32>
    %746 = vector.extract_strided_slice %736 {offsets = [0, 384], sizes = [8, 128], strides = [1, 1]} : vector<8x512xf32> to vector<8x128xf32>
    %747 = math.tanh %746 : vector<8x128xf32>
    %748 = arith.mulf %744, %699 : vector<8x128xf32>
    %749 = arith.mulf %743, %747 : vector<8x128xf32>
    %750 = arith.addf %748, %749 : vector<8x128xf32>
    %751 = math.tanh %750 : vector<8x128xf32>
    %752 = arith.mulf %745, %751 : vector<8x128xf32>
    %753 = arith.truncf %752 : vector<8x128xf32> to vector<8x128xbf16>
    %754 = arith.truncf %723 : vector<8x128xf32> to vector<8x128xbf16>
    %755 = tpu.concatenate %753, %754 in 1 : vector<8x128xbf16>, vector<8x128xbf16> -> vector<8x256xbf16>
    %cst_135 = arith.constant dense<0.000000e+00> : vector<8x512xf32>
    %756 = tpu.matmul %755, %4, %cst_135 {dimension_numbers = #tpu.dot_dimension_numbers<[1], [0], [0], [1], [0, 0, 1, 1], [], []>} : vector<8x256xbf16>, vector<256x512xbf16>, vector<8x512xf32> -> vector<8x512xf32>
    %757 = vector.broadcast %6 : vector<1x512xf32> to vector<8x512xf32>
    %758 = arith.addf %756, %757 : vector<8x512xf32>
    %759 = vector.extract_strided_slice %758 {offsets = [0, 0], sizes = [8, 384], strides = [1, 1]} : vector<8x512xf32> to vector<8x384xf32>
    %760 = arith.negf %759 : vector<8x384xf32>
    %761 = math.exp %760 : vector<8x384xf32>
    %cst_136 = arith.constant 1.000000e+00 : f32
    %762 = vector.broadcast %cst_136 : f32 to vector<8x384xf32>
    %763 = arith.addf %762, %761 : vector<8x384xf32>
    %764 = arith.divf %762, %763 : vector<8x384xf32>
    %765 = vector.extract_strided_slice %764 {offsets = [0, 0], sizes = [8, 128], strides = [1, 1]} : vector<8x384xf32> to vector<8x128xf32>
    %766 = vector.extract_strided_slice %764 {offsets = [0, 128], sizes = [8, 128], strides = [1, 1]} : vector<8x384xf32> to vector<8x128xf32>
    %767 = vector.extract_strided_slice %764 {offsets = [0, 256], sizes = [8, 128], strides = [1, 1]} : vector<8x384xf32> to vector<8x128xf32>
    %768 = vector.extract_strided_slice %758 {offsets = [0, 384], sizes = [8, 128], strides = [1, 1]} : vector<8x512xf32> to vector<8x128xf32>
    %769 = math.tanh %768 : vector<8x128xf32>
    %770 = arith.mulf %766, %721 : vector<8x128xf32>
    %771 = arith.mulf %765, %769 : vector<8x128xf32>
    %772 = arith.addf %770, %771 : vector<8x128xf32>
    %773 = math.tanh %772 : vector<8x128xf32>
    %774 = arith.mulf %767, %773 : vector<8x128xf32>
    %775 = arith.truncf %774 : vector<8x128xf32> to vector<8x128xbf16>
    %776 = arith.index_cast %c14_i32 : i32 to index
    %c0_137 = arith.constant 0 : index
    %c0_138 = arith.constant 0 : index
    %777 = vector.load %arg9[%776, %c0_137, %c0_138] : memref<16x8x128xbf16, #tpu.memory_space<vmem>>, vector<1x8x128xbf16>
    %778 = vector.shape_cast %777 : vector<1x8x128xbf16> to vector<8x128xbf16>
    %779 = vector.shape_cast %775 : vector<8x128xbf16> to vector<1x8x128xbf16>
    tpu.vector_store %arg9[%776, %c0_137, %c0_138], %779 {strides = array<i32>} : memref<16x8x128xbf16, #tpu.memory_space<vmem>>, vector<1x8x128xbf16>,
    %c15_i32 = arith.constant 15 : i32
    %780 = arith.index_cast %c15_i32 : i32 to index
    %c0_139 = arith.constant 0 : index
    %c0_140 = arith.constant 0 : index
    %781 = vector.load %arg2[%780, %c0_139, %c0_140] : memref<16x8x128xbf16, #tpu.memory_space<vmem>>, vector<1x8x128xbf16>
    %782 = vector.shape_cast %781 : vector<1x8x128xbf16> to vector<8x128xbf16>
    %783 = arith.truncf %752 : vector<8x128xf32> to vector<8x128xbf16>
    %784 = tpu.concatenate %782, %783 in 1 : vector<8x128xbf16>, vector<8x128xbf16> -> vector<8x256xbf16>
    %cst_141 = arith.constant dense<0.000000e+00> : vector<8x512xf32>
    %785 = tpu.matmul %784, %3, %cst_141 {dimension_numbers = #tpu.dot_dimension_numbers<[1], [0], [0], [1], [0, 0, 1, 1], [], []>} : vector<8x256xbf16>, vector<256x512xbf16>, vector<8x512xf32> -> vector<8x512xf32>
    %786 = vector.broadcast %5 : vector<1x512xf32> to vector<8x512xf32>
    %787 = arith.addf %785, %786 : vector<8x512xf32>
    %788 = vector.extract_strided_slice %787 {offsets = [0, 0], sizes = [8, 384], strides = [1, 1]} : vector<8x512xf32> to vector<8x384xf32>
    %789 = arith.negf %788 : vector<8x384xf32>
    %790 = math.exp %789 : vector<8x384xf32>
    %cst_142 = arith.constant 1.000000e+00 : f32
    %791 = vector.broadcast %cst_142 : f32 to vector<8x384xf32>
    %792 = arith.addf %791, %790 : vector<8x384xf32>
    %793 = arith.divf %791, %792 : vector<8x384xf32>
    %794 = vector.extract_strided_slice %793 {offsets = [0, 0], sizes = [8, 128], strides = [1, 1]} : vector<8x384xf32> to vector<8x128xf32>
    %795 = vector.extract_strided_slice %793 {offsets = [0, 128], sizes = [8, 128], strides = [1, 1]} : vector<8x384xf32> to vector<8x128xf32>
    %796 = vector.extract_strided_slice %793 {offsets = [0, 256], sizes = [8, 128], strides = [1, 1]} : vector<8x384xf32> to vector<8x128xf32>
    %797 = vector.extract_strided_slice %787 {offsets = [0, 384], sizes = [8, 128], strides = [1, 1]} : vector<8x512xf32> to vector<8x128xf32>
    %798 = math.tanh %797 : vector<8x128xf32>
    %799 = arith.mulf %795, %750 : vector<8x128xf32>
    %800 = arith.mulf %794, %798 : vector<8x128xf32>
    %801 = arith.addf %799, %800 : vector<8x128xf32>
    %802 = math.tanh %801 : vector<8x128xf32>
    %803 = arith.mulf %796, %802 : vector<8x128xf32>
    %804 = arith.truncf %803 : vector<8x128xf32> to vector<8x128xbf16>
    %805 = arith.truncf %774 : vector<8x128xf32> to vector<8x128xbf16>
    %806 = tpu.concatenate %804, %805 in 1 : vector<8x128xbf16>, vector<8x128xbf16> -> vector<8x256xbf16>
    %cst_143 = arith.constant dense<0.000000e+00> : vector<8x512xf32>
    %807 = tpu.matmul %806, %4, %cst_143 {dimension_numbers = #tpu.dot_dimension_numbers<[1], [0], [0], [1], [0, 0, 1, 1], [], []>} : vector<8x256xbf16>, vector<256x512xbf16>, vector<8x512xf32> -> vector<8x512xf32>
    %808 = vector.broadcast %6 : vector<1x512xf32> to vector<8x512xf32>
    %809 = arith.addf %807, %808 : vector<8x512xf32>
    %810 = vector.extract_strided_slice %809 {offsets = [0, 0], sizes = [8, 384], strides = [1, 1]} : vector<8x512xf32> to vector<8x384xf32>
    %811 = arith.negf %810 : vector<8x384xf32>
    %812 = math.exp %811 : vector<8x384xf32>
    %cst_144 = arith.constant 1.000000e+00 : f32
    %813 = vector.broadcast %cst_144 : f32 to vector<8x384xf32>
    %814 = arith.addf %813, %812 : vector<8x384xf32>
    %815 = arith.divf %813, %814 : vector<8x384xf32>
    %816 = vector.extract_strided_slice %815 {offsets = [0, 0], sizes = [8, 128], strides = [1, 1]} : vector<8x384xf32> to vector<8x128xf32>
    %817 = vector.extract_strided_slice %815 {offsets = [0, 128], sizes = [8, 128], strides = [1, 1]} : vector<8x384xf32> to vector<8x128xf32>
    %818 = vector.extract_strided_slice %815 {offsets = [0, 256], sizes = [8, 128], strides = [1, 1]} : vector<8x384xf32> to vector<8x128xf32>
    %819 = vector.extract_strided_slice %809 {offsets = [0, 384], sizes = [8, 128], strides = [1, 1]} : vector<8x512xf32> to vector<8x128xf32>
    %820 = math.tanh %819 : vector<8x128xf32>
    %821 = arith.mulf %817, %772 : vector<8x128xf32>
    %822 = arith.mulf %816, %820 : vector<8x128xf32>
    %823 = arith.addf %821, %822 : vector<8x128xf32>
    %824 = math.tanh %823 : vector<8x128xf32>
    %825 = arith.mulf %818, %824 : vector<8x128xf32>
    %826 = arith.truncf %825 : vector<8x128xf32> to vector<8x128xbf16>
    %827 = arith.index_cast %c15_i32 : i32 to index
    %c0_145 = arith.constant 0 : index
    %c0_146 = arith.constant 0 : index
    %828 = vector.load %arg9[%827, %c0_145, %c0_146] : memref<16x8x128xbf16, #tpu.memory_space<vmem>>, vector<1x8x128xbf16>
    %829 = vector.shape_cast %828 : vector<1x8x128xbf16> to vector<8x128xbf16>
    %830 = vector.shape_cast %826 : vector<8x128xbf16> to vector<1x8x128xbf16>
    tpu.vector_store %arg9[%827, %c0_145, %c0_146], %830 {strides = array<i32>} : memref<16x8x128xbf16, #tpu.memory_space<vmem>>, vector<1x8x128xbf16>,
    %c16_i32 = arith.constant 16 : i32
    %c0_147 = arith.constant 0 : index
    %c0_148 = arith.constant 0 : index
    %c0_149 = arith.constant 0 : index
    %831 = vector.load %arg10[%c0_147, %c0_148, %c0_149] : memref<2x8x128xf32, #tpu.memory_space<vmem>>, vector<1x8x128xf32>
    %832 = vector.shape_cast %831 : vector<1x8x128xf32> to vector<8x128xf32>
    %833 = vector.shape_cast %803 : vector<8x128xf32> to vector<1x8x128xf32>
    tpu.vector_store %arg10[%c0_147, %c0_148, %c0_149], %833 {strides = array<i32>} : memref<2x8x128xf32, #tpu.memory_space<vmem>>, vector<1x8x128xf32>,
    %c0_150 = arith.constant 0 : index
    %c0_151 = arith.constant 0 : index
    %c0_152 = arith.constant 0 : index
    %834 = vector.load %arg11[%c0_150, %c0_151, %c0_152] : memref<2x8x128xf32, #tpu.memory_space<vmem>>, vector<1x8x128xf32>
    %835 = vector.shape_cast %834 : vector<1x8x128xf32> to vector<8x128xf32>
    %836 = vector.shape_cast %801 : vector<8x128xf32> to vector<1x8x128xf32>
    tpu.vector_store %arg11[%c0_150, %c0_151, %c0_152], %836 {strides = array<i32>} : memref<2x8x128xf32, #tpu.memory_space<vmem>>, vector<1x8x128xf32>,
    %c1_153 = arith.constant 1 : index
    %c0_154 = arith.constant 0 : index
    %c0_155 = arith.constant 0 : index
    %837 = vector.load %arg10[%c1_153, %c0_154, %c0_155] : memref<2x8x128xf32, #tpu.memory_space<vmem>>, vector<1x8x128xf32>
    %838 = vector.shape_cast %837 : vector<1x8x128xf32> to vector<8x128xf32>
    %839 = vector.shape_cast %825 : vector<8x128xf32> to vector<1x8x128xf32>
    tpu.vector_store %arg10[%c1_153, %c0_154, %c0_155], %839 {strides = array<i32>} : memref<2x8x128xf32, #tpu.memory_space<vmem>>, vector<1x8x128xf32>,
    %c1_156 = arith.constant 1 : index
    %c0_157 = arith.constant 0 : index
    %c0_158 = arith.constant 0 : index
    %840 = vector.load %arg11[%c1_156, %c0_157, %c0_158] : memref<2x8x128xf32, #tpu.memory_space<vmem>>, vector<1x8x128xf32>
    %841 = vector.shape_cast %840 : vector<1x8x128xf32> to vector<8x128xf32>
    %842 = vector.shape_cast %823 : vector<8x128xf32> to vector<1x8x128xf32>
    tpu.vector_store %arg11[%c1_156, %c0_157, %c0_158], %842 {strides = array<i32>} : memref<2x8x128xf32, #tpu.memory_space<vmem>>, vector<1x8x128xf32>,
    return
  }
  func.func @transform_0(%arg0: i32, %arg1: i32) -> (i32, i32, i32) {
    %c0_i32 = arith.constant 0 : i32
    %c0_i32_0 = arith.constant 0 : i32
    return %arg1, %arg0, %c0_i32 : i32, i32, i32
  }
  func.func @transform_1(%arg0: i32, %arg1: i32) -> (i32, i32) {
    %c0_i32 = arith.constant 0 : i32
    %c0_i32_0 = arith.constant 0 : i32
    %c0_i32_1 = arith.constant 0 : i32
    return %c0_i32, %c0_i32_0 : i32, i32
  }
  func.func @transform_2(%arg0: i32, %arg1: i32) -> (i32, i32) {
    %c0_i32 = arith.constant 0 : i32
    %c0_i32_0 = arith.constant 0 : i32
    %c0_i32_1 = arith.constant 0 : i32
    return %c0_i32, %c0_i32_0 : i32, i32
  }
  func.func @transform_3(%arg0: i32, %arg1: i32) -> (i32, i32) {
    %c0_i32 = arith.constant 0 : i32
    %c0_i32_0 = arith.constant 0 : i32
    %c0_i32_1 = arith.constant 0 : i32
    return %c0_i32, %c0_i32_0 : i32, i32
  }
  func.func @transform_4(%arg0: i32, %arg1: i32) -> (i32, i32) {
    %c0_i32 = arith.constant 0 : i32
    %c0_i32_0 = arith.constant 0 : i32
    %c0_i32_1 = arith.constant 0 : i32
    return %c0_i32, %c0_i32_0 : i32, i32
  }
  func.func @transform_5(%arg0: i32, %arg1: i32) -> (i32, i32, i32) {
    %c0_i32 = arith.constant 0 : i32
    %c0_i32_0 = arith.constant 0 : i32
    %c0_i32_1 = arith.constant 0 : i32
    return %c0_i32, %arg0, %c0_i32_0 : i32, i32, i32
  }
  func.func @transform_6(%arg0: i32, %arg1: i32) -> (i32, i32, i32) {
    %c0_i32 = arith.constant 0 : i32
    %c0_i32_0 = arith.constant 0 : i32
    %c0_i32_1 = arith.constant 0 : i32
    return %c0_i32, %arg0, %c0_i32_0 : i32, i32, i32
  }
  func.func @transform_7(%arg0: i32, %arg1: i32) -> (i32, i32, i32) {
    %c0_i32 = arith.constant 0 : i32
    %c0_i32_0 = arith.constant 0 : i32
    return %arg1, %arg0, %c0_i32 : i32, i32, i32
  }
  func.func @transform_8(%arg0: i32, %arg1: i32) -> (i32, i32, i32) {
    %c0_i32 = arith.constant 0 : i32
    %c0_i32_0 = arith.constant 0 : i32
    %c0_i32_1 = arith.constant 0 : i32
    return %c0_i32, %arg0, %c0_i32_0 : i32, i32, i32
  }
  func.func @transform_9(%arg0: i32, %arg1: i32) -> (i32, i32, i32) {
    %c0_i32 = arith.constant 0 : i32
    %c0_i32_0 = arith.constant 0 : i32
    %c0_i32_1 = arith.constant 0 : i32
    return %c0_i32, %arg0, %c0_i32_0 : i32, i32, i32
  }
}

module attributes {stable_mosaic.version = 11 : i64} {
  func.func @linear_kernel(%arg0: i32, %arg1: i32, %arg2: memref<128x128xbf16, #tpu.memory_space<vmem>>, %arg3: memref<128x256xbf16, #tpu.memory_space<vmem>>, %arg4: memref<1x256xf32, #tpu.memory_space<vmem>>, %arg5: memref<128x256xf32, #tpu.memory_space<vmem>>) attributes {dimension_semantics = [#tpu.dimension_semantics<parallel>, #tpu.dimension_semantics<parallel>], iteration_bounds = array<i64: 1, 1>, scalar_prefetch = 0 : i64, scratch_operands = 0 : i64, tpu.core_type = #tpu.core_type<tc>, window_params = [{transform_indices = @transform_0, window_bounds = array<i64: 128, 128>}, {transform_indices = @transform_1, window_bounds = array<i64: 128, 256>}, {transform_indices = @transform_2, window_bounds = array<i64: 1, 256>}, {transform_indices = @transform_3, window_bounds = array<i64: 128, 256>}]} {
    %c0 = arith.constant 0 : index
    %c0_0 = arith.constant 0 : index
    %0 = vector.load %arg2[%c0, %c0_0] : memref<128x128xbf16, #tpu.memory_space<vmem>>, vector<128x128xbf16>
    %c0_1 = arith.constant 0 : index
    %c0_2 = arith.constant 0 : index
    %1 = vector.load %arg3[%c0_1, %c0_2] : memref<128x256xbf16, #tpu.memory_space<vmem>>, vector<128x256xbf16>
    %cst = arith.constant dense<0.000000e+00> : vector<128x256xf32>
    %2 = tpu.matmul %0, %1, %cst {dimension_numbers = #tpu.dot_dimension_numbers<[1], [0], [0], [1], [0, 0, 1, 1], [], []>} : vector<128x128xbf16>, vector<128x256xbf16>, vector<128x256xf32> -> vector<128x256xf32>
    %c0_3 = arith.constant 0 : index
    %c0_4 = arith.constant 0 : index
    %3 = vector.load %arg4[%c0_3, %c0_4] : memref<1x256xf32, #tpu.memory_space<vmem>>, vector<1x256xf32>
    %4 = vector.broadcast %3 : vector<1x256xf32> to vector<128x256xf32>
    %5 = arith.addf %2, %4 : vector<128x256xf32>
    %c0_5 = arith.constant 0 : index
    %c0_6 = arith.constant 0 : index
    %6 = vector.load %arg5[%c0_5, %c0_6] : memref<128x256xf32, #tpu.memory_space<vmem>>, vector<128x256xf32>
    tpu.vector_store %arg5[%c0_5, %c0_6], %5 {strides = array<i32>} : memref<128x256xf32, #tpu.memory_space<vmem>>, vector<128x256xf32>,
    return
  }
  func.func @transform_0(%arg0: i32, %arg1: i32) -> (i32, i32) {
    %c0_i32 = arith.constant 0 : i32
    %c0_i32_0 = arith.constant 0 : i32
    return %arg0, %c0_i32 : i32, i32
  }
  func.func @transform_1(%arg0: i32, %arg1: i32) -> (i32, i32) {
    %c0_i32 = arith.constant 0 : i32
    %c0_i32_0 = arith.constant 0 : i32
    return %c0_i32, %arg1 : i32, i32
  }
  func.func @transform_2(%arg0: i32, %arg1: i32) -> (i32, i32) {
    %c0_i32 = arith.constant 0 : i32
    %c0_i32_0 = arith.constant 0 : i32
    return %c0_i32, %arg1 : i32, i32
  }
  func.func @transform_3(%arg0: i32, %arg1: i32) -> (i32, i32) {
    %c0_i32 = arith.constant 0 : i32
    return %arg0, %arg1 : i32, i32
  }
}

</mosaic_0001>

<llo_original>
// kernel: poetry_model_forward.3
$region0: #{poetry_model_forward.3}
  #allocation0 [shape = 'u32[]', space=smem, size = 0x4, offset = 0x4, fixed_abs, tag = 'smem constant byte address 0x4 - core index']
  #allocation1 [shape = 'u32[144,128]{1,0:T(1,128)}', space=vmem, size = 0x12000, scoped, tag = 'internal scratch']
  %s0 = inlined_call_operand.vmem [shape: bf16[128,128], index: 0, kind: input, shape index: {}]
  %s1 = inlined_call_operand.vmem [shape: bf16[128,256], index: 1, kind: input, shape index: {}]
  %s2 = inlined_call_operand.vmem [shape: f32[1,256], index: 2, kind: input, shape index: {}]
  %s3 = inlined_call_operand.hbm [shape: f32[128,256], index: 3, kind: output, shape index: {}]
  %s4 = sld [smem:[#allocation0]]
  $region22: #{poetry_model_forward.3} parent=0
    _
  %s6 = ssub.s32 1, %s4
  %s7 = scalar_select 0, %s6, %s4
  $region1: #{poetry_model_forward.3} parent=0
    #allocation2 [shape = 'u8[131072]{0}', space=vmem, size = 0x20000, scoped, tag = 'output window, operand 0, single buffered']
    #allocation3 [shape = 's32[1]{0}', space=sflag, size = 0x4, scoped, tag = 'scoped memory for poetry_model_forward.3']
    %8 = vsyncpa [#allocation3], 0
    // Predicated region
    $region2: #{poetry_model_forward.3} parent=1 // pred_check
      _
    $region3: #{poetry_model_forward.3} parent=1 // pred_check_branch
      %10 = sbr.rel (0) target = $region5
    $region4: #{poetry_model_forward.3} parent=1 // pred_region
      _
    $region5: #{poetry_model_forward.3} parent=1 // pred_fallthru
      _
    // Predicated region
    $region6: #{poetry_model_forward.3} parent=1 // pred_check
      _
    $region7: #{poetry_model_forward.3} parent=1 // pred_check_branch
      %12 = sbr.rel (0) target = $region9
    $region8: #{poetry_model_forward.3} parent=1 // pred_region
      _
    $region9: #{poetry_model_forward.3} parent=1 // pred_fallthru
      _
    // Predicated region
    $region10: #{poetry_model_forward.3} parent=1 // pred_check
      _
    $region11: #{poetry_model_forward.3} parent=1 // pred_check_branch
      %14 = sbr.rel (0) target = $region13
    $region12: #{poetry_model_forward.3} parent=1 // pred_region
      _
    $region13: #{poetry_model_forward.3} parent=1 // pred_fallthru
      _
    %v16 = vld [vmem:[%s0] sm:$0xf]
    %v17 = vld [vmem:[%s0 + $0x4] sm:$0xf]
    %v18 = vld [vmem:[%s0 + $0x8] sm:$0xf]
    %v19 = vld [vmem:[%s0 + $0xc] sm:$0xf]
    %v20 = vld [vmem:[%s0 + $0x10] sm:$0xf]
    %v21 = vld [vmem:[%s0 + $0x14] sm:$0xf]
    %v22 = vld [vmem:[%s0 + $0x18] sm:$0xf]
    %v23 = vld [vmem:[%s0 + $0x1c] sm:$0xf]
    %v24 = vld [vmem:[%s0 + $0x20] sm:$0xf]
    %v25 = vld [vmem:[%s0 + $0x24] sm:$0xf]
    %v26 = vld [vmem:[%s0 + $0x28] sm:$0xf]
    %v27 = vld [vmem:[%s0 + $0x2c] sm:$0xf]
    %v28 = vld [vmem:[%s0 + $0x30] sm:$0xf]
    %v29 = vld [vmem:[%s0 + $0x34] sm:$0xf]
    %v30 = vld [vmem:[%s0 + $0x38] sm:$0xf]
    %v31 = vld [vmem:[%s0 + $0x3c] sm:$0xf]
    %v32 = vld [vmem:[%s1] sm:$0xff]
    %v33 = vld [vmem:[%s1 + $0x8] sm:$0xff]
    %v34 = vld [vmem:[%s1 + $0x10] sm:$0xff]
    %v35 = vld [vmem:[%s1 + $0x18] sm:$0xff]
    %v36 = vld [vmem:[%s1 + $0x20] sm:$0xff]
    %v37 = vld [vmem:[%s1 + $0x28] sm:$0xff]
    %v38 = vld [vmem:[%s1 + $0x30] sm:$0xff]
    %v39 = vld [vmem:[%s1 + $0x38] sm:$0xff]
    %v40 = vld [vmem:[%s1 + $0x40] sm:$0xff]
    %v41 = vld [vmem:[%s1 + $0x48] sm:$0xff]
    %v42 = vld [vmem:[%s1 + $0x50] sm:$0xff]
    %v43 = vld [vmem:[%s1 + $0x58] sm:$0xff]
    %v44 = vld [vmem:[%s1 + $0x60] sm:$0xff]
    %v45 = vld [vmem:[%s1 + $0x68] sm:$0xff]
    %v46 = vld [vmem:[%s1 + $0x70] sm:$0xff]
    %v47 = vld [vmem:[%s1 + $0x78] sm:$0xff]
    %v48 = vld [vmem:[%s2] sm:$0x3]
    %v50 = vlaneseq
    %v51 = vshrl.u32 %v50, 7
    %v52 = vsub.s32 0, %v51
    %v53 = vrot.slane %v48, %v52
    %v54 = vlaneseq
    %v55 = vshrl.u32 %v54, 7
    %v56 = vsub.s32 1, %v55
    %v57 = vrot.slane %v48, %v56
    %v76 = vunpack.c.l.b16 %v16
    %v77 = vunpack.c.l.b16 %v17
    %v78 = vunpack.c.l.b16 %v18
    %v79 = vunpack.c.l.b16 %v19
    %v80 = vunpack.c.l.b16 %v20
    %v81 = vunpack.c.l.b16 %v21
    %v82 = vunpack.c.l.b16 %v22
    %v83 = vunpack.c.l.b16 %v23
    %v84 = vunpack.c.l.b16 %v24
    %v85 = vunpack.c.l.b16 %v25
    %v86 = vunpack.c.l.b16 %v26
    %v87 = vunpack.c.l.b16 %v27
    %v88 = vunpack.c.l.b16 %v28
    %v89 = vunpack.c.l.b16 %v29
    %v90 = vunpack.c.l.b16 %v30
    %v91 = vunpack.c.l.b16 %v31
    %v92 = vpack.c.b16 %v77, %v76
    %v93 = vpack.c.b16 %v79, %v78
    %v94 = vpack.c.b16 %v81, %v80
    %v95 = vpack.c.b16 %v83, %v82
    %v96 = vpack.c.b16 %v85, %v84
    %v97 = vpack.c.b16 %v87, %v86
    %v98 = vpack.c.b16 %v89, %v88
    %v99 = vpack.c.b16 %v91, %v90
    %v124 = vunpack.c.l.b16 %v32
    %v125 = vunpack.c.h.b16 %v32
    %v126 = vunpack.c.l.b16 %v33
    %v127 = vunpack.c.h.b16 %v33
    %v128 = vunpack.c.l.b16 %v34
    %v129 = vunpack.c.h.b16 %v34
    %v130 = vunpack.c.l.b16 %v35
    %v131 = vunpack.c.h.b16 %v35
    %v132 = vunpack.c.l.b16 %v36
    %v133 = vunpack.c.h.b16 %v36
    %v134 = vunpack.c.l.b16 %v37
    %v135 = vunpack.c.h.b16 %v37
    %v136 = vunpack.c.l.b16 %v38
    %v137 = vunpack.c.h.b16 %v38
    %v138 = vunpack.c.l.b16 %v39
    %v139 = vunpack.c.h.b16 %v39
    %v140 = vunpack.c.l.b16 %v40
    %v141 = vunpack.c.h.b16 %v40
    %v142 = vunpack.c.l.b16 %v41
    %v143 = vunpack.c.h.b16 %v41
    %v144 = vunpack.c.l.b16 %v42
    %v145 = vunpack.c.h.b16 %v42
    %v146 = vunpack.c.l.b16 %v43
    %v147 = vunpack.c.h.b16 %v43
    %v148 = vunpack.c.l.b16 %v44
    %v149 = vunpack.c.h.b16 %v44
    %v150 = vunpack.c.l.b16 %v45
    %v151 = vunpack.c.h.b16 %v45
    %v152 = vunpack.c.l.b16 %v46
    %v153 = vunpack.c.h.b16 %v46
    %v154 = vunpack.c.l.b16 %v47
    %v155 = vunpack.c.h.b16 %v47
    %v156 = vpack.c.b16 %v126, %v124
    %v157 = vpack.c.b16 %v127, %v125
    %v158 = vpack.c.b16 %v130, %v128
    %v159 = vpack.c.b16 %v131, %v129
    %v160 = vpack.c.b16 %v134, %v132
    %v161 = vpack.c.b16 %v135, %v133
    %v162 = vpack.c.b16 %v138, %v136
    %v163 = vpack.c.b16 %v139, %v137
    %v164 = vpack.c.b16 %v142, %v140
    %v165 = vpack.c.b16 %v143, %v141
    %v166 = vpack.c.b16 %v146, %v144
    %v167 = vpack.c.b16 %v147, %v145
    %v168 = vpack.c.b16 %v150, %v148
    %v169 = vpack.c.b16 %v151, %v149
    %v170 = vpack.c.b16 %v154, %v152
    %v171 = vpack.c.b16 %v155, %v153
    %188 = vmatprep.subr.bf16.mxu0 %v157
    %189 = vmatpush1.bf16.msra.mxu0 %v156
    %190 = vmatprep.subr.bf16.mxu0 %v159
    %191 = vmatpush1.bf16.msra.mxu0 %v158
    %192 = vmatprep.subr.bf16.mxu0 %v161
    %193 = vmatpush1.bf16.msra.mxu0 %v160
    %194 = vmatprep.subr.bf16.mxu0 %v163
    %195 = vmatpush1.bf16.msra.mxu0 %v162
    %196 = vmatprep.subr.bf16.mxu0 %v165
    %197 = vmatpush1.bf16.msra.mxu0 %v164
    %198 = vmatprep.subr.bf16.mxu0 %v167
    %199 = vmatpush1.bf16.msra.mxu0 %v166
    %200 = vmatprep.subr.bf16.mxu0 %v169
    %201 = vmatpush1.bf16.msra.mxu0 %v168
    %202 = vmatprep.subr.bf16.mxu0 %v171
    %203 = vmatpush1.bf16.msra.mxu0 %v170
    %204 = vmatprep.subr.bf16.mxu0 0
    %205 = vmatpush1.bf16.msra.mxu0 0
    %206 = vmatprep.subr.bf16.mxu0 0
    %207 = vmatpush1.bf16.msra.mxu0 0
    %208 = vmatprep.subr.bf16.mxu0 0
    %209 = vmatpush1.bf16.msra.mxu0 0
    %210 = vmatprep.subr.bf16.mxu0 0
    %211 = vmatpush1.bf16.msra.mxu0 0
    %212 = vmatprep.subr.bf16.mxu0 0
    %213 = vmatpush1.bf16.msra.mxu0 0
    %214 = vmatprep.subr.bf16.mxu0 0
    %215 = vmatpush1.bf16.msra.mxu0 0
    %216 = vmatprep.subr.bf16.mxu0 0
    %217 = vmatpush1.bf16.msra.mxu0 0
    %218 = vmatprep.subr.bf16.mxu0 0
    %219 = vmatpush1.bf16.msra.mxu0 0
    %220 = vmatprep.mubr.bf16.mxu0 0
    %221 = vmatmul.mubr.bf16.gmra.mrb[0].mxu0 %v92
    %v222 = vpop.f32.mrb[0].mxu0
    %v223 = vadd.f32 %v53, %v222
    %v224 = vpop.f32.mrb[0].mxu0
    %v225 = vadd.f32 %v57, %v224
    %v226 = vpop.f32.mrb[0].mxu0
    %v227 = vadd.f32 %v53, %v226
    %v228 = vpop.f32.mrb[0].mxu0
    %v229 = vadd.f32 %v57, %v228
    %230 = vmatprep.mubr.bf16.mxu0 0
    %231 = vmatmul.mubr.bf16.gmra.mrb[0].mxu0 %v93
    %v232 = vpop.f32.mrb[0].mxu0
    %v233 = vadd.f32 %v53, %v232
    %v234 = vpop.f32.mrb[0].mxu0
    %v235 = vadd.f32 %v57, %v234
    %v236 = vpop.f32.mrb[0].mxu0
    %v237 = vadd.f32 %v53, %v236
    %v238 = vpop.f32.mrb[0].mxu0
    %v239 = vadd.f32 %v57, %v238
    %240 = vmatprep.mubr.bf16.mxu0 0
    %241 = vmatmul.mubr.bf16.gmra.mrb[0].mxu0 %v94
    %v242 = vpop.f32.mrb[0].mxu0
    %v243 = vadd.f32 %v53, %v242
    %v244 = vpop.f32.mrb[0].mxu0
    %v245 = vadd.f32 %v57, %v244
    %v246 = vpop.f32.mrb[0].mxu0
    %v247 = vadd.f32 %v53, %v246
    %v248 = vpop.f32.mrb[0].mxu0
    %v249 = vadd.f32 %v57, %v248
    %250 = vmatprep.mubr.bf16.mxu0 0
    %251 = vmatmul.mubr.bf16.gmra.mrb[0].mxu0 %v95
    %v252 = vpop.f32.mrb[0].mxu0
    %v253 = vadd.f32 %v53, %v252
    %v254 = vpop.f32.mrb[0].mxu0
    %v255 = vadd.f32 %v57, %v254
    %v256 = vpop.f32.mrb[0].mxu0
    %v257 = vadd.f32 %v53, %v256
    %v258 = vpop.f32.mrb[0].mxu0
    %v259 = vadd.f32 %v57, %v258
    %260 = vmatprep.mubr.bf16.mxu0 0
    %261 = vmatmul.mubr.bf16.gmra.mrb[0].mxu0 %v96
    %v262 = vpop.f32.mrb[0].mxu0
    %v263 = vadd.f32 %v53, %v262
    %v264 = vpop.f32.mrb[0].mxu0
    %v265 = vadd.f32 %v57, %v264
    %v266 = vpop.f32.mrb[0].mxu0
    %v267 = vadd.f32 %v53, %v266
    %v268 = vpop.f32.mrb[0].mxu0
    %v269 = vadd.f32 %v57, %v268
    %270 = vmatprep.mubr.bf16.mxu0 0
    %271 = vmatmul.mubr.bf16.gmra.mrb[0].mxu0 %v97
    %v272 = vpop.f32.mrb[0].mxu0
    %v273 = vadd.f32 %v53, %v272
    %v274 = vpop.f32.mrb[0].mxu0
    %v275 = vadd.f32 %v57, %v274
    %v276 = vpop.f32.mrb[0].mxu0
    %v277 = vadd.f32 %v53, %v276
    %v278 = vpop.f32.mrb[0].mxu0
    %v279 = vadd.f32 %v57, %v278
    %280 = vmatprep.mubr.bf16.mxu0 0
    %281 = vmatmul.mubr.bf16.gmra.mrb[0].mxu0 %v98
    %v282 = vpop.f32.mrb[0].mxu0
    %v283 = vadd.f32 %v53, %v282
    %v284 = vpop.f32.mrb[0].mxu0
    %v285 = vadd.f32 %v57, %v284
    %v286 = vpop.f32.mrb[0].mxu0
    %v287 = vadd.f32 %v53, %v286
    %v288 = vpop.f32.mrb[0].mxu0
    %v289 = vadd.f32 %v57, %v288
    %290 = vmatprep.mubr.bf16.mxu0 0
    %291 = vmatmul.mubr.bf16.gmra.mrb[0].mxu0 %v99
    %v292 = vpop.f32.mrb[0].mxu0
    %v293 = vadd.f32 %v53, %v292
    %v294 = vpop.f32.mrb[0].mxu0
    %v295 = vadd.f32 %v57, %v294
    %v296 = vpop.f32.mrb[0].mxu0
    %v297 = vadd.f32 %v53, %v296
    %v298 = vpop.f32.mrb[0].mxu0
    %v299 = vadd.f32 %v57, %v298
    %300 = vdwg.mxu0
    %301 = vst [vmem:[#allocation2] sm:$0xff] %v223
    %302 = vst [vmem:[#allocation2 + $0x8] sm:$0xff] %v225
    %303 = vst [vmem:[#allocation2 + $0x10] sm:$0xff] %v227
    %304 = vst [vmem:[#allocation2 + $0x18] sm:$0xff] %v229
    %305 = vst [vmem:[#allocation2 + $0x20] sm:$0xff] %v233
    %306 = vst [vmem:[#allocation2 + $0x28] sm:$0xff] %v235
    %307 = vst [vmem:[#allocation2 + $0x30] sm:$0xff] %v237
    %308 = vst [vmem:[#allocation2 + $0x38] sm:$0xff] %v239
    %309 = vst [vmem:[#allocation2 + $0x40] sm:$0xff] %v243
    %310 = vst [vmem:[#allocation2 + $0x48] sm:$0xff] %v245
    %311 = vst [vmem:[#allocation2 + $0x50] sm:$0xff] %v247
    %312 = vst [vmem:[#allocation2 + $0x58] sm:$0xff] %v249
    %313 = vst [vmem:[#allocation2 + $0x60] sm:$0xff] %v253
    %314 = vst [vmem:[#allocation2 + $0x68] sm:$0xff] %v255
    %315 = vst [vmem:[#allocation2 + $0x70] sm:$0xff] %v257
    %316 = vst [vmem:[#allocation2 + $0x78] sm:$0xff] %v259
    %317 = vst [vmem:[#allocation2 + $0x80] sm:$0xff] %v263
    %318 = vst [vmem:[#allocation2 + $0x88] sm:$0xff] %v265
    %319 = vst [vmem:[#allocation2 + $0x90] sm:$0xff] %v267
    %320 = vst [vmem:[#allocation2 + $0x98] sm:$0xff] %v269
    %321 = vst [vmem:[#allocation2 + $0xa0] sm:$0xff] %v273
    %322 = vst [vmem:[#allocation2 + $0xa8] sm:$0xff] %v275
    %323 = vst [vmem:[#allocation2 + $0xb0] sm:$0xff] %v277
    %324 = vst [vmem:[#allocation2 + $0xb8] sm:$0xff] %v279
    %325 = vst [vmem:[#allocation2 + $0xc0] sm:$0xff] %v283
    %326 = vst [vmem:[#allocation2 + $0xc8] sm:$0xff] %v285
    %327 = vst [vmem:[#allocation2 + $0xd0] sm:$0xff] %v287
    %328 = vst [vmem:[#allocation2 + $0xd8] sm:$0xff] %v289
    %329 = vst [vmem:[#allocation2 + $0xe0] sm:$0xff] %v293
    %330 = vst [vmem:[#allocation2 + $0xe8] sm:$0xff] %v295
    %331 = vst [vmem:[#allocation2 + $0xf0] sm:$0xff] %v297
    %332 = vst [vmem:[#allocation2 + $0xf8] sm:$0xff] %v299
    // Predicated region
    $region14: #{poetry_model_forward.3} parent=1 // pred_check
      _
    $region15: #{poetry_model_forward.3} parent=1 // pred_check_branch
      %334 = sbr.rel (0) target = $region17
    $region16: #{poetry_model_forward.3} parent=1 // pred_region
      %s336 = ssub.s32 4096, 4096
      %337 = vsyncadd [#allocation3], %s336
      %s338 = sshll.u32 [#allocation2], 4
      %s339 = int_to_ptr.vmem [resolvable:$true] %s338
      %344 = dma.vmem_to_hbm [thread:$0]  %s339, 4096, %s3, [#allocation3], 256, 256, 16
    $region17: #{poetry_model_forward.3} parent=1 // pred_fallthru
      _
    // Predicated region
    $region18: #{poetry_model_forward.3} parent=1 // pred_check
      _
    $region19: #{poetry_model_forward.3} parent=1 // pred_check_branch
      %346 = sbr.rel (0) target = $region21
    $region20: #{poetry_model_forward.3} parent=1 // pred_region
      %347 = dma.done [#allocation3], 4096
    $region21: #{poetry_model_forward.3} parent=1 // pred_fallthru
      _
    %348 = vsyncpa [#allocation3], 1

// kernel: poetry_model_forward.2
$region0: #{poetry_model_forward.2}
  #allocation0 [shape = 'u32[]', space=smem, size = 0x4, offset = 0x4, fixed_abs, tag = 'smem constant byte address 0x4 - core index']
  #allocation1 [shape = 'u32[144,128]{1,0:T(1,128)}', space=vmem, size = 0x12000, scoped, tag = 'internal scratch']
  %s0 = inlined_call_operand.vmem [shape: bf16[16,8,128], index: 0, kind: input, shape index: {}]
  %s1 = inlined_call_operand.vmem [shape: bf16[256,512], index: 1, kind: input, shape index: {}]
  %s2 = inlined_call_operand.vmem [shape: bf16[256,512], index: 2, kind: input, shape index: {}]
  %s3 = inlined_call_operand.vmem [shape: f32[1,512], index: 3, kind: input, shape index: {}]
  %s4 = inlined_call_operand.vmem [shape: f32[1,512], index: 4, kind: input, shape index: {}]
  %s5 = inlined_call_operand.vmem [shape: f32[2,8,128], index: 5, kind: input, shape index: {}, may-alias: {5,6}]
  %s6 = inlined_call_operand.vmem [shape: f32[2,8,128], index: 6, kind: input, shape index: {}, may-alias: {5,6}]
  %s7 = inlined_call_operand.vmem [shape: bf16[16,8,128], index: 7, kind: output, shape index: {0}]
  %s8 = inlined_call_operand.hbm [shape: f32[2,8,128], index: 8, kind: output, shape index: {1}]
  %s9 = inlined_call_operand.hbm [shape: f32[2,8,128], index: 9, kind: output, shape index: {2}]
  %10 = xla_tuple %s7, %s8, %s9
  %s11 = sld [smem:[#allocation0]]
  $region58: #{poetry_model_forward.2} parent=0
    _
  %s13 = ssub.s32 1, %s11
  %s14 = scalar_select 0, %s13, %s11
  $region1: #{poetry_model_forward.2} parent=0
    #allocation2 [shape = 'u8[8192]{0}', space=vmem, size = 0x2000, scoped, tag = 'output window, operand 1, single buffered']
    #allocation3 [shape = 's32[1]{0}', space=sflag, size = 0x4, scoped, tag = 'scoped memory for poetry_model_forward.2']
    #allocation4 [shape = 'u8[8192]{0}', space=vmem, size = 0x2000, scoped, tag = 'output window, operand 2, single buffered']
    #allocation5 [shape = 's32[1]{0}', space=sflag, size = 0x4, scoped, tag = 'scoped memory for poetry_model_forward.2']
    %15 = vsyncpa [#allocation3], 0
    %16 = vsyncpa [#allocation5], 0
    // Predicated region
    $region2: #{poetry_model_forward.2} parent=1 // pred_check
      _
    $region3: #{poetry_model_forward.2} parent=1 // pred_check_branch
      %18 = sbr.rel (0) target = $region5
    $region4: #{poetry_model_forward.2} parent=1 // pred_region
      _
    $region5: #{poetry_model_forward.2} parent=1 // pred_fallthru
      _
    // Predicated region
    $region6: #{poetry_model_forward.2} parent=1 // pred_check
      _
    $region7: #{poetry_model_forward.2} parent=1 // pred_check_branch
      %20 = sbr.rel (0) target = $region9
    $region8: #{poetry_model_forward.2} parent=1 // pred_region
      _
    $region9: #{poetry_model_forward.2} parent=1 // pred_fallthru
      _
    // Predicated region
    $region10: #{poetry_model_forward.2} parent=1 // pred_check
      _
    $region11: #{poetry_model_forward.2} parent=1 // pred_check_branch
      %22 = sbr.rel (0) target = $region13
    $region12: #{poetry_model_forward.2} parent=1 // pred_region
      _
    $region13: #{poetry_model_forward.2} parent=1 // pred_fallthru
      _
    // Predicated region
    $region14: #{poetry_model_forward.2} parent=1 // pred_check
      _
    $region15: #{poetry_model_forward.2} parent=1 // pred_check_branch
      %24 = sbr.rel (0) target = $region17
    $region16: #{poetry_model_forward.2} parent=1 // pred_region
      _
    $region17: #{poetry_model_forward.2} parent=1 // pred_fallthru
      _
    // Predicated region
    $region18: #{poetry_model_forward.2} parent=1 // pred_check
      _
    $region19: #{poetry_model_forward.2} parent=1 // pred_check_branch
      %26 = sbr.rel (0) target = $region21
    $region20: #{poetry_model_forward.2} parent=1 // pred_region
      _
    $region21: #{poetry_model_forward.2} parent=1 // pred_fallthru
      _
    // Predicated region
    $region22: #{poetry_model_forward.2} parent=1 // pred_check
      _
    $region23: #{poetry_model_forward.2} parent=1 // pred_check_branch
      %28 = sbr.rel (0) target = $region25
    $region24: #{poetry_model_forward.2} parent=1 // pred_region
      _
    $region25: #{poetry_model_forward.2} parent=1 // pred_fallthru
      _
    // Predicated region
    $region26: #{poetry_model_forward.2} parent=1 // pred_check
      _
    $region27: #{poetry_model_forward.2} parent=1 // pred_check_branch
      %30 = sbr.rel (0) target = $region29
    $region28: #{poetry_model_forward.2} parent=1 // pred_region
      _
    $region29: #{poetry_model_forward.2} parent=1 // pred_fallthru
      _
    %p31 = scmp.eq.s32.totalorder 0, 0
    // Predicated region
    $region30: #{poetry_model_forward.2} parent=1 // pred_check
      %p32 = pneg %p31
    $region31: #{poetry_model_forward.2} parent=1 // pred_check_branch
      %34 = sbr.rel (%p32) target = $region33
    $region32: #{poetry_model_forward.2} parent=1 // pred_region
      %v35 = vld [vmem:[%s5] sm:$0xff]
      %v36 = vld [vmem:[%s5 + $0x8] sm:$0xff]
      %37 = vst [vmem:[#allocation2] sm:$0xff] %v35
      %38 = vst [vmem:[#allocation2 + $0x8] sm:$0xff] %v36
      %v39 = vld [vmem:[%s6] sm:$0xff]
      %v40 = vld [vmem:[%s6 + $0x8] sm:$0xff]
      %41 = vst [vmem:[#allocation4] sm:$0xff] %v39
      %42 = vst [vmem:[#allocation4 + $0x8] sm:$0xff] %v40
    $region33: #{poetry_model_forward.2} parent=1 // pred_fallthru
      _
    %v43 = vld [vmem:[%s1] sm:$0xff]
    %v44 = vld [vmem:[%s1 + $0x8] sm:$0xff]
    %v45 = vld [vmem:[%s1 + $0x10] sm:$0xff]
    %v46 = vld [vmem:[%s1 + $0x18] sm:$0xff]
    %v47 = vld [vmem:[%s1 + $0x20] sm:$0xff]
    %v48 = vld [vmem:[%s1 + $0x28] sm:$0xff]
    %v49 = vld [vmem:[%s1 + $0x30] sm:$0xff]
    %v50 = vld [vmem:[%s1 + $0x38] sm:$0xff]
    %v51 = vld [vmem:[%s1 + $0x40] sm:$0xff]
    %v52 = vld [vmem:[%s1 + $0x48] sm:$0xff]
    %v53 = vld [vmem:[%s1 + $0x50] sm:$0xff]
    %v54 = vld [vmem:[%s1 + $0x58] sm:$0xff]
    %v55 = vld [vmem:[%s1 + $0x60] sm:$0xff]
    %v56 = vld [vmem:[%s1 + $0x68] sm:$0xff]
    %v57 = vld [vmem:[%s1 + $0x70] sm:$0xff]
    %v58 = vld [vmem:[%s1 + $0x78] sm:$0xff]
    %v59 = vld [vmem:[%s1 + $0x80] sm:$0xff]
    %v60 = vld [vmem:[%s1 + $0x88] sm:$0xff]
    %v61 = vld [vmem:[%s1 + $0x90] sm:$0xff]
    %v62 = vld [vmem:[%s1 + $0x98] sm:$0xff]
    %v63 = vld [vmem:[%s1 + $0xa0] sm:$0xff]
    %v64 = vld [vmem:[%s1 + $0xa8] sm:$0xff]
    %v65 = vld [vmem:[%s1 + $0xb0] sm:$0xff]
    %v66 = vld [vmem:[%s1 + $0xb8] sm:$0xff]
    %v67 = vld [vmem:[%s1 + $0xc0] sm:$0xff]
    %v68 = vld [vmem:[%s1 + $0xc8] sm:$0xff]
    %v69 = vld [vmem:[%s1 + $0xd0] sm:$0xff]
    %v70 = vld [vmem:[%s1 + $0xd8] sm:$0xff]
    %v71 = vld [vmem:[%s1 + $0xe0] sm:$0xff]
    %v72 = vld [vmem:[%s1 + $0xe8] sm:$0xff]
    %v73 = vld [vmem:[%s1 + $0xf0] sm:$0xff]
    %v74 = vld [vmem:[%s1 + $0xf8] sm:$0xff]
    %v75 = vld [vmem:[%s1 + $0x100] sm:$0xff]
    %v76 = vld [vmem:[%s1 + $0x108] sm:$0xff]
    %v77 = vld [vmem:[%s1 + $0x110] sm:$0xff]
    %v78 = vld [vmem:[%s1 + $0x118] sm:$0xff]
    %v79 = vld [vmem:[%s1 + $0x120] sm:$0xff]
    %v80 = vld [vmem:[%s1 + $0x128] sm:$0xff]
    %v81 = vld [vmem:[%s1 + $0x130] sm:$0xff]
    %v82 = vld [vmem:[%s1 + $0x138] sm:$0xff]
    %v83 = vld [vmem:[%s1 + $0x140] sm:$0xff]
    %v84 = vld [vmem:[%s1 + $0x148] sm:$0xff]
    %v85 = vld [vmem:[%s1 + $0x150] sm:$0xff]
    %v86 = vld [vmem:[%s1 + $0x158] sm:$0xff]
    %v87 = vld [vmem:[%s1 + $0x160] sm:$0xff]
    %v88 = vld [vmem:[%s1 + $0x168] sm:$0xff]
    %v89 = vld [vmem:[%s1 + $0x170] sm:$0xff]
    %v90 = vld [vmem:[%s1 + $0x178] sm:$0xff]
    %v91 = vld [vmem:[%s1 + $0x180] sm:$0xff]
    %v92 = vld [vmem:[%s1 + $0x188] sm:$0xff]
    %v93 = vld [vmem:[%s1 + $0x190] sm:$0xff]
    %v94 = vld [vmem:[%s1 + $0x198] sm:$0xff]
    %v95 = vld [vmem:[%s1 + $0x1a0] sm:$0xff]
    %v96 = vld [vmem:[%s1 + $0x1a8] sm:$0xff]
    %v97 = vld [vmem:[%s1 + $0x1b0] sm:$0xff]
    %v98 = vld [vmem:[%s1 + $0x1b8] sm:$0xff]
    %v99 = vld [vmem:[%s1 + $0x1c0] sm:$0xff]
    %v100 = vld [vmem:[%s1 + $0x1c8] sm:$0xff]
    %v101 = vld [vmem:[%s1 + $0x1d0] sm:$0xff]
    %v102 = vld [vmem:[%s1 + $0x1d8] sm:$0xff]
    %v103 = vld [vmem:[%s1 + $0x1e0] sm:$0xff]
    %v104 = vld [vmem:[%s1 + $0x1e8] sm:$0xff]
    %v105 = vld [vmem:[%s1 + $0x1f0] sm:$0xff]
    %v106 = vld [vmem:[%s1 + $0x1f8] sm:$0xff]
    %v107 = vld [vmem:[%s2] sm:$0xff]
    %v108 = vld [vmem:[%s2 + $0x8] sm:$0xff]
    %v109 = vld [vmem:[%s2 + $0x10] sm:$0xff]
    %v110 = vld [vmem:[%s2 + $0x18] sm:$0xff]
    %v111 = vld [vmem:[%s2 + $0x20] sm:$0xff]
    %v112 = vld [vmem:[%s2 + $0x28] sm:$0xff]
    %v113 = vld [vmem:[%s2 + $0x30] sm:$0xff]
    %v114 = vld [vmem:[%s2 + $0x38] sm:$0xff]
    %v115 = vld [vmem:[%s2 + $0x40] sm:$0xff]
    %v116 = vld [vmem:[%s2 + $0x48] sm:$0xff]
    %v117 = vld [vmem:[%s2 + $0x50] sm:$0xff]
    %v118 = vld [vmem:[%s2 + $0x58] sm:$0xff]
    %v119 = vld [vmem:[%s2 + $0x60] sm:$0xff]
    %v120 = vld [vmem:[%s2 + $0x68] sm:$0xff]
    %v121 = vld [vmem:[%s2 + $0x70] sm:$0xff]
    %v122 = vld [vmem:[%s2 + $0x78] sm:$0xff]
    %v123 = vld [vmem:[%s2 + $0x80] sm:$0xff]
    %v124 = vld [vmem:[%s2 + $0x88] sm:$0xff]
    %v125 = vld [vmem:[%s2 + $0x90] sm:$0xff]
    %v126 = vld [vmem:[%s2 + $0x98] sm:$0xff]
    %v127 = vld [vmem:[%s2 + $0xa0] sm:$0xff]
    %v128 = vld [vmem:[%s2 + $0xa8] sm:$0xff]
    %v129 = vld [vmem:[%s2 + $0xb0] sm:$0xff]
    %v130 = vld [vmem:[%s2 + $0xb8] sm:$0xff]
    %v131 = vld [vmem:[%s2 + $0xc0] sm:$0xff]
    %v132 = vld [vmem:[%s2 + $0xc8] sm:$0xff]
    %v133 = vld [vmem:[%s2 + $0xd0] sm:$0xff]
    %v134 = vld [vmem:[%s2 + $0xd8] sm:$0xff]
    %v135 = vld [vmem:[%s2 + $0xe0] sm:$0xff]
    %v136 = vld [vmem:[%s2 + $0xe8] sm:$0xff]
    %v137 = vld [vmem:[%s2 + $0xf0] sm:$0xff]
    %v138 = vld [vmem:[%s2 + $0xf8] sm:$0xff]
    %v139 = vld [vmem:[%s2 + $0x100] sm:$0xff]
    %v140 = vld [vmem:[%s2 + $0x108] sm:$0xff]
    %v141 = vld [vmem:[%s2 + $0x110] sm:$0xff]
    %v142 = vld [vmem:[%s2 + $0x118] sm:$0xff]
    %v143 = vld [vmem:[%s2 + $0x120] sm:$0xff]
    %v144 = vld [vmem:[%s2 + $0x128] sm:$0xff]
    %v145 = vld [vmem:[%s2 + $0x130] sm:$0xff]
    %v146 = vld [vmem:[%s2 + $0x138] sm:$0xff]
    %v147 = vld [vmem:[%s2 + $0x140] sm:$0xff]
    %v148 = vld [vmem:[%s2 + $0x148] sm:$0xff]
    %v149 = vld [vmem:[%s2 + $0x150] sm:$0xff]
    %v150 = vld [vmem:[%s2 + $0x158] sm:$0xff]
    %v151 = vld [vmem:[%s2 + $0x160] sm:$0xff]
    %v152 = vld [vmem:[%s2 + $0x168] sm:$0xff]
    %v153 = vld [vmem:[%s2 + $0x170] sm:$0xff]
    %v154 = vld [vmem:[%s2 + $0x178] sm:$0xff]
    %v155 = vld [vmem:[%s2 + $0x180] sm:$0xff]
    %v156 = vld [vmem:[%s2 + $0x188] sm:$0xff]
    %v157 = vld [vmem:[%s2 + $0x190] sm:$0xff]
    %v158 = vld [vmem:[%s2 + $0x198] sm:$0xff]
    %v159 = vld [vmem:[%s2 + $0x1a0] sm:$0xff]
    %v160 = vld [vmem:[%s2 + $0x1a8] sm:$0xff]
    %v161 = vld [vmem:[%s2 + $0x1b0] sm:$0xff]
    %v162 = vld [vmem:[%s2 + $0x1b8] sm:$0xff]
    %v163 = vld [vmem:[%s2 + $0x1c0] sm:$0xff]
    %v164 = vld [vmem:[%s2 + $0x1c8] sm:$0xff]
    %v165 = vld [vmem:[%s2 + $0x1d0] sm:$0xff]
    %v166 = vld [vmem:[%s2 + $0x1d8] sm:$0xff]
    %v167 = vld [vmem:[%s2 + $0x1e0] sm:$0xff]
    %v168 = vld [vmem:[%s2 + $0x1e8] sm:$0xff]
    %v169 = vld [vmem:[%s2 + $0x1f0] sm:$0xff]
    %v170 = vld [vmem:[%s2 + $0x1f8] sm:$0xff]
    %v171 = vld [vmem:[%s3] sm:$0xf]
    %v172 = vld [vmem:[%s4] sm:$0xf]
    %v173 = vld [vmem:[#allocation2] sm:$0xff]
    %v174 = vld [vmem:[#allocation4] sm:$0xff]
    %s175 = scalar_lea.vmem [#allocation2], 8
    %v176 = vld [vmem:[%s175] sm:$0xff]
    %s177 = scalar_lea.vmem [#allocation4], 8
    %v178 = vld [vmem:[%s177] sm:$0xff]
    %v179 = vld [vmem:[%s0] sm:$0xf]
    %v180 = vpack.c.bf16 %v173, %v173
    %v182 = vlaneseq
    %v183 = vshrl.u32 %v182, 7
    %v184 = vsub.s32 0, %v183
    %v185 = vrot.slane %v171, %v184
    %v186 = vlaneseq
    %v187 = vshrl.u32 %v186, 7
    %v188 = vsub.s32 1, %v187
    %v189 = vrot.slane %v171, %v188
    %v190 = vlaneseq
    %v191 = vshrl.u32 %v190, 7
    %v192 = vsub.s32 2, %v191
    %v193 = vrot.slane %v171, %v192
    %v194 = vlaneseq
    %v195 = vshrl.u32 %v194, 7
    %v196 = vsub.s32 3, %v195
    %v197 = vrot.slane %v171, %v196
    %v266 = vunpack.c.l.b16 %v43
    %v267 = vunpack.c.h.b16 %v43
    %v268 = vunpack.c.l.b16 %v44
    %v269 = vunpack.c.h.b16 %v44
    %v270 = vunpack.c.l.b16 %v45
    %v271 = vunpack.c.h.b16 %v45
    %v272 = vunpack.c.l.b16 %v46
    %v273 = vunpack.c.h.b16 %v46
    %v274 = vunpack.c.l.b16 %v47
    %v275 = vunpack.c.h.b16 %v47
    %v276 = vunpack.c.l.b16 %v48
    %v277 = vunpack.c.h.b16 %v48
    %v278 = vunpack.c.l.b16 %v49
    %v279 = vunpack.c.h.b16 %v49
    %v280 = vunpack.c.l.b16 %v50
    %v281 = vunpack.c.h.b16 %v50
    %v282 = vunpack.c.l.b16 %v51
    %v283 = vunpack.c.h.b16 %v51
    %v284 = vunpack.c.l.b16 %v52
    %v285 = vunpack.c.h.b16 %v52
    %v286 = vunpack.c.l.b16 %v53
    %v287 = vunpack.c.h.b16 %v53
    %v288 = vunpack.c.l.b16 %v54
    %v289 = vunpack.c.h.b16 %v54
    %v290 = vunpack.c.l.b16 %v55
    %v291 = vunpack.c.h.b16 %v55
    %v292 = vunpack.c.l.b16 %v56
    %v293 = vunpack.c.h.b16 %v56
    %v294 = vunpack.c.l.b16 %v57
    %v295 = vunpack.c.h.b16 %v57
    %v296 = vunpack.c.l.b16 %v58
    %v297 = vunpack.c.h.b16 %v58
    %v298 = vunpack.c.l.b16 %v59
    %v299 = vunpack.c.h.b16 %v59
    %v300 = vunpack.c.l.b16 %v60
    %v301 = vunpack.c.h.b16 %v60
    %v302 = vunpack.c.l.b16 %v61
    %v303 = vunpack.c.h.b16 %v61
    %v304 = vunpack.c.l.b16 %v62
    %v305 = vunpack.c.h.b16 %v62
    %v306 = vunpack.c.l.b16 %v63
    %v307 = vunpack.c.h.b16 %v63
    %v308 = vunpack.c.l.b16 %v64
    %v309 = vunpack.c.h.b16 %v64
    %v310 = vunpack.c.l.b16 %v65
    %v311 = vunpack.c.h.b16 %v65
    %v312 = vunpack.c.l.b16 %v66
    %v313 = vunpack.c.h.b16 %v66
    %v314 = vunpack.c.l.b16 %v67
    %v315 = vunpack.c.h.b16 %v67
    %v316 = vunpack.c.l.b16 %v68
    %v317 = vunpack.c.h.b16 %v68
    %v318 = vunpack.c.l.b16 %v69
    %v319 = vunpack.c.h.b16 %v69
    %v320 = vunpack.c.l.b16 %v70
    %v321 = vunpack.c.h.b16 %v70
    %v322 = vunpack.c.l.b16 %v71
    %v323 = vunpack.c.h.b16 %v71
    %v324 = vunpack.c.l.b16 %v72
    %v325 = vunpack.c.h.b16 %v72
    %v326 = vunpack.c.l.b16 %v73
    %v327 = vunpack.c.h.b16 %v73
    %v328 = vunpack.c.l.b16 %v74
    %v329 = vunpack.c.h.b16 %v74
    %v330 = vunpack.c.l.b16 %v75
    %v331 = vunpack.c.h.b16 %v75
    %v332 = vunpack.c.l.b16 %v76
    %v333 = vunpack.c.h.b16 %v76
    %v334 = vunpack.c.l.b16 %v77
    %v335 = vunpack.c.h.b16 %v77
    %v336 = vunpack.c.l.b16 %v78
    %v337 = vunpack.c.h.b16 %v78
    %v338 = vunpack.c.l.b16 %v79
    %v339 = vunpack.c.h.b16 %v79
    %v340 = vunpack.c.l.b16 %v80
    %v341 = vunpack.c.h.b16 %v80
    %v342 = vunpack.c.l.b16 %v81
    %v343 = vunpack.c.h.b16 %v81
    %v344 = vunpack.c.l.b16 %v82
    %v345 = vunpack.c.h.b16 %v82
    %v346 = vunpack.c.l.b16 %v83
    %v347 = vunpack.c.h.b16 %v83
    %v348 = vunpack.c.l.b16 %v84
    %v349 = vunpack.c.h.b16 %v84
    %v350 = vunpack.c.l.b16 %v85
    %v351 = vunpack.c.h.b16 %v85
    %v352 = vunpack.c.l.b16 %v86
    %v353 = vunpack.c.h.b16 %v86
    %v354 = vunpack.c.l.b16 %v87
    %v355 = vunpack.c.h.b16 %v87
    %v356 = vunpack.c.l.b16 %v88
    %v357 = vunpack.c.h.b16 %v88
    %v358 = vunpack.c.l.b16 %v89
    %v359 = vunpack.c.h.b16 %v89
    %v360 = vunpack.c.l.b16 %v90
    %v361 = vunpack.c.h.b16 %v90
    %v362 = vunpack.c.l.b16 %v91
    %v363 = vunpack.c.h.b16 %v91
    %v364 = vunpack.c.l.b16 %v92
    %v365 = vunpack.c.h.b16 %v92
    %v366 = vunpack.c.l.b16 %v93
    %v367 = vunpack.c.h.b16 %v93
    %v368 = vunpack.c.l.b16 %v94
    %v369 = vunpack.c.h.b16 %v94
    %v370 = vunpack.c.l.b16 %v95
    %v371 = vunpack.c.h.b16 %v95
    %v372 = vunpack.c.l.b16 %v96
    %v373 = vunpack.c.h.b16 %v96
    %v374 = vunpack.c.l.b16 %v97
    %v375 = vunpack.c.h.b16 %v97
    %v376 = vunpack.c.l.b16 %v98
    %v377 = vunpack.c.h.b16 %v98
    %v378 = vunpack.c.l.b16 %v99
    %v379 = vunpack.c.h.b16 %v99
    %v380 = vunpack.c.l.b16 %v100
    %v381 = vunpack.c.h.b16 %v100
    %v382 = vunpack.c.l.b16 %v101
    %v383 = vunpack.c.h.b16 %v101
    %v384 = vunpack.c.l.b16 %v102
    %v385 = vunpack.c.h.b16 %v102
    %v386 = vunpack.c.l.b16 %v103
    %v387 = vunpack.c.h.b16 %v103
    %v388 = vunpack.c.l.b16 %v104
    %v389 = vunpack.c.h.b16 %v104
    %v390 = vunpack.c.l.b16 %v105
    %v391 = vunpack.c.h.b16 %v105
    %v392 = vunpack.c.l.b16 %v106
    %v393 = vunpack.c.h.b16 %v106
    %v394 = vpack.c.b16 %v270, %v266
    %v395 = vpack.c.b16 %v271, %v267
    %v396 = vpack.c.b16 %v272, %v268
    %v397 = vpack.c.b16 %v273, %v269
    %v398 = vpack.c.b16 %v278, %v274
    %v399 = vpack.c.b16 %v279, %v275
    %v400 = vpack.c.b16 %v280, %v276
    %v401 = vpack.c.b16 %v281, %v277
    %v402 = vpack.c.b16 %v286, %v282
    %v403 = vpack.c.b16 %v287, %v283
    %v404 = vpack.c.b16 %v288, %v284
    %v405 = vpack.c.b16 %v289, %v285
    %v406 = vpack.c.b16 %v294, %v290
    %v407 = vpack.c.b16 %v295, %v291
    %v408 = vpack.c.b16 %v296, %v292
    %v409 = vpack.c.b16 %v297, %v293
    %v410 = vpack.c.b16 %v302, %v298
    %v411 = vpack.c.b16 %v303, %v299
    %v412 = vpack.c.b16 %v304, %v300
    %v413 = vpack.c.b16 %v305, %v301
    %v414 = vpack.c.b16 %v310, %v306
    %v415 = vpack.c.b16 %v311, %v307
    %v416 = vpack.c.b16 %v312, %v308
    %v417 = vpack.c.b16 %v313, %v309
    %v418 = vpack.c.b16 %v318, %v314
    %v419 = vpack.c.b16 %v319, %v315
    %v420 = vpack.c.b16 %v320, %v316
    %v421 = vpack.c.b16 %v321, %v317
    %v422 = vpack.c.b16 %v326, %v322
    %v423 = vpack.c.b16 %v327, %v323
    %v424 = vpack.c.b16 %v328, %v324
    %v425 = vpack.c.b16 %v329, %v325
    %v426 = vpack.c.b16 %v334, %v330
    %v427 = vpack.c.b16 %v335, %v331
    %v428 = vpack.c.b16 %v336, %v332
    %v429 = vpack.c.b16 %v337, %v333
    %v430 = vpack.c.b16 %v342, %v338
    %v431 = vpack.c.b16 %v343, %v339
    %v432 = vpack.c.b16 %v344, %v340
    %v433 = vpack.c.b16 %v345, %v341
    %v434 = vpack.c.b16 %v350, %v346
    %v435 = vpack.c.b16 %v351, %v347
    %v436 = vpack.c.b16 %v352, %v348
    %v437 = vpack.c.b16 %v353, %v349
    %v438 = vpack.c.b16 %v358, %v354
    %v439 = vpack.c.b16 %v359, %v355
    %v440 = vpack.c.b16 %v360, %v356
    %v441 = vpack.c.b16 %v361, %v357
    %v442 = vpack.c.b16 %v366, %v362
    %v443 = vpack.c.b16 %v367, %v363
    %v444 = vpack.c.b16 %v368, %v364
    %v445 = vpack.c.b16 %v369, %v365
    %v446 = vpack.c.b16 %v374, %v370
    %v447 = vpack.c.b16 %v375, %v371
    %v448 = vpack.c.b16 %v376, %v372
    %v449 = vpack.c.b16 %v377, %v373
    %v450 = vpack.c.b16 %v382, %v378
    %v451 = vpack.c.b16 %v383, %v379
    %v452 = vpack.c.b16 %v384, %v380
    %v453 = vpack.c.b16 %v385, %v381
    %v454 = vpack.c.b16 %v390, %v386
    %v455 = vpack.c.b16 %v391, %v387
    %v456 = vpack.c.b16 %v392, %v388
    %v457 = vpack.c.b16 %v393, %v389
    %522 = vmatprep.subr.bf16.mxu0 %v395
    %523 = vmatpush1.bf16.msra.mxu0 %v394
    %524 = vmatprep.subr.bf16.mxu0 %v399
    %525 = vmatpush1.bf16.msra.mxu0 %v398
    %526 = vmatprep.subr.bf16.mxu0 %v403
    %527 = vmatpush1.bf16.msra.mxu0 %v402
    %528 = vmatprep.subr.bf16.mxu0 %v407
    %529 = vmatpush1.bf16.msra.mxu0 %v406
    %530 = vmatprep.subr.bf16.mxu0 %v411
    %531 = vmatpush1.bf16.msra.mxu0 %v410
    %532 = vmatprep.subr.bf16.mxu0 %v415
    %533 = vmatpush1.bf16.msra.mxu0 %v414
    %534 = vmatprep.subr.bf16.mxu0 %v419
    %535 = vmatpush1.bf16.msra.mxu0 %v418
    %536 = vmatprep.subr.bf16.mxu0 %v423
    %537 = vmatpush1.bf16.msra.mxu0 %v422
    %538 = vmatprep.subr.bf16.mxu0 %v427
    %539 = vmatpush1.bf16.msra.mxu0 %v426
    %540 = vmatprep.subr.bf16.mxu0 %v431
    %541 = vmatpush1.bf16.msra.mxu0 %v430
    %542 = vmatprep.subr.bf16.mxu0 %v435
    %543 = vmatpush1.bf16.msra.mxu0 %v434
    %544 = vmatprep.subr.bf16.mxu0 %v439
    %545 = vmatpush1.bf16.msra.mxu0 %v438
    %546 = vmatprep.subr.bf16.mxu0 %v443
    %547 = vmatpush1.bf16.msra.mxu0 %v442
    %548 = vmatprep.subr.bf16.mxu0 %v447
    %549 = vmatpush1.bf16.msra.mxu0 %v446
    %550 = vmatprep.subr.bf16.mxu0 %v451
    %551 = vmatpush1.bf16.msra.mxu0 %v450
    %552 = vmatprep.subr.bf16.mxu0 %v455
    %553 = vmatpush1.bf16.msra.mxu0 %v454
    %554 = vmatprep.mubr.bf16.mxu0 %v180
    %555 = vmatmul.mubr.bf16.gmra.mrb[0].mxu0 %v179
    %v556 = vpop.f32.mrb[0].mxu0
    %v557 = vadd.f32 %v185, %v556
    %v558 = vpop.f32.mrb[0].mxu0
    %v559 = vadd.f32 %v189, %v558
    %v560 = vpop.f32.mrb[0].mxu0
    %v561 = vpop.f32.mrb[0].mxu0
    %562 = vdwg.mxu0
    %563 = vmatprep.subr.bf16.mxu0 %v397
    %564 = vmatpush1.bf16.msra.mxu0 %v396
    %565 = vmatprep.subr.bf16.mxu0 %v401
    %566 = vmatpush1.bf16.msra.mxu0 %v400
    %567 = vmatprep.subr.bf16.mxu0 %v405
    %568 = vmatpush1.bf16.msra.mxu0 %v404
    %569 = vmatprep.subr.bf16.mxu0 %v409
    %570 = vmatpush1.bf16.msra.mxu0 %v408
    %571 = vmatprep.subr.bf16.mxu0 %v413
    %572 = vmatpush1.bf16.msra.mxu0 %v412
    %573 = vmatprep.subr.bf16.mxu0 %v417
    %574 = vmatpush1.bf16.msra.mxu0 %v416
    %575 = vmatprep.subr.bf16.mxu0 %v421
    %576 = vmatpush1.bf16.msra.mxu0 %v420
    %577 = vmatprep.subr.bf16.mxu0 %v425
    %578 = vmatpush1.bf16.msra.mxu0 %v424
    %579 = vmatprep.subr.bf16.mxu0 %v429
    %580 = vmatpush1.bf16.msra.mxu0 %v428
    %581 = vmatprep.subr.bf16.mxu0 %v433
    %582 = vmatpush1.bf16.msra.mxu0 %v432
    %583 = vmatprep.subr.bf16.mxu0 %v437
    %584 = vmatpush1.bf16.msra.mxu0 %v436
    %585 = vmatprep.subr.bf16.mxu0 %v441
    %586 = vmatpush1.bf16.msra.mxu0 %v440
    %587 = vmatprep.subr.bf16.mxu0 %v445
    %588 = vmatpush1.bf16.msra.mxu0 %v444
    %589 = vmatprep.subr.bf16.mxu0 %v449
    %590 = vmatpush1.bf16.msra.mxu0 %v448
    %591 = vmatprep.subr.bf16.mxu0 %v453
    %592 = vmatpush1.bf16.msra.mxu0 %v452
    %593 = vmatprep.subr.bf16.mxu0 %v457
    %594 = vmatpush1.bf16.msra.mxu0 %v456
    %595 = vmatprep.mubr.bf16.mxu0 %v180
    %596 = vmatmul.mubr.bf16.gmra.mrb[0].mxu0 %v179
    %v597 = vpop.f32.mrb[0].mxu0
    %v598 = vadd.f32 %v193, %v597
    %v599 = vpop.f32.mrb[0].mxu0
    %v600 = vadd.f32 %v197, %v599
    %v601 = vpop.f32.mrb[0].mxu0
    %v602 = vpop.f32.mrb[0].mxu0
    %603 = vdwg.mxu0
    %v604 = vxor.u32 %v557, 2147483648
    %v605 = vxor.u32 %v559, 2147483648
    %v606 = vxor.u32 %v598, 2147483648
    %v607 = vmul.f32 %v604, 1.442695
    %v608 = vpow.pop %v607
    %v609 = vmul.f32 %v605, 1.442695
    %v610 = vpow.pop %v609
    %v611 = vmul.f32 %v606, 1.442695
    %v612 = vpow.pop %v611
    %v613 = vadd.f32 %v608, 1.0
    %v614 = vadd.f32 %v610, 1.0
    %v615 = vadd.f32 %v612, 1.0
    %v616 = vrcp.pop %v613
    %v617 = vmul.f32 1.0, %v616
    %v618 = vrcp.pop %v614
    %v619 = vmul.f32 1.0, %v618
    %v620 = vrcp.pop %v615
    %v621 = vmul.f32 1.0, %v620
    %v622 = vtanh.pop %v600
    %v623 = vmul.f32 %v619, %v174
    %v624 = vmul.f32 %v617, %v622
    %v625 = vadd.f32 %v623, %v624
    %v626 = vtanh.pop %v625
    %v627 = vmul.f32 %v621, %v626
    %v628 = vpack.c.bf16 %v627, %v627
    %v629 = vpack.c.bf16 %v176, %v176
    %v631 = vlaneseq
    %v632 = vshrl.u32 %v631, 7
    %v633 = vsub.s32 0, %v632
    %v634 = vrot.slane %v172, %v633
    %v635 = vlaneseq
    %v636 = vshrl.u32 %v635, 7
    %v637 = vsub.s32 1, %v636
    %v638 = vrot.slane %v172, %v637
    %v639 = vlaneseq
    %v640 = vshrl.u32 %v639, 7
    %v641 = vsub.s32 2, %v640
    %v642 = vrot.slane %v172, %v641
    %v643 = vlaneseq
    %v644 = vshrl.u32 %v643, 7
    %v645 = vsub.s32 3, %v644
    %v646 = vrot.slane %v172, %v645
    %v715 = vunpack.c.l.b16 %v107
    %v716 = vunpack.c.h.b16 %v107
    %v717 = vunpack.c.l.b16 %v108
    %v718 = vunpack.c.h.b16 %v108
    %v719 = vunpack.c.l.b16 %v109
    %v720 = vunpack.c.h.b16 %v109
    %v721 = vunpack.c.l.b16 %v110
    %v722 = vunpack.c.h.b16 %v110
    %v723 = vunpack.c.l.b16 %v111
    %v724 = vunpack.c.h.b16 %v111
    %v725 = vunpack.c.l.b16 %v112
    %v726 = vunpack.c.h.b16 %v112
    %v727 = vunpack.c.l.b16 %v113
    %v728 = vunpack.c.h.b16 %v113
    %v729 = vunpack.c.l.b16 %v114
    %v730 = vunpack.c.h.b16 %v114
    %v731 = vunpack.c.l.b16 %v115
    %v732 = vunpack.c.h.b16 %v115
    %v733 = vunpack.c.l.b16 %v116
    %v734 = vunpack.c.h.b16 %v116
    %v735 = vunpack.c.l.b16 %v117
    %v736 = vunpack.c.h.b16 %v117
    %v737 = vunpack.c.l.b16 %v118
    %v738 = vunpack.c.h.b16 %v118
    %v739 = vunpack.c.l.b16 %v119
    %v740 = vunpack.c.h.b16 %v119
    %v741 = vunpack.c.l.b16 %v120
    %v742 = vunpack.c.h.b16 %v120
    %v743 = vunpack.c.l.b16 %v121
    %v744 = vunpack.c.h.b16 %v121
    %v745 = vunpack.c.l.b16 %v122
    %v746 = vunpack.c.h.b16 %v122
    %v747 = vunpack.c.l.b16 %v123
    %v748 = vunpack.c.h.b16 %v123
    %v749 = vunpack.c.l.b16 %v124
    %v750 = vunpack.c.h.b16 %v124
    %v751 = vunpack.c.l.b16 %v125
    %v752 = vunpack.c.h.b16 %v125
    %v753 = vunpack.c.l.b16 %v126
    %v754 = vunpack.c.h.b16 %v126
    %v755 = vunpack.c.l.b16 %v127
    %v756 = vunpack.c.h.b16 %v127
    %v757 = vunpack.c.l.b16 %v128
    %v758 = vunpack.c.h.b16 %v128
    %v759 = vunpack.c.l.b16 %v129
    %v760 = vunpack.c.h.b16 %v129
    %v761 = vunpack.c.l.b16 %v130
    %v762 = vunpack.c.h.b16 %v130
    %v763 = vunpack.c.l.b16 %v131
    %v764 = vunpack.c.h.b16 %v131
    %v765 = vunpack.c.l.b16 %v132
    %v766 = vunpack.c.h.b16 %v132
    %v767 = vunpack.c.l.b16 %v133
    %v768 = vunpack.c.h.b16 %v133
    %v769 = vunpack.c.l.b16 %v134
    %v770 = vunpack.c.h.b16 %v134
    %v771 = vunpack.c.l.b16 %v135
    %v772 = vunpack.c.h.b16 %v135
    %v773 = vunpack.c.l.b16 %v136
    %v774 = vunpack.c.h.b16 %v136
    %v775 = vunpack.c.l.b16 %v137
    %v776 = vunpack.c.h.b16 %v137
    %v777 = vunpack.c.l.b16 %v138
    %v778 = vunpack.c.h.b16 %v138
    %v779 = vunpack.c.l.b16 %v139
    %v780 = vunpack.c.h.b16 %v139
    %v781 = vunpack.c.l.b16 %v140
    %v782 = vunpack.c.h.b16 %v140
    %v783 = vunpack.c.l.b16 %v141
    %v784 = vunpack.c.h.b16 %v141
    %v785 = vunpack.c.l.b16 %v142
    %v786 = vunpack.c.h.b16 %v142
    %v787 = vunpack.c.l.b16 %v143
    %v788 = vunpack.c.h.b16 %v143
    %v789 = vunpack.c.l.b16 %v144
    %v790 = vunpack.c.h.b16 %v144
    %v791 = vunpack.c.l.b16 %v145
    %v792 = vunpack.c.h.b16 %v145
    %v793 = vunpack.c.l.b16 %v146
    %v794 = vunpack.c.h.b16 %v146
    %v795 = vunpack.c.l.b16 %v147
    %v796 = vunpack.c.h.b16 %v147
    %v797 = vunpack.c.l.b16 %v148
    %v798 = vunpack.c.h.b16 %v148
    %v799 = vunpack.c.l.b16 %v149
    %v800 = vunpack.c.h.b16 %v149
    %v801 = vunpack.c.l.b16 %v150
    %v802 = vunpack.c.h.b16 %v150
    %v803 = vunpack.c.l.b16 %v151
    %v804 = vunpack.c.h.b16 %v151
    %v805 = vunpack.c.l.b16 %v152
    %v806 = vunpack.c.h.b16 %v152
    %v807 = vunpack.c.l.b16 %v153
    %v808 = vunpack.c.h.b16 %v153
    %v809 = vunpack.c.l.b16 %v154
    %v810 = vunpack.c.h.b16 %v154
    %v811 = vunpack.c.l.b16 %v155
    %v812 = vunpack.c.h.b16 %v155
    %v813 = vunpack.c.l.b16 %v156
    %v814 = vunpack.c.h.b16 %v156
    %v815 = vunpack.c.l.b16 %v157
    %v816 = vunpack.c.h.b16 %v157
    %v817 = vunpack.c.l.b16 %v158
    %v818 = vunpack.c.h.b16 %v158
    %v819 = vunpack.c.l.b16 %v159
    %v820 = vunpack.c.h.b16 %v159
    %v821 = vunpack.c.l.b16 %v160
    %v822 = vunpack.c.h.b16 %v160
    %v823 = vunpack.c.l.b16 %v161
    %v824 = vunpack.c.h.b16 %v161
    %v825 = vunpack.c.l.b16 %v162
    %v826 = vunpack.c.h.b16 %v162
    %v827 = vunpack.c.l.b16 %v163
    %v828 = vunpack.c.h.b16 %v163
    %v829 = vunpack.c.l.b16 %v164
    %v830 = vunpack.c.h.b16 %v164
    %v831 = vunpack.c.l.b16 %v165
    %v832 = vunpack.c.h.b16 %v165
    %v833 = vunpack.c.l.b16 %v166
    %v834 = vunpack.c.h.b16 %v166
    %v835 = vunpack.c.l.b16 %v167
    %v836 = vunpack.c.h.b16 %v167
    %v837 = vunpack.c.l.b16 %v168
    %v838 = vunpack.c.h.b16 %v168
    %v839 = vunpack.c.l.b16 %v169
    %v840 = vunpack.c.h.b16 %v169
    %v841 = vunpack.c.l.b16 %v170
    %v842 = vunpack.c.h.b16 %v170
    %v843 = vpack.c.b16 %v719, %v715
    %v844 = vpack.c.b16 %v720, %v716
    %v845 = vpack.c.b16 %v721, %v717
    %v846 = vpack.c.b16 %v722, %v718
    %v847 = vpack.c.b16 %v727, %v723
    %v848 = vpack.c.b16 %v728, %v724
    %v849 = vpack.c.b16 %v729, %v725
    %v850 = vpack.c.b16 %v730, %v726
    %v851 = vpack.c.b16 %v735, %v731
    %v852 = vpack.c.b16 %v736, %v732
    %v853 = vpack.c.b16 %v737, %v733
    %v854 = vpack.c.b16 %v738, %v734
    %v855 = vpack.c.b16 %v743, %v739
    %v856 = vpack.c.b16 %v744, %v740
    %v857 = vpack.c.b16 %v745, %v741
    %v858 = vpack.c.b16 %v746, %v742
    %v859 = vpack.c.b16 %v751, %v747
    %v860 = vpack.c.b16 %v752, %v748
    %v861 = vpack.c.b16 %v753, %v749
    %v862 = vpack.c.b16 %v754, %v750
    %v863 = vpack.c.b16 %v759, %v755
    %v864 = vpack.c.b16 %v760, %v756
    %v865 = vpack.c.b16 %v761, %v757
    %v866 = vpack.c.b16 %v762, %v758
    %v867 = vpack.c.b16 %v767, %v763
    %v868 = vpack.c.b16 %v768, %v764
    %v869 = vpack.c.b16 %v769, %v765
    %v870 = vpack.c.b16 %v770, %v766
    %v871 = vpack.c.b16 %v775, %v771
    %v872 = vpack.c.b16 %v776, %v772
    %v873 = vpack.c.b16 %v777, %v773
    %v874 = vpack.c.b16 %v778, %v774
    %v875 = vpack.c.b16 %v783, %v779
    %v876 = vpack.c.b16 %v784, %v780
    %v877 = vpack.c.b16 %v785, %v781
    %v878 = vpack.c.b16 %v786, %v782
    %v879 = vpack.c.b16 %v791, %v787
    %v880 = vpack.c.b16 %v792, %v788
    %v881 = vpack.c.b16 %v793, %v789
    %v882 = vpack.c.b16 %v794, %v790
    %v883 = vpack.c.b16 %v799, %v795
    %v884 = vpack.c.b16 %v800, %v796
    %v885 = vpack.c.b16 %v801, %v797
    %v886 = vpack.c.b16 %v802, %v798
    %v887 = vpack.c.b16 %v807, %v803
    %v888 = vpack.c.b16 %v808, %v804
    %v889 = vpack.c.b16 %v809, %v805
    %v890 = vpack.c.b16 %v810, %v806
    %v891 = vpack.c.b16 %v815, %v811
    %v892 = vpack.c.b16 %v816, %v812
    %v893 = vpack.c.b16 %v817, %v813
    %v894 = vpack.c.b16 %v818, %v814
    %v895 = vpack.c.b16 %v823, %v819
    %v896 = vpack.c.b16 %v824, %v820
    %v897 = vpack.c.b16 %v825, %v821
    %v898 = vpack.c.b16 %v826, %v822
    %v899 = vpack.c.b16 %v831, %v827
    %v900 = vpack.c.b16 %v832, %v828
    %v901 = vpack.c.b16 %v833, %v829
    %v902 = vpack.c.b16 %v834, %v830
    %v903 = vpack.c.b16 %v839, %v835
    %v904 = vpack.c.b16 %v840, %v836
    %v905 = vpack.c.b16 %v841, %v837
    %v906 = vpack.c.b16 %v842, %v838
    %971 = vmatprep.subr.bf16.mxu0 %v844
    %972 = vmatpush1.bf16.msra.mxu0 %v843
    %973 = vmatprep.subr.bf16.mxu0 %v848
    %974 = vmatpush1.bf16.msra.mxu0 %v847
    %975 = vmatprep.subr.bf16.mxu0 %v852
    %976 = vmatpush1.bf16.msra.mxu0 %v851
    %977 = vmatprep.subr.bf16.mxu0 %v856
    %978 = vmatpush1.bf16.msra.mxu0 %v855
    %979 = vmatprep.subr.bf16.mxu0 %v860
    %980 = vmatpush1.bf16.msra.mxu0 %v859
    %981 = vmatprep.subr.bf16.mxu0 %v864
    %982 = vmatpush1.bf16.msra.mxu0 %v863
    %983 = vmatprep.subr.bf16.mxu0 %v868
    %984 = vmatpush1.bf16.msra.mxu0 %v867
    %985 = vmatprep.subr.bf16.mxu0 %v872
    %986 = vmatpush1.bf16.msra.mxu0 %v871
    %987 = vmatprep.subr.bf16.mxu0 %v876
    %988 = vmatpush1.bf16.msra.mxu0 %v875
    %989 = vmatprep.subr.bf16.mxu0 %v880
    %990 = vmatpush1.bf16.msra.mxu0 %v879
    %991 = vmatprep.subr.bf16.mxu0 %v884
    %992 = vmatpush1.bf16.msra.mxu0 %v883
    %993 = vmatprep.subr.bf16.mxu0 %v888
    %994 = vmatpush1.bf16.msra.mxu0 %v887
    %995 = vmatprep.subr.bf16.mxu0 %v892
    %996 = vmatpush1.bf16.msra.mxu0 %v891
    %997 = vmatprep.subr.bf16.mxu0 %v896
    %998 = vmatpush1.bf16.msra.mxu0 %v895
    %999 = vmatprep.subr.bf16.mxu0 %v900
    %1000 = vmatpush1.bf16.msra.mxu0 %v899
    %1001 = vmatprep.subr.bf16.mxu0 %v904
    %1002 = vmatpush1.bf16.msra.mxu0 %v903
    %1003 = vmatprep.mubr.bf16.mxu0 %v629
    %1004 = vmatmul.mubr.bf16.gmra.mrb[0].mxu0 %v628
    %v1005 = vpop.f32.mrb[0].mxu0
    %v1006 = vadd.f32 %v634, %v1005
    %v1007 = vpop.f32.mrb[0].mxu0
    %v1008 = vadd.f32 %v638, %v1007
    %v1009 = vpop.f32.mrb[0].mxu0
    %v1010 = vpop.f32.mrb[0].mxu0
    %1011 = vdwg.mxu0
    %1012 = vmatprep.subr.bf16.mxu0 %v846
    %1013 = vmatpush1.bf16.msra.mxu0 %v845
    %1014 = vmatprep.subr.bf16.mxu0 %v850
    %1015 = vmatpush1.bf16.msra.mxu0 %v849
    %1016 = vmatprep.subr.bf16.mxu0 %v854
    %1017 = vmatpush1.bf16.msra.mxu0 %v853
    %1018 = vmatprep.subr.bf16.mxu0 %v858
    %1019 = vmatpush1.bf16.msra.mxu0 %v857
    %1020 = vmatprep.subr.bf16.mxu0 %v862
    %1021 = vmatpush1.bf16.msra.mxu0 %v861
    %1022 = vmatprep.subr.bf16.mxu0 %v866
    %1023 = vmatpush1.bf16.msra.mxu0 %v865
    %1024 = vmatprep.subr.bf16.mxu0 %v870
    %1025 = vmatpush1.bf16.msra.mxu0 %v869
    %1026 = vmatprep.subr.bf16.mxu0 %v874
    %1027 = vmatpush1.bf16.msra.mxu0 %v873
    %1028 = vmatprep.subr.bf16.mxu0 %v878
    %1029 = vmatpush1.bf16.msra.mxu0 %v877
    %1030 = vmatprep.subr.bf16.mxu0 %v882
    %1031 = vmatpush1.bf16.msra.mxu0 %v881
    %1032 = vmatprep.subr.bf16.mxu0 %v886
    %1033 = vmatpush1.bf16.msra.mxu0 %v885
    %1034 = vmatprep.subr.bf16.mxu0 %v890
    %1035 = vmatpush1.bf16.msra.mxu0 %v889
    %1036 = vmatprep.subr.bf16.mxu0 %v894
    %1037 = vmatpush1.bf16.msra.mxu0 %v893
    %1038 = vmatprep.subr.bf16.mxu0 %v898
    %1039 = vmatpush1.bf16.msra.mxu0 %v897
    %1040 = vmatprep.subr.bf16.mxu0 %v902
    %1041 = vmatpush1.bf16.msra.mxu0 %v901
    %1042 = vmatprep.subr.bf16.mxu0 %v906
    %1043 = vmatpush1.bf16.msra.mxu0 %v905
    %1044 = vmatprep.mubr.bf16.mxu0 %v629
    %1045 = vmatmul.mubr.bf16.gmra.mrb[0].mxu0 %v628
    %v1046 = vpop.f32.mrb[0].mxu0
    %v1047 = vadd.f32 %v642, %v1046
    %v1048 = vpop.f32.mrb[0].mxu0
    %v1049 = vadd.f32 %v646, %v1048
    %v1050 = vpop.f32.mrb[0].mxu0
    %v1051 = vpop.f32.mrb[0].mxu0
    %1052 = vdwg.mxu0
    %v1053 = vxor.u32 %v1006, 2147483648
    %v1054 = vxor.u32 %v1008, 2147483648
    %v1055 = vxor.u32 %v1047, 2147483648
    %v1056 = vmul.f32 %v1053, 1.442695
    %v1057 = vpow.pop %v1056
    %v1058 = vmul.f32 %v1054, 1.442695
    %v1059 = vpow.pop %v1058
    %v1060 = vmul.f32 %v1055, 1.442695
    %v1061 = vpow.pop %v1060
    %v1062 = vadd.f32 %v1057, 1.0
    %v1063 = vadd.f32 %v1059, 1.0
    %v1064 = vadd.f32 %v1061, 1.0
    %v1065 = vrcp.pop %v1062
    %v1066 = vmul.f32 1.0, %v1065
    %v1067 = vrcp.pop %v1063
    %v1068 = vmul.f32 1.0, %v1067
    %v1069 = vrcp.pop %v1064
    %v1070 = vmul.f32 1.0, %v1069
    %v1071 = vtanh.pop %v1049
    %v1072 = vmul.f32 %v1068, %v178
    %v1073 = vmul.f32 %v1066, %v1071
    %v1074 = vadd.f32 %v1072, %v1073
    %v1075 = vtanh.pop %v1074
    %v1076 = vmul.f32 %v1070, %v1075
    %v1077 = vpack.c.bf16 %v1076, %v1076
    %1078 = vst [vmem:[%s7] sm:$0xf] %v1077
    %s1079 = scalar_lea.vmem %s0, 4
    %v1080 = vld [vmem:[%s1079] sm:$0xf]
    %1081 = vmatprep.subr.bf16.mxu0 %v395
    %1082 = vmatpush1.bf16.msra.mxu0 %v394
    %1083 = vmatprep.subr.bf16.mxu0 %v399
    %1084 = vmatpush1.bf16.msra.mxu0 %v398
    %1085 = vmatprep.subr.bf16.mxu0 %v403
    %1086 = vmatpush1.bf16.msra.mxu0 %v402
    %1087 = vmatprep.subr.bf16.mxu0 %v407
    %1088 = vmatpush1.bf16.msra.mxu0 %v406
    %1089 = vmatprep.subr.bf16.mxu0 %v411
    %1090 = vmatpush1.bf16.msra.mxu0 %v410
    %1091 = vmatprep.subr.bf16.mxu0 %v415
    %1092 = vmatpush1.bf16.msra.mxu0 %v414
    %1093 = vmatprep.subr.bf16.mxu0 %v419
    %1094 = vmatpush1.bf16.msra.mxu0 %v418
    %1095 = vmatprep.subr.bf16.mxu0 %v423
    %1096 = vmatpush1.bf16.msra.mxu0 %v422
    %1097 = vmatprep.subr.bf16.mxu0 %v427
    %1098 = vmatpush1.bf16.msra.mxu0 %v426
    %1099 = vmatprep.subr.bf16.mxu0 %v431
    %1100 = vmatpush1.bf16.msra.mxu0 %v430
    %1101 = vmatprep.subr.bf16.mxu0 %v435
    %1102 = vmatpush1.bf16.msra.mxu0 %v434
    %1103 = vmatprep.subr.bf16.mxu0 %v439
    %1104 = vmatpush1.bf16.msra.mxu0 %v438
    %1105 = vmatprep.subr.bf16.mxu0 %v443
    %1106 = vmatpush1.bf16.msra.mxu0 %v442
    %1107 = vmatprep.subr.bf16.mxu0 %v447
    %1108 = vmatpush1.bf16.msra.mxu0 %v446
    %1109 = vmatprep.subr.bf16.mxu0 %v451
    %1110 = vmatpush1.bf16.msra.mxu0 %v450
    %1111 = vmatprep.subr.bf16.mxu0 %v455
    %1112 = vmatpush1.bf16.msra.mxu0 %v454
    %1113 = vmatprep.mubr.bf16.mxu0 %v628
    %1114 = vmatmul.mubr.bf16.gmra.mrb[0].mxu0 %v1080
    %v1115 = vpop.f32.mrb[0].mxu0
    %v1116 = vadd.f32 %v185, %v1115
    %v1117 = vpop.f32.mrb[0].mxu0
    %v1118 = vadd.f32 %v189, %v1117
    %v1119 = vpop.f32.mrb[0].mxu0
    %v1120 = vpop.f32.mrb[0].mxu0
    %1121 = vdwg.mxu0
    %1122 = vmatprep.subr.bf16.mxu0 %v397
    %1123 = vmatpush1.bf16.msra.mxu0 %v396
    %1124 = vmatprep.subr.bf16.mxu0 %v401
    %1125 = vmatpush1.bf16.msra.mxu0 %v400
    %1126 = vmatprep.subr.bf16.mxu0 %v405
    %1127 = vmatpush1.bf16.msra.mxu0 %v404
    %1128 = vmatprep.subr.bf16.mxu0 %v409
    %1129 = vmatpush1.bf16.msra.mxu0 %v408
    %1130 = vmatprep.subr.bf16.mxu0 %v413
    %1131 = vmatpush1.bf16.msra.mxu0 %v412
    %1132 = vmatprep.subr.bf16.mxu0 %v417
    %1133 = vmatpush1.bf16.msra.mxu0 %v416
    %1134 = vmatprep.subr.bf16.mxu0 %v421
    %1135 = vmatpush1.bf16.msra.mxu0 %v420
    %1136 = vmatprep.subr.bf16.mxu0 %v425
    %1137 = vmatpush1.bf16.msra.mxu0 %v424
    %1138 = vmatprep.subr.bf16.mxu0 %v429
    %1139 = vmatpush1.bf16.msra.mxu0 %v428
    %1140 = vmatprep.subr.bf16.mxu0 %v433
    %1141 = vmatpush1.bf16.msra.mxu0 %v432
    %1142 = vmatprep.subr.bf16.mxu0 %v437
    %1143 = vmatpush1.bf16.msra.mxu0 %v436
    %1144 = vmatprep.subr.bf16.mxu0 %v441
    %1145 = vmatpush1.bf16.msra.mxu0 %v440
    %1146 = vmatprep.subr.bf16.mxu0 %v445
    %1147 = vmatpush1.bf16.msra.mxu0 %v444
    %1148 = vmatprep.subr.bf16.mxu0 %v449
    %1149 = vmatpush1.bf16.msra.mxu0 %v448
    %1150 = vmatprep.subr.bf16.mxu0 %v453
    %1151 = vmatpush1.bf16.msra.mxu0 %v452
    %1152 = vmatprep.subr.bf16.mxu0 %v457
    %1153 = vmatpush1.bf16.msra.mxu0 %v456
    %1154 = vmatprep.mubr.bf16.mxu0 %v628
    %1155 = vmatmul.mubr.bf16.gmra.mrb[0].mxu0 %v1080
    %v1156 = vpop.f32.mrb[0].mxu0
    %v1157 = vadd.f32 %v193, %v1156
    %v1158 = vpop.f32.mrb[0].mxu0
    %v1159 = vadd.f32 %v197, %v1158
    %v1160 = vpop.f32.mrb[0].mxu0
    %v1161 = vpop.f32.mrb[0].mxu0
    %1162 = vdwg.mxu0
    %v1163 = vxor.u32 %v1116, 2147483648
    %v1164 = vxor.u32 %v1118, 2147483648
    %v1165 = vxor.u32 %v1157, 2147483648
    %v1166 = vmul.f32 %v1163, 1.442695
    %v1167 = vpow.pop %v1166
    %v1168 = vmul.f32 %v1164, 1.442695
    %v1169 = vpow.pop %v1168
    %v1170 = vmul.f32 %v1165, 1.442695
    %v1171 = vpow.pop %v1170
    %v1172 = vadd.f32 %v1167, 1.0
    %v1173 = vadd.f32 %v1169, 1.0
    %v1174 = vadd.f32 %v1171, 1.0
    %v1175 = vrcp.pop %v1172
    %v1176 = vmul.f32 1.0, %v1175
    %v1177 = vrcp.pop %v1173
    %v1178 = vmul.f32 1.0, %v1177
    %v1179 = vrcp.pop %v1174
    %v1180 = vmul.f32 1.0, %v1179
    %v1181 = vtanh.pop %v1159
    %v1182 = vmul.f32 %v1178, %v625
    %v1183 = vmul.f32 %v1176, %v1181
    %v1184 = vadd.f32 %v1182, %v1183
    %v1185 = vtanh.pop %v1184
    %v1186 = vmul.f32 %v1180, %v1185
    %v1187 = vpack.c.bf16 %v1186, %v1186
    %1188 = vmatprep.subr.bf16.mxu0 %v844
    %1189 = vmatpush1.bf16.msra.mxu0 %v843
    %1190 = vmatprep.subr.bf16.mxu0 %v848
    %1191 = vmatpush1.bf16.msra.mxu0 %v847
    %1192 = vmatprep.subr.bf16.mxu0 %v852
    %1193 = vmatpush1.bf16.msra.mxu0 %v851
    %1194 = vmatprep.subr.bf16.mxu0 %v856
    %1195 = vmatpush1.bf16.msra.mxu0 %v855
    %1196 = vmatprep.subr.bf16.mxu0 %v860
    %1197 = vmatpush1.bf16.msra.mxu0 %v859
    %1198 = vmatprep.subr.bf16.mxu0 %v864
    %1199 = vmatpush1.bf16.msra.mxu0 %v863
    %1200 = vmatprep.subr.bf16.mxu0 %v868
    %1201 = vmatpush1.bf16.msra.mxu0 %v867
    %1202 = vmatprep.subr.bf16.mxu0 %v872
    %1203 = vmatpush1.bf16.msra.mxu0 %v871
    %1204 = vmatprep.subr.bf16.mxu0 %v876
    %1205 = vmatpush1.bf16.msra.mxu0 %v875
    %1206 = vmatprep.subr.bf16.mxu0 %v880
    %1207 = vmatpush1.bf16.msra.mxu0 %v879
    %1208 = vmatprep.subr.bf16.mxu0 %v884
    %1209 = vmatpush1.bf16.msra.mxu0 %v883
    %1210 = vmatprep.subr.bf16.mxu0 %v888
    %1211 = vmatpush1.bf16.msra.mxu0 %v887
    %1212 = vmatprep.subr.bf16.mxu0 %v892
    %1213 = vmatpush1.bf16.msra.mxu0 %v891
    %1214 = vmatprep.subr.bf16.mxu0 %v896
    %1215 = vmatpush1.bf16.msra.mxu0 %v895
    %1216 = vmatprep.subr.bf16.mxu0 %v900
    %1217 = vmatpush1.bf16.msra.mxu0 %v899
    %1218 = vmatprep.subr.bf16.mxu0 %v904
    %1219 = vmatpush1.bf16.msra.mxu0 %v903
    %1220 = vmatprep.mubr.bf16.mxu0 %v1077
    %1221 = vmatmul.mubr.bf16.gmra.mrb[0].mxu0 %v1187
    %v1222 = vpop.f32.mrb[0].mxu0
    %v1223 = vadd.f32 %v634, %v1222
    %v1224 = vpop.f32.mrb[0].mxu0
    %v1225 = vadd.f32 %v638, %v1224
    %v1226 = vpop.f32.mrb[0].mxu0
    %v1227 = vpop.f32.mrb[0].mxu0
    %1228 = vdwg.mxu0
    %1229 = vmatprep.subr.bf16.mxu0 %v846
    %1230 = vmatpush1.bf16.msra.mxu0 %v845
    %1231 = vmatprep.subr.bf16.mxu0 %v850
    %1232 = vmatpush1.bf16.msra.mxu0 %v849
    %1233 = vmatprep.subr.bf16.mxu0 %v854
    %1234 = vmatpush1.bf16.msra.mxu0 %v853
    %1235 = vmatprep.subr.bf16.mxu0 %v858
    %1236 = vmatpush1.bf16.msra.mxu0 %v857
    %1237 = vmatprep.subr.bf16.mxu0 %v862
    %1238 = vmatpush1.bf16.msra.mxu0 %v861
    %1239 = vmatprep.subr.bf16.mxu0 %v866
    %1240 = vmatpush1.bf16.msra.mxu0 %v865
    %1241 = vmatprep.subr.bf16.mxu0 %v870
    %1242 = vmatpush1.bf16.msra.mxu0 %v869
    %1243 = vmatprep.subr.bf16.mxu0 %v874
    %1244 = vmatpush1.bf16.msra.mxu0 %v873
    %1245 = vmatprep.subr.bf16.mxu0 %v878
    %1246 = vmatpush1.bf16.msra.mxu0 %v877
    %1247 = vmatprep.subr.bf16.mxu0 %v882
    %1248 = vmatpush1.bf16.msra.mxu0 %v881
    %1249 = vmatprep.subr.bf16.mxu0 %v886
    %1250 = vmatpush1.bf16.msra.mxu0 %v885
    %1251 = vmatprep.subr.bf16.mxu0 %v890
    %1252 = vmatpush1.bf16.msra.mxu0 %v889
    %1253 = vmatprep.subr.bf16.mxu0 %v894
    %1254 = vmatpush1.bf16.msra.mxu0 %v893
    %1255 = vmatprep.subr.bf16.mxu0 %v898
    %1256 = vmatpush1.bf16.msra.mxu0 %v897
    %1257 = vmatprep.subr.bf16.mxu0 %v902
    %1258 = vmatpush1.bf16.msra.mxu0 %v901
    %1259 = vmatprep.subr.bf16.mxu0 %v906
    %1260 = vmatpush1.bf16.msra.mxu0 %v905
    %1261 = vmatprep.mubr.bf16.mxu0 %v1077
    %1262 = vmatmul.mubr.bf16.gmra.mrb[0].mxu0 %v1187
    %v1263 = vpop.f32.mrb[0].mxu0
    %v1264 = vadd.f32 %v642, %v1263
    %v1265 = vpop.f32.mrb[0].mxu0
    %v1266 = vadd.f32 %v646, %v1265
    %v1267 = vpop.f32.mrb[0].mxu0
    %v1268 = vpop.f32.mrb[0].mxu0
    %1269 = vdwg.mxu0
    %v1270 = vxor.u32 %v1223, 2147483648
    %v1271 = vxor.u32 %v1225, 2147483648
    %v1272 = vxor.u32 %v1264, 2147483648
    %v1273 = vmul.f32 %v1270, 1.442695
    %v1274 = vpow.pop %v1273
    %v1275 = vmul.f32 %v1271, 1.442695
    %v1276 = vpow.pop %v1275
    %v1277 = vmul.f32 %v1272, 1.442695
    %v1278 = vpow.pop %v1277
    %v1279 = vadd.f32 %v1274, 1.0
    %v1280 = vadd.f32 %v1276, 1.0
    %v1281 = vadd.f32 %v1278, 1.0
    %v1282 = vrcp.pop %v1279
    %v1283 = vmul.f32 1.0, %v1282
    %v1284 = vrcp.pop %v1280
    %v1285 = vmul.f32 1.0, %v1284
    %v1286 = vrcp.pop %v1281
    %v1287 = vmul.f32 1.0, %v1286
    %v1288 = vtanh.pop %v1266
    %v1289 = vmul.f32 %v1285, %v1074
    %v1290 = vmul.f32 %v1283, %v1288
    %v1291 = vadd.f32 %v1289, %v1290
    %v1292 = vtanh.pop %v1291
    %v1293 = vmul.f32 %v1287, %v1292
    %v1294 = vpack.c.bf16 %v1293, %v1293
    %s1295 = scalar_lea.vmem %s7, 4
    %1296 = vst [vmem:[%s1295] sm:$0xf] %v1294
    %s1297 = scalar_lea.vmem %s0, 8
    %v1298 = vld [vmem:[%s1297] sm:$0xf]
    %1299 = vmatprep.subr.bf16.mxu0 %v395
    %1300 = vmatpush1.bf16.msra.mxu0 %v394
    %1301 = vmatprep.subr.bf16.mxu0 %v399
    %1302 = vmatpush1.bf16.msra.mxu0 %v398
    %1303 = vmatprep.subr.bf16.mxu0 %v403
    %1304 = vmatpush1.bf16.msra.mxu0 %v402
    %1305 = vmatprep.subr.bf16.mxu0 %v407
    %1306 = vmatpush1.bf16.msra.mxu0 %v406
    %1307 = vmatprep.subr.bf16.mxu0 %v411
    %1308 = vmatpush1.bf16.msra.mxu0 %v410
    %1309 = vmatprep.subr.bf16.mxu0 %v415
    %1310 = vmatpush1.bf16.msra.mxu0 %v414
    %1311 = vmatprep.subr.bf16.mxu0 %v419
    %1312 = vmatpush1.bf16.msra.mxu0 %v418
    %1313 = vmatprep.subr.bf16.mxu0 %v423
    %1314 = vmatpush1.bf16.msra.mxu0 %v422
    %1315 = vmatprep.subr.bf16.mxu0 %v427
    %1316 = vmatpush1.bf16.msra.mxu0 %v426
    %1317 = vmatprep.subr.bf16.mxu0 %v431
    %1318 = vmatpush1.bf16.msra.mxu0 %v430
    %1319 = vmatprep.subr.bf16.mxu0 %v435
    %1320 = vmatpush1.bf16.msra.mxu0 %v434
    %1321 = vmatprep.subr.bf16.mxu0 %v439
    %1322 = vmatpush1.bf16.msra.mxu0 %v438
    %1323 = vmatprep.subr.bf16.mxu0 %v443
    %1324 = vmatpush1.bf16.msra.mxu0 %v442
    %1325 = vmatprep.subr.bf16.mxu0 %v447
    %1326 = vmatpush1.bf16.msra.mxu0 %v446
    %1327 = vmatprep.subr.bf16.mxu0 %v451
    %1328 = vmatpush1.bf16.msra.mxu0 %v450
    %1329 = vmatprep.subr.bf16.mxu0 %v455
    %1330 = vmatpush1.bf16.msra.mxu0 %v454
    %1331 = vmatprep.mubr.bf16.mxu0 %v1187
    %1332 = vmatmul.mubr.bf16.gmra.mrb[0].mxu0 %v1298
    %v1333 = vpop.f32.mrb[0].mxu0
    %v1334 = vadd.f32 %v185, %v1333
    %v1335 = vpop.f32.mrb[0].mxu0
    %v1336 = vadd.f32 %v189, %v1335
    %v1337 = vpop.f32.mrb[0].mxu0
    %v1338 = vpop.f32.mrb[0].mxu0
    %1339 = vdwg.mxu0
    %1340 = vmatprep.subr.bf16.mxu0 %v397
    %1341 = vmatpush1.bf16.msra.mxu0 %v396
    %1342 = vmatprep.subr.bf16.mxu0 %v401
    %1343 = vmatpush1.bf16.msra.mxu0 %v400
    %1344 = vmatprep.subr.bf16.mxu0 %v405
    %1345 = vmatpush1.bf16.msra.mxu0 %v404
    %1346 = vmatprep.subr.bf16.mxu0 %v409
    %1347 = vmatpush1.bf16.msra.mxu0 %v408
    %1348 = vmatprep.subr.bf16.mxu0 %v413
    %1349 = vmatpush1.bf16.msra.mxu0 %v412
    %1350 = vmatprep.subr.bf16.mxu0 %v417
    %1351 = vmatpush1.bf16.msra.mxu0 %v416
    %1352 = vmatprep.subr.bf16.mxu0 %v421
    %1353 = vmatpush1.bf16.msra.mxu0 %v420
    %1354 = vmatprep.subr.bf16.mxu0 %v425
    %1355 = vmatpush1.bf16.msra.mxu0 %v424
    %1356 = vmatprep.subr.bf16.mxu0 %v429
    %1357 = vmatpush1.bf16.msra.mxu0 %v428
    %1358 = vmatprep.subr.bf16.mxu0 %v433
    %1359 = vmatpush1.bf16.msra.mxu0 %v432
    %1360 = vmatprep.subr.bf16.mxu0 %v437
    %1361 = vmatpush1.bf16.msra.mxu0 %v436
    %1362 = vmatprep.subr.bf16.mxu0 %v441
    %1363 = vmatpush1.bf16.msra.mxu0 %v440
    %1364 = vmatprep.subr.bf16.mxu0 %v445
    %1365 = vmatpush1.bf16.msra.mxu0 %v444
    %1366 = vmatprep.subr.bf16.mxu0 %v449
    %1367 = vmatpush1.bf16.msra.mxu0 %v448
    %1368 = vmatprep.subr.bf16.mxu0 %v453
    %1369 = vmatpush1.bf16.msra.mxu0 %v452
    %1370 = vmatprep.subr.bf16.mxu0 %v457
    %1371 = vmatpush1.bf16.msra.mxu0 %v456
    %1372 = vmatprep.mubr.bf16.mxu0 %v1187
    %1373 = vmatmul.mubr.bf16.gmra.mrb[0].mxu0 %v1298
    %v1374 = vpop.f32.mrb[0].mxu0
    %v1375 = vadd.f32 %v193, %v1374
    %v1376 = vpop.f32.mrb[0].mxu0
    %v1377 = vadd.f32 %v197, %v1376
    %v1378 = vpop.f32.mrb[0].mxu0
    %v1379 = vpop.f32.mrb[0].mxu0
    %1380 = vdwg.mxu0
    %v1381 = vxor.u32 %v1334, 2147483648
    %v1382 = vxor.u32 %v1336, 2147483648
    %v1383 = vxor.u32 %v1375, 2147483648
    %v1384 = vmul.f32 %v1381, 1.442695
    %v1385 = vpow.pop %v1384
    %v1386 = vmul.f32 %v1382, 1.442695
    %v1387 = vpow.pop %v1386
    %v1388 = vmul.f32 %v1383, 1.442695
    %v1389 = vpow.pop %v1388
    %v1390 = vadd.f32 %v1385, 1.0
    %v1391 = vadd.f32 %v1387, 1.0
    %v1392 = vadd.f32 %v1389, 1.0
    %v1393 = vrcp.pop %v1390
    %v1394 = vmul.f32 1.0, %v1393
    %v1395 = vrcp.pop %v1391
    %v1396 = vmul.f32 1.0, %v1395
    %v1397 = vrcp.pop %v1392
    %v1398 = vmul.f32 1.0, %v1397
    %v1399 = vtanh.pop %v1377
    %v1400 = vmul.f32 %v1396, %v1184
    %v1401 = vmul.f32 %v1394, %v1399
    %v1402 = vadd.f32 %v1400, %v1401
    %v1403 = vtanh.pop %v1402
    %v1404 = vmul.f32 %v1398, %v1403
    %v1405 = vpack.c.bf16 %v1404, %v1404
    %1406 = vmatprep.subr.bf16.mxu0 %v844
    %1407 = vmatpush1.bf16.msra.mxu0 %v843
    %1408 = vmatprep.subr.bf16.mxu0 %v848
    %1409 = vmatpush1.bf16.msra.mxu0 %v847
    %1410 = vmatprep.subr.bf16.mxu0 %v852
    %1411 = vmatpush1.bf16.msra.mxu0 %v851
    %1412 = vmatprep.subr.bf16.mxu0 %v856
    %1413 = vmatpush1.bf16.msra.mxu0 %v855
    %1414 = vmatprep.subr.bf16.mxu0 %v860
    %1415 = vmatpush1.bf16.msra.mxu0 %v859
    %1416 = vmatprep.subr.bf16.mxu0 %v864
    %1417 = vmatpush1.bf16.msra.mxu0 %v863
    %1418 = vmatprep.subr.bf16.mxu0 %v868
    %1419 = vmatpush1.bf16.msra.mxu0 %v867
    %1420 = vmatprep.subr.bf16.mxu0 %v872
    %1421 = vmatpush1.bf16.msra.mxu0 %v871
    %1422 = vmatprep.subr.bf16.mxu0 %v876
    %1423 = vmatpush1.bf16.msra.mxu0 %v875
    %1424 = vmatprep.subr.bf16.mxu0 %v880
    %1425 = vmatpush1.bf16.msra.mxu0 %v879
    %1426 = vmatprep.subr.bf16.mxu0 %v884
    %1427 = vmatpush1.bf16.msra.mxu0 %v883
    %1428 = vmatprep.subr.bf16.mxu0 %v888
    %1429 = vmatpush1.bf16.msra.mxu0 %v887
    %1430 = vmatprep.subr.bf16.mxu0 %v892
    %1431 = vmatpush1.bf16.msra.mxu0 %v891
    %1432 = vmatprep.subr.bf16.mxu0 %v896
    %1433 = vmatpush1.bf16.msra.mxu0 %v895
    %1434 = vmatprep.subr.bf16.mxu0 %v900
    %1435 = vmatpush1.bf16.msra.mxu0 %v899
    %1436 = vmatprep.subr.bf16.mxu0 %v904
    %1437 = vmatpush1.bf16.msra.mxu0 %v903
    %1438 = vmatprep.mubr.bf16.mxu0 %v1294
    %1439 = vmatmul.mubr.bf16.gmra.mrb[0].mxu0 %v1405
    %v1440 = vpop.f32.mrb[0].mxu0
    %v1441 = vadd.f32 %v634, %v1440
    %v1442 = vpop.f32.mrb[0].mxu0
    %v1443 = vadd.f32 %v638, %v1442
    %v1444 = vpop.f32.mrb[0].mxu0
    %v1445 = vpop.f32.mrb[0].mxu0
    %1446 = vdwg.mxu0
    %1447 = vmatprep.subr.bf16.mxu0 %v846
    %1448 = vmatpush1.bf16.msra.mxu0 %v845
    %1449 = vmatprep.subr.bf16.mxu0 %v850
    %1450 = vmatpush1.bf16.msra.mxu0 %v849
    %1451 = vmatprep.subr.bf16.mxu0 %v854
    %1452 = vmatpush1.bf16.msra.mxu0 %v853
    %1453 = vmatprep.subr.bf16.mxu0 %v858
    %1454 = vmatpush1.bf16.msra.mxu0 %v857
    %1455 = vmatprep.subr.bf16.mxu0 %v862
    %1456 = vmatpush1.bf16.msra.mxu0 %v861
    %1457 = vmatprep.subr.bf16.mxu0 %v866
    %1458 = vmatpush1.bf16.msra.mxu0 %v865
    %1459 = vmatprep.subr.bf16.mxu0 %v870
    %1460 = vmatpush1.bf16.msra.mxu0 %v869
    %1461 = vmatprep.subr.bf16.mxu0 %v874
    %1462 = vmatpush1.bf16.msra.mxu0 %v873
    %1463 = vmatprep.subr.bf16.mxu0 %v878
    %1464 = vmatpush1.bf16.msra.mxu0 %v877
    %1465 = vmatprep.subr.bf16.mxu0 %v882
    %1466 = vmatpush1.bf16.msra.mxu0 %v881
    %1467 = vmatprep.subr.bf16.mxu0 %v886
    %1468 = vmatpush1.bf16.msra.mxu0 %v885
    %1469 = vmatprep.subr.bf16.mxu0 %v890
    %1470 = vmatpush1.bf16.msra.mxu0 %v889
    %1471 = vmatprep.subr.bf16.mxu0 %v894
    %1472 = vmatpush1.bf16.msra.mxu0 %v893
    %1473 = vmatprep.subr.bf16.mxu0 %v898
    %1474 = vmatpush1.bf16.msra.mxu0 %v897
    %1475 = vmatprep.subr.bf16.mxu0 %v902
    %1476 = vmatpush1.bf16.msra.mxu0 %v901
    %1477 = vmatprep.subr.bf16.mxu0 %v906
    %1478 = vmatpush1.bf16.msra.mxu0 %v905
    %1479 = vmatprep.mubr.bf16.mxu0 %v1294
    %1480 = vmatmul.mubr.bf16.gmra.mrb[0].mxu0 %v1405
    %v1481 = vpop.f32.mrb[0].mxu0
    %v1482 = vadd.f32 %v642, %v1481
    %v1483 = vpop.f32.mrb[0].mxu0
    %v1484 = vadd.f32 %v646, %v1483
    %v1485 = vpop.f32.mrb[0].mxu0
    %v1486 = vpop.f32.mrb[0].mxu0
    %1487 = vdwg.mxu0
    %v1488 = vxor.u32 %v1441, 2147483648
    %v1489 = vxor.u32 %v1443, 2147483648
    %v1490 = vxor.u32 %v1482, 2147483648
    %v1491 = vmul.f32 %v1488, 1.442695
    %v1492 = vpow.pop %v1491
    %v1493 = vmul.f32 %v1489, 1.442695
    %v1494 = vpow.pop %v1493
    %v1495 = vmul.f32 %v1490, 1.442695
    %v1496 = vpow.pop %v1495
    %v1497 = vadd.f32 %v1492, 1.0
    %v1498 = vadd.f32 %v1494, 1.0
    %v1499 = vadd.f32 %v1496, 1.0
    %v1500 = vrcp.pop %v1497
    %v1501 = vmul.f32 1.0, %v1500
    %v1502 = vrcp.pop %v1498
    %v1503 = vmul.f32 1.0, %v1502
    %v1504 = vrcp.pop %v1499
    %v1505 = vmul.f32 1.0, %v1504
    %v1506 = vtanh.pop %v1484
    %v1507 = vmul.f32 %v1503, %v1291
    %v1508 = vmul.f32 %v1501, %v1506
    %v1509 = vadd.f32 %v1507, %v1508
    %v1510 = vtanh.pop %v1509
    %v1511 = vmul.f32 %v1505, %v1510
    %v1512 = vpack.c.bf16 %v1511, %v1511
    %s1513 = scalar_lea.vmem %s7, 8
    %1514 = vst [vmem:[%s1513] sm:$0xf] %v1512
    %s1515 = scalar_lea.vmem %s0, 12
    %v1516 = vld [vmem:[%s1515] sm:$0xf]
    %1517 = vmatprep.subr.bf16.mxu0 %v395
    %1518 = vmatpush1.bf16.msra.mxu0 %v394
    %1519 = vmatprep.subr.bf16.mxu0 %v399
    %1520 = vmatpush1.bf16.msra.mxu0 %v398
    %1521 = vmatprep.subr.bf16.mxu0 %v403
    %1522 = vmatpush1.bf16.msra.mxu0 %v402
    %1523 = vmatprep.subr.bf16.mxu0 %v407
    %1524 = vmatpush1.bf16.msra.mxu0 %v406
    %1525 = vmatprep.subr.bf16.mxu0 %v411
    %1526 = vmatpush1.bf16.msra.mxu0 %v410
    %1527 = vmatprep.subr.bf16.mxu0 %v415
    %1528 = vmatpush1.bf16.msra.mxu0 %v414
    %1529 = vmatprep.subr.bf16.mxu0 %v419
    %1530 = vmatpush1.bf16.msra.mxu0 %v418
    %1531 = vmatprep.subr.bf16.mxu0 %v423
    %1532 = vmatpush1.bf16.msra.mxu0 %v422
    %1533 = vmatprep.subr.bf16.mxu0 %v427
    %1534 = vmatpush1.bf16.msra.mxu0 %v426
    %1535 = vmatprep.subr.bf16.mxu0 %v431
    %1536 = vmatpush1.bf16.msra.mxu0 %v430
    %1537 = vmatprep.subr.bf16.mxu0 %v435
    %1538 = vmatpush1.bf16.msra.mxu0 %v434
    %1539 = vmatprep.subr.bf16.mxu0 %v439
    %1540 = vmatpush1.bf16.msra.mxu0 %v438
    %1541 = vmatprep.subr.bf16.mxu0 %v443
    %1542 = vmatpush1.bf16.msra.mxu0 %v442
    %1543 = vmatprep.subr.bf16.mxu0 %v447
    %1544 = vmatpush1.bf16.msra.mxu0 %v446
    %1545 = vmatprep.subr.bf16.mxu0 %v451
    %1546 = vmatpush1.bf16.msra.mxu0 %v450
    %1547 = vmatprep.subr.bf16.mxu0 %v455
    %1548 = vmatpush1.bf16.msra.mxu0 %v454
    %1549 = vmatprep.mubr.bf16.mxu0 %v1405
    %1550 = vmatmul.mubr.bf16.gmra.mrb[0].mxu0 %v1516
    %v1551 = vpop.f32.mrb[0].mxu0
    %v1552 = vadd.f32 %v185, %v1551
    %v1553 = vpop.f32.mrb[0].mxu0
    %v1554 = vadd.f32 %v189, %v1553
    %v1555 = vpop.f32.mrb[0].mxu0
    %v1556 = vpop.f32.mrb[0].mxu0
    %1557 = vdwg.mxu0
    %1558 = vmatprep.subr.bf16.mxu0 %v397
    %1559 = vmatpush1.bf16.msra.mxu0 %v396
    %1560 = vmatprep.subr.bf16.mxu0 %v401
    %1561 = vmatpush1.bf16.msra.mxu0 %v400
    %1562 = vmatprep.subr.bf16.mxu0 %v405
    %1563 = vmatpush1.bf16.msra.mxu0 %v404
    %1564 = vmatprep.subr.bf16.mxu0 %v409
    %1565 = vmatpush1.bf16.msra.mxu0 %v408
    %1566 = vmatprep.subr.bf16.mxu0 %v413
    %1567 = vmatpush1.bf16.msra.mxu0 %v412
    %1568 = vmatprep.subr.bf16.mxu0 %v417
    %1569 = vmatpush1.bf16.msra.mxu0 %v416
    %1570 = vmatprep.subr.bf16.mxu0 %v421
    %1571 = vmatpush1.bf16.msra.mxu0 %v420
    %1572 = vmatprep.subr.bf16.mxu0 %v425
    %1573 = vmatpush1.bf16.msra.mxu0 %v424
    %1574 = vmatprep.subr.bf16.mxu0 %v429
    %1575 = vmatpush1.bf16.msra.mxu0 %v428
    %1576 = vmatprep.subr.bf16.mxu0 %v433
    %1577 = vmatpush1.bf16.msra.mxu0 %v432
    %1578 = vmatprep.subr.bf16.mxu0 %v437
    %1579 = vmatpush1.bf16.msra.mxu0 %v436
    %1580 = vmatprep.subr.bf16.mxu0 %v441
    %1581 = vmatpush1.bf16.msra.mxu0 %v440
    %1582 = vmatprep.subr.bf16.mxu0 %v445
    %1583 = vmatpush1.bf16.msra.mxu0 %v444
    %1584 = vmatprep.subr.bf16.mxu0 %v449
    %1585 = vmatpush1.bf16.msra.mxu0 %v448
    %1586 = vmatprep.subr.bf16.mxu0 %v453
    %1587 = vmatpush1.bf16.msra.mxu0 %v452
    %1588 = vmatprep.subr.bf16.mxu0 %v457
    %1589 = vmatpush1.bf16.msra.mxu0 %v456
    %1590 = vmatprep.mubr.bf16.mxu0 %v1405
    %1591 = vmatmul.mubr.bf16.gmra.mrb[0].mxu0 %v1516
    %v1592 = vpop.f32.mrb[0].mxu0
    %v1593 = vadd.f32 %v193, %v1592
    %v1594 = vpop.f32.mrb[0].mxu0
    %v1595 = vadd.f32 %v197, %v1594
    %v1596 = vpop.f32.mrb[0].mxu0
    %v1597 = vpop.f32.mrb[0].mxu0
    %1598 = vdwg.mxu0
    %v1599 = vxor.u32 %v1552, 2147483648
    %v1600 = vxor.u32 %v1554, 2147483648
    %v1601 = vxor.u32 %v1593, 2147483648
    %v1602 = vmul.f32 %v1599, 1.442695
    %v1603 = vpow.pop %v1602
    %v1604 = vmul.f32 %v1600, 1.442695
    %v1605 = vpow.pop %v1604
    %v1606 = vmul.f32 %v1601, 1.442695
    %v1607 = vpow.pop %v1606
    %v1608 = vadd.f32 %v1603, 1.0
    %v1609 = vadd.f32 %v1605, 1.0
    %v1610 = vadd.f32 %v1607, 1.0
    %v1611 = vrcp.pop %v1608
    %v1612 = vmul.f32 1.0, %v1611
    %v1613 = vrcp.pop %v1609
    %v1614 = vmul.f32 1.0, %v1613
    %v1615 = vrcp.pop %v1610
    %v1616 = vmul.f32 1.0, %v1615
    %v1617 = vtanh.pop %v1595
    %v1618 = vmul.f32 %v1614, %v1402
    %v1619 = vmul.f32 %v1612, %v1617
    %v1620 = vadd.f32 %v1618, %v1619
    %v1621 = vtanh.pop %v1620
    %v1622 = vmul.f32 %v1616, %v1621
    %v1623 = vpack.c.bf16 %v1622, %v1622
    %1624 = vmatprep.subr.bf16.mxu0 %v844
    %1625 = vmatpush1.bf16.msra.mxu0 %v843
    %1626 = vmatprep.subr.bf16.mxu0 %v848
    %1627 = vmatpush1.bf16.msra.mxu0 %v847
    %1628 = vmatprep.subr.bf16.mxu0 %v852
    %1629 = vmatpush1.bf16.msra.mxu0 %v851
    %1630 = vmatprep.subr.bf16.mxu0 %v856
    %1631 = vmatpush1.bf16.msra.mxu0 %v855
    %1632 = vmatprep.subr.bf16.mxu0 %v860
    %1633 = vmatpush1.bf16.msra.mxu0 %v859
    %1634 = vmatprep.subr.bf16.mxu0 %v864
    %1635 = vmatpush1.bf16.msra.mxu0 %v863
    %1636 = vmatprep.subr.bf16.mxu0 %v868
    %1637 = vmatpush1.bf16.msra.mxu0 %v867
    %1638 = vmatprep.subr.bf16.mxu0 %v872
    %1639 = vmatpush1.bf16.msra.mxu0 %v871
    %1640 = vmatprep.subr.bf16.mxu0 %v876
    %1641 = vmatpush1.bf16.msra.mxu0 %v875
    %1642 = vmatprep.subr.bf16.mxu0 %v880
    %1643 = vmatpush1.bf16.msra.mxu0 %v879
    %1644 = vmatprep.subr.bf16.mxu0 %v884
    %1645 = vmatpush1.bf16.msra.mxu0 %v883
    %1646 = vmatprep.subr.bf16.mxu0 %v888
    %1647 = vmatpush1.bf16.msra.mxu0 %v887
    %1648 = vmatprep.subr.bf16.mxu0 %v892
    %1649 = vmatpush1.bf16.msra.mxu0 %v891
    %1650 = vmatprep.subr.bf16.mxu0 %v896
    %1651 = vmatpush1.bf16.msra.mxu0 %v895
    %1652 = vmatprep.subr.bf16.mxu0 %v900
    %1653 = vmatpush1.bf16.msra.mxu0 %v899
    %1654 = vmatprep.subr.bf16.mxu0 %v904
    %1655 = vmatpush1.bf16.msra.mxu0 %v903
    %1656 = vmatprep.mubr.bf16.mxu0 %v1512
    %1657 = vmatmul.mubr.bf16.gmra.mrb[0].mxu0 %v1623
    %v1658 = vpop.f32.mrb[0].mxu0
    %v1659 = vadd.f32 %v634, %v1658
    %v1660 = vpop.f32.mrb[0].mxu0
    %v1661 = vadd.f32 %v638, %v1660
    %v1662 = vpop.f32.mrb[0].mxu0
    %v1663 = vpop.f32.mrb[0].mxu0
    %1664 = vdwg.mxu0
    %1665 = vmatprep.subr.bf16.mxu0 %v846
    %1666 = vmatpush1.bf16.msra.mxu0 %v845
    %1667 = vmatprep.subr.bf16.mxu0 %v850
    %1668 = vmatpush1.bf16.msra.mxu0 %v849
    %1669 = vmatprep.subr.bf16.mxu0 %v854
    %1670 = vmatpush1.bf16.msra.mxu0 %v853
    %1671 = vmatprep.subr.bf16.mxu0 %v858
    %1672 = vmatpush1.bf16.msra.mxu0 %v857
    %1673 = vmatprep.subr.bf16.mxu0 %v862
    %1674 = vmatpush1.bf16.msra.mxu0 %v861
    %1675 = vmatprep.subr.bf16.mxu0 %v866
    %1676 = vmatpush1.bf16.msra.mxu0 %v865
    %1677 = vmatprep.subr.bf16.mxu0 %v870
    %1678 = vmatpush1.bf16.msra.mxu0 %v869
    %1679 = vmatprep.subr.bf16.mxu0 %v874
    %1680 = vmatpush1.bf16.msra.mxu0 %v873
    %1681 = vmatprep.subr.bf16.mxu0 %v878
    %1682 = vmatpush1.bf16.msra.mxu0 %v877
    %1683 = vmatprep.subr.bf16.mxu0 %v882
    %1684 = vmatpush1.bf16.msra.mxu0 %v881
    %1685 = vmatprep.subr.bf16.mxu0 %v886
    %1686 = vmatpush1.bf16.msra.mxu0 %v885
    %1687 = vmatprep.subr.bf16.mxu0 %v890
    %1688 = vmatpush1.bf16.msra.mxu0 %v889
    %1689 = vmatprep.subr.bf16.mxu0 %v894
    %1690 = vmatpush1.bf16.msra.mxu0 %v893
    %1691 = vmatprep.subr.bf16.mxu0 %v898
    %1692 = vmatpush1.bf16.msra.mxu0 %v897
    %1693 = vmatprep.subr.bf16.mxu0 %v902
    %1694 = vmatpush1.bf16.msra.mxu0 %v901
    %1695 = vmatprep.subr.bf16.mxu0 %v906
    %1696 = vmatpush1.bf16.msra.mxu0 %v905
    %1697 = vmatprep.mubr.bf16.mxu0 %v1512
    %1698 = vmatmul.mubr.bf16.gmra.mrb[0].mxu0 %v1623
    %v1699 = vpop.f32.mrb[0].mxu0
    %v1700 = vadd.f32 %v642, %v1699
    %v1701 = vpop.f32.mrb[0].mxu0
    %v1702 = vadd.f32 %v646, %v1701
    %v1703 = vpop.f32.mrb[0].mxu0
    %v1704 = vpop.f32.mrb[0].mxu0
    %1705 = vdwg.mxu0
    %v1706 = vxor.u32 %v1659, 2147483648
    %v1707 = vxor.u32 %v1661, 2147483648
    %v1708 = vxor.u32 %v1700, 2147483648
    %v1709 = vmul.f32 %v1706, 1.442695
    %v1710 = vpow.pop %v1709
    %v1711 = vmul.f32 %v1707, 1.442695
    %v1712 = vpow.pop %v1711
    %v1713 = vmul.f32 %v1708, 1.442695
    %v1714 = vpow.pop %v1713
    %v1715 = vadd.f32 %v1710, 1.0
    %v1716 = vadd.f32 %v1712, 1.0
    %v1717 = vadd.f32 %v1714, 1.0
    %v1718 = vrcp.pop %v1715
    %v1719 = vmul.f32 1.0, %v1718
    %v1720 = vrcp.pop %v1716
    %v1721 = vmul.f32 1.0, %v1720
    %v1722 = vrcp.pop %v1717
    %v1723 = vmul.f32 1.0, %v1722
    %v1724 = vtanh.pop %v1702
    %v1725 = vmul.f32 %v1721, %v1509
    %v1726 = vmul.f32 %v1719, %v1724
    %v1727 = vadd.f32 %v1725, %v1726
    %v1728 = vtanh.pop %v1727
    %v1729 = vmul.f32 %v1723, %v1728
    %v1730 = vpack.c.bf16 %v1729, %v1729
    %s1731 = scalar_lea.vmem %s7, 12
    %1732 = vst [vmem:[%s1731] sm:$0xf] %v1730
    %s1733 = scalar_lea.vmem %s0, 16
    %v1734 = vld [vmem:[%s1733] sm:$0xf]
    %1735 = vmatprep.subr.bf16.mxu0 %v395
    %1736 = vmatpush1.bf16.msra.mxu0 %v394
    %1737 = vmatprep.subr.bf16.mxu0 %v399
    %1738 = vmatpush1.bf16.msra.mxu0 %v398
    %1739 = vmatprep.subr.bf16.mxu0 %v403
    %1740 = vmatpush1.bf16.msra.mxu0 %v402
    %1741 = vmatprep.subr.bf16.mxu0 %v407
    %1742 = vmatpush1.bf16.msra.mxu0 %v406
    %1743 = vmatprep.subr.bf16.mxu0 %v411
    %1744 = vmatpush1.bf16.msra.mxu0 %v410
    %1745 = vmatprep.subr.bf16.mxu0 %v415
    %1746 = vmatpush1.bf16.msra.mxu0 %v414
    %1747 = vmatprep.subr.bf16.mxu0 %v419
    %1748 = vmatpush1.bf16.msra.mxu0 %v418
    %1749 = vmatprep.subr.bf16.mxu0 %v423
    %1750 = vmatpush1.bf16.msra.mxu0 %v422
    %1751 = vmatprep.subr.bf16.mxu0 %v427
    %1752 = vmatpush1.bf16.msra.mxu0 %v426
    %1753 = vmatprep.subr.bf16.mxu0 %v431
    %1754 = vmatpush1.bf16.msra.mxu0 %v430
    %1755 = vmatprep.subr.bf16.mxu0 %v435
    %1756 = vmatpush1.bf16.msra.mxu0 %v434
    %1757 = vmatprep.subr.bf16.mxu0 %v439
    %1758 = vmatpush1.bf16.msra.mxu0 %v438
    %1759 = vmatprep.subr.bf16.mxu0 %v443
    %1760 = vmatpush1.bf16.msra.mxu0 %v442
    %1761 = vmatprep.subr.bf16.mxu0 %v447
    %1762 = vmatpush1.bf16.msra.mxu0 %v446
    %1763 = vmatprep.subr.bf16.mxu0 %v451
    %1764 = vmatpush1.bf16.msra.mxu0 %v450
    %1765 = vmatprep.subr.bf16.mxu0 %v455
    %1766 = vmatpush1.bf16.msra.mxu0 %v454
    %1767 = vmatprep.mubr.bf16.mxu0 %v1623
    %1768 = vmatmul.mubr.bf16.gmra.mrb[0].mxu0 %v1734
    %v1769 = vpop.f32.mrb[0].mxu0
    %v1770 = vadd.f32 %v185, %v1769
    %v1771 = vpop.f32.mrb[0].mxu0
    %v1772 = vadd.f32 %v189, %v1771
    %v1773 = vpop.f32.mrb[0].mxu0
    %v1774 = vpop.f32.mrb[0].mxu0
    %1775 = vdwg.mxu0
    %1776 = vmatprep.subr.bf16.mxu0 %v397
    %1777 = vmatpush1.bf16.msra.mxu0 %v396
    %1778 = vmatprep.subr.bf16.mxu0 %v401
    %1779 = vmatpush1.bf16.msra.mxu0 %v400
    %1780 = vmatprep.subr.bf16.mxu0 %v405
    %1781 = vmatpush1.bf16.msra.mxu0 %v404
    %1782 = vmatprep.subr.bf16.mxu0 %v409
    %1783 = vmatpush1.bf16.msra.mxu0 %v408
    %1784 = vmatprep.subr.bf16.mxu0 %v413
    %1785 = vmatpush1.bf16.msra.mxu0 %v412
    %1786 = vmatprep.subr.bf16.mxu0 %v417
    %1787 = vmatpush1.bf16.msra.mxu0 %v416
    %1788 = vmatprep.subr.bf16.mxu0 %v421
    %1789 = vmatpush1.bf16.msra.mxu0 %v420
    %1790 = vmatprep.subr.bf16.mxu0 %v425
    %1791 = vmatpush1.bf16.msra.mxu0 %v424
    %1792 = vmatprep.subr.bf16.mxu0 %v429
    %1793 = vmatpush1.bf16.msra.mxu0 %v428
    %1794 = vmatprep.subr.bf16.mxu0 %v433
    %1795 = vmatpush1.bf16.msra.mxu0 %v432
    %1796 = vmatprep.subr.bf16.mxu0 %v437
    %1797 = vmatpush1.bf16.msra.mxu0 %v436
    %1798 = vmatprep.subr.bf16.mxu0 %v441
    %1799 = vmatpush1.bf16.msra.mxu0 %v440
    %1800 = vmatprep.subr.bf16.mxu0 %v445
    %1801 = vmatpush1.bf16.msra.mxu0 %v444
    %1802 = vmatprep.subr.bf16.mxu0 %v449
    %1803 = vmatpush1.bf16.msra.mxu0 %v448
    %1804 = vmatprep.subr.bf16.mxu0 %v453
    %1805 = vmatpush1.bf16.msra.mxu0 %v452
    %1806 = vmatprep.subr.bf16.mxu0 %v457
    %1807 = vmatpush1.bf16.msra.mxu0 %v456
    %1808 = vmatprep.mubr.bf16.mxu0 %v1623
    %1809 = vmatmul.mubr.bf16.gmra.mrb[0].mxu0 %v1734
    %v1810 = vpop.f32.mrb[0].mxu0
    %v1811 = vadd.f32 %v193, %v1810
    %v1812 = vpop.f32.mrb[0].mxu0
    %v1813 = vadd.f32 %v197, %v1812
    %v1814 = vpop.f32.mrb[0].mxu0
    %v1815 = vpop.f32.mrb[0].mxu0
    %1816 = vdwg.mxu0
    %v1817 = vxor.u32 %v1770, 2147483648
    %v1818 = vxor.u32 %v1772, 2147483648
    %v1819 = vxor.u32 %v1811, 2147483648
    %v1820 = vmul.f32 %v1817, 1.442695
    %v1821 = vpow.pop %v1820
    %v1822 = vmul.f32 %v1818, 1.442695
    %v1823 = vpow.pop %v1822
    %v1824 = vmul.f32 %v1819, 1.442695
    %v1825 = vpow.pop %v1824
    %v1826 = vadd.f32 %v1821, 1.0
    %v1827 = vadd.f32 %v1823, 1.0
    %v1828 = vadd.f32 %v1825, 1.0
    %v1829 = vrcp.pop %v1826
    %v1830 = vmul.f32 1.0, %v1829
    %v1831 = vrcp.pop %v1827
    %v1832 = vmul.f32 1.0, %v1831
    %v1833 = vrcp.pop %v1828
    %v1834 = vmul.f32 1.0, %v1833
    %v1835 = vtanh.pop %v1813
    %v1836 = vmul.f32 %v1832, %v1620
    %v1837 = vmul.f32 %v1830, %v1835
    %v1838 = vadd.f32 %v1836, %v1837
    %v1839 = vtanh.pop %v1838
    %v1840 = vmul.f32 %v1834, %v1839
    %v1841 = vpack.c.bf16 %v1840, %v1840
    %1842 = vmatprep.subr.bf16.mxu0 %v844
    %1843 = vmatpush1.bf16.msra.mxu0 %v843
    %1844 = vmatprep.subr.bf16.mxu0 %v848
    %1845 = vmatpush1.bf16.msra.mxu0 %v847
    %1846 = vmatprep.subr.bf16.mxu0 %v852
    %1847 = vmatpush1.bf16.msra.mxu0 %v851
    %1848 = vmatprep.subr.bf16.mxu0 %v856
    %1849 = vmatpush1.bf16.msra.mxu0 %v855
    %1850 = vmatprep.subr.bf16.mxu0 %v860
    %1851 = vmatpush1.bf16.msra.mxu0 %v859
    %1852 = vmatprep.subr.bf16.mxu0 %v864
    %1853 = vmatpush1.bf16.msra.mxu0 %v863
    %1854 = vmatprep.subr.bf16.mxu0 %v868
    %1855 = vmatpush1.bf16.msra.mxu0 %v867
    %1856 = vmatprep.subr.bf16.mxu0 %v872
    %1857 = vmatpush1.bf16.msra.mxu0 %v871
    %1858 = vmatprep.subr.bf16.mxu0 %v876
    %1859 = vmatpush1.bf16.msra.mxu0 %v875
    %1860 = vmatprep.subr.bf16.mxu0 %v880
    %1861 = vmatpush1.bf16.msra.mxu0 %v879
    %1862 = vmatprep.subr.bf16.mxu0 %v884
    %1863 = vmatpush1.bf16.msra.mxu0 %v883
    %1864 = vmatprep.subr.bf16.mxu0 %v888
    %1865 = vmatpush1.bf16.msra.mxu0 %v887
    %1866 = vmatprep.subr.bf16.mxu0 %v892
    %1867 = vmatpush1.bf16.msra.mxu0 %v891
    %1868 = vmatprep.subr.bf16.mxu0 %v896
    %1869 = vmatpush1.bf16.msra.mxu0 %v895
    %1870 = vmatprep.subr.bf16.mxu0 %v900
    %1871 = vmatpush1.bf16.msra.mxu0 %v899
    %1872 = vmatprep.subr.bf16.mxu0 %v904
    %1873 = vmatpush1.bf16.msra.mxu0 %v903
    %1874 = vmatprep.mubr.bf16.mxu0 %v1730
    %1875 = vmatmul.mubr.bf16.gmra.mrb[0].mxu0 %v1841
    %v1876 = vpop.f32.mrb[0].mxu0
    %v1877 = vadd.f32 %v634, %v1876
    %v1878 = vpop.f32.mrb[0].mxu0
    %v1879 = vadd.f32 %v638, %v1878
    %v1880 = vpop.f32.mrb[0].mxu0
    %v1881 = vpop.f32.mrb[0].mxu0
    %1882 = vdwg.mxu0
    %1883 = vmatprep.subr.bf16.mxu0 %v846
    %1884 = vmatpush1.bf16.msra.mxu0 %v845
    %1885 = vmatprep.subr.bf16.mxu0 %v850
    %1886 = vmatpush1.bf16.msra.mxu0 %v849
    %1887 = vmatprep.subr.bf16.mxu0 %v854
    %1888 = vmatpush1.bf16.msra.mxu0 %v853
    %1889 = vmatprep.subr.bf16.mxu0 %v858
    %1890 = vmatpush1.bf16.msra.mxu0 %v857
    %1891 = vmatprep.subr.bf16.mxu0 %v862
    %1892 = vmatpush1.bf16.msra.mxu0 %v861
    %1893 = vmatprep.subr.bf16.mxu0 %v866
    %1894 = vmatpush1.bf16.msra.mxu0 %v865
    %1895 = vmatprep.subr.bf16.mxu0 %v870
    %1896 = vmatpush1.bf16.msra.mxu0 %v869
    %1897 = vmatprep.subr.bf16.mxu0 %v874
    %1898 = vmatpush1.bf16.msra.mxu0 %v873
    %1899 = vmatprep.subr.bf16.mxu0 %v878
    %1900 = vmatpush1.bf16.msra.mxu0 %v877
    %1901 = vmatprep.subr.bf16.mxu0 %v882
    %1902 = vmatpush1.bf16.msra.mxu0 %v881
    %1903 = vmatprep.subr.bf16.mxu0 %v886
    %1904 = vmatpush1.bf16.msra.mxu0 %v885
    %1905 = vmatprep.subr.bf16.mxu0 %v890
    %1906 = vmatpush1.bf16.msra.mxu0 %v889
    %1907 = vmatprep.subr.bf16.mxu0 %v894
    %1908 = vmatpush1.bf16.msra.mxu0 %v893
    %1909 = vmatprep.subr.bf16.mxu0 %v898
    %1910 = vmatpush1.bf16.msra.mxu0 %v897
    %1911 = vmatprep.subr.bf16.mxu0 %v902
    %1912 = vmatpush1.bf16.msra.mxu0 %v901
    %1913 = vmatprep.subr.bf16.mxu0 %v906
    %1914 = vmatpush1.bf16.msra.mxu0 %v905
    %1915 = vmatprep.mubr.bf16.mxu0 %v1730
    %1916 = vmatmul.mubr.bf16.gmra.mrb[0].mxu0 %v1841
    %v1917 = vpop.f32.mrb[0].mxu0
    %v1918 = vadd.f32 %v642, %v1917
    %v1919 = vpop.f32.mrb[0].mxu0
    %v1920 = vadd.f32 %v646, %v1919
    %v1921 = vpop.f32.mrb[0].mxu0
    %v1922 = vpop.f32.mrb[0].mxu0
    %1923 = vdwg.mxu0
    %v1924 = vxor.u32 %v1877, 2147483648
    %v1925 = vxor.u32 %v1879, 2147483648
    %v1926 = vxor.u32 %v1918, 2147483648
    %v1927 = vmul.f32 %v1924, 1.442695
    %v1928 = vpow.pop %v1927
    %v1929 = vmul.f32 %v1925, 1.442695
    %v1930 = vpow.pop %v1929
    %v1931 = vmul.f32 %v1926, 1.442695
    %v1932 = vpow.pop %v1931
    %v1933 = vadd.f32 %v1928, 1.0
    %v1934 = vadd.f32 %v1930, 1.0
    %v1935 = vadd.f32 %v1932, 1.0
    %v1936 = vrcp.pop %v1933
    %v1937 = vmul.f32 1.0, %v1936
    %v1938 = vrcp.pop %v1934
    %v1939 = vmul.f32 1.0, %v1938
    %v1940 = vrcp.pop %v1935
    %v1941 = vmul.f32 1.0, %v1940
    %v1942 = vtanh.pop %v1920
    %v1943 = vmul.f32 %v1939, %v1727
    %v1944 = vmul.f32 %v1937, %v1942
    %v1945 = vadd.f32 %v1943, %v1944
    %v1946 = vtanh.pop %v1945
    %v1947 = vmul.f32 %v1941, %v1946
    %v1948 = vpack.c.bf16 %v1947, %v1947
    %s1949 = scalar_lea.vmem %s7, 16
    %1950 = vst [vmem:[%s1949] sm:$0xf] %v1948
    %s1951 = scalar_lea.vmem %s0, 20
    %v1952 = vld [vmem:[%s1951] sm:$0xf]
    %1953 = vmatprep.subr.bf16.mxu0 %v395
    %1954 = vmatpush1.bf16.msra.mxu0 %v394
    %1955 = vmatprep.subr.bf16.mxu0 %v399
    %1956 = vmatpush1.bf16.msra.mxu0 %v398
    %1957 = vmatprep.subr.bf16.mxu0 %v403
    %1958 = vmatpush1.bf16.msra.mxu0 %v402
    %1959 = vmatprep.subr.bf16.mxu0 %v407
    %1960 = vmatpush1.bf16.msra.mxu0 %v406
    %1961 = vmatprep.subr.bf16.mxu0 %v411
    %1962 = vmatpush1.bf16.msra.mxu0 %v410
    %1963 = vmatprep.subr.bf16.mxu0 %v415
    %1964 = vmatpush1.bf16.msra.mxu0 %v414
    %1965 = vmatprep.subr.bf16.mxu0 %v419
    %1966 = vmatpush1.bf16.msra.mxu0 %v418
    %1967 = vmatprep.subr.bf16.mxu0 %v423
    %1968 = vmatpush1.bf16.msra.mxu0 %v422
    %1969 = vmatprep.subr.bf16.mxu0 %v427
    %1970 = vmatpush1.bf16.msra.mxu0 %v426
    %1971 = vmatprep.subr.bf16.mxu0 %v431
    %1972 = vmatpush1.bf16.msra.mxu0 %v430
    %1973 = vmatprep.subr.bf16.mxu0 %v435
    %1974 = vmatpush1.bf16.msra.mxu0 %v434
    %1975 = vmatprep.subr.bf16.mxu0 %v439
    %1976 = vmatpush1.bf16.msra.mxu0 %v438
    %1977 = vmatprep.subr.bf16.mxu0 %v443
    %1978 = vmatpush1.bf16.msra.mxu0 %v442
    %1979 = vmatprep.subr.bf16.mxu0 %v447
    %1980 = vmatpush1.bf16.msra.mxu0 %v446
    %1981 = vmatprep.subr.bf16.mxu0 %v451
    %1982 = vmatpush1.bf16.msra.mxu0 %v450
    %1983 = vmatprep.subr.bf16.mxu0 %v455
    %1984 = vmatpush1.bf16.msra.mxu0 %v454
    %1985 = vmatprep.mubr.bf16.mxu0 %v1841
    %1986 = vmatmul.mubr.bf16.gmra.mrb[0].mxu0 %v1952
    %v1987 = vpop.f32.mrb[0].mxu0
    %v1988 = vadd.f32 %v185, %v1987
    %v1989 = vpop.f32.mrb[0].mxu0
    %v1990 = vadd.f32 %v189, %v1989
    %v1991 = vpop.f32.mrb[0].mxu0
    %v1992 = vpop.f32.mrb[0].mxu0
    %1993 = vdwg.mxu0
    %1994 = vmatprep.subr.bf16.mxu0 %v397
    %1995 = vmatpush1.bf16.msra.mxu0 %v396
    %1996 = vmatprep.subr.bf16.mxu0 %v401
    %1997 = vmatpush1.bf16.msra.mxu0 %v400
    %1998 = vmatprep.subr.bf16.mxu0 %v405
    %1999 = vmatpush1.bf16.msra.mxu0 %v404
    %2000 = vmatprep.subr.bf16.mxu0 %v409
    %2001 = vmatpush1.bf16.msra.mxu0 %v408
    %2002 = vmatprep.subr.bf16.mxu0 %v413
    %2003 = vmatpush1.bf16.msra.mxu0 %v412
    %2004 = vmatprep.subr.bf16.mxu0 %v417
    %2005 = vmatpush1.bf16.msra.mxu0 %v416
    %2006 = vmatprep.subr.bf16.mxu0 %v421
    %2007 = vmatpush1.bf16.msra.mxu0 %v420
    %2008 = vmatprep.subr.bf16.mxu0 %v425
    %2009 = vmatpush1.bf16.msra.mxu0 %v424
    %2010 = vmatprep.subr.bf16.mxu0 %v429
    %2011 = vmatpush1.bf16.msra.mxu0 %v428
    %2012 = vmatprep.subr.bf16.mxu0 %v433
    %2013 = vmatpush1.bf16.msra.mxu0 %v432
    %2014 = vmatprep.subr.bf16.mxu0 %v437
    %2015 = vmatpush1.bf16.msra.mxu0 %v436
    %2016 = vmatprep.subr.bf16.mxu0 %v441
    %2017 = vmatpush1.bf16.msra.mxu0 %v440
    %2018 = vmatprep.subr.bf16.mxu0 %v445
    %2019 = vmatpush1.bf16.msra.mxu0 %v444
    %2020 = vmatprep.subr.bf16.mxu0 %v449
    %2021 = vmatpush1.bf16.msra.mxu0 %v448
    %2022 = vmatprep.subr.bf16.mxu0 %v453
    %2023 = vmatpush1.bf16.msra.mxu0 %v452
    %2024 = vmatprep.subr.bf16.mxu0 %v457
    %2025 = vmatpush1.bf16.msra.mxu0 %v456
    %2026 = vmatprep.mubr.bf16.mxu0 %v1841
    %2027 = vmatmul.mubr.bf16.gmra.mrb[0].mxu0 %v1952
    %v2028 = vpop.f32.mrb[0].mxu0
    %v2029 = vadd.f32 %v193, %v2028
    %v2030 = vpop.f32.mrb[0].mxu0
    %v2031 = vadd.f32 %v197, %v2030
    %v2032 = vpop.f32.mrb[0].mxu0
    %v2033 = vpop.f32.mrb[0].mxu0
    %2034 = vdwg.mxu0
    %v2035 = vxor.u32 %v1988, 2147483648
    %v2036 = vxor.u32 %v1990, 2147483648
    %v2037 = vxor.u32 %v2029, 2147483648
    %v2038 = vmul.f32 %v2035, 1.442695
    %v2039 = vpow.pop %v2038
    %v2040 = vmul.f32 %v2036, 1.442695
    %v2041 = vpow.pop %v2040
    %v2042 = vmul.f32 %v2037, 1.442695
    %v2043 = vpow.pop %v2042
    %v2044 = vadd.f32 %v2039, 1.0
    %v2045 = vadd.f32 %v2041, 1.0
    %v2046 = vadd.f32 %v2043, 1.0
    %v2047 = vrcp.pop %v2044
    %v2048 = vmul.f32 1.0, %v2047
    %v2049 = vrcp.pop %v2045
    %v2050 = vmul.f32 1.0, %v2049
    %v2051 = vrcp.pop %v2046
    %v2052 = vmul.f32 1.0, %v2051
    %v2053 = vtanh.pop %v2031
    %v2054 = vmul.f32 %v2050, %v1838
    %v2055 = vmul.f32 %v2048, %v2053
    %v2056 = vadd.f32 %v2054, %v2055
    %v2057 = vtanh.pop %v2056
    %v2058 = vmul.f32 %v2052, %v2057
    %v2059 = vpack.c.bf16 %v2058, %v2058
    %2060 = vmatprep.subr.bf16.mxu0 %v844
    %2061 = vmatpush1.bf16.msra.mxu0 %v843
    %2062 = vmatprep.subr.bf16.mxu0 %v848
    %2063 = vmatpush1.bf16.msra.mxu0 %v847
    %2064 = vmatprep.subr.bf16.mxu0 %v852
    %2065 = vmatpush1.bf16.msra.mxu0 %v851
    %2066 = vmatprep.subr.bf16.mxu0 %v856
    %2067 = vmatpush1.bf16.msra.mxu0 %v855
    %2068 = vmatprep.subr.bf16.mxu0 %v860
    %2069 = vmatpush1.bf16.msra.mxu0 %v859
    %2070 = vmatprep.subr.bf16.mxu0 %v864
    %2071 = vmatpush1.bf16.msra.mxu0 %v863
    %2072 = vmatprep.subr.bf16.mxu0 %v868
    %2073 = vmatpush1.bf16.msra.mxu0 %v867
    %2074 = vmatprep.subr.bf16.mxu0 %v872
    %2075 = vmatpush1.bf16.msra.mxu0 %v871
    %2076 = vmatprep.subr.bf16.mxu0 %v876
    %2077 = vmatpush1.bf16.msra.mxu0 %v875
    %2078 = vmatprep.subr.bf16.mxu0 %v880
    %2079 = vmatpush1.bf16.msra.mxu0 %v879
    %2080 = vmatprep.subr.bf16.mxu0 %v884
    %2081 = vmatpush1.bf16.msra.mxu0 %v883
    %2082 = vmatprep.subr.bf16.mxu0 %v888
    %2083 = vmatpush1.bf16.msra.mxu0 %v887
    %2084 = vmatprep.subr.bf16.mxu0 %v892
    %2085 = vmatpush1.bf16.msra.mxu0 %v891
    %2086 = vmatprep.subr.bf16.mxu0 %v896
    %2087 = vmatpush1.bf16.msra.mxu0 %v895
    %2088 = vmatprep.subr.bf16.mxu0 %v900
    %2089 = vmatpush1.bf16.msra.mxu0 %v899
    %2090 = vmatprep.subr.bf16.mxu0 %v904
    %2091 = vmatpush1.bf16.msra.mxu0 %v903
    %2092 = vmatprep.mubr.bf16.mxu0 %v1948
    %2093 = vmatmul.mubr.bf16.gmra.mrb[0].mxu0 %v2059
    %v2094 = vpop.f32.mrb[0].mxu0
    %v2095 = vadd.f32 %v634, %v2094
    %v2096 = vpop.f32.mrb[0].mxu0
    %v2097 = vadd.f32 %v638, %v2096
    %v2098 = vpop.f32.mrb[0].mxu0
    %v2099 = vpop.f32.mrb[0].mxu0
    %2100 = vdwg.mxu0
    %2101 = vmatprep.subr.bf16.mxu0 %v846
    %2102 = vmatpush1.bf16.msra.mxu0 %v845
    %2103 = vmatprep.subr.bf16.mxu0 %v850
    %2104 = vmatpush1.bf16.msra.mxu0 %v849
    %2105 = vmatprep.subr.bf16.mxu0 %v854
    %2106 = vmatpush1.bf16.msra.mxu0 %v853
    %2107 = vmatprep.subr.bf16.mxu0 %v858
    %2108 = vmatpush1.bf16.msra.mxu0 %v857
    %2109 = vmatprep.subr.bf16.mxu0 %v862
    %2110 = vmatpush1.bf16.msra.mxu0 %v861
    %2111 = vmatprep.subr.bf16.mxu0 %v866
    %2112 = vmatpush1.bf16.msra.mxu0 %v865
    %2113 = vmatprep.subr.bf16.mxu0 %v870
    %2114 = vmatpush1.bf16.msra.mxu0 %v869
    %2115 = vmatprep.subr.bf16.mxu0 %v874
    %2116 = vmatpush1.bf16.msra.mxu0 %v873
    %2117 = vmatprep.subr.bf16.mxu0 %v878
    %2118 = vmatpush1.bf16.msra.mxu0 %v877
    %2119 = vmatprep.subr.bf16.mxu0 %v882
    %2120 = vmatpush1.bf16.msra.mxu0 %v881
    %2121 = vmatprep.subr.bf16.mxu0 %v886
    %2122 = vmatpush1.bf16.msra.mxu0 %v885
    %2123 = vmatprep.subr.bf16.mxu0 %v890
    %2124 = vmatpush1.bf16.msra.mxu0 %v889
    %2125 = vmatprep.subr.bf16.mxu0 %v894
    %2126 = vmatpush1.bf16.msra.mxu0 %v893
    %2127 = vmatprep.subr.bf16.mxu0 %v898
    %2128 = vmatpush1.bf16.msra.mxu0 %v897
    %2129 = vmatprep.subr.bf16.mxu0 %v902
    %2130 = vmatpush1.bf16.msra.mxu0 %v901
    %2131 = vmatprep.subr.bf16.mxu0 %v906
    %2132 = vmatpush1.bf16.msra.mxu0 %v905
    %2133 = vmatprep.mubr.bf16.mxu0 %v1948
    %2134 = vmatmul.mubr.bf16.gmra.mrb[0].mxu0 %v2059
    %v2135 = vpop.f32.mrb[0].mxu0
    %v2136 = vadd.f32 %v642, %v2135
    %v2137 = vpop.f32.mrb[0].mxu0
    %v2138 = vadd.f32 %v646, %v2137
    %v2139 = vpop.f32.mrb[0].mxu0
    %v2140 = vpop.f32.mrb[0].mxu0
    %2141 = vdwg.mxu0
    %v2142 = vxor.u32 %v2095, 2147483648
    %v2143 = vxor.u32 %v2097, 2147483648
    %v2144 = vxor.u32 %v2136, 2147483648
    %v2145 = vmul.f32 %v2142, 1.442695
    %v2146 = vpow.pop %v2145
    %v2147 = vmul.f32 %v2143, 1.442695
    %v2148 = vpow.pop %v2147
    %v2149 = vmul.f32 %v2144, 1.442695
    %v2150 = vpow.pop %v2149
    %v2151 = vadd.f32 %v2146, 1.0
    %v2152 = vadd.f32 %v2148, 1.0
    %v2153 = vadd.f32 %v2150, 1.0
    %v2154 = vrcp.pop %v2151
    %v2155 = vmul.f32 1.0, %v2154
    %v2156 = vrcp.pop %v2152
    %v2157 = vmul.f32 1.0, %v2156
    %v2158 = vrcp.pop %v2153
    %v2159 = vmul.f32 1.0, %v2158
    %v2160 = vtanh.pop %v2138
    %v2161 = vmul.f32 %v2157, %v1945
    %v2162 = vmul.f32 %v2155, %v2160
    %v2163 = vadd.f32 %v2161, %v2162
    %v2164 = vtanh.pop %v2163
    %v2165 = vmul.f32 %v2159, %v2164
    %v2166 = vpack.c.bf16 %v2165, %v2165
    %s2167 = scalar_lea.vmem %s7, 20
    %2168 = vst [vmem:[%s2167] sm:$0xf] %v2166
    %s2169 = scalar_lea.vmem %s0, 24
    %v2170 = vld [vmem:[%s2169] sm:$0xf]
    %2171 = vmatprep.subr.bf16.mxu0 %v395
    %2172 = vmatpush1.bf16.msra.mxu0 %v394
    %2173 = vmatprep.subr.bf16.mxu0 %v399
    %2174 = vmatpush1.bf16.msra.mxu0 %v398
    %2175 = vmatprep.subr.bf16.mxu0 %v403
    %2176 = vmatpush1.bf16.msra.mxu0 %v402
    %2177 = vmatprep.subr.bf16.mxu0 %v407
    %2178 = vmatpush1.bf16.msra.mxu0 %v406
    %2179 = vmatprep.subr.bf16.mxu0 %v411
    %2180 = vmatpush1.bf16.msra.mxu0 %v410
    %2181 = vmatprep.subr.bf16.mxu0 %v415
    %2182 = vmatpush1.bf16.msra.mxu0 %v414
    %2183 = vmatprep.subr.bf16.mxu0 %v419
    %2184 = vmatpush1.bf16.msra.mxu0 %v418
    %2185 = vmatprep.subr.bf16.mxu0 %v423
    %2186 = vmatpush1.bf16.msra.mxu0 %v422
    %2187 = vmatprep.subr.bf16.mxu0 %v427
    %2188 = vmatpush1.bf16.msra.mxu0 %v426
    %2189 = vmatprep.subr.bf16.mxu0 %v431
    %2190 = vmatpush1.bf16.msra.mxu0 %v430
    %2191 = vmatprep.subr.bf16.mxu0 %v435
    %2192 = vmatpush1.bf16.msra.mxu0 %v434
    %2193 = vmatprep.subr.bf16.mxu0 %v439
    %2194 = vmatpush1.bf16.msra.mxu0 %v438
    %2195 = vmatprep.subr.bf16.mxu0 %v443
    %2196 = vmatpush1.bf16.msra.mxu0 %v442
    %2197 = vmatprep.subr.bf16.mxu0 %v447
    %2198 = vmatpush1.bf16.msra.mxu0 %v446
    %2199 = vmatprep.subr.bf16.mxu0 %v451
    %2200 = vmatpush1.bf16.msra.mxu0 %v450
    %2201 = vmatprep.subr.bf16.mxu0 %v455
    %2202 = vmatpush1.bf16.msra.mxu0 %v454
    %2203 = vmatprep.mubr.bf16.mxu0 %v2059
    %2204 = vmatmul.mubr.bf16.gmra.mrb[0].mxu0 %v2170
    %v2205 = vpop.f32.mrb[0].mxu0
    %v2206 = vadd.f32 %v185, %v2205
    %v2207 = vpop.f32.mrb[0].mxu0
    %v2208 = vadd.f32 %v189, %v2207
    %v2209 = vpop.f32.mrb[0].mxu0
    %v2210 = vpop.f32.mrb[0].mxu0
    %2211 = vdwg.mxu0
    %2212 = vmatprep.subr.bf16.mxu0 %v397
    %2213 = vmatpush1.bf16.msra.mxu0 %v396
    %2214 = vmatprep.subr.bf16.mxu0 %v401
    %2215 = vmatpush1.bf16.msra.mxu0 %v400
    %2216 = vmatprep.subr.bf16.mxu0 %v405
    %2217 = vmatpush1.bf16.msra.mxu0 %v404
    %2218 = vmatprep.subr.bf16.mxu0 %v409
    %2219 = vmatpush1.bf16.msra.mxu0 %v408
    %2220 = vmatprep.subr.bf16.mxu0 %v413
    %2221 = vmatpush1.bf16.msra.mxu0 %v412
    %2222 = vmatprep.subr.bf16.mxu0 %v417
    %2223 = vmatpush1.bf16.msra.mxu0 %v416
    %2224 = vmatprep.subr.bf16.mxu0 %v421
    %2225 = vmatpush1.bf16.msra.mxu0 %v420
    %2226 = vmatprep.subr.bf16.mxu0 %v425
    %2227 = vmatpush1.bf16.msra.mxu0 %v424
    %2228 = vmatprep.subr.bf16.mxu0 %v429
    %2229 = vmatpush1.bf16.msra.mxu0 %v428
    %2230 = vmatprep.subr.bf16.mxu0 %v433
    %2231 = vmatpush1.bf16.msra.mxu0 %v432
    %2232 = vmatprep.subr.bf16.mxu0 %v437
    %2233 = vmatpush1.bf16.msra.mxu0 %v436
    %2234 = vmatprep.subr.bf16.mxu0 %v441
    %2235 = vmatpush1.bf16.msra.mxu0 %v440
    %2236 = vmatprep.subr.bf16.mxu0 %v445
    %2237 = vmatpush1.bf16.msra.mxu0 %v444
    %2238 = vmatprep.subr.bf16.mxu0 %v449
    %2239 = vmatpush1.bf16.msra.mxu0 %v448
    %2240 = vmatprep.subr.bf16.mxu0 %v453
    %2241 = vmatpush1.bf16.msra.mxu0 %v452
    %2242 = vmatprep.subr.bf16.mxu0 %v457
    %2243 = vmatpush1.bf16.msra.mxu0 %v456
    %2244 = vmatprep.mubr.bf16.mxu0 %v2059
    %2245 = vmatmul.mubr.bf16.gmra.mrb[0].mxu0 %v2170
    %v2246 = vpop.f32.mrb[0].mxu0
    %v2247 = vadd.f32 %v193, %v2246
    %v2248 = vpop.f32.mrb[0].mxu0
    %v2249 = vadd.f32 %v197, %v2248
    %v2250 = vpop.f32.mrb[0].mxu0
    %v2251 = vpop.f32.mrb[0].mxu0
    %2252 = vdwg.mxu0
    %v2253 = vxor.u32 %v2206, 2147483648
    %v2254 = vxor.u32 %v2208, 2147483648
    %v2255 = vxor.u32 %v2247, 2147483648
    %v2256 = vmul.f32 %v2253, 1.442695
    %v2257 = vpow.pop %v2256
    %v2258 = vmul.f32 %v2254, 1.442695
    %v2259 = vpow.pop %v2258
    %v2260 = vmul.f32 %v2255, 1.442695
    %v2261 = vpow.pop %v2260
    %v2262 = vadd.f32 %v2257, 1.0
    %v2263 = vadd.f32 %v2259, 1.0
    %v2264 = vadd.f32 %v2261, 1.0
    %v2265 = vrcp.pop %v2262
    %v2266 = vmul.f32 1.0, %v2265
    %v2267 = vrcp.pop %v2263
    %v2268 = vmul.f32 1.0, %v2267
    %v2269 = vrcp.pop %v2264
    %v2270 = vmul.f32 1.0, %v2269
    %v2271 = vtanh.pop %v2249
    %v2272 = vmul.f32 %v2268, %v2056
    %v2273 = vmul.f32 %v2266, %v2271
    %v2274 = vadd.f32 %v2272, %v2273
    %v2275 = vtanh.pop %v2274
    %v2276 = vmul.f32 %v2270, %v2275
    %v2277 = vpack.c.bf16 %v2276, %v2276
    %2278 = vmatprep.subr.bf16.mxu0 %v844
    %2279 = vmatpush1.bf16.msra.mxu0 %v843
    %2280 = vmatprep.subr.bf16.mxu0 %v848
    %2281 = vmatpush1.bf16.msra.mxu0 %v847
    %2282 = vmatprep.subr.bf16.mxu0 %v852
    %2283 = vmatpush1.bf16.msra.mxu0 %v851
    %2284 = vmatprep.subr.bf16.mxu0 %v856
    %2285 = vmatpush1.bf16.msra.mxu0 %v855
    %2286 = vmatprep.subr.bf16.mxu0 %v860
    %2287 = vmatpush1.bf16.msra.mxu0 %v859
    %2288 = vmatprep.subr.bf16.mxu0 %v864
    %2289 = vmatpush1.bf16.msra.mxu0 %v863
    %2290 = vmatprep.subr.bf16.mxu0 %v868
    %2291 = vmatpush1.bf16.msra.mxu0 %v867
    %2292 = vmatprep.subr.bf16.mxu0 %v872
    %2293 = vmatpush1.bf16.msra.mxu0 %v871
    %2294 = vmatprep.subr.bf16.mxu0 %v876
    %2295 = vmatpush1.bf16.msra.mxu0 %v875
    %2296 = vmatprep.subr.bf16.mxu0 %v880
    %2297 = vmatpush1.bf16.msra.mxu0 %v879
    %2298 = vmatprep.subr.bf16.mxu0 %v884
    %2299 = vmatpush1.bf16.msra.mxu0 %v883
    %2300 = vmatprep.subr.bf16.mxu0 %v888
    %2301 = vmatpush1.bf16.msra.mxu0 %v887
    %2302 = vmatprep.subr.bf16.mxu0 %v892
    %2303 = vmatpush1.bf16.msra.mxu0 %v891
    %2304 = vmatprep.subr.bf16.mxu0 %v896
    %2305 = vmatpush1.bf16.msra.mxu0 %v895
    %2306 = vmatprep.subr.bf16.mxu0 %v900
    %2307 = vmatpush1.bf16.msra.mxu0 %v899
    %2308 = vmatprep.subr.bf16.mxu0 %v904
    %2309 = vmatpush1.bf16.msra.mxu0 %v903
    %2310 = vmatprep.mubr.bf16.mxu0 %v2166
    %2311 = vmatmul.mubr.bf16.gmra.mrb[0].mxu0 %v2277
    %v2312 = vpop.f32.mrb[0].mxu0
    %v2313 = vadd.f32 %v634, %v2312
    %v2314 = vpop.f32.mrb[0].mxu0
    %v2315 = vadd.f32 %v638, %v2314
    %v2316 = vpop.f32.mrb[0].mxu0
    %v2317 = vpop.f32.mrb[0].mxu0
    %2318 = vdwg.mxu0
    %2319 = vmatprep.subr.bf16.mxu0 %v846
    %2320 = vmatpush1.bf16.msra.mxu0 %v845
    %2321 = vmatprep.subr.bf16.mxu0 %v850
    %2322 = vmatpush1.bf16.msra.mxu0 %v849
    %2323 = vmatprep.subr.bf16.mxu0 %v854
    %2324 = vmatpush1.bf16.msra.mxu0 %v853
    %2325 = vmatprep.subr.bf16.mxu0 %v858
    %2326 = vmatpush1.bf16.msra.mxu0 %v857
    %2327 = vmatprep.subr.bf16.mxu0 %v862
    %2328 = vmatpush1.bf16.msra.mxu0 %v861
    %2329 = vmatprep.subr.bf16.mxu0 %v866
    %2330 = vmatpush1.bf16.msra.mxu0 %v865
    %2331 = vmatprep.subr.bf16.mxu0 %v870
    %2332 = vmatpush1.bf16.msra.mxu0 %v869
    %2333 = vmatprep.subr.bf16.mxu0 %v874
    %2334 = vmatpush1.bf16.msra.mxu0 %v873
    %2335 = vmatprep.subr.bf16.mxu0 %v878
    %2336 = vmatpush1.bf16.msra.mxu0 %v877
    %2337 = vmatprep.subr.bf16.mxu0 %v882
    %2338 = vmatpush1.bf16.msra.mxu0 %v881
    %2339 = vmatprep.subr.bf16.mxu0 %v886
    %2340 = vmatpush1.bf16.msra.mxu0 %v885
    %2341 = vmatprep.subr.bf16.mxu0 %v890
    %2342 = vmatpush1.bf16.msra.mxu0 %v889
    %2343 = vmatprep.subr.bf16.mxu0 %v894
    %2344 = vmatpush1.bf16.msra.mxu0 %v893
    %2345 = vmatprep.subr.bf16.mxu0 %v898
    %2346 = vmatpush1.bf16.msra.mxu0 %v897
    %2347 = vmatprep.subr.bf16.mxu0 %v902
    %2348 = vmatpush1.bf16.msra.mxu0 %v901
    %2349 = vmatprep.subr.bf16.mxu0 %v906
    %2350 = vmatpush1.bf16.msra.mxu0 %v905
    %2351 = vmatprep.mubr.bf16.mxu0 %v2166
    %2352 = vmatmul.mubr.bf16.gmra.mrb[0].mxu0 %v2277
    %v2353 = vpop.f32.mrb[0].mxu0
    %v2354 = vadd.f32 %v642, %v2353
    %v2355 = vpop.f32.mrb[0].mxu0
    %v2356 = vadd.f32 %v646, %v2355
    %v2357 = vpop.f32.mrb[0].mxu0
    %v2358 = vpop.f32.mrb[0].mxu0
    %2359 = vdwg.mxu0
    %v2360 = vxor.u32 %v2313, 2147483648
    %v2361 = vxor.u32 %v2315, 2147483648
    %v2362 = vxor.u32 %v2354, 2147483648
    %v2363 = vmul.f32 %v2360, 1.442695
    %v2364 = vpow.pop %v2363
    %v2365 = vmul.f32 %v2361, 1.442695
    %v2366 = vpow.pop %v2365
    %v2367 = vmul.f32 %v2362, 1.442695
    %v2368 = vpow.pop %v2367
    %v2369 = vadd.f32 %v2364, 1.0
    %v2370 = vadd.f32 %v2366, 1.0
    %v2371 = vadd.f32 %v2368, 1.0
    %v2372 = vrcp.pop %v2369
    %v2373 = vmul.f32 1.0, %v2372
    %v2374 = vrcp.pop %v2370
    %v2375 = vmul.f32 1.0, %v2374
    %v2376 = vrcp.pop %v2371
    %v2377 = vmul.f32 1.0, %v2376
    %v2378 = vtanh.pop %v2356
    %v2379 = vmul.f32 %v2375, %v2163
    %v2380 = vmul.f32 %v2373, %v2378
    %v2381 = vadd.f32 %v2379, %v2380
    %v2382 = vtanh.pop %v2381
    %v2383 = vmul.f32 %v2377, %v2382
    %v2384 = vpack.c.bf16 %v2383, %v2383
    %s2385 = scalar_lea.vmem %s7, 24
    %2386 = vst [vmem:[%s2385] sm:$0xf] %v2384
    %s2387 = scalar_lea.vmem %s0, 28
    %v2388 = vld [vmem:[%s2387] sm:$0xf]
    %2389 = vmatprep.subr.bf16.mxu0 %v395
    %2390 = vmatpush1.bf16.msra.mxu0 %v394
    %2391 = vmatprep.subr.bf16.mxu0 %v399
    %2392 = vmatpush1.bf16.msra.mxu0 %v398
    %2393 = vmatprep.subr.bf16.mxu0 %v403
    %2394 = vmatpush1.bf16.msra.mxu0 %v402
    %2395 = vmatprep.subr.bf16.mxu0 %v407
    %2396 = vmatpush1.bf16.msra.mxu0 %v406
    %2397 = vmatprep.subr.bf16.mxu0 %v411
    %2398 = vmatpush1.bf16.msra.mxu0 %v410
    %2399 = vmatprep.subr.bf16.mxu0 %v415
    %2400 = vmatpush1.bf16.msra.mxu0 %v414
    %2401 = vmatprep.subr.bf16.mxu0 %v419
    %2402 = vmatpush1.bf16.msra.mxu0 %v418
    %2403 = vmatprep.subr.bf16.mxu0 %v423
    %2404 = vmatpush1.bf16.msra.mxu0 %v422
    %2405 = vmatprep.subr.bf16.mxu0 %v427
    %2406 = vmatpush1.bf16.msra.mxu0 %v426
    %2407 = vmatprep.subr.bf16.mxu0 %v431
    %2408 = vmatpush1.bf16.msra.mxu0 %v430
    %2409 = vmatprep.subr.bf16.mxu0 %v435
    %2410 = vmatpush1.bf16.msra.mxu0 %v434
    %2411 = vmatprep.subr.bf16.mxu0 %v439
    %2412 = vmatpush1.bf16.msra.mxu0 %v438
    %2413 = vmatprep.subr.bf16.mxu0 %v443
    %2414 = vmatpush1.bf16.msra.mxu0 %v442
    %2415 = vmatprep.subr.bf16.mxu0 %v447
    %2416 = vmatpush1.bf16.msra.mxu0 %v446
    %2417 = vmatprep.subr.bf16.mxu0 %v451
    %2418 = vmatpush1.bf16.msra.mxu0 %v450
    %2419 = vmatprep.subr.bf16.mxu0 %v455
    %2420 = vmatpush1.bf16.msra.mxu0 %v454
    %2421 = vmatprep.mubr.bf16.mxu0 %v2277
    %2422 = vmatmul.mubr.bf16.gmra.mrb[0].mxu0 %v2388
    %v2423 = vpop.f32.mrb[0].mxu0
    %v2424 = vadd.f32 %v185, %v2423
    %v2425 = vpop.f32.mrb[0].mxu0
    %v2426 = vadd.f32 %v189, %v2425
    %v2427 = vpop.f32.mrb[0].mxu0
    %v2428 = vpop.f32.mrb[0].mxu0
    %2429 = vdwg.mxu0
    %2430 = vmatprep.subr.bf16.mxu0 %v397
    %2431 = vmatpush1.bf16.msra.mxu0 %v396
    %2432 = vmatprep.subr.bf16.mxu0 %v401
    %2433 = vmatpush1.bf16.msra.mxu0 %v400
    %2434 = vmatprep.subr.bf16.mxu0 %v405
    %2435 = vmatpush1.bf16.msra.mxu0 %v404
    %2436 = vmatprep.subr.bf16.mxu0 %v409
    %2437 = vmatpush1.bf16.msra.mxu0 %v408
    %2438 = vmatprep.subr.bf16.mxu0 %v413
    %2439 = vmatpush1.bf16.msra.mxu0 %v412
    %2440 = vmatprep.subr.bf16.mxu0 %v417
    %2441 = vmatpush1.bf16.msra.mxu0 %v416
    %2442 = vmatprep.subr.bf16.mxu0 %v421
    %2443 = vmatpush1.bf16.msra.mxu0 %v420
    %2444 = vmatprep.subr.bf16.mxu0 %v425
    %2445 = vmatpush1.bf16.msra.mxu0 %v424
    %2446 = vmatprep.subr.bf16.mxu0 %v429
    %2447 = vmatpush1.bf16.msra.mxu0 %v428
    %2448 = vmatprep.subr.bf16.mxu0 %v433
    %2449 = vmatpush1.bf16.msra.mxu0 %v432
    %2450 = vmatprep.subr.bf16.mxu0 %v437
    %2451 = vmatpush1.bf16.msra.mxu0 %v436
    %2452 = vmatprep.subr.bf16.mxu0 %v441
    %2453 = vmatpush1.bf16.msra.mxu0 %v440
    %2454 = vmatprep.subr.bf16.mxu0 %v445
    %2455 = vmatpush1.bf16.msra.mxu0 %v444
    %2456 = vmatprep.subr.bf16.mxu0 %v449
    %2457 = vmatpush1.bf16.msra.mxu0 %v448
    %2458 = vmatprep.subr.bf16.mxu0 %v453
    %2459 = vmatpush1.bf16.msra.mxu0 %v452
    %2460 = vmatprep.subr.bf16.mxu0 %v457
    %2461 = vmatpush1.bf16.msra.mxu0 %v456
    %2462 = vmatprep.mubr.bf16.mxu0 %v2277
    %2463 = vmatmul.mubr.bf16.gmra.mrb[0].mxu0 %v2388
    %v2464 = vpop.f32.mrb[0].mxu0
    %v2465 = vadd.f32 %v193, %v2464
    %v2466 = vpop.f32.mrb[0].mxu0
    %v2467 = vadd.f32 %v197, %v2466
    %v2468 = vpop.f32.mrb[0].mxu0
    %v2469 = vpop.f32.mrb[0].mxu0
    %2470 = vdwg.mxu0
    %v2471 = vxor.u32 %v2424, 2147483648
    %v2472 = vxor.u32 %v2426, 2147483648
    %v2473 = vxor.u32 %v2465, 2147483648
    %v2474 = vmul.f32 %v2471, 1.442695
    %v2475 = vpow.pop %v2474
    %v2476 = vmul.f32 %v2472, 1.442695
    %v2477 = vpow.pop %v2476
    %v2478 = vmul.f32 %v2473, 1.442695
    %v2479 = vpow.pop %v2478
    %v2480 = vadd.f32 %v2475, 1.0
    %v2481 = vadd.f32 %v2477, 1.0
    %v2482 = vadd.f32 %v2479, 1.0
    %v2483 = vrcp.pop %v2480
    %v2484 = vmul.f32 1.0, %v2483
    %v2485 = vrcp.pop %v2481
    %v2486 = vmul.f32 1.0, %v2485
    %v2487 = vrcp.pop %v2482
    %v2488 = vmul.f32 1.0, %v2487
    %v2489 = vtanh.pop %v2467
    %v2490 = vmul.f32 %v2486, %v2274
    %v2491 = vmul.f32 %v2484, %v2489
    %v2492 = vadd.f32 %v2490, %v2491
    %v2493 = vtanh.pop %v2492
    %v2494 = vmul.f32 %v2488, %v2493
    %v2495 = vpack.c.bf16 %v2494, %v2494
    %2496 = vmatprep.subr.bf16.mxu0 %v844
    %2497 = vmatpush1.bf16.msra.mxu0 %v843
    %2498 = vmatprep.subr.bf16.mxu0 %v848
    %2499 = vmatpush1.bf16.msra.mxu0 %v847
    %2500 = vmatprep.subr.bf16.mxu0 %v852
    %2501 = vmatpush1.bf16.msra.mxu0 %v851
    %2502 = vmatprep.subr.bf16.mxu0 %v856
    %2503 = vmatpush1.bf16.msra.mxu0 %v855
    %2504 = vmatprep.subr.bf16.mxu0 %v860
    %2505 = vmatpush1.bf16.msra.mxu0 %v859
    %2506 = vmatprep.subr.bf16.mxu0 %v864
    %2507 = vmatpush1.bf16.msra.mxu0 %v863
    %2508 = vmatprep.subr.bf16.mxu0 %v868
    %2509 = vmatpush1.bf16.msra.mxu0 %v867
    %2510 = vmatprep.subr.bf16.mxu0 %v872
    %2511 = vmatpush1.bf16.msra.mxu0 %v871
    %2512 = vmatprep.subr.bf16.mxu0 %v876
    %2513 = vmatpush1.bf16.msra.mxu0 %v875
    %2514 = vmatprep.subr.bf16.mxu0 %v880
    %2515 = vmatpush1.bf16.msra.mxu0 %v879
    %2516 = vmatprep.subr.bf16.mxu0 %v884
    %2517 = vmatpush1.bf16.msra.mxu0 %v883
    %2518 = vmatprep.subr.bf16.mxu0 %v888
    %2519 = vmatpush1.bf16.msra.mxu0 %v887
    %2520 = vmatprep.subr.bf16.mxu0 %v892
    %2521 = vmatpush1.bf16.msra.mxu0 %v891
    %2522 = vmatprep.subr.bf16.mxu0 %v896
    %2523 = vmatpush1.bf16.msra.mxu0 %v895
    %2524 = vmatprep.subr.bf16.mxu0 %v900
    %2525 = vmatpush1.bf16.msra.mxu0 %v899
    %2526 = vmatprep.subr.bf16.mxu0 %v904
    %2527 = vmatpush1.bf16.msra.mxu0 %v903
    %2528 = vmatprep.mubr.bf16.mxu0 %v2384
    %2529 = vmatmul.mubr.bf16.gmra.mrb[0].mxu0 %v2495
    %v2530 = vpop.f32.mrb[0].mxu0
    %v2531 = vadd.f32 %v634, %v2530
    %v2532 = vpop.f32.mrb[0].mxu0
    %v2533 = vadd.f32 %v638, %v2532
    %v2534 = vpop.f32.mrb[0].mxu0
    %v2535 = vpop.f32.mrb[0].mxu0
    %2536 = vdwg.mxu0
    %2537 = vmatprep.subr.bf16.mxu0 %v846
    %2538 = vmatpush1.bf16.msra.mxu0 %v845
    %2539 = vmatprep.subr.bf16.mxu0 %v850
    %2540 = vmatpush1.bf16.msra.mxu0 %v849
    %2541 = vmatprep.subr.bf16.mxu0 %v854
    %2542 = vmatpush1.bf16.msra.mxu0 %v853
    %2543 = vmatprep.subr.bf16.mxu0 %v858
    %2544 = vmatpush1.bf16.msra.mxu0 %v857
    %2545 = vmatprep.subr.bf16.mxu0 %v862
    %2546 = vmatpush1.bf16.msra.mxu0 %v861
    %2547 = vmatprep.subr.bf16.mxu0 %v866
    %2548 = vmatpush1.bf16.msra.mxu0 %v865
    %2549 = vmatprep.subr.bf16.mxu0 %v870
    %2550 = vmatpush1.bf16.msra.mxu0 %v869
    %2551 = vmatprep.subr.bf16.mxu0 %v874
    %2552 = vmatpush1.bf16.msra.mxu0 %v873
    %2553 = vmatprep.subr.bf16.mxu0 %v878
    %2554 = vmatpush1.bf16.msra.mxu0 %v877
    %2555 = vmatprep.subr.bf16.mxu0 %v882
    %2556 = vmatpush1.bf16.msra.mxu0 %v881
    %2557 = vmatprep.subr.bf16.mxu0 %v886
    %2558 = vmatpush1.bf16.msra.mxu0 %v885
    %2559 = vmatprep.subr.bf16.mxu0 %v890
    %2560 = vmatpush1.bf16.msra.mxu0 %v889
    %2561 = vmatprep.subr.bf16.mxu0 %v894
    %2562 = vmatpush1.bf16.msra.mxu0 %v893
    %2563 = vmatprep.subr.bf16.mxu0 %v898
    %2564 = vmatpush1.bf16.msra.mxu0 %v897
    %2565 = vmatprep.subr.bf16.mxu0 %v902
    %2566 = vmatpush1.bf16.msra.mxu0 %v901
    %2567 = vmatprep.subr.bf16.mxu0 %v906
    %2568 = vmatpush1.bf16.msra.mxu0 %v905
    %2569 = vmatprep.mubr.bf16.mxu0 %v2384
    %2570 = vmatmul.mubr.bf16.gmra.mrb[0].mxu0 %v2495
    %v2571 = vpop.f32.mrb[0].mxu0
    %v2572 = vadd.f32 %v642, %v2571
    %v2573 = vpop.f32.mrb[0].mxu0
    %v2574 = vadd.f32 %v646, %v2573
    %v2575 = vpop.f32.mrb[0].mxu0
    %v2576 = vpop.f32.mrb[0].mxu0
    %2577 = vdwg.mxu0
    %v2578 = vxor.u32 %v2531, 2147483648
    %v2579 = vxor.u32 %v2533, 2147483648
    %v2580 = vxor.u32 %v2572, 2147483648
    %v2581 = vmul.f32 %v2578, 1.442695
    %v2582 = vpow.pop %v2581
    %v2583 = vmul.f32 %v2579, 1.442695
    %v2584 = vpow.pop %v2583
    %v2585 = vmul.f32 %v2580, 1.442695
    %v2586 = vpow.pop %v2585
    %v2587 = vadd.f32 %v2582, 1.0
    %v2588 = vadd.f32 %v2584, 1.0
    %v2589 = vadd.f32 %v2586, 1.0
    %v2590 = vrcp.pop %v2587
    %v2591 = vmul.f32 1.0, %v2590
    %v2592 = vrcp.pop %v2588
    %v2593 = vmul.f32 1.0, %v2592
    %v2594 = vrcp.pop %v2589
    %v2595 = vmul.f32 1.0, %v2594
    %v2596 = vtanh.pop %v2574
    %v2597 = vmul.f32 %v2593, %v2381
    %v2598 = vmul.f32 %v2591, %v2596
    %v2599 = vadd.f32 %v2597, %v2598
    %v2600 = vtanh.pop %v2599
    %v2601 = vmul.f32 %v2595, %v2600
    %v2602 = vpack.c.bf16 %v2601, %v2601
    %s2603 = scalar_lea.vmem %s7, 28
    %2604 = vst [vmem:[%s2603] sm:$0xf] %v2602
    %s2605 = scalar_lea.vmem %s0, 32
    %v2606 = vld [vmem:[%s2605] sm:$0xf]
    %2607 = vmatprep.subr.bf16.mxu0 %v395
    %2608 = vmatpush1.bf16.msra.mxu0 %v394
    %2609 = vmatprep.subr.bf16.mxu0 %v399
    %2610 = vmatpush1.bf16.msra.mxu0 %v398
    %2611 = vmatprep.subr.bf16.mxu0 %v403
    %2612 = vmatpush1.bf16.msra.mxu0 %v402
    %2613 = vmatprep.subr.bf16.mxu0 %v407
    %2614 = vmatpush1.bf16.msra.mxu0 %v406
    %2615 = vmatprep.subr.bf16.mxu0 %v411
    %2616 = vmatpush1.bf16.msra.mxu0 %v410
    %2617 = vmatprep.subr.bf16.mxu0 %v415
    %2618 = vmatpush1.bf16.msra.mxu0 %v414
    %2619 = vmatprep.subr.bf16.mxu0 %v419
    %2620 = vmatpush1.bf16.msra.mxu0 %v418
    %2621 = vmatprep.subr.bf16.mxu0 %v423
    %2622 = vmatpush1.bf16.msra.mxu0 %v422
    %2623 = vmatprep.subr.bf16.mxu0 %v427
    %2624 = vmatpush1.bf16.msra.mxu0 %v426
    %2625 = vmatprep.subr.bf16.mxu0 %v431
    %2626 = vmatpush1.bf16.msra.mxu0 %v430
    %2627 = vmatprep.subr.bf16.mxu0 %v435
    %2628 = vmatpush1.bf16.msra.mxu0 %v434
    %2629 = vmatprep.subr.bf16.mxu0 %v439
    %2630 = vmatpush1.bf16.msra.mxu0 %v438
    %2631 = vmatprep.subr.bf16.mxu0 %v443
    %2632 = vmatpush1.bf16.msra.mxu0 %v442
    %2633 = vmatprep.subr.bf16.mxu0 %v447
    %2634 = vmatpush1.bf16.msra.mxu0 %v446
    %2635 = vmatprep.subr.bf16.mxu0 %v451
    %2636 = vmatpush1.bf16.msra.mxu0 %v450
    %2637 = vmatprep.subr.bf16.mxu0 %v455
    %2638 = vmatpush1.bf16.msra.mxu0 %v454
    %2639 = vmatprep.mubr.bf16.mxu0 %v2495
    %2640 = vmatmul.mubr.bf16.gmra.mrb[0].mxu0 %v2606
    %v2641 = vpop.f32.mrb[0].mxu0
    %v2642 = vadd.f32 %v185, %v2641
    %v2643 = vpop.f32.mrb[0].mxu0
    %v2644 = vadd.f32 %v189, %v2643
    %v2645 = vpop.f32.mrb[0].mxu0
    %v2646 = vpop.f32.mrb[0].mxu0
    %2647 = vdwg.mxu0
    %2648 = vmatprep.subr.bf16.mxu0 %v397
    %2649 = vmatpush1.bf16.msra.mxu0 %v396
    %2650 = vmatprep.subr.bf16.mxu0 %v401
    %2651 = vmatpush1.bf16.msra.mxu0 %v400
    %2652 = vmatprep.subr.bf16.mxu0 %v405
    %2653 = vmatpush1.bf16.msra.mxu0 %v404
    %2654 = vmatprep.subr.bf16.mxu0 %v409
    %2655 = vmatpush1.bf16.msra.mxu0 %v408
    %2656 = vmatprep.subr.bf16.mxu0 %v413
    %2657 = vmatpush1.bf16.msra.mxu0 %v412
    %2658 = vmatprep.subr.bf16.mxu0 %v417
    %2659 = vmatpush1.bf16.msra.mxu0 %v416
    %2660 = vmatprep.subr.bf16.mxu0 %v421
    %2661 = vmatpush1.bf16.msra.mxu0 %v420
    %2662 = vmatprep.subr.bf16.mxu0 %v425
    %2663 = vmatpush1.bf16.msra.mxu0 %v424
    %2664 = vmatprep.subr.bf16.mxu0 %v429
    %2665 = vmatpush1.bf16.msra.mxu0 %v428
    %2666 = vmatprep.subr.bf16.mxu0 %v433
    %2667 = vmatpush1.bf16.msra.mxu0 %v432
    %2668 = vmatprep.subr.bf16.mxu0 %v437
    %2669 = vmatpush1.bf16.msra.mxu0 %v436
    %2670 = vmatprep.subr.bf16.mxu0 %v441
    %2671 = vmatpush1.bf16.msra.mxu0 %v440
    %2672 = vmatprep.subr.bf16.mxu0 %v445
    %2673 = vmatpush1.bf16.msra.mxu0 %v444
    %2674 = vmatprep.subr.bf16.mxu0 %v449
    %2675 = vmatpush1.bf16.msra.mxu0 %v448
    %2676 = vmatprep.subr.bf16.mxu0 %v453
    %2677 = vmatpush1.bf16.msra.mxu0 %v452
    %2678 = vmatprep.subr.bf16.mxu0 %v457
    %2679 = vmatpush1.bf16.msra.mxu0 %v456
    %2680 = vmatprep.mubr.bf16.mxu0 %v2495
    %2681 = vmatmul.mubr.bf16.gmra.mrb[0].mxu0 %v2606
    %v2682 = vpop.f32.mrb[0].mxu0
    %v2683 = vadd.f32 %v193, %v2682
    %v2684 = vpop.f32.mrb[0].mxu0
    %v2685 = vadd.f32 %v197, %v2684
    %v2686 = vpop.f32.mrb[0].mxu0
    %v2687 = vpop.f32.mrb[0].mxu0
    %2688 = vdwg.mxu0
    %v2689 = vxor.u32 %v2642, 2147483648
    %v2690 = vxor.u32 %v2644, 2147483648
    %v2691 = vxor.u32 %v2683, 2147483648
    %v2692 = vmul.f32 %v2689, 1.442695
    %v2693 = vpow.pop %v2692
    %v2694 = vmul.f32 %v2690, 1.442695
    %v2695 = vpow.pop %v2694
    %v2696 = vmul.f32 %v2691, 1.442695
    %v2697 = vpow.pop %v2696
    %v2698 = vadd.f32 %v2693, 1.0
    %v2699 = vadd.f32 %v2695, 1.0
    %v2700 = vadd.f32 %v2697, 1.0
    %v2701 = vrcp.pop %v2698
    %v2702 = vmul.f32 1.0, %v2701
    %v2703 = vrcp.pop %v2699
    %v2704 = vmul.f32 1.0, %v2703
    %v2705 = vrcp.pop %v2700
    %v2706 = vmul.f32 1.0, %v2705
    %v2707 = vtanh.pop %v2685
    %v2708 = vmul.f32 %v2704, %v2492
    %v2709 = vmul.f32 %v2702, %v2707
    %v2710 = vadd.f32 %v2708, %v2709
    %v2711 = vtanh.pop %v2710
    %v2712 = vmul.f32 %v2706, %v2711
    %v2713 = vpack.c.bf16 %v2712, %v2712
    %2714 = vmatprep.subr.bf16.mxu0 %v844
    %2715 = vmatpush1.bf16.msra.mxu0 %v843
    %2716 = vmatprep.subr.bf16.mxu0 %v848
    %2717 = vmatpush1.bf16.msra.mxu0 %v847
    %2718 = vmatprep.subr.bf16.mxu0 %v852
    %2719 = vmatpush1.bf16.msra.mxu0 %v851
    %2720 = vmatprep.subr.bf16.mxu0 %v856
    %2721 = vmatpush1.bf16.msra.mxu0 %v855
    %2722 = vmatprep.subr.bf16.mxu0 %v860
    %2723 = vmatpush1.bf16.msra.mxu0 %v859
    %2724 = vmatprep.subr.bf16.mxu0 %v864
    %2725 = vmatpush1.bf16.msra.mxu0 %v863
    %2726 = vmatprep.subr.bf16.mxu0 %v868
    %2727 = vmatpush1.bf16.msra.mxu0 %v867
    %2728 = vmatprep.subr.bf16.mxu0 %v872
    %2729 = vmatpush1.bf16.msra.mxu0 %v871
    %2730 = vmatprep.subr.bf16.mxu0 %v876
    %2731 = vmatpush1.bf16.msra.mxu0 %v875
    %2732 = vmatprep.subr.bf16.mxu0 %v880
    %2733 = vmatpush1.bf16.msra.mxu0 %v879
    %2734 = vmatprep.subr.bf16.mxu0 %v884
    %2735 = vmatpush1.bf16.msra.mxu0 %v883
    %2736 = vmatprep.subr.bf16.mxu0 %v888
    %2737 = vmatpush1.bf16.msra.mxu0 %v887
    %2738 = vmatprep.subr.bf16.mxu0 %v892
    %2739 = vmatpush1.bf16.msra.mxu0 %v891
    %2740 = vmatprep.subr.bf16.mxu0 %v896
    %2741 = vmatpush1.bf16.msra.mxu0 %v895
    %2742 = vmatprep.subr.bf16.mxu0 %v900
    %2743 = vmatpush1.bf16.msra.mxu0 %v899
    %2744 = vmatprep.subr.bf16.mxu0 %v904
    %2745 = vmatpush1.bf16.msra.mxu0 %v903
    %2746 = vmatprep.mubr.bf16.mxu0 %v2602
    %2747 = vmatmul.mubr.bf16.gmra.mrb[0].mxu0 %v2713
    %v2748 = vpop.f32.mrb[0].mxu0
    %v2749 = vadd.f32 %v634, %v2748
    %v2750 = vpop.f32.mrb[0].mxu0
    %v2751 = vadd.f32 %v638, %v2750
    %v2752 = vpop.f32.mrb[0].mxu0
    %v2753 = vpop.f32.mrb[0].mxu0
    %2754 = vdwg.mxu0
    %2755 = vmatprep.subr.bf16.mxu0 %v846
    %2756 = vmatpush1.bf16.msra.mxu0 %v845
    %2757 = vmatprep.subr.bf16.mxu0 %v850
    %2758 = vmatpush1.bf16.msra.mxu0 %v849
    %2759 = vmatprep.subr.bf16.mxu0 %v854
    %2760 = vmatpush1.bf16.msra.mxu0 %v853
    %2761 = vmatprep.subr.bf16.mxu0 %v858
    %2762 = vmatpush1.bf16.msra.mxu0 %v857
    %2763 = vmatprep.subr.bf16.mxu0 %v862
    %2764 = vmatpush1.bf16.msra.mxu0 %v861
    %2765 = vmatprep.subr.bf16.mxu0 %v866
    %2766 = vmatpush1.bf16.msra.mxu0 %v865
    %2767 = vmatprep.subr.bf16.mxu0 %v870
    %2768 = vmatpush1.bf16.msra.mxu0 %v869
    %2769 = vmatprep.subr.bf16.mxu0 %v874
    %2770 = vmatpush1.bf16.msra.mxu0 %v873
    %2771 = vmatprep.subr.bf16.mxu0 %v878
    %2772 = vmatpush1.bf16.msra.mxu0 %v877
    %2773 = vmatprep.subr.bf16.mxu0 %v882
    %2774 = vmatpush1.bf16.msra.mxu0 %v881
    %2775 = vmatprep.subr.bf16.mxu0 %v886
    %2776 = vmatpush1.bf16.msra.mxu0 %v885
    %2777 = vmatprep.subr.bf16.mxu0 %v890
    %2778 = vmatpush1.bf16.msra.mxu0 %v889
    %2779 = vmatprep.subr.bf16.mxu0 %v894
    %2780 = vmatpush1.bf16.msra.mxu0 %v893
    %2781 = vmatprep.subr.bf16.mxu0 %v898
    %2782 = vmatpush1.bf16.msra.mxu0 %v897
    %2783 = vmatprep.subr.bf16.mxu0 %v902
    %2784 = vmatpush1.bf16.msra.mxu0 %v901
    %2785 = vmatprep.subr.bf16.mxu0 %v906
    %2786 = vmatpush1.bf16.msra.mxu0 %v905
    %2787 = vmatprep.mubr.bf16.mxu0 %v2602
    %2788 = vmatmul.mubr.bf16.gmra.mrb[0].mxu0 %v2713
    %v2789 = vpop.f32.mrb[0].mxu0
    %v2790 = vadd.f32 %v642, %v2789
    %v2791 = vpop.f32.mrb[0].mxu0
    %v2792 = vadd.f32 %v646, %v2791
    %v2793 = vpop.f32.mrb[0].mxu0
    %v2794 = vpop.f32.mrb[0].mxu0
    %2795 = vdwg.mxu0
    %v2796 = vxor.u32 %v2749, 2147483648
    %v2797 = vxor.u32 %v2751, 2147483648
    %v2798 = vxor.u32 %v2790, 2147483648
    %v2799 = vmul.f32 %v2796, 1.442695
    %v2800 = vpow.pop %v2799
    %v2801 = vmul.f32 %v2797, 1.442695
    %v2802 = vpow.pop %v2801
    %v2803 = vmul.f32 %v2798, 1.442695
    %v2804 = vpow.pop %v2803
    %v2805 = vadd.f32 %v2800, 1.0
    %v2806 = vadd.f32 %v2802, 1.0
    %v2807 = vadd.f32 %v2804, 1.0
    %v2808 = vrcp.pop %v2805
    %v2809 = vmul.f32 1.0, %v2808
    %v2810 = vrcp.pop %v2806
    %v2811 = vmul.f32 1.0, %v2810
    %v2812 = vrcp.pop %v2807
    %v2813 = vmul.f32 1.0, %v2812
    %v2814 = vtanh.pop %v2792
    %v2815 = vmul.f32 %v2811, %v2599
    %v2816 = vmul.f32 %v2809, %v2814
    %v2817 = vadd.f32 %v2815, %v2816
    %v2818 = vtanh.pop %v2817
    %v2819 = vmul.f32 %v2813, %v2818
    %v2820 = vpack.c.bf16 %v2819, %v2819
    %s2821 = scalar_lea.vmem %s7, 32
    %2822 = vst [vmem:[%s2821] sm:$0xf] %v2820
    %s2823 = scalar_lea.vmem %s0, 36
    %v2824 = vld [vmem:[%s2823] sm:$0xf]
    %2825 = vmatprep.subr.bf16.mxu0 %v395
    %2826 = vmatpush1.bf16.msra.mxu0 %v394
    %2827 = vmatprep.subr.bf16.mxu0 %v399
    %2828 = vmatpush1.bf16.msra.mxu0 %v398
    %2829 = vmatprep.subr.bf16.mxu0 %v403
    %2830 = vmatpush1.bf16.msra.mxu0 %v402
    %2831 = vmatprep.subr.bf16.mxu0 %v407
    %2832 = vmatpush1.bf16.msra.mxu0 %v406
    %2833 = vmatprep.subr.bf16.mxu0 %v411
    %2834 = vmatpush1.bf16.msra.mxu0 %v410
    %2835 = vmatprep.subr.bf16.mxu0 %v415
    %2836 = vmatpush1.bf16.msra.mxu0 %v414
    %2837 = vmatprep.subr.bf16.mxu0 %v419
    %2838 = vmatpush1.bf16.msra.mxu0 %v418
    %2839 = vmatprep.subr.bf16.mxu0 %v423
    %2840 = vmatpush1.bf16.msra.mxu0 %v422
    %2841 = vmatprep.subr.bf16.mxu0 %v427
    %2842 = vmatpush1.bf16.msra.mxu0 %v426
    %2843 = vmatprep.subr.bf16.mxu0 %v431
    %2844 = vmatpush1.bf16.msra.mxu0 %v430
    %2845 = vmatprep.subr.bf16.mxu0 %v435
    %2846 = vmatpush1.bf16.msra.mxu0 %v434
    %2847 = vmatprep.subr.bf16.mxu0 %v439
    %2848 = vmatpush1.bf16.msra.mxu0 %v438
    %2849 = vmatprep.subr.bf16.mxu0 %v443
    %2850 = vmatpush1.bf16.msra.mxu0 %v442
    %2851 = vmatprep.subr.bf16.mxu0 %v447
    %2852 = vmatpush1.bf16.msra.mxu0 %v446
    %2853 = vmatprep.subr.bf16.mxu0 %v451
    %2854 = vmatpush1.bf16.msra.mxu0 %v450
    %2855 = vmatprep.subr.bf16.mxu0 %v455
    %2856 = vmatpush1.bf16.msra.mxu0 %v454
    %2857 = vmatprep.mubr.bf16.mxu0 %v2713
    %2858 = vmatmul.mubr.bf16.gmra.mrb[0].mxu0 %v2824
    %v2859 = vpop.f32.mrb[0].mxu0
    %v2860 = vadd.f32 %v185, %v2859
    %v2861 = vpop.f32.mrb[0].mxu0
    %v2862 = vadd.f32 %v189, %v2861
    %v2863 = vpop.f32.mrb[0].mxu0
    %v2864 = vpop.f32.mrb[0].mxu0
    %2865 = vdwg.mxu0
    %2866 = vmatprep.subr.bf16.mxu0 %v397
    %2867 = vmatpush1.bf16.msra.mxu0 %v396
    %2868 = vmatprep.subr.bf16.mxu0 %v401
    %2869 = vmatpush1.bf16.msra.mxu0 %v400
    %2870 = vmatprep.subr.bf16.mxu0 %v405
    %2871 = vmatpush1.bf16.msra.mxu0 %v404
    %2872 = vmatprep.subr.bf16.mxu0 %v409
    %2873 = vmatpush1.bf16.msra.mxu0 %v408
    %2874 = vmatprep.subr.bf16.mxu0 %v413
    %2875 = vmatpush1.bf16.msra.mxu0 %v412
    %2876 = vmatprep.subr.bf16.mxu0 %v417
    %2877 = vmatpush1.bf16.msra.mxu0 %v416
    %2878 = vmatprep.subr.bf16.mxu0 %v421
    %2879 = vmatpush1.bf16.msra.mxu0 %v420
    %2880 = vmatprep.subr.bf16.mxu0 %v425
    %2881 = vmatpush1.bf16.msra.mxu0 %v424
    %2882 = vmatprep.subr.bf16.mxu0 %v429
    %2883 = vmatpush1.bf16.msra.mxu0 %v428
    %2884 = vmatprep.subr.bf16.mxu0 %v433
    %2885 = vmatpush1.bf16.msra.mxu0 %v432
    %2886 = vmatprep.subr.bf16.mxu0 %v437
    %2887 = vmatpush1.bf16.msra.mxu0 %v436
    %2888 = vmatprep.subr.bf16.mxu0 %v441
    %2889 = vmatpush1.bf16.msra.mxu0 %v440
    %2890 = vmatprep.subr.bf16.mxu0 %v445
    %2891 = vmatpush1.bf16.msra.mxu0 %v444
    %2892 = vmatprep.subr.bf16.mxu0 %v449
    %2893 = vmatpush1.bf16.msra.mxu0 %v448
    %2894 = vmatprep.subr.bf16.mxu0 %v453
    %2895 = vmatpush1.bf16.msra.mxu0 %v452
    %2896 = vmatprep.subr.bf16.mxu0 %v457
    %2897 = vmatpush1.bf16.msra.mxu0 %v456
    %2898 = vmatprep.mubr.bf16.mxu0 %v2713
    %2899 = vmatmul.mubr.bf16.gmra.mrb[0].mxu0 %v2824
    %v2900 = vpop.f32.mrb[0].mxu0
    %v2901 = vadd.f32 %v193, %v2900
    %v2902 = vpop.f32.mrb[0].mxu0
    %v2903 = vadd.f32 %v197, %v2902
    %v2904 = vpop.f32.mrb[0].mxu0
    %v2905 = vpop.f32.mrb[0].mxu0
    %2906 = vdwg.mxu0
    %v2907 = vxor.u32 %v2860, 2147483648
    %v2908 = vxor.u32 %v2862, 2147483648
    %v2909 = vxor.u32 %v2901, 2147483648
    %v2910 = vmul.f32 %v2907, 1.442695
    %v2911 = vpow.pop %v2910
    %v2912 = vmul.f32 %v2908, 1.442695
    %v2913 = vpow.pop %v2912
    %v2914 = vmul.f32 %v2909, 1.442695
    %v2915 = vpow.pop %v2914
    %v2916 = vadd.f32 %v2911, 1.0
    %v2917 = vadd.f32 %v2913, 1.0
    %v2918 = vadd.f32 %v2915, 1.0
    %v2919 = vrcp.pop %v2916
    %v2920 = vmul.f32 1.0, %v2919
    %v2921 = vrcp.pop %v2917
    %v2922 = vmul.f32 1.0, %v2921
    %v2923 = vrcp.pop %v2918
    %v2924 = vmul.f32 1.0, %v2923
    %v2925 = vtanh.pop %v2903
    %v2926 = vmul.f32 %v2922, %v2710
    %v2927 = vmul.f32 %v2920, %v2925
    %v2928 = vadd.f32 %v2926, %v2927
    %v2929 = vtanh.pop %v2928
    %v2930 = vmul.f32 %v2924, %v2929
    %v2931 = vpack.c.bf16 %v2930, %v2930
    %2932 = vmatprep.subr.bf16.mxu0 %v844
    %2933 = vmatpush1.bf16.msra.mxu0 %v843
    %2934 = vmatprep.subr.bf16.mxu0 %v848
    %2935 = vmatpush1.bf16.msra.mxu0 %v847
    %2936 = vmatprep.subr.bf16.mxu0 %v852
    %2937 = vmatpush1.bf16.msra.mxu0 %v851
    %2938 = vmatprep.subr.bf16.mxu0 %v856
    %2939 = vmatpush1.bf16.msra.mxu0 %v855
    %2940 = vmatprep.subr.bf16.mxu0 %v860
    %2941 = vmatpush1.bf16.msra.mxu0 %v859
    %2942 = vmatprep.subr.bf16.mxu0 %v864
    %2943 = vmatpush1.bf16.msra.mxu0 %v863
    %2944 = vmatprep.subr.bf16.mxu0 %v868
    %2945 = vmatpush1.bf16.msra.mxu0 %v867
    %2946 = vmatprep.subr.bf16.mxu0 %v872
    %2947 = vmatpush1.bf16.msra.mxu0 %v871
    %2948 = vmatprep.subr.bf16.mxu0 %v876
    %2949 = vmatpush1.bf16.msra.mxu0 %v875
    %2950 = vmatprep.subr.bf16.mxu0 %v880
    %2951 = vmatpush1.bf16.msra.mxu0 %v879
    %2952 = vmatprep.subr.bf16.mxu0 %v884
    %2953 = vmatpush1.bf16.msra.mxu0 %v883
    %2954 = vmatprep.subr.bf16.mxu0 %v888
    %2955 = vmatpush1.bf16.msra.mxu0 %v887
    %2956 = vmatprep.subr.bf16.mxu0 %v892
    %2957 = vmatpush1.bf16.msra.mxu0 %v891
    %2958 = vmatprep.subr.bf16.mxu0 %v896
    %2959 = vmatpush1.bf16.msra.mxu0 %v895
    %2960 = vmatprep.subr.bf16.mxu0 %v900
    %2961 = vmatpush1.bf16.msra.mxu0 %v899
    %2962 = vmatprep.subr.bf16.mxu0 %v904
    %2963 = vmatpush1.bf16.msra.mxu0 %v903
    %2964 = vmatprep.mubr.bf16.mxu0 %v2820
    %2965 = vmatmul.mubr.bf16.gmra.mrb[0].mxu0 %v2931
    %v2966 = vpop.f32.mrb[0].mxu0
    %v2967 = vadd.f32 %v634, %v2966
    %v2968 = vpop.f32.mrb[0].mxu0
    %v2969 = vadd.f32 %v638, %v2968
    %v2970 = vpop.f32.mrb[0].mxu0
    %v2971 = vpop.f32.mrb[0].mxu0
    %2972 = vdwg.mxu0
    %2973 = vmatprep.subr.bf16.mxu0 %v846
    %2974 = vmatpush1.bf16.msra.mxu0 %v845
    %2975 = vmatprep.subr.bf16.mxu0 %v850
    %2976 = vmatpush1.bf16.msra.mxu0 %v849
    %2977 = vmatprep.subr.bf16.mxu0 %v854
    %2978 = vmatpush1.bf16.msra.mxu0 %v853
    %2979 = vmatprep.subr.bf16.mxu0 %v858
    %2980 = vmatpush1.bf16.msra.mxu0 %v857
    %2981 = vmatprep.subr.bf16.mxu0 %v862
    %2982 = vmatpush1.bf16.msra.mxu0 %v861
    %2983 = vmatprep.subr.bf16.mxu0 %v866
    %2984 = vmatpush1.bf16.msra.mxu0 %v865
    %2985 = vmatprep.subr.bf16.mxu0 %v870
    %2986 = vmatpush1.bf16.msra.mxu0 %v869
    %2987 = vmatprep.subr.bf16.mxu0 %v874
    %2988 = vmatpush1.bf16.msra.mxu0 %v873
    %2989 = vmatprep.subr.bf16.mxu0 %v878
    %2990 = vmatpush1.bf16.msra.mxu0 %v877
    %2991 = vmatprep.subr.bf16.mxu0 %v882
    %2992 = vmatpush1.bf16.msra.mxu0 %v881
    %2993 = vmatprep.subr.bf16.mxu0 %v886
    %2994 = vmatpush1.bf16.msra.mxu0 %v885
    %2995 = vmatprep.subr.bf16.mxu0 %v890
    %2996 = vmatpush1.bf16.msra.mxu0 %v889
    %2997 = vmatprep.subr.bf16.mxu0 %v894
    %2998 = vmatpush1.bf16.msra.mxu0 %v893
    %2999 = vmatprep.subr.bf16.mxu0 %v898
    %3000 = vmatpush1.bf16.msra.mxu0 %v897
    %3001 = vmatprep.subr.bf16.mxu0 %v902
    %3002 = vmatpush1.bf16.msra.mxu0 %v901
    %3003 = vmatprep.subr.bf16.mxu0 %v906
    %3004 = vmatpush1.bf16.msra.mxu0 %v905
    %3005 = vmatprep.mubr.bf16.mxu0 %v2820
    %3006 = vmatmul.mubr.bf16.gmra.mrb[0].mxu0 %v2931
    %v3007 = vpop.f32.mrb[0].mxu0
    %v3008 = vadd.f32 %v642, %v3007
    %v3009 = vpop.f32.mrb[0].mxu0
    %v3010 = vadd.f32 %v646, %v3009
    %v3011 = vpop.f32.mrb[0].mxu0
    %v3012 = vpop.f32.mrb[0].mxu0
    %3013 = vdwg.mxu0
    %v3014 = vxor.u32 %v2967, 2147483648
    %v3015 = vxor.u32 %v2969, 2147483648
    %v3016 = vxor.u32 %v3008, 2147483648
    %v3017 = vmul.f32 %v3014, 1.442695
    %v3018 = vpow.pop %v3017
    %v3019 = vmul.f32 %v3015, 1.442695
    %v3020 = vpow.pop %v3019
    %v3021 = vmul.f32 %v3016, 1.442695
    %v3022 = vpow.pop %v3021
    %v3023 = vadd.f32 %v3018, 1.0
    %v3024 = vadd.f32 %v3020, 1.0
    %v3025 = vadd.f32 %v3022, 1.0
    %v3026 = vrcp.pop %v3023
    %v3027 = vmul.f32 1.0, %v3026
    %v3028 = vrcp.pop %v3024
    %v3029 = vmul.f32 1.0, %v3028
    %v3030 = vrcp.pop %v3025
    %v3031 = vmul.f32 1.0, %v3030
    %v3032 = vtanh.pop %v3010
    %v3033 = vmul.f32 %v3029, %v2817
    %v3034 = vmul.f32 %v3027, %v3032
    %v3035 = vadd.f32 %v3033, %v3034
    %v3036 = vtanh.pop %v3035
    %v3037 = vmul.f32 %v3031, %v3036
    %v3038 = vpack.c.bf16 %v3037, %v3037
    %s3039 = scalar_lea.vmem %s7, 36
    %3040 = vst [vmem:[%s3039] sm:$0xf] %v3038
    %s3041 = scalar_lea.vmem %s0, 40
    %v3042 = vld [vmem:[%s3041] sm:$0xf]
    %3043 = vmatprep.subr.bf16.mxu0 %v395
    %3044 = vmatpush1.bf16.msra.mxu0 %v394
    %3045 = vmatprep.subr.bf16.mxu0 %v399
    %3046 = vmatpush1.bf16.msra.mxu0 %v398
    %3047 = vmatprep.subr.bf16.mxu0 %v403
    %3048 = vmatpush1.bf16.msra.mxu0 %v402
    %3049 = vmatprep.subr.bf16.mxu0 %v407
    %3050 = vmatpush1.bf16.msra.mxu0 %v406
    %3051 = vmatprep.subr.bf16.mxu0 %v411
    %3052 = vmatpush1.bf16.msra.mxu0 %v410
    %3053 = vmatprep.subr.bf16.mxu0 %v415
    %3054 = vmatpush1.bf16.msra.mxu0 %v414
    %3055 = vmatprep.subr.bf16.mxu0 %v419
    %3056 = vmatpush1.bf16.msra.mxu0 %v418
    %3057 = vmatprep.subr.bf16.mxu0 %v423
    %3058 = vmatpush1.bf16.msra.mxu0 %v422
    %3059 = vmatprep.subr.bf16.mxu0 %v427
    %3060 = vmatpush1.bf16.msra.mxu0 %v426
    %3061 = vmatprep.subr.bf16.mxu0 %v431
    %3062 = vmatpush1.bf16.msra.mxu0 %v430
    %3063 = vmatprep.subr.bf16.mxu0 %v435
    %3064 = vmatpush1.bf16.msra.mxu0 %v434
    %3065 = vmatprep.subr.bf16.mxu0 %v439
    %3066 = vmatpush1.bf16.msra.mxu0 %v438
    %3067 = vmatprep.subr.bf16.mxu0 %v443
    %3068 = vmatpush1.bf16.msra.mxu0 %v442
    %3069 = vmatprep.subr.bf16.mxu0 %v447
    %3070 = vmatpush1.bf16.msra.mxu0 %v446
    %3071 = vmatprep.subr.bf16.mxu0 %v451
    %3072 = vmatpush1.bf16.msra.mxu0 %v450
    %3073 = vmatprep.subr.bf16.mxu0 %v455
    %3074 = vmatpush1.bf16.msra.mxu0 %v454
    %3075 = vmatprep.mubr.bf16.mxu0 %v2931
    %3076 = vmatmul.mubr.bf16.gmra.mrb[0].mxu0 %v3042
    %v3077 = vpop.f32.mrb[0].mxu0
    %v3078 = vadd.f32 %v185, %v3077
    %v3079 = vpop.f32.mrb[0].mxu0
    %v3080 = vadd.f32 %v189, %v3079
    %v3081 = vpop.f32.mrb[0].mxu0
    %v3082 = vpop.f32.mrb[0].mxu0
    %3083 = vdwg.mxu0
    %3084 = vmatprep.subr.bf16.mxu0 %v397
    %3085 = vmatpush1.bf16.msra.mxu0 %v396
    %3086 = vmatprep.subr.bf16.mxu0 %v401
    %3087 = vmatpush1.bf16.msra.mxu0 %v400
    %3088 = vmatprep.subr.bf16.mxu0 %v405
    %3089 = vmatpush1.bf16.msra.mxu0 %v404
    %3090 = vmatprep.subr.bf16.mxu0 %v409
    %3091 = vmatpush1.bf16.msra.mxu0 %v408
    %3092 = vmatprep.subr.bf16.mxu0 %v413
    %3093 = vmatpush1.bf16.msra.mxu0 %v412
    %3094 = vmatprep.subr.bf16.mxu0 %v417
    %3095 = vmatpush1.bf16.msra.mxu0 %v416
    %3096 = vmatprep.subr.bf16.mxu0 %v421
    %3097 = vmatpush1.bf16.msra.mxu0 %v420
    %3098 = vmatprep.subr.bf16.mxu0 %v425
    %3099 = vmatpush1.bf16.msra.mxu0 %v424
    %3100 = vmatprep.subr.bf16.mxu0 %v429
    %3101 = vmatpush1.bf16.msra.mxu0 %v428
    %3102 = vmatprep.subr.bf16.mxu0 %v433
    %3103 = vmatpush1.bf16.msra.mxu0 %v432
    %3104 = vmatprep.subr.bf16.mxu0 %v437
    %3105 = vmatpush1.bf16.msra.mxu0 %v436
    %3106 = vmatprep.subr.bf16.mxu0 %v441
    %3107 = vmatpush1.bf16.msra.mxu0 %v440
    %3108 = vmatprep.subr.bf16.mxu0 %v445
    %3109 = vmatpush1.bf16.msra.mxu0 %v444
    %3110 = vmatprep.subr.bf16.mxu0 %v449
    %3111 = vmatpush1.bf16.msra.mxu0 %v448
    %3112 = vmatprep.subr.bf16.mxu0 %v453
    %3113 = vmatpush1.bf16.msra.mxu0 %v452
    %3114 = vmatprep.subr.bf16.mxu0 %v457
    %3115 = vmatpush1.bf16.msra.mxu0 %v456
    %3116 = vmatprep.mubr.bf16.mxu0 %v2931
    %3117 = vmatmul.mubr.bf16.gmra.mrb[0].mxu0 %v3042
    %v3118 = vpop.f32.mrb[0].mxu0
    %v3119 = vadd.f32 %v193, %v3118
    %v3120 = vpop.f32.mrb[0].mxu0
    %v3121 = vadd.f32 %v197, %v3120
    %v3122 = vpop.f32.mrb[0].mxu0
    %v3123 = vpop.f32.mrb[0].mxu0
    %3124 = vdwg.mxu0
    %v3125 = vxor.u32 %v3078, 2147483648
    %v3126 = vxor.u32 %v3080, 2147483648
    %v3127 = vxor.u32 %v3119, 2147483648
    %v3128 = vmul.f32 %v3125, 1.442695
    %v3129 = vpow.pop %v3128
    %v3130 = vmul.f32 %v3126, 1.442695
    %v3131 = vpow.pop %v3130
    %v3132 = vmul.f32 %v3127, 1.442695
    %v3133 = vpow.pop %v3132
    %v3134 = vadd.f32 %v3129, 1.0
    %v3135 = vadd.f32 %v3131, 1.0
    %v3136 = vadd.f32 %v3133, 1.0
    %v3137 = vrcp.pop %v3134
    %v3138 = vmul.f32 1.0, %v3137
    %v3139 = vrcp.pop %v3135
    %v3140 = vmul.f32 1.0, %v3139
    %v3141 = vrcp.pop %v3136
    %v3142 = vmul.f32 1.0, %v3141
    %v3143 = vtanh.pop %v3121
    %v3144 = vmul.f32 %v3140, %v2928
    %v3145 = vmul.f32 %v3138, %v3143
    %v3146 = vadd.f32 %v3144, %v3145
    %v3147 = vtanh.pop %v3146
    %v3148 = vmul.f32 %v3142, %v3147
    %v3149 = vpack.c.bf16 %v3148, %v3148
    %3150 = vmatprep.subr.bf16.mxu0 %v844
    %3151 = vmatpush1.bf16.msra.mxu0 %v843
    %3152 = vmatprep.subr.bf16.mxu0 %v848
    %3153 = vmatpush1.bf16.msra.mxu0 %v847
    %3154 = vmatprep.subr.bf16.mxu0 %v852
    %3155 = vmatpush1.bf16.msra.mxu0 %v851
    %3156 = vmatprep.subr.bf16.mxu0 %v856
    %3157 = vmatpush1.bf16.msra.mxu0 %v855
    %3158 = vmatprep.subr.bf16.mxu0 %v860
    %3159 = vmatpush1.bf16.msra.mxu0 %v859
    %3160 = vmatprep.subr.bf16.mxu0 %v864
    %3161 = vmatpush1.bf16.msra.mxu0 %v863
    %3162 = vmatprep.subr.bf16.mxu0 %v868
    %3163 = vmatpush1.bf16.msra.mxu0 %v867
    %3164 = vmatprep.subr.bf16.mxu0 %v872
    %3165 = vmatpush1.bf16.msra.mxu0 %v871
    %3166 = vmatprep.subr.bf16.mxu0 %v876
    %3167 = vmatpush1.bf16.msra.mxu0 %v875
    %3168 = vmatprep.subr.bf16.mxu0 %v880
    %3169 = vmatpush1.bf16.msra.mxu0 %v879
    %3170 = vmatprep.subr.bf16.mxu0 %v884
    %3171 = vmatpush1.bf16.msra.mxu0 %v883
    %3172 = vmatprep.subr.bf16.mxu0 %v888
    %3173 = vmatpush1.bf16.msra.mxu0 %v887
    %3174 = vmatprep.subr.bf16.mxu0 %v892
    %3175 = vmatpush1.bf16.msra.mxu0 %v891
    %3176 = vmatprep.subr.bf16.mxu0 %v896
    %3177 = vmatpush1.bf16.msra.mxu0 %v895
    %3178 = vmatprep.subr.bf16.mxu0 %v900
    %3179 = vmatpush1.bf16.msra.mxu0 %v899
    %3180 = vmatprep.subr.bf16.mxu0 %v904
    %3181 = vmatpush1.bf16.msra.mxu0 %v903
    %3182 = vmatprep.mubr.bf16.mxu0 %v3038
    %3183 = vmatmul.mubr.bf16.gmra.mrb[0].mxu0 %v3149
    %v3184 = vpop.f32.mrb[0].mxu0
    %v3185 = vadd.f32 %v634, %v3184
    %v3186 = vpop.f32.mrb[0].mxu0
    %v3187 = vadd.f32 %v638, %v3186
    %v3188 = vpop.f32.mrb[0].mxu0
    %v3189 = vpop.f32.mrb[0].mxu0
    %3190 = vdwg.mxu0
    %3191 = vmatprep.subr.bf16.mxu0 %v846
    %3192 = vmatpush1.bf16.msra.mxu0 %v845
    %3193 = vmatprep.subr.bf16.mxu0 %v850
    %3194 = vmatpush1.bf16.msra.mxu0 %v849
    %3195 = vmatprep.subr.bf16.mxu0 %v854
    %3196 = vmatpush1.bf16.msra.mxu0 %v853
    %3197 = vmatprep.subr.bf16.mxu0 %v858
    %3198 = vmatpush1.bf16.msra.mxu0 %v857
    %3199 = vmatprep.subr.bf16.mxu0 %v862
    %3200 = vmatpush1.bf16.msra.mxu0 %v861
    %3201 = vmatprep.subr.bf16.mxu0 %v866
    %3202 = vmatpush1.bf16.msra.mxu0 %v865
    %3203 = vmatprep.subr.bf16.mxu0 %v870
    %3204 = vmatpush1.bf16.msra.mxu0 %v869
    %3205 = vmatprep.subr.bf16.mxu0 %v874
    %3206 = vmatpush1.bf16.msra.mxu0 %v873
    %3207 = vmatprep.subr.bf16.mxu0 %v878
    %3208 = vmatpush1.bf16.msra.mxu0 %v877
    %3209 = vmatprep.subr.bf16.mxu0 %v882
    %3210 = vmatpush1.bf16.msra.mxu0 %v881
    %3211 = vmatprep.subr.bf16.mxu0 %v886
    %3212 = vmatpush1.bf16.msra.mxu0 %v885
    %3213 = vmatprep.subr.bf16.mxu0 %v890
    %3214 = vmatpush1.bf16.msra.mxu0 %v889
    %3215 = vmatprep.subr.bf16.mxu0 %v894
    %3216 = vmatpush1.bf16.msra.mxu0 %v893
    %3217 = vmatprep.subr.bf16.mxu0 %v898
    %3218 = vmatpush1.bf16.msra.mxu0 %v897
    %3219 = vmatprep.subr.bf16.mxu0 %v902
    %3220 = vmatpush1.bf16.msra.mxu0 %v901
    %3221 = vmatprep.subr.bf16.mxu0 %v906
    %3222 = vmatpush1.bf16.msra.mxu0 %v905
    %3223 = vmatprep.mubr.bf16.mxu0 %v3038
    %3224 = vmatmul.mubr.bf16.gmra.mrb[0].mxu0 %v3149
    %v3225 = vpop.f32.mrb[0].mxu0
    %v3226 = vadd.f32 %v642, %v3225
    %v3227 = vpop.f32.mrb[0].mxu0
    %v3228 = vadd.f32 %v646, %v3227
    %v3229 = vpop.f32.mrb[0].mxu0
    %v3230 = vpop.f32.mrb[0].mxu0
    %3231 = vdwg.mxu0
    %v3232 = vxor.u32 %v3185, 2147483648
    %v3233 = vxor.u32 %v3187, 2147483648
    %v3234 = vxor.u32 %v3226, 2147483648
    %v3235 = vmul.f32 %v3232, 1.442695
    %v3236 = vpow.pop %v3235
    %v3237 = vmul.f32 %v3233, 1.442695
    %v3238 = vpow.pop %v3237
    %v3239 = vmul.f32 %v3234, 1.442695
    %v3240 = vpow.pop %v3239
    %v3241 = vadd.f32 %v3236, 1.0
    %v3242 = vadd.f32 %v3238, 1.0
    %v3243 = vadd.f32 %v3240, 1.0
    %v3244 = vrcp.pop %v3241
    %v3245 = vmul.f32 1.0, %v3244
    %v3246 = vrcp.pop %v3242
    %v3247 = vmul.f32 1.0, %v3246
    %v3248 = vrcp.pop %v3243
    %v3249 = vmul.f32 1.0, %v3248
    %v3250 = vtanh.pop %v3228
    %v3251 = vmul.f32 %v3247, %v3035
    %v3252 = vmul.f32 %v3245, %v3250
    %v3253 = vadd.f32 %v3251, %v3252
    %v3254 = vtanh.pop %v3253
    %v3255 = vmul.f32 %v3249, %v3254
    %v3256 = vpack.c.bf16 %v3255, %v3255
    %s3257 = scalar_lea.vmem %s7, 40
    %3258 = vst [vmem:[%s3257] sm:$0xf] %v3256
    %s3259 = scalar_lea.vmem %s0, 44
    %v3260 = vld [vmem:[%s3259] sm:$0xf]
    %3261 = vmatprep.subr.bf16.mxu0 %v395
    %3262 = vmatpush1.bf16.msra.mxu0 %v394
    %3263 = vmatprep.subr.bf16.mxu0 %v399
    %3264 = vmatpush1.bf16.msra.mxu0 %v398
    %3265 = vmatprep.subr.bf16.mxu0 %v403
    %3266 = vmatpush1.bf16.msra.mxu0 %v402
    %3267 = vmatprep.subr.bf16.mxu0 %v407
    %3268 = vmatpush1.bf16.msra.mxu0 %v406
    %3269 = vmatprep.subr.bf16.mxu0 %v411
    %3270 = vmatpush1.bf16.msra.mxu0 %v410
    %3271 = vmatprep.subr.bf16.mxu0 %v415
    %3272 = vmatpush1.bf16.msra.mxu0 %v414
    %3273 = vmatprep.subr.bf16.mxu0 %v419
    %3274 = vmatpush1.bf16.msra.mxu0 %v418
    %3275 = vmatprep.subr.bf16.mxu0 %v423
    %3276 = vmatpush1.bf16.msra.mxu0 %v422
    %3277 = vmatprep.subr.bf16.mxu0 %v427
    %3278 = vmatpush1.bf16.msra.mxu0 %v426
    %3279 = vmatprep.subr.bf16.mxu0 %v431
    %3280 = vmatpush1.bf16.msra.mxu0 %v430
    %3281 = vmatprep.subr.bf16.mxu0 %v435
    %3282 = vmatpush1.bf16.msra.mxu0 %v434
    %3283 = vmatprep.subr.bf16.mxu0 %v439
    %3284 = vmatpush1.bf16.msra.mxu0 %v438
    %3285 = vmatprep.subr.bf16.mxu0 %v443
    %3286 = vmatpush1.bf16.msra.mxu0 %v442
    %3287 = vmatprep.subr.bf16.mxu0 %v447
    %3288 = vmatpush1.bf16.msra.mxu0 %v446
    %3289 = vmatprep.subr.bf16.mxu0 %v451
    %3290 = vmatpush1.bf16.msra.mxu0 %v450
    %3291 = vmatprep.subr.bf16.mxu0 %v455
    %3292 = vmatpush1.bf16.msra.mxu0 %v454
    %3293 = vmatprep.mubr.bf16.mxu0 %v3149
    %3294 = vmatmul.mubr.bf16.gmra.mrb[0].mxu0 %v3260
    %v3295 = vpop.f32.mrb[0].mxu0
    %v3296 = vadd.f32 %v185, %v3295
    %v3297 = vpop.f32.mrb[0].mxu0
    %v3298 = vadd.f32 %v189, %v3297
    %v3299 = vpop.f32.mrb[0].mxu0
    %v3300 = vpop.f32.mrb[0].mxu0
    %3301 = vdwg.mxu0
    %3302 = vmatprep.subr.bf16.mxu0 %v397
    %3303 = vmatpush1.bf16.msra.mxu0 %v396
    %3304 = vmatprep.subr.bf16.mxu0 %v401
    %3305 = vmatpush1.bf16.msra.mxu0 %v400
    %3306 = vmatprep.subr.bf16.mxu0 %v405
    %3307 = vmatpush1.bf16.msra.mxu0 %v404
    %3308 = vmatprep.subr.bf16.mxu0 %v409
    %3309 = vmatpush1.bf16.msra.mxu0 %v408
    %3310 = vmatprep.subr.bf16.mxu0 %v413
    %3311 = vmatpush1.bf16.msra.mxu0 %v412
    %3312 = vmatprep.subr.bf16.mxu0 %v417
    %3313 = vmatpush1.bf16.msra.mxu0 %v416
    %3314 = vmatprep.subr.bf16.mxu0 %v421
    %3315 = vmatpush1.bf16.msra.mxu0 %v420
    %3316 = vmatprep.subr.bf16.mxu0 %v425
    %3317 = vmatpush1.bf16.msra.mxu0 %v424
    %3318 = vmatprep.subr.bf16.mxu0 %v429
    %3319 = vmatpush1.bf16.msra.mxu0 %v428
    %3320 = vmatprep.subr.bf16.mxu0 %v433
    %3321 = vmatpush1.bf16.msra.mxu0 %v432
    %3322 = vmatprep.subr.bf16.mxu0 %v437
    %3323 = vmatpush1.bf16.msra.mxu0 %v436
    %3324 = vmatprep.subr.bf16.mxu0 %v441
    %3325 = vmatpush1.bf16.msra.mxu0 %v440
    %3326 = vmatprep.subr.bf16.mxu0 %v445
    %3327 = vmatpush1.bf16.msra.mxu0 %v444
    %3328 = vmatprep.subr.bf16.mxu0 %v449
    %3329 = vmatpush1.bf16.msra.mxu0 %v448
    %3330 = vmatprep.subr.bf16.mxu0 %v453
    %3331 = vmatpush1.bf16.msra.mxu0 %v452
    %3332 = vmatprep.subr.bf16.mxu0 %v457
    %3333 = vmatpush1.bf16.msra.mxu0 %v456
    %3334 = vmatprep.mubr.bf16.mxu0 %v3149
    %3335 = vmatmul.mubr.bf16.gmra.mrb[0].mxu0 %v3260
    %v3336 = vpop.f32.mrb[0].mxu0
    %v3337 = vadd.f32 %v193, %v3336
    %v3338 = vpop.f32.mrb[0].mxu0
    %v3339 = vadd.f32 %v197, %v3338
    %v3340 = vpop.f32.mrb[0].mxu0
    %v3341 = vpop.f32.mrb[0].mxu0
    %3342 = vdwg.mxu0
    %v3343 = vxor.u32 %v3296, 2147483648
    %v3344 = vxor.u32 %v3298, 2147483648
    %v3345 = vxor.u32 %v3337, 2147483648
    %v3346 = vmul.f32 %v3343, 1.442695
    %v3347 = vpow.pop %v3346
    %v3348 = vmul.f32 %v3344, 1.442695
    %v3349 = vpow.pop %v3348
    %v3350 = vmul.f32 %v3345, 1.442695
    %v3351 = vpow.pop %v3350
    %v3352 = vadd.f32 %v3347, 1.0
    %v3353 = vadd.f32 %v3349, 1.0
    %v3354 = vadd.f32 %v3351, 1.0
    %v3355 = vrcp.pop %v3352
    %v3356 = vmul.f32 1.0, %v3355
    %v3357 = vrcp.pop %v3353
    %v3358 = vmul.f32 1.0, %v3357
    %v3359 = vrcp.pop %v3354
    %v3360 = vmul.f32 1.0, %v3359
    %v3361 = vtanh.pop %v3339
    %v3362 = vmul.f32 %v3358, %v3146
    %v3363 = vmul.f32 %v3356, %v3361
    %v3364 = vadd.f32 %v3362, %v3363
    %v3365 = vtanh.pop %v3364
    %v3366 = vmul.f32 %v3360, %v3365
    %v3367 = vpack.c.bf16 %v3366, %v3366
    %3368 = vmatprep.subr.bf16.mxu0 %v844
    %3369 = vmatpush1.bf16.msra.mxu0 %v843
    %3370 = vmatprep.subr.bf16.mxu0 %v848
    %3371 = vmatpush1.bf16.msra.mxu0 %v847
    %3372 = vmatprep.subr.bf16.mxu0 %v852
    %3373 = vmatpush1.bf16.msra.mxu0 %v851
    %3374 = vmatprep.subr.bf16.mxu0 %v856
    %3375 = vmatpush1.bf16.msra.mxu0 %v855
    %3376 = vmatprep.subr.bf16.mxu0 %v860
    %3377 = vmatpush1.bf16.msra.mxu0 %v859
    %3378 = vmatprep.subr.bf16.mxu0 %v864
    %3379 = vmatpush1.bf16.msra.mxu0 %v863
    %3380 = vmatprep.subr.bf16.mxu0 %v868
    %3381 = vmatpush1.bf16.msra.mxu0 %v867
    %3382 = vmatprep.subr.bf16.mxu0 %v872
    %3383 = vmatpush1.bf16.msra.mxu0 %v871
    %3384 = vmatprep.subr.bf16.mxu0 %v876
    %3385 = vmatpush1.bf16.msra.mxu0 %v875
    %3386 = vmatprep.subr.bf16.mxu0 %v880
    %3387 = vmatpush1.bf16.msra.mxu0 %v879
    %3388 = vmatprep.subr.bf16.mxu0 %v884
    %3389 = vmatpush1.bf16.msra.mxu0 %v883
    %3390 = vmatprep.subr.bf16.mxu0 %v888
    %3391 = vmatpush1.bf16.msra.mxu0 %v887
    %3392 = vmatprep.subr.bf16.mxu0 %v892
    %3393 = vmatpush1.bf16.msra.mxu0 %v891
    %3394 = vmatprep.subr.bf16.mxu0 %v896
    %3395 = vmatpush1.bf16.msra.mxu0 %v895
    %3396 = vmatprep.subr.bf16.mxu0 %v900
    %3397 = vmatpush1.bf16.msra.mxu0 %v899
    %3398 = vmatprep.subr.bf16.mxu0 %v904
    %3399 = vmatpush1.bf16.msra.mxu0 %v903
    %3400 = vmatprep.mubr.bf16.mxu0 %v3256
    %3401 = vmatmul.mubr.bf16.gmra.mrb[0].mxu0 %v3367
    %v3402 = vpop.f32.mrb[0].mxu0
    %v3403 = vadd.f32 %v634, %v3402
    %v3404 = vpop.f32.mrb[0].mxu0
    %v3405 = vadd.f32 %v638, %v3404
    %v3406 = vpop.f32.mrb[0].mxu0
    %v3407 = vpop.f32.mrb[0].mxu0
    %3408 = vdwg.mxu0
    %3409 = vmatprep.subr.bf16.mxu0 %v846
    %3410 = vmatpush1.bf16.msra.mxu0 %v845
    %3411 = vmatprep.subr.bf16.mxu0 %v850
    %3412 = vmatpush1.bf16.msra.mxu0 %v849
    %3413 = vmatprep.subr.bf16.mxu0 %v854
    %3414 = vmatpush1.bf16.msra.mxu0 %v853
    %3415 = vmatprep.subr.bf16.mxu0 %v858
    %3416 = vmatpush1.bf16.msra.mxu0 %v857
    %3417 = vmatprep.subr.bf16.mxu0 %v862
    %3418 = vmatpush1.bf16.msra.mxu0 %v861
    %3419 = vmatprep.subr.bf16.mxu0 %v866
    %3420 = vmatpush1.bf16.msra.mxu0 %v865
    %3421 = vmatprep.subr.bf16.mxu0 %v870
    %3422 = vmatpush1.bf16.msra.mxu0 %v869
    %3423 = vmatprep.subr.bf16.mxu0 %v874
    %3424 = vmatpush1.bf16.msra.mxu0 %v873
    %3425 = vmatprep.subr.bf16.mxu0 %v878
    %3426 = vmatpush1.bf16.msra.mxu0 %v877
    %3427 = vmatprep.subr.bf16.mxu0 %v882
    %3428 = vmatpush1.bf16.msra.mxu0 %v881
    %3429 = vmatprep.subr.bf16.mxu0 %v886
    %3430 = vmatpush1.bf16.msra.mxu0 %v885
    %3431 = vmatprep.subr.bf16.mxu0 %v890
    %3432 = vmatpush1.bf16.msra.mxu0 %v889
    %3433 = vmatprep.subr.bf16.mxu0 %v894
    %3434 = vmatpush1.bf16.msra.mxu0 %v893
    %3435 = vmatprep.subr.bf16.mxu0 %v898
    %3436 = vmatpush1.bf16.msra.mxu0 %v897
    %3437 = vmatprep.subr.bf16.mxu0 %v902
    %3438 = vmatpush1.bf16.msra.mxu0 %v901
    %3439 = vmatprep.subr.bf16.mxu0 %v906
    %3440 = vmatpush1.bf16.msra.mxu0 %v905
    %3441 = vmatprep.mubr.bf16.mxu0 %v3256
    %3442 = vmatmul.mubr.bf16.gmra.mrb[0].mxu0 %v3367
    %v3443 = vpop.f32.mrb[0].mxu0
    %v3444 = vadd.f32 %v642, %v3443
    %v3445 = vpop.f32.mrb[0].mxu0
    %v3446 = vadd.f32 %v646, %v3445
    %v3447 = vpop.f32.mrb[0].mxu0
    %v3448 = vpop.f32.mrb[0].mxu0
    %3449 = vdwg.mxu0
    %v3450 = vxor.u32 %v3403, 2147483648
    %v3451 = vxor.u32 %v3405, 2147483648
    %v3452 = vxor.u32 %v3444, 2147483648
    %v3453 = vmul.f32 %v3450, 1.442695
    %v3454 = vpow.pop %v3453
    %v3455 = vmul.f32 %v3451, 1.442695
    %v3456 = vpow.pop %v3455
    %v3457 = vmul.f32 %v3452, 1.442695
    %v3458 = vpow.pop %v3457
    %v3459 = vadd.f32 %v3454, 1.0
    %v3460 = vadd.f32 %v3456, 1.0
    %v3461 = vadd.f32 %v3458, 1.0
    %v3462 = vrcp.pop %v3459
    %v3463 = vmul.f32 1.0, %v3462
    %v3464 = vrcp.pop %v3460
    %v3465 = vmul.f32 1.0, %v3464
    %v3466 = vrcp.pop %v3461
    %v3467 = vmul.f32 1.0, %v3466
    %v3468 = vtanh.pop %v3446
    %v3469 = vmul.f32 %v3465, %v3253
    %v3470 = vmul.f32 %v3463, %v3468
    %v3471 = vadd.f32 %v3469, %v3470
    %v3472 = vtanh.pop %v3471
    %v3473 = vmul.f32 %v3467, %v3472
    %v3474 = vpack.c.bf16 %v3473, %v3473
    %s3475 = scalar_lea.vmem %s7, 44
    %3476 = vst [vmem:[%s3475] sm:$0xf] %v3474
    %s3477 = scalar_lea.vmem %s0, 48
    %v3478 = vld [vmem:[%s3477] sm:$0xf]
    %3479 = vmatprep.subr.bf16.mxu0 %v395
    %3480 = vmatpush1.bf16.msra.mxu0 %v394
    %3481 = vmatprep.subr.bf16.mxu0 %v399
    %3482 = vmatpush1.bf16.msra.mxu0 %v398
    %3483 = vmatprep.subr.bf16.mxu0 %v403
    %3484 = vmatpush1.bf16.msra.mxu0 %v402
    %3485 = vmatprep.subr.bf16.mxu0 %v407
    %3486 = vmatpush1.bf16.msra.mxu0 %v406
    %3487 = vmatprep.subr.bf16.mxu0 %v411
    %3488 = vmatpush1.bf16.msra.mxu0 %v410
    %3489 = vmatprep.subr.bf16.mxu0 %v415
    %3490 = vmatpush1.bf16.msra.mxu0 %v414
    %3491 = vmatprep.subr.bf16.mxu0 %v419
    %3492 = vmatpush1.bf16.msra.mxu0 %v418
    %3493 = vmatprep.subr.bf16.mxu0 %v423
    %3494 = vmatpush1.bf16.msra.mxu0 %v422
    %3495 = vmatprep.subr.bf16.mxu0 %v427
    %3496 = vmatpush1.bf16.msra.mxu0 %v426
    %3497 = vmatprep.subr.bf16.mxu0 %v431
    %3498 = vmatpush1.bf16.msra.mxu0 %v430
    %3499 = vmatprep.subr.bf16.mxu0 %v435
    %3500 = vmatpush1.bf16.msra.mxu0 %v434
    %3501 = vmatprep.subr.bf16.mxu0 %v439
    %3502 = vmatpush1.bf16.msra.mxu0 %v438
    %3503 = vmatprep.subr.bf16.mxu0 %v443
    %3504 = vmatpush1.bf16.msra.mxu0 %v442
    %3505 = vmatprep.subr.bf16.mxu0 %v447
    %3506 = vmatpush1.bf16.msra.mxu0 %v446
    %3507 = vmatprep.subr.bf16.mxu0 %v451
    %3508 = vmatpush1.bf16.msra.mxu0 %v450
    %3509 = vmatprep.subr.bf16.mxu0 %v455
    %3510 = vmatpush1.bf16.msra.mxu0 %v454
    %3511 = vmatprep.mubr.bf16.mxu0 %v3367
    %3512 = vmatmul.mubr.bf16.gmra.mrb[0].mxu0 %v3478
    %v3513 = vpop.f32.mrb[0].mxu0
    %v3514 = vadd.f32 %v185, %v3513
    %v3515 = vpop.f32.mrb[0].mxu0
    %v3516 = vadd.f32 %v189, %v3515
    %v3517 = vpop.f32.mrb[0].mxu0
    %v3518 = vpop.f32.mrb[0].mxu0
    %3519 = vdwg.mxu0
    %3520 = vmatprep.subr.bf16.mxu0 %v397
    %3521 = vmatpush1.bf16.msra.mxu0 %v396
    %3522 = vmatprep.subr.bf16.mxu0 %v401
    %3523 = vmatpush1.bf16.msra.mxu0 %v400
    %3524 = vmatprep.subr.bf16.mxu0 %v405
    %3525 = vmatpush1.bf16.msra.mxu0 %v404
    %3526 = vmatprep.subr.bf16.mxu0 %v409
    %3527 = vmatpush1.bf16.msra.mxu0 %v408
    %3528 = vmatprep.subr.bf16.mxu0 %v413
    %3529 = vmatpush1.bf16.msra.mxu0 %v412
    %3530 = vmatprep.subr.bf16.mxu0 %v417
    %3531 = vmatpush1.bf16.msra.mxu0 %v416
    %3532 = vmatprep.subr.bf16.mxu0 %v421
    %3533 = vmatpush1.bf16.msra.mxu0 %v420
    %3534 = vmatprep.subr.bf16.mxu0 %v425
    %3535 = vmatpush1.bf16.msra.mxu0 %v424
    %3536 = vmatprep.subr.bf16.mxu0 %v429
    %3537 = vmatpush1.bf16.msra.mxu0 %v428
    %3538 = vmatprep.subr.bf16.mxu0 %v433
    %3539 = vmatpush1.bf16.msra.mxu0 %v432
    %3540 = vmatprep.subr.bf16.mxu0 %v437
    %3541 = vmatpush1.bf16.msra.mxu0 %v436
    %3542 = vmatprep.subr.bf16.mxu0 %v441
    %3543 = vmatpush1.bf16.msra.mxu0 %v440
    %3544 = vmatprep.subr.bf16.mxu0 %v445
    %3545 = vmatpush1.bf16.msra.mxu0 %v444
    %3546 = vmatprep.subr.bf16.mxu0 %v449
    %3547 = vmatpush1.bf16.msra.mxu0 %v448
    %3548 = vmatprep.subr.bf16.mxu0 %v453
    %3549 = vmatpush1.bf16.msra.mxu0 %v452
    %3550 = vmatprep.subr.bf16.mxu0 %v457
    %3551 = vmatpush1.bf16.msra.mxu0 %v456
    %3552 = vmatprep.mubr.bf16.mxu0 %v3367
    %3553 = vmatmul.mubr.bf16.gmra.mrb[0].mxu0 %v3478
    %v3554 = vpop.f32.mrb[0].mxu0
    %v3555 = vadd.f32 %v193, %v3554
    %v3556 = vpop.f32.mrb[0].mxu0
    %v3557 = vadd.f32 %v197, %v3556
    %v3558 = vpop.f32.mrb[0].mxu0
    %v3559 = vpop.f32.mrb[0].mxu0
    %3560 = vdwg.mxu0
    %v3561 = vxor.u32 %v3514, 2147483648
    %v3562 = vxor.u32 %v3516, 2147483648
    %v3563 = vxor.u32 %v3555, 2147483648
    %v3564 = vmul.f32 %v3561, 1.442695
    %v3565 = vpow.pop %v3564
    %v3566 = vmul.f32 %v3562, 1.442695
    %v3567 = vpow.pop %v3566
    %v3568 = vmul.f32 %v3563, 1.442695
    %v3569 = vpow.pop %v3568
    %v3570 = vadd.f32 %v3565, 1.0
    %v3571 = vadd.f32 %v3567, 1.0
    %v3572 = vadd.f32 %v3569, 1.0
    %v3573 = vrcp.pop %v3570
    %v3574 = vmul.f32 1.0, %v3573
    %v3575 = vrcp.pop %v3571
    %v3576 = vmul.f32 1.0, %v3575
    %v3577 = vrcp.pop %v3572
    %v3578 = vmul.f32 1.0, %v3577
    %v3579 = vtanh.pop %v3557
    %v3580 = vmul.f32 %v3576, %v3364
    %v3581 = vmul.f32 %v3574, %v3579
    %v3582 = vadd.f32 %v3580, %v3581
    %v3583 = vtanh.pop %v3582
    %v3584 = vmul.f32 %v3578, %v3583
    %v3585 = vpack.c.bf16 %v3584, %v3584
    %3586 = vmatprep.subr.bf16.mxu0 %v844
    %3587 = vmatpush1.bf16.msra.mxu0 %v843
    %3588 = vmatprep.subr.bf16.mxu0 %v848
    %3589 = vmatpush1.bf16.msra.mxu0 %v847
    %3590 = vmatprep.subr.bf16.mxu0 %v852
    %3591 = vmatpush1.bf16.msra.mxu0 %v851
    %3592 = vmatprep.subr.bf16.mxu0 %v856
    %3593 = vmatpush1.bf16.msra.mxu0 %v855
    %3594 = vmatprep.subr.bf16.mxu0 %v860
    %3595 = vmatpush1.bf16.msra.mxu0 %v859
    %3596 = vmatprep.subr.bf16.mxu0 %v864
    %3597 = vmatpush1.bf16.msra.mxu0 %v863
    %3598 = vmatprep.subr.bf16.mxu0 %v868
    %3599 = vmatpush1.bf16.msra.mxu0 %v867
    %3600 = vmatprep.subr.bf16.mxu0 %v872
    %3601 = vmatpush1.bf16.msra.mxu0 %v871
    %3602 = vmatprep.subr.bf16.mxu0 %v876
    %3603 = vmatpush1.bf16.msra.mxu0 %v875
    %3604 = vmatprep.subr.bf16.mxu0 %v880
    %3605 = vmatpush1.bf16.msra.mxu0 %v879
    %3606 = vmatprep.subr.bf16.mxu0 %v884
    %3607 = vmatpush1.bf16.msra.mxu0 %v883
    %3608 = vmatprep.subr.bf16.mxu0 %v888
    %3609 = vmatpush1.bf16.msra.mxu0 %v887
    %3610 = vmatprep.subr.bf16.mxu0 %v892
    %3611 = vmatpush1.bf16.msra.mxu0 %v891
    %3612 = vmatprep.subr.bf16.mxu0 %v896
    %3613 = vmatpush1.bf16.msra.mxu0 %v895
    %3614 = vmatprep.subr.bf16.mxu0 %v900
    %3615 = vmatpush1.bf16.msra.mxu0 %v899
    %3616 = vmatprep.subr.bf16.mxu0 %v904
    %3617 = vmatpush1.bf16.msra.mxu0 %v903
    %3618 = vmatprep.mubr.bf16.mxu0 %v3474
    %3619 = vmatmul.mubr.bf16.gmra.mrb[0].mxu0 %v3585
    %v3620 = vpop.f32.mrb[0].mxu0
    %v3621 = vadd.f32 %v634, %v3620
    %v3622 = vpop.f32.mrb[0].mxu0
    %v3623 = vadd.f32 %v638, %v3622
    %v3624 = vpop.f32.mrb[0].mxu0
    %v3625 = vpop.f32.mrb[0].mxu0
    %3626 = vdwg.mxu0
    %3627 = vmatprep.subr.bf16.mxu0 %v846
    %3628 = vmatpush1.bf16.msra.mxu0 %v845
    %3629 = vmatprep.subr.bf16.mxu0 %v850
    %3630 = vmatpush1.bf16.msra.mxu0 %v849
    %3631 = vmatprep.subr.bf16.mxu0 %v854
    %3632 = vmatpush1.bf16.msra.mxu0 %v853
    %3633 = vmatprep.subr.bf16.mxu0 %v858
    %3634 = vmatpush1.bf16.msra.mxu0 %v857
    %3635 = vmatprep.subr.bf16.mxu0 %v862
    %3636 = vmatpush1.bf16.msra.mxu0 %v861
    %3637 = vmatprep.subr.bf16.mxu0 %v866
    %3638 = vmatpush1.bf16.msra.mxu0 %v865
    %3639 = vmatprep.subr.bf16.mxu0 %v870
    %3640 = vmatpush1.bf16.msra.mxu0 %v869
    %3641 = vmatprep.subr.bf16.mxu0 %v874
    %3642 = vmatpush1.bf16.msra.mxu0 %v873
    %3643 = vmatprep.subr.bf16.mxu0 %v878
    %3644 = vmatpush1.bf16.msra.mxu0 %v877
    %3645 = vmatprep.subr.bf16.mxu0 %v882
    %3646 = vmatpush1.bf16.msra.mxu0 %v881
    %3647 = vmatprep.subr.bf16.mxu0 %v886
    %3648 = vmatpush1.bf16.msra.mxu0 %v885
    %3649 = vmatprep.subr.bf16.mxu0 %v890
    %3650 = vmatpush1.bf16.msra.mxu0 %v889
    %3651 = vmatprep.subr.bf16.mxu0 %v894
    %3652 = vmatpush1.bf16.msra.mxu0 %v893
    %3653 = vmatprep.subr.bf16.mxu0 %v898
    %3654 = vmatpush1.bf16.msra.mxu0 %v897
    %3655 = vmatprep.subr.bf16.mxu0 %v902
    %3656 = vmatpush1.bf16.msra.mxu0 %v901
    %3657 = vmatprep.subr.bf16.mxu0 %v906
    %3658 = vmatpush1.bf16.msra.mxu0 %v905
    %3659 = vmatprep.mubr.bf16.mxu0 %v3474
    %3660 = vmatmul.mubr.bf16.gmra.mrb[0].mxu0 %v3585
    %v3661 = vpop.f32.mrb[0].mxu0
    %v3662 = vadd.f32 %v642, %v3661
    %v3663 = vpop.f32.mrb[0].mxu0
    %v3664 = vadd.f32 %v646, %v3663
    %v3665 = vpop.f32.mrb[0].mxu0
    %v3666 = vpop.f32.mrb[0].mxu0
    %3667 = vdwg.mxu0
    %v3668 = vxor.u32 %v3621, 2147483648
    %v3669 = vxor.u32 %v3623, 2147483648
    %v3670 = vxor.u32 %v3662, 2147483648
    %v3671 = vmul.f32 %v3668, 1.442695
    %v3672 = vpow.pop %v3671
    %v3673 = vmul.f32 %v3669, 1.442695
    %v3674 = vpow.pop %v3673
    %v3675 = vmul.f32 %v3670, 1.442695
    %v3676 = vpow.pop %v3675
    %v3677 = vadd.f32 %v3672, 1.0
    %v3678 = vadd.f32 %v3674, 1.0
    %v3679 = vadd.f32 %v3676, 1.0
    %v3680 = vrcp.pop %v3677
    %v3681 = vmul.f32 1.0, %v3680
    %v3682 = vrcp.pop %v3678
    %v3683 = vmul.f32 1.0, %v3682
    %v3684 = vrcp.pop %v3679
    %v3685 = vmul.f32 1.0, %v3684
    %v3686 = vtanh.pop %v3664
    %v3687 = vmul.f32 %v3683, %v3471
    %v3688 = vmul.f32 %v3681, %v3686
    %v3689 = vadd.f32 %v3687, %v3688
    %v3690 = vtanh.pop %v3689
    %v3691 = vmul.f32 %v3685, %v3690
    %v3692 = vpack.c.bf16 %v3691, %v3691
    %s3693 = scalar_lea.vmem %s7, 48
    %3694 = vst [vmem:[%s3693] sm:$0xf] %v3692
    %s3695 = scalar_lea.vmem %s0, 52
    %v3696 = vld [vmem:[%s3695] sm:$0xf]
    %3697 = vmatprep.subr.bf16.mxu0 %v395
    %3698 = vmatpush1.bf16.msra.mxu0 %v394
    %3699 = vmatprep.subr.bf16.mxu0 %v399
    %3700 = vmatpush1.bf16.msra.mxu0 %v398
    %3701 = vmatprep.subr.bf16.mxu0 %v403
    %3702 = vmatpush1.bf16.msra.mxu0 %v402
    %3703 = vmatprep.subr.bf16.mxu0 %v407
    %3704 = vmatpush1.bf16.msra.mxu0 %v406
    %3705 = vmatprep.subr.bf16.mxu0 %v411
    %3706 = vmatpush1.bf16.msra.mxu0 %v410
    %3707 = vmatprep.subr.bf16.mxu0 %v415
    %3708 = vmatpush1.bf16.msra.mxu0 %v414
    %3709 = vmatprep.subr.bf16.mxu0 %v419
    %3710 = vmatpush1.bf16.msra.mxu0 %v418
    %3711 = vmatprep.subr.bf16.mxu0 %v423
    %3712 = vmatpush1.bf16.msra.mxu0 %v422
    %3713 = vmatprep.subr.bf16.mxu0 %v427
    %3714 = vmatpush1.bf16.msra.mxu0 %v426
    %3715 = vmatprep.subr.bf16.mxu0 %v431
    %3716 = vmatpush1.bf16.msra.mxu0 %v430
    %3717 = vmatprep.subr.bf16.mxu0 %v435
    %3718 = vmatpush1.bf16.msra.mxu0 %v434
    %3719 = vmatprep.subr.bf16.mxu0 %v439
    %3720 = vmatpush1.bf16.msra.mxu0 %v438
    %3721 = vmatprep.subr.bf16.mxu0 %v443
    %3722 = vmatpush1.bf16.msra.mxu0 %v442
    %3723 = vmatprep.subr.bf16.mxu0 %v447
    %3724 = vmatpush1.bf16.msra.mxu0 %v446
    %3725 = vmatprep.subr.bf16.mxu0 %v451
    %3726 = vmatpush1.bf16.msra.mxu0 %v450
    %3727 = vmatprep.subr.bf16.mxu0 %v455
    %3728 = vmatpush1.bf16.msra.mxu0 %v454
    %3729 = vmatprep.mubr.bf16.mxu0 %v3585
    %3730 = vmatmul.mubr.bf16.gmra.mrb[0].mxu0 %v3696
    %v3731 = vpop.f32.mrb[0].mxu0
    %v3732 = vadd.f32 %v185, %v3731
    %v3733 = vpop.f32.mrb[0].mxu0
    %v3734 = vadd.f32 %v189, %v3733
    %v3735 = vpop.f32.mrb[0].mxu0
    %v3736 = vpop.f32.mrb[0].mxu0
    %3737 = vdwg.mxu0
    %3738 = vmatprep.subr.bf16.mxu0 %v397
    %3739 = vmatpush1.bf16.msra.mxu0 %v396
    %3740 = vmatprep.subr.bf16.mxu0 %v401
    %3741 = vmatpush1.bf16.msra.mxu0 %v400
    %3742 = vmatprep.subr.bf16.mxu0 %v405
    %3743 = vmatpush1.bf16.msra.mxu0 %v404
    %3744 = vmatprep.subr.bf16.mxu0 %v409
    %3745 = vmatpush1.bf16.msra.mxu0 %v408
    %3746 = vmatprep.subr.bf16.mxu0 %v413
    %3747 = vmatpush1.bf16.msra.mxu0 %v412
    %3748 = vmatprep.subr.bf16.mxu0 %v417
    %3749 = vmatpush1.bf16.msra.mxu0 %v416
    %3750 = vmatprep.subr.bf16.mxu0 %v421
    %3751 = vmatpush1.bf16.msra.mxu0 %v420
    %3752 = vmatprep.subr.bf16.mxu0 %v425
    %3753 = vmatpush1.bf16.msra.mxu0 %v424
    %3754 = vmatprep.subr.bf16.mxu0 %v429
    %3755 = vmatpush1.bf16.msra.mxu0 %v428
    %3756 = vmatprep.subr.bf16.mxu0 %v433
    %3757 = vmatpush1.bf16.msra.mxu0 %v432
    %3758 = vmatprep.subr.bf16.mxu0 %v437
    %3759 = vmatpush1.bf16.msra.mxu0 %v436
    %3760 = vmatprep.subr.bf16.mxu0 %v441
    %3761 = vmatpush1.bf16.msra.mxu0 %v440
    %3762 = vmatprep.subr.bf16.mxu0 %v445
    %3763 = vmatpush1.bf16.msra.mxu0 %v444
    %3764 = vmatprep.subr.bf16.mxu0 %v449
    %3765 = vmatpush1.bf16.msra.mxu0 %v448
    %3766 = vmatprep.subr.bf16.mxu0 %v453
    %3767 = vmatpush1.bf16.msra.mxu0 %v452
    %3768 = vmatprep.subr.bf16.mxu0 %v457
    %3769 = vmatpush1.bf16.msra.mxu0 %v456
    %3770 = vmatprep.mubr.bf16.mxu0 %v3585
    %3771 = vmatmul.mubr.bf16.gmra.mrb[0].mxu0 %v3696
    %v3772 = vpop.f32.mrb[0].mxu0
    %v3773 = vadd.f32 %v193, %v3772
    %v3774 = vpop.f32.mrb[0].mxu0
    %v3775 = vadd.f32 %v197, %v3774
    %v3776 = vpop.f32.mrb[0].mxu0
    %v3777 = vpop.f32.mrb[0].mxu0
    %3778 = vdwg.mxu0
    %v3779 = vxor.u32 %v3732, 2147483648
    %v3780 = vxor.u32 %v3734, 2147483648
    %v3781 = vxor.u32 %v3773, 2147483648
    %v3782 = vmul.f32 %v3779, 1.442695
    %v3783 = vpow.pop %v3782
    %v3784 = vmul.f32 %v3780, 1.442695
    %v3785 = vpow.pop %v3784
    %v3786 = vmul.f32 %v3781, 1.442695
    %v3787 = vpow.pop %v3786
    %v3788 = vadd.f32 %v3783, 1.0
    %v3789 = vadd.f32 %v3785, 1.0
    %v3790 = vadd.f32 %v3787, 1.0
    %v3791 = vrcp.pop %v3788
    %v3792 = vmul.f32 1.0, %v3791
    %v3793 = vrcp.pop %v3789
    %v3794 = vmul.f32 1.0, %v3793
    %v3795 = vrcp.pop %v3790
    %v3796 = vmul.f32 1.0, %v3795
    %v3797 = vtanh.pop %v3775
    %v3798 = vmul.f32 %v3794, %v3582
    %v3799 = vmul.f32 %v3792, %v3797
    %v3800 = vadd.f32 %v3798, %v3799
    %v3801 = vtanh.pop %v3800
    %v3802 = vmul.f32 %v3796, %v3801
    %v3803 = vpack.c.bf16 %v3802, %v3802
    %3804 = vmatprep.subr.bf16.mxu0 %v844
    %3805 = vmatpush1.bf16.msra.mxu0 %v843
    %3806 = vmatprep.subr.bf16.mxu0 %v848
    %3807 = vmatpush1.bf16.msra.mxu0 %v847
    %3808 = vmatprep.subr.bf16.mxu0 %v852
    %3809 = vmatpush1.bf16.msra.mxu0 %v851
    %3810 = vmatprep.subr.bf16.mxu0 %v856
    %3811 = vmatpush1.bf16.msra.mxu0 %v855
    %3812 = vmatprep.subr.bf16.mxu0 %v860
    %3813 = vmatpush1.bf16.msra.mxu0 %v859
    %3814 = vmatprep.subr.bf16.mxu0 %v864
    %3815 = vmatpush1.bf16.msra.mxu0 %v863
    %3816 = vmatprep.subr.bf16.mxu0 %v868
    %3817 = vmatpush1.bf16.msra.mxu0 %v867
    %3818 = vmatprep.subr.bf16.mxu0 %v872
    %3819 = vmatpush1.bf16.msra.mxu0 %v871
    %3820 = vmatprep.subr.bf16.mxu0 %v876
    %3821 = vmatpush1.bf16.msra.mxu0 %v875
    %3822 = vmatprep.subr.bf16.mxu0 %v880
    %3823 = vmatpush1.bf16.msra.mxu0 %v879
    %3824 = vmatprep.subr.bf16.mxu0 %v884
    %3825 = vmatpush1.bf16.msra.mxu0 %v883
    %3826 = vmatprep.subr.bf16.mxu0 %v888
    %3827 = vmatpush1.bf16.msra.mxu0 %v887
    %3828 = vmatprep.subr.bf16.mxu0 %v892
    %3829 = vmatpush1.bf16.msra.mxu0 %v891
    %3830 = vmatprep.subr.bf16.mxu0 %v896
    %3831 = vmatpush1.bf16.msra.mxu0 %v895
    %3832 = vmatprep.subr.bf16.mxu0 %v900
    %3833 = vmatpush1.bf16.msra.mxu0 %v899
    %3834 = vmatprep.subr.bf16.mxu0 %v904
    %3835 = vmatpush1.bf16.msra.mxu0 %v903
    %3836 = vmatprep.mubr.bf16.mxu0 %v3692
    %3837 = vmatmul.mubr.bf16.gmra.mrb[0].mxu0 %v3803
    %v3838 = vpop.f32.mrb[0].mxu0
    %v3839 = vadd.f32 %v634, %v3838
    %v3840 = vpop.f32.mrb[0].mxu0
    %v3841 = vadd.f32 %v638, %v3840
    %v3842 = vpop.f32.mrb[0].mxu0
    %v3843 = vpop.f32.mrb[0].mxu0
    %3844 = vdwg.mxu0
    %3845 = vmatprep.subr.bf16.mxu0 %v846
    %3846 = vmatpush1.bf16.msra.mxu0 %v845
    %3847 = vmatprep.subr.bf16.mxu0 %v850
    %3848 = vmatpush1.bf16.msra.mxu0 %v849
    %3849 = vmatprep.subr.bf16.mxu0 %v854
    %3850 = vmatpush1.bf16.msra.mxu0 %v853
    %3851 = vmatprep.subr.bf16.mxu0 %v858
    %3852 = vmatpush1.bf16.msra.mxu0 %v857
    %3853 = vmatprep.subr.bf16.mxu0 %v862
    %3854 = vmatpush1.bf16.msra.mxu0 %v861
    %3855 = vmatprep.subr.bf16.mxu0 %v866
    %3856 = vmatpush1.bf16.msra.mxu0 %v865
    %3857 = vmatprep.subr.bf16.mxu0 %v870
    %3858 = vmatpush1.bf16.msra.mxu0 %v869
    %3859 = vmatprep.subr.bf16.mxu0 %v874
    %3860 = vmatpush1.bf16.msra.mxu0 %v873
    %3861 = vmatprep.subr.bf16.mxu0 %v878
    %3862 = vmatpush1.bf16.msra.mxu0 %v877
    %3863 = vmatprep.subr.bf16.mxu0 %v882
    %3864 = vmatpush1.bf16.msra.mxu0 %v881
    %3865 = vmatprep.subr.bf16.mxu0 %v886
    %3866 = vmatpush1.bf16.msra.mxu0 %v885
    %3867 = vmatprep.subr.bf16.mxu0 %v890
    %3868 = vmatpush1.bf16.msra.mxu0 %v889
    %3869 = vmatprep.subr.bf16.mxu0 %v894
    %3870 = vmatpush1.bf16.msra.mxu0 %v893
    %3871 = vmatprep.subr.bf16.mxu0 %v898
    %3872 = vmatpush1.bf16.msra.mxu0 %v897
    %3873 = vmatprep.subr.bf16.mxu0 %v902
    %3874 = vmatpush1.bf16.msra.mxu0 %v901
    %3875 = vmatprep.subr.bf16.mxu0 %v906
    %3876 = vmatpush1.bf16.msra.mxu0 %v905
    %3877 = vmatprep.mubr.bf16.mxu0 %v3692
    %3878 = vmatmul.mubr.bf16.gmra.mrb[0].mxu0 %v3803
    %v3879 = vpop.f32.mrb[0].mxu0
    %v3880 = vadd.f32 %v642, %v3879
    %v3881 = vpop.f32.mrb[0].mxu0
    %v3882 = vadd.f32 %v646, %v3881
    %v3883 = vpop.f32.mrb[0].mxu0
    %v3884 = vpop.f32.mrb[0].mxu0
    %3885 = vdwg.mxu0
    %v3886 = vxor.u32 %v3839, 2147483648
    %v3887 = vxor.u32 %v3841, 2147483648
    %v3888 = vxor.u32 %v3880, 2147483648
    %v3889 = vmul.f32 %v3886, 1.442695
    %v3890 = vpow.pop %v3889
    %v3891 = vmul.f32 %v3887, 1.442695
    %v3892 = vpow.pop %v3891
    %v3893 = vmul.f32 %v3888, 1.442695
    %v3894 = vpow.pop %v3893
    %v3895 = vadd.f32 %v3890, 1.0
    %v3896 = vadd.f32 %v3892, 1.0
    %v3897 = vadd.f32 %v3894, 1.0
    %v3898 = vrcp.pop %v3895
    %v3899 = vmul.f32 1.0, %v3898
    %v3900 = vrcp.pop %v3896
    %v3901 = vmul.f32 1.0, %v3900
    %v3902 = vrcp.pop %v3897
    %v3903 = vmul.f32 1.0, %v3902
    %v3904 = vtanh.pop %v3882
    %v3905 = vmul.f32 %v3901, %v3689
    %v3906 = vmul.f32 %v3899, %v3904
    %v3907 = vadd.f32 %v3905, %v3906
    %v3908 = vtanh.pop %v3907
    %v3909 = vmul.f32 %v3903, %v3908
    %v3910 = vpack.c.bf16 %v3909, %v3909
    %s3911 = scalar_lea.vmem %s7, 52
    %3912 = vst [vmem:[%s3911] sm:$0xf] %v3910
    %s3913 = scalar_lea.vmem %s0, 56
    %v3914 = vld [vmem:[%s3913] sm:$0xf]
    %3915 = vmatprep.subr.bf16.mxu0 %v395
    %3916 = vmatpush1.bf16.msra.mxu0 %v394
    %3917 = vmatprep.subr.bf16.mxu0 %v399
    %3918 = vmatpush1.bf16.msra.mxu0 %v398
    %3919 = vmatprep.subr.bf16.mxu0 %v403
    %3920 = vmatpush1.bf16.msra.mxu0 %v402
    %3921 = vmatprep.subr.bf16.mxu0 %v407
    %3922 = vmatpush1.bf16.msra.mxu0 %v406
    %3923 = vmatprep.subr.bf16.mxu0 %v411
    %3924 = vmatpush1.bf16.msra.mxu0 %v410
    %3925 = vmatprep.subr.bf16.mxu0 %v415
    %3926 = vmatpush1.bf16.msra.mxu0 %v414
    %3927 = vmatprep.subr.bf16.mxu0 %v419
    %3928 = vmatpush1.bf16.msra.mxu0 %v418
    %3929 = vmatprep.subr.bf16.mxu0 %v423
    %3930 = vmatpush1.bf16.msra.mxu0 %v422
    %3931 = vmatprep.subr.bf16.mxu0 %v427
    %3932 = vmatpush1.bf16.msra.mxu0 %v426
    %3933 = vmatprep.subr.bf16.mxu0 %v431
    %3934 = vmatpush1.bf16.msra.mxu0 %v430
    %3935 = vmatprep.subr.bf16.mxu0 %v435
    %3936 = vmatpush1.bf16.msra.mxu0 %v434
    %3937 = vmatprep.subr.bf16.mxu0 %v439
    %3938 = vmatpush1.bf16.msra.mxu0 %v438
    %3939 = vmatprep.subr.bf16.mxu0 %v443
    %3940 = vmatpush1.bf16.msra.mxu0 %v442
    %3941 = vmatprep.subr.bf16.mxu0 %v447
    %3942 = vmatpush1.bf16.msra.mxu0 %v446
    %3943 = vmatprep.subr.bf16.mxu0 %v451
    %3944 = vmatpush1.bf16.msra.mxu0 %v450
    %3945 = vmatprep.subr.bf16.mxu0 %v455
    %3946 = vmatpush1.bf16.msra.mxu0 %v454
    %3947 = vmatprep.mubr.bf16.mxu0 %v3803
    %3948 = vmatmul.mubr.bf16.gmra.mrb[0].mxu0 %v3914
    %v3949 = vpop.f32.mrb[0].mxu0
    %v3950 = vadd.f32 %v185, %v3949
    %v3951 = vpop.f32.mrb[0].mxu0
    %v3952 = vadd.f32 %v189, %v3951
    %v3953 = vpop.f32.mrb[0].mxu0
    %v3954 = vpop.f32.mrb[0].mxu0
    %3955 = vdwg.mxu0
    %3956 = vmatprep.subr.bf16.mxu0 %v397
    %3957 = vmatpush1.bf16.msra.mxu0 %v396
    %3958 = vmatprep.subr.bf16.mxu0 %v401
    %3959 = vmatpush1.bf16.msra.mxu0 %v400
    %3960 = vmatprep.subr.bf16.mxu0 %v405
    %3961 = vmatpush1.bf16.msra.mxu0 %v404
    %3962 = vmatprep.subr.bf16.mxu0 %v409
    %3963 = vmatpush1.bf16.msra.mxu0 %v408
    %3964 = vmatprep.subr.bf16.mxu0 %v413
    %3965 = vmatpush1.bf16.msra.mxu0 %v412
    %3966 = vmatprep.subr.bf16.mxu0 %v417
    %3967 = vmatpush1.bf16.msra.mxu0 %v416
    %3968 = vmatprep.subr.bf16.mxu0 %v421
    %3969 = vmatpush1.bf16.msra.mxu0 %v420
    %3970 = vmatprep.subr.bf16.mxu0 %v425
    %3971 = vmatpush1.bf16.msra.mxu0 %v424
    %3972 = vmatprep.subr.bf16.mxu0 %v429
    %3973 = vmatpush1.bf16.msra.mxu0 %v428
    %3974 = vmatprep.subr.bf16.mxu0 %v433
    %3975 = vmatpush1.bf16.msra.mxu0 %v432
    %3976 = vmatprep.subr.bf16.mxu0 %v437
    %3977 = vmatpush1.bf16.msra.mxu0 %v436
    %3978 = vmatprep.subr.bf16.mxu0 %v441
    %3979 = vmatpush1.bf16.msra.mxu0 %v440
    %3980 = vmatprep.subr.bf16.mxu0 %v445
    %3981 = vmatpush1.bf16.msra.mxu0 %v444
    %3982 = vmatprep.subr.bf16.mxu0 %v449
    %3983 = vmatpush1.bf16.msra.mxu0 %v448
    %3984 = vmatprep.subr.bf16.mxu0 %v453
    %3985 = vmatpush1.bf16.msra.mxu0 %v452
    %3986 = vmatprep.subr.bf16.mxu0 %v457
    %3987 = vmatpush1.bf16.msra.mxu0 %v456
    %3988 = vmatprep.mubr.bf16.mxu0 %v3803
    %3989 = vmatmul.mubr.bf16.gmra.mrb[0].mxu0 %v3914
    %v3990 = vpop.f32.mrb[0].mxu0
    %v3991 = vadd.f32 %v193, %v3990
    %v3992 = vpop.f32.mrb[0].mxu0
    %v3993 = vadd.f32 %v197, %v3992
    %v3994 = vpop.f32.mrb[0].mxu0
    %v3995 = vpop.f32.mrb[0].mxu0
    %3996 = vdwg.mxu0
    %v3997 = vxor.u32 %v3950, 2147483648
    %v3998 = vxor.u32 %v3952, 2147483648
    %v3999 = vxor.u32 %v3991, 2147483648
    %v4000 = vmul.f32 %v3997, 1.442695
    %v4001 = vpow.pop %v4000
    %v4002 = vmul.f32 %v3998, 1.442695
    %v4003 = vpow.pop %v4002
    %v4004 = vmul.f32 %v3999, 1.442695
    %v4005 = vpow.pop %v4004
    %v4006 = vadd.f32 %v4001, 1.0
    %v4007 = vadd.f32 %v4003, 1.0
    %v4008 = vadd.f32 %v4005, 1.0
    %v4009 = vrcp.pop %v4006
    %v4010 = vmul.f32 1.0, %v4009
    %v4011 = vrcp.pop %v4007
    %v4012 = vmul.f32 1.0, %v4011
    %v4013 = vrcp.pop %v4008
    %v4014 = vmul.f32 1.0, %v4013
    %v4015 = vtanh.pop %v3993
    %v4016 = vmul.f32 %v4012, %v3800
    %v4017 = vmul.f32 %v4010, %v4015
    %v4018 = vadd.f32 %v4016, %v4017
    %v4019 = vtanh.pop %v4018
    %v4020 = vmul.f32 %v4014, %v4019
    %v4021 = vpack.c.bf16 %v4020, %v4020
    %4022 = vmatprep.subr.bf16.mxu0 %v844
    %4023 = vmatpush1.bf16.msra.mxu0 %v843
    %4024 = vmatprep.subr.bf16.mxu0 %v848
    %4025 = vmatpush1.bf16.msra.mxu0 %v847
    %4026 = vmatprep.subr.bf16.mxu0 %v852
    %4027 = vmatpush1.bf16.msra.mxu0 %v851
    %4028 = vmatprep.subr.bf16.mxu0 %v856
    %4029 = vmatpush1.bf16.msra.mxu0 %v855
    %4030 = vmatprep.subr.bf16.mxu0 %v860
    %4031 = vmatpush1.bf16.msra.mxu0 %v859
    %4032 = vmatprep.subr.bf16.mxu0 %v864
    %4033 = vmatpush1.bf16.msra.mxu0 %v863
    %4034 = vmatprep.subr.bf16.mxu0 %v868
    %4035 = vmatpush1.bf16.msra.mxu0 %v867
    %4036 = vmatprep.subr.bf16.mxu0 %v872
    %4037 = vmatpush1.bf16.msra.mxu0 %v871
    %4038 = vmatprep.subr.bf16.mxu0 %v876
    %4039 = vmatpush1.bf16.msra.mxu0 %v875
    %4040 = vmatprep.subr.bf16.mxu0 %v880
    %4041 = vmatpush1.bf16.msra.mxu0 %v879
    %4042 = vmatprep.subr.bf16.mxu0 %v884
    %4043 = vmatpush1.bf16.msra.mxu0 %v883
    %4044 = vmatprep.subr.bf16.mxu0 %v888
    %4045 = vmatpush1.bf16.msra.mxu0 %v887
    %4046 = vmatprep.subr.bf16.mxu0 %v892
    %4047 = vmatpush1.bf16.msra.mxu0 %v891
    %4048 = vmatprep.subr.bf16.mxu0 %v896
    %4049 = vmatpush1.bf16.msra.mxu0 %v895
    %4050 = vmatprep.subr.bf16.mxu0 %v900
    %4051 = vmatpush1.bf16.msra.mxu0 %v899
    %4052 = vmatprep.subr.bf16.mxu0 %v904
    %4053 = vmatpush1.bf16.msra.mxu0 %v903
    %4054 = vmatprep.mubr.bf16.mxu0 %v3910
    %4055 = vmatmul.mubr.bf16.gmra.mrb[0].mxu0 %v4021
    %v4056 = vpop.f32.mrb[0].mxu0
    %v4057 = vadd.f32 %v634, %v4056
    %v4058 = vpop.f32.mrb[0].mxu0
    %v4059 = vadd.f32 %v638, %v4058
    %v4060 = vpop.f32.mrb[0].mxu0
    %v4061 = vpop.f32.mrb[0].mxu0
    %4062 = vdwg.mxu0
    %4063 = vmatprep.subr.bf16.mxu0 %v846
    %4064 = vmatpush1.bf16.msra.mxu0 %v845
    %4065 = vmatprep.subr.bf16.mxu0 %v850
    %4066 = vmatpush1.bf16.msra.mxu0 %v849
    %4067 = vmatprep.subr.bf16.mxu0 %v854
    %4068 = vmatpush1.bf16.msra.mxu0 %v853
    %4069 = vmatprep.subr.bf16.mxu0 %v858
    %4070 = vmatpush1.bf16.msra.mxu0 %v857
    %4071 = vmatprep.subr.bf16.mxu0 %v862
    %4072 = vmatpush1.bf16.msra.mxu0 %v861
    %4073 = vmatprep.subr.bf16.mxu0 %v866
    %4074 = vmatpush1.bf16.msra.mxu0 %v865
    %4075 = vmatprep.subr.bf16.mxu0 %v870
    %4076 = vmatpush1.bf16.msra.mxu0 %v869
    %4077 = vmatprep.subr.bf16.mxu0 %v874
    %4078 = vmatpush1.bf16.msra.mxu0 %v873
    %4079 = vmatprep.subr.bf16.mxu0 %v878
    %4080 = vmatpush1.bf16.msra.mxu0 %v877
    %4081 = vmatprep.subr.bf16.mxu0 %v882
    %4082 = vmatpush1.bf16.msra.mxu0 %v881
    %4083 = vmatprep.subr.bf16.mxu0 %v886
    %4084 = vmatpush1.bf16.msra.mxu0 %v885
    %4085 = vmatprep.subr.bf16.mxu0 %v890
    %4086 = vmatpush1.bf16.msra.mxu0 %v889
    %4087 = vmatprep.subr.bf16.mxu0 %v894
    %4088 = vmatpush1.bf16.msra.mxu0 %v893
    %4089 = vmatprep.subr.bf16.mxu0 %v898
    %4090 = vmatpush1.bf16.msra.mxu0 %v897
    %4091 = vmatprep.subr.bf16.mxu0 %v902
    %4092 = vmatpush1.bf16.msra.mxu0 %v901
    %4093 = vmatprep.subr.bf16.mxu0 %v906
    %4094 = vmatpush1.bf16.msra.mxu0 %v905
    %4095 = vmatprep.mubr.bf16.mxu0 %v3910
    %4096 = vmatmul.mubr.bf16.gmra.mrb[0].mxu0 %v4021
    %v4097 = vpop.f32.mrb[0].mxu0
    %v4098 = vadd.f32 %v642, %v4097
    %v4099 = vpop.f32.mrb[0].mxu0
    %v4100 = vadd.f32 %v646, %v4099
    %v4101 = vpop.f32.mrb[0].mxu0
    %v4102 = vpop.f32.mrb[0].mxu0
    %4103 = vdwg.mxu0
    %v4104 = vxor.u32 %v4057, 2147483648
    %v4105 = vxor.u32 %v4059, 2147483648
    %v4106 = vxor.u32 %v4098, 2147483648
    %v4107 = vmul.f32 %v4104, 1.442695
    %v4108 = vpow.pop %v4107
    %v4109 = vmul.f32 %v4105, 1.442695
    %v4110 = vpow.pop %v4109
    %v4111 = vmul.f32 %v4106, 1.442695
    %v4112 = vpow.pop %v4111
    %v4113 = vadd.f32 %v4108, 1.0
    %v4114 = vadd.f32 %v4110, 1.0
    %v4115 = vadd.f32 %v4112, 1.0
    %v4116 = vrcp.pop %v4113
    %v4117 = vmul.f32 1.0, %v4116
    %v4118 = vrcp.pop %v4114
    %v4119 = vmul.f32 1.0, %v4118
    %v4120 = vrcp.pop %v4115
    %v4121 = vmul.f32 1.0, %v4120
    %v4122 = vtanh.pop %v4100
    %v4123 = vmul.f32 %v4119, %v3907
    %v4124 = vmul.f32 %v4117, %v4122
    %v4125 = vadd.f32 %v4123, %v4124
    %v4126 = vtanh.pop %v4125
    %v4127 = vmul.f32 %v4121, %v4126
    %v4128 = vpack.c.bf16 %v4127, %v4127
    %s4129 = scalar_lea.vmem %s7, 56
    %4130 = vst [vmem:[%s4129] sm:$0xf] %v4128
    %s4131 = scalar_lea.vmem %s0, 60
    %v4132 = vld [vmem:[%s4131] sm:$0xf]
    %4133 = vmatprep.subr.bf16.mxu0 %v395
    %4134 = vmatpush1.bf16.msra.mxu0 %v394
    %4135 = vmatprep.subr.bf16.mxu0 %v399
    %4136 = vmatpush1.bf16.msra.mxu0 %v398
    %4137 = vmatprep.subr.bf16.mxu0 %v403
    %4138 = vmatpush1.bf16.msra.mxu0 %v402
    %4139 = vmatprep.subr.bf16.mxu0 %v407
    %4140 = vmatpush1.bf16.msra.mxu0 %v406
    %4141 = vmatprep.subr.bf16.mxu0 %v411
    %4142 = vmatpush1.bf16.msra.mxu0 %v410
    %4143 = vmatprep.subr.bf16.mxu0 %v415
    %4144 = vmatpush1.bf16.msra.mxu0 %v414
    %4145 = vmatprep.subr.bf16.mxu0 %v419
    %4146 = vmatpush1.bf16.msra.mxu0 %v418
    %4147 = vmatprep.subr.bf16.mxu0 %v423
    %4148 = vmatpush1.bf16.msra.mxu0 %v422
    %4149 = vmatprep.subr.bf16.mxu0 %v427
    %4150 = vmatpush1.bf16.msra.mxu0 %v426
    %4151 = vmatprep.subr.bf16.mxu0 %v431
    %4152 = vmatpush1.bf16.msra.mxu0 %v430
    %4153 = vmatprep.subr.bf16.mxu0 %v435
    %4154 = vmatpush1.bf16.msra.mxu0 %v434
    %4155 = vmatprep.subr.bf16.mxu0 %v439
    %4156 = vmatpush1.bf16.msra.mxu0 %v438
    %4157 = vmatprep.subr.bf16.mxu0 %v443
    %4158 = vmatpush1.bf16.msra.mxu0 %v442
    %4159 = vmatprep.subr.bf16.mxu0 %v447
    %4160 = vmatpush1.bf16.msra.mxu0 %v446
    %4161 = vmatprep.subr.bf16.mxu0 %v451
    %4162 = vmatpush1.bf16.msra.mxu0 %v450
    %4163 = vmatprep.subr.bf16.mxu0 %v455
    %4164 = vmatpush1.bf16.msra.mxu0 %v454
    %4165 = vmatprep.mubr.bf16.mxu0 %v4021
    %4166 = vmatmul.mubr.bf16.gmra.mrb[0].mxu0 %v4132
    %v4167 = vpop.f32.mrb[0].mxu0
    %v4168 = vadd.f32 %v185, %v4167
    %v4169 = vpop.f32.mrb[0].mxu0
    %v4170 = vadd.f32 %v189, %v4169
    %v4171 = vpop.f32.mrb[0].mxu0
    %v4172 = vpop.f32.mrb[0].mxu0
    %4173 = vdwg.mxu0
    %4174 = vmatprep.subr.bf16.mxu0 %v397
    %4175 = vmatpush1.bf16.msra.mxu0 %v396
    %4176 = vmatprep.subr.bf16.mxu0 %v401
    %4177 = vmatpush1.bf16.msra.mxu0 %v400
    %4178 = vmatprep.subr.bf16.mxu0 %v405
    %4179 = vmatpush1.bf16.msra.mxu0 %v404
    %4180 = vmatprep.subr.bf16.mxu0 %v409
    %4181 = vmatpush1.bf16.msra.mxu0 %v408
    %4182 = vmatprep.subr.bf16.mxu0 %v413
    %4183 = vmatpush1.bf16.msra.mxu0 %v412
    %4184 = vmatprep.subr.bf16.mxu0 %v417
    %4185 = vmatpush1.bf16.msra.mxu0 %v416
    %4186 = vmatprep.subr.bf16.mxu0 %v421
    %4187 = vmatpush1.bf16.msra.mxu0 %v420
    %4188 = vmatprep.subr.bf16.mxu0 %v425
    %4189 = vmatpush1.bf16.msra.mxu0 %v424
    %4190 = vmatprep.subr.bf16.mxu0 %v429
    %4191 = vmatpush1.bf16.msra.mxu0 %v428
    %4192 = vmatprep.subr.bf16.mxu0 %v433
    %4193 = vmatpush1.bf16.msra.mxu0 %v432
    %4194 = vmatprep.subr.bf16.mxu0 %v437
    %4195 = vmatpush1.bf16.msra.mxu0 %v436
    %4196 = vmatprep.subr.bf16.mxu0 %v441
    %4197 = vmatpush1.bf16.msra.mxu0 %v440
    %4198 = vmatprep.subr.bf16.mxu0 %v445
    %4199 = vmatpush1.bf16.msra.mxu0 %v444
    %4200 = vmatprep.subr.bf16.mxu0 %v449
    %4201 = vmatpush1.bf16.msra.mxu0 %v448
    %4202 = vmatprep.subr.bf16.mxu0 %v453
    %4203 = vmatpush1.bf16.msra.mxu0 %v452
    %4204 = vmatprep.subr.bf16.mxu0 %v457
    %4205 = vmatpush1.bf16.msra.mxu0 %v456
    %4206 = vmatprep.mubr.bf16.mxu0 %v4021
    %4207 = vmatmul.mubr.bf16.gmra.mrb[0].mxu0 %v4132
    %v4208 = vpop.f32.mrb[0].mxu0
    %v4209 = vadd.f32 %v193, %v4208
    %v4210 = vpop.f32.mrb[0].mxu0
    %v4211 = vadd.f32 %v197, %v4210
    %v4212 = vpop.f32.mrb[0].mxu0
    %v4213 = vpop.f32.mrb[0].mxu0
    %4214 = vdwg.mxu0
    %v4215 = vxor.u32 %v4168, 2147483648
    %v4216 = vxor.u32 %v4170, 2147483648
    %v4217 = vxor.u32 %v4209, 2147483648
    %v4218 = vmul.f32 %v4215, 1.442695
    %v4219 = vpow.pop %v4218
    %v4220 = vmul.f32 %v4216, 1.442695
    %v4221 = vpow.pop %v4220
    %v4222 = vmul.f32 %v4217, 1.442695
    %v4223 = vpow.pop %v4222
    %v4224 = vadd.f32 %v4219, 1.0
    %v4225 = vadd.f32 %v4221, 1.0
    %v4226 = vadd.f32 %v4223, 1.0
    %v4227 = vrcp.pop %v4224
    %v4228 = vmul.f32 1.0, %v4227
    %v4229 = vrcp.pop %v4225
    %v4230 = vmul.f32 1.0, %v4229
    %v4231 = vrcp.pop %v4226
    %v4232 = vmul.f32 1.0, %v4231
    %v4233 = vtanh.pop %v4211
    %v4234 = vmul.f32 %v4230, %v4018
    %v4235 = vmul.f32 %v4228, %v4233
    %v4236 = vadd.f32 %v4234, %v4235
    %v4237 = vtanh.pop %v4236
    %v4238 = vmul.f32 %v4232, %v4237
    %v4239 = vpack.c.bf16 %v4238, %v4238
    %4240 = vmatprep.subr.bf16.mxu0 %v844
    %4241 = vmatpush1.bf16.msra.mxu0 %v843
    %4242 = vmatprep.subr.bf16.mxu0 %v848
    %4243 = vmatpush1.bf16.msra.mxu0 %v847
    %4244 = vmatprep.subr.bf16.mxu0 %v852
    %4245 = vmatpush1.bf16.msra.mxu0 %v851
    %4246 = vmatprep.subr.bf16.mxu0 %v856
    %4247 = vmatpush1.bf16.msra.mxu0 %v855
    %4248 = vmatprep.subr.bf16.mxu0 %v860
    %4249 = vmatpush1.bf16.msra.mxu0 %v859
    %4250 = vmatprep.subr.bf16.mxu0 %v864
    %4251 = vmatpush1.bf16.msra.mxu0 %v863
    %4252 = vmatprep.subr.bf16.mxu0 %v868
    %4253 = vmatpush1.bf16.msra.mxu0 %v867
    %4254 = vmatprep.subr.bf16.mxu0 %v872
    %4255 = vmatpush1.bf16.msra.mxu0 %v871
    %4256 = vmatprep.subr.bf16.mxu0 %v876
    %4257 = vmatpush1.bf16.msra.mxu0 %v875
    %4258 = vmatprep.subr.bf16.mxu0 %v880
    %4259 = vmatpush1.bf16.msra.mxu0 %v879
    %4260 = vmatprep.subr.bf16.mxu0 %v884
    %4261 = vmatpush1.bf16.msra.mxu0 %v883
    %4262 = vmatprep.subr.bf16.mxu0 %v888
    %4263 = vmatpush1.bf16.msra.mxu0 %v887
    %4264 = vmatprep.subr.bf16.mxu0 %v892
    %4265 = vmatpush1.bf16.msra.mxu0 %v891
    %4266 = vmatprep.subr.bf16.mxu0 %v896
    %4267 = vmatpush1.bf16.msra.mxu0 %v895
    %4268 = vmatprep.subr.bf16.mxu0 %v900
    %4269 = vmatpush1.bf16.msra.mxu0 %v899
    %4270 = vmatprep.subr.bf16.mxu0 %v904
    %4271 = vmatpush1.bf16.msra.mxu0 %v903
    %4272 = vmatprep.mubr.bf16.mxu0 %v4128
    %4273 = vmatmul.mubr.bf16.gmra.mrb[0].mxu0 %v4239
    %v4274 = vpop.f32.mrb[0].mxu0
    %v4275 = vadd.f32 %v634, %v4274
    %v4276 = vpop.f32.mrb[0].mxu0
    %v4277 = vadd.f32 %v638, %v4276
    %v4278 = vpop.f32.mrb[0].mxu0
    %v4279 = vpop.f32.mrb[0].mxu0
    %4280 = vdwg.mxu0
    %4281 = vmatprep.subr.bf16.mxu0 %v846
    %4282 = vmatpush1.bf16.msra.mxu0 %v845
    %4283 = vmatprep.subr.bf16.mxu0 %v850
    %4284 = vmatpush1.bf16.msra.mxu0 %v849
    %4285 = vmatprep.subr.bf16.mxu0 %v854
    %4286 = vmatpush1.bf16.msra.mxu0 %v853
    %4287 = vmatprep.subr.bf16.mxu0 %v858
    %4288 = vmatpush1.bf16.msra.mxu0 %v857
    %4289 = vmatprep.subr.bf16.mxu0 %v862
    %4290 = vmatpush1.bf16.msra.mxu0 %v861
    %4291 = vmatprep.subr.bf16.mxu0 %v866
    %4292 = vmatpush1.bf16.msra.mxu0 %v865
    %4293 = vmatprep.subr.bf16.mxu0 %v870
    %4294 = vmatpush1.bf16.msra.mxu0 %v869
    %4295 = vmatprep.subr.bf16.mxu0 %v874
    %4296 = vmatpush1.bf16.msra.mxu0 %v873
    %4297 = vmatprep.subr.bf16.mxu0 %v878
    %4298 = vmatpush1.bf16.msra.mxu0 %v877
    %4299 = vmatprep.subr.bf16.mxu0 %v882
    %4300 = vmatpush1.bf16.msra.mxu0 %v881
    %4301 = vmatprep.subr.bf16.mxu0 %v886
    %4302 = vmatpush1.bf16.msra.mxu0 %v885
    %4303 = vmatprep.subr.bf16.mxu0 %v890
    %4304 = vmatpush1.bf16.msra.mxu0 %v889
    %4305 = vmatprep.subr.bf16.mxu0 %v894
    %4306 = vmatpush1.bf16.msra.mxu0 %v893
    %4307 = vmatprep.subr.bf16.mxu0 %v898
    %4308 = vmatpush1.bf16.msra.mxu0 %v897
    %4309 = vmatprep.subr.bf16.mxu0 %v902
    %4310 = vmatpush1.bf16.msra.mxu0 %v901
    %4311 = vmatprep.subr.bf16.mxu0 %v906
    %4312 = vmatpush1.bf16.msra.mxu0 %v905
    %4313 = vmatprep.mubr.bf16.mxu0 %v4128
    %4314 = vmatmul.mubr.bf16.gmra.mrb[0].mxu0 %v4239
    %v4315 = vpop.f32.mrb[0].mxu0
    %v4316 = vadd.f32 %v642, %v4315
    %v4317 = vpop.f32.mrb[0].mxu0
    %v4318 = vadd.f32 %v646, %v4317
    %v4319 = vpop.f32.mrb[0].mxu0
    %v4320 = vpop.f32.mrb[0].mxu0
    %4321 = vdwg.mxu0
    %v4322 = vxor.u32 %v4275, 2147483648
    %v4323 = vxor.u32 %v4277, 2147483648
    %v4324 = vxor.u32 %v4316, 2147483648
    %v4325 = vmul.f32 %v4322, 1.442695
    %v4326 = vpow.pop %v4325
    %v4327 = vmul.f32 %v4323, 1.442695
    %v4328 = vpow.pop %v4327
    %v4329 = vmul.f32 %v4324, 1.442695
    %v4330 = vpow.pop %v4329
    %v4331 = vadd.f32 %v4326, 1.0
    %v4332 = vadd.f32 %v4328, 1.0
    %v4333 = vadd.f32 %v4330, 1.0
    %v4334 = vrcp.pop %v4331
    %v4335 = vmul.f32 1.0, %v4334
    %v4336 = vrcp.pop %v4332
    %v4337 = vmul.f32 1.0, %v4336
    %v4338 = vrcp.pop %v4333
    %v4339 = vmul.f32 1.0, %v4338
    %v4340 = vtanh.pop %v4318
    %v4341 = vmul.f32 %v4337, %v4125
    %v4342 = vmul.f32 %v4335, %v4340
    %v4343 = vadd.f32 %v4341, %v4342
    %v4344 = vtanh.pop %v4343
    %v4345 = vmul.f32 %v4339, %v4344
    %v4346 = vpack.c.bf16 %v4345, %v4345
    %s4347 = scalar_lea.vmem %s7, 60
    %4348 = vst [vmem:[%s4347] sm:$0xf] %v4346
    %4349 = vst [vmem:[#allocation2] sm:$0xff] %v4238
    %4350 = vst [vmem:[#allocation4] sm:$0xff] %v4236
    %4351 = vst [vmem:[%s175] sm:$0xff] %v4345
    %4352 = vst [vmem:[%s177] sm:$0xff] %v4343
    // Predicated region
    $region34: #{poetry_model_forward.2} parent=1 // pred_check
      _
    $region35: #{poetry_model_forward.2} parent=1 // pred_check_branch
      %4354 = sbr.rel (0) target = $region37
    $region36: #{poetry_model_forward.2} parent=1 // pred_region
      _
    $region37: #{poetry_model_forward.2} parent=1 // pred_fallthru
      _
    // Predicated region
    $region38: #{poetry_model_forward.2} parent=1 // pred_check
      _
    $region39: #{poetry_model_forward.2} parent=1 // pred_check_branch
      %4356 = sbr.rel (0) target = $region41
    $region40: #{poetry_model_forward.2} parent=1 // pred_region
      %s4358 = ssub.s32 256, 256
      %4359 = vsyncadd [#allocation3], %s4358
      %s4360 = sshll.u32 [#allocation2], 4
      %s4361 = int_to_ptr.vmem [resolvable:$true] %s4360
      %4366 = dma.vmem_to_hbm [thread:$0]  %s4361, 256, %s8, [#allocation3], 128, 128, 8
    $region41: #{poetry_model_forward.2} parent=1 // pred_fallthru
      _
    // Predicated region
    $region42: #{poetry_model_forward.2} parent=1 // pred_check
      _
    $region43: #{poetry_model_forward.2} parent=1 // pred_check_branch
      %4368 = sbr.rel (0) target = $region45
    $region44: #{poetry_model_forward.2} parent=1 // pred_region
      %s4370 = ssub.s32 256, 256
      %4371 = vsyncadd [#allocation5], %s4370
      %s4372 = sshll.u32 [#allocation4], 4
      %s4373 = int_to_ptr.vmem [resolvable:$true] %s4372
      %4378 = dma.vmem_to_hbm [thread:$0]  %s4373, 256, %s9, [#allocation5], 128, 128, 8
    $region45: #{poetry_model_forward.2} parent=1 // pred_fallthru
      _
    // Predicated region
    $region46: #{poetry_model_forward.2} parent=1 // pred_check
      _
    $region47: #{poetry_model_forward.2} parent=1 // pred_check_branch
      %4380 = sbr.rel (0) target = $region49
    $region48: #{poetry_model_forward.2} parent=1 // pred_region
      _
    $region49: #{poetry_model_forward.2} parent=1 // pred_fallthru
      _
    // Predicated region
    $region50: #{poetry_model_forward.2} parent=1 // pred_check
      _
    $region51: #{poetry_model_forward.2} parent=1 // pred_check_branch
      %4382 = sbr.rel (0) target = $region53
    $region52: #{poetry_model_forward.2} parent=1 // pred_region
      %4383 = dma.done [#allocation3], 256
    $region53: #{poetry_model_forward.2} parent=1 // pred_fallthru
      _
    // Predicated region
    $region54: #{poetry_model_forward.2} parent=1 // pred_check
      _
    $region55: #{poetry_model_forward.2} parent=1 // pred_check_branch
      %4385 = sbr.rel (0) target = $region57
    $region56: #{poetry_model_forward.2} parent=1 // pred_region
      %4386 = dma.done [#allocation5], 256
    $region57: #{poetry_model_forward.2} parent=1 // pred_fallthru
      _
    %4387 = vsyncpa [#allocation3], 1
    %4388 = vsyncpa [#allocation5], 1

</llo_original>
